<compile_context>
chip_gen: v7x
topology: tpu7x:2x2x1
jax: 0.10.0
libtpu: 0.0.40
codegen_flags: <defaults>
</compile_context>

<pallas_src>
import functools

import jax
import jax.numpy as jnp
from jax import lax
from jax.experimental import pallas as pl
from jax.experimental.pallas import tpu as pltpu

GATE_PAD = 128   # lanes per gate block: i/f/g/o live at lane offsets 0/128/256/384
OUT_PAD = 128    # lane-padded width of the output Linear (lane-dense stores)
# Per-gate pre-activation scale so one tanh() produces every gate:
#   sigmoid(x) = 0.5 + 0.5*tanh(0.5*x)  -> i/f/o scaled by 0.5
#   tanh(x)                              -> g scaled by 1.0
GATE_SCALE = (0.5, 0.5, 1.0, 0.5)


def _make_kernel(layers_num, hid_num, batch, batch_pad, seq_len):
    L, H, B, BP, N = layers_num, hid_num, batch, batch_pad, seq_len
    GP = GATE_PAD

    def cell(pre, c_prev):
        # one EUP pass over the lane-padded gate slab; VPU fix-ups afterwards
        t = jnp.tanh(pre)                                     # (BP, 4*GP)
        i_g = 0.5 * t[:, 0 * GP:0 * GP + H] + 0.5
        f_g = 0.5 * t[:, 1 * GP:1 * GP + H] + 0.5
        g_g = t[:, 2 * GP:2 * GP + H]
        o_g = 0.5 * t[:, 3 * GP:3 * GP + H] + 0.5
        c_new = f_g * c_prev + i_g * g_g
        h_new = o_g * jnp.tanh(c_new)
        return h_new, c_new

    def kernel(x_ref, adj_ref, wih0_ref, b0_ref, *rest):
        # rest = [wcat_0, (wcat_1, b_1), ..., wout, bout, o_ref, gates_ref, seq_ref]
        idx = 0
        wcat_refs = []
        bias_refs = [None]
        for l in range(L):
            wcat_refs.append(rest[idx])
            idx += 1
            if l >= 1:
                bias_refs.append(rest[idx])
                idx += 1
        wout_ref = rest[idx]
        bout_ref = rest[idx + 1]
        o_ref = rest[idx + 2]
        gates_ref = rest[idx + 3]      # (N*BP, 4*GP) scratch: hoisted layer-0 x-proj
        seq_ref = rest[idx + 4]        # (N*BP, H)    scratch: top-layer h sequence

        # ---- hoisted layer-0 input projection (one big MXU matmul, off the chain)
        gates_ref[...] = (
            jnp.dot(x_ref[...], wih0_ref[...], preferred_element_type=jnp.float32)
            + b0_ref[...])

        # hoist the (1, 4GP) -> (BP, 4GP) bias broadcasts out of the unrolled loop
        bias_b = [None]
        for l in range(1, L):
            bias_b.append(jnp.broadcast_to(bias_refs[l][...], (BP, 4 * GP)))

        h = [jnp.zeros((BP, H), jnp.float32) for _ in range(L)]
        c = [jnp.zeros((BP, H), jnp.float32) for _ in range(L)]

        # ---- wavefront recurrence: at step s, layer l handles node index s - l
        for s in range(N + L - 1):
            res = [None] * L
            for l in range(L):
                self_active = 0 <= s - l <= N - 1
                feeds_next = (l + 1 < L) and (0 <= s - (l + 1) <= N - 1)
                if (self_active or feeds_next) and s > l:     # s == l  =>  h[l] == 0
                    # Wcat_l = [W_hh_l | W_ih_{l+1}], re-read per step (no vreg pin)
                    res[l] = jnp.dot(h[l], wcat_refs[l][...],
                                     preferred_element_type=jnp.float32)
            for l in range(L):
                if not (0 <= s - l <= N - 1):
                    continue
                rec = None if res[l] is None else res[l][:, :4 * GP]
                if l == 0:
                    base = gates_ref[s * BP:(s + 1) * BP, :]
                else:
                    base = res[l - 1][:, 4 * GP:8 * GP] + bias_b[l]
                pre = base if rec is None else base + rec
                h_new, c_new = cell(pre, c[l])
                h[l], c[l] = h_new, c_new
                if l == L - 1:                                # only top layer stored
                    t_out = s - l
                    seq_ref[t_out * BP:(t_out + 1) * BP, :] = h_new

        # ---- GCN head per real batch element (no kron(A_hat, I_B) blow-up) ----
        adjm = adj_ref[...]                                   # (N, N)
        wout = wout_ref[...]                                  # (H, OUT_PAD)
        bout = bout_ref[...]                                  # (1, OUT_PAD)
        for b in range(B):
            # rows b, b+BP, ..., b+(N-1)*BP  ->  this batch element's (N, H) sequence
            seq_b = seq_ref[pl.ds(b, N, stride=BP), :]
            g1 = jnp.maximum(
                jnp.dot(adjm, seq_b, preferred_element_type=jnp.float32), 0.0)
            g2 = jnp.dot(g1, wout, preferred_element_type=jnp.float32) + bout
            g3 = jnp.maximum(
                jnp.dot(adjm, g2, preferred_element_type=jnp.float32), 0.0)
            o_ref[b * N:(b + 1) * N, :] = g3                  # lane-dense store

    return kernel


def _pack_cols(src, H):
    """(4H, K) PyTorch-layout weight -> (K, 4*GATE_PAD) transposed, per-gate scaled."""
    K = src.shape[1]
    out = jnp.zeros((K, 4 * GATE_PAD), jnp.float32)
    for g in range(4):
        out = out.at[:, g * GATE_PAD:g * GATE_PAD + H].set(
            GATE_SCALE[g] * src[g * H:(g + 1) * H, :].astype(jnp.float32).T)
    return out


def _pack_bias(b_ih, b_hh, H):
    out = jnp.zeros((1, 4 * GATE_PAD), jnp.float32)
    b = (b_ih + b_hh).astype(jnp.float32)
    for g in range(4):
        out = out.at[0, g * GATE_PAD:g * GATE_PAD + H].set(
            GATE_SCALE[g] * b[g * H:(g + 1) * H])
    return out


def gcn_lstm_forward(flow_x, graph, params, *, layers_num, hid_num, out_num):
    B, N, T, F = flow_x.shape
    d_in = T * F
    H = hid_num
    L = layers_num
    BP = ((B + 7) // 8) * 8          # batch rows padded to a full sublane group
    GP = GATE_PAD
    OP = OUT_PAD

    # time-major, batch-padded, flattened rows: row (t, b) -> t*BP + b
    x = flow_x.reshape(B, N, d_in).astype(jnp.float32)
    x_tm = jnp.transpose(x, (1, 0, 2))                       # (N, B, d_in)
    x_pad = jnp.zeros((N, BP, d_in), jnp.float32).at[:, :B, :].set(x_tm)
    x_flat = x_pad.reshape(N * BP, d_in)

    # A_hat = D^-1 (I + A), precomputed once in the wrapper
    adj = graph[0].astype(jnp.float32)
    a_plus = adj + jnp.eye(N, dtype=jnp.float32)
    deg = a_plus.sum(axis=1)
    d_inv = jnp.where(deg == 0.0, 0.0, 1.0 / deg)
    adj_hat = d_inv[:, None] * a_plus                        # (N, N)

    # layer-0 input projection weights (pre-scaled per gate) + fused bias
    w_ih0, _, b_ih0, b_hh0 = params["lstm"][0]
    wih0 = _pack_cols(w_ih0, H)                              # (d_in, 4*GP)
    b0 = _pack_bias(b_ih0, b_hh0, H)                         # (1, 4*GP)

    args = [x_flat, adj_hat, wih0, b0]
    in_specs = [
        pl.BlockSpec(x_flat.shape, lambda i: (0, 0)),
        pl.BlockSpec(adj_hat.shape, lambda i: (0, 0)),
        pl.BlockSpec(wih0.shape, lambda i: (0, 0)),
        pl.BlockSpec(b0.shape, lambda i: (0, 0)),
    ]
    for l in range(L):
        _, w_hh_l, _, _ = params["lstm"][l]
        whh_packed = _pack_cols(w_hh_l, H)                   # (H, 4*GP)
        if l + 1 < L:
            w_ih_next = params["lstm"][l + 1][0]             # (4H, H)
            wcat = jnp.concatenate([whh_packed, _pack_cols(w_ih_next, H)], axis=1)
        else:
            wcat = whh_packed
        args.append(wcat)
        in_specs.append(pl.BlockSpec(wcat.shape, lambda i: (0, 0)))
        if l >= 1:
            _, _, b_ih_l, b_hh_l = params["lstm"][l]
            bl = _pack_bias(b_ih_l, b_hh_l, H)
            args.append(bl)
            in_specs.append(pl.BlockSpec(bl.shape, lambda i: (0, 0)))

    w_out, b_out = params["out"]
    wout = jnp.zeros((H, OP), jnp.float32).at[:, :out_num].set(
        w_out.astype(jnp.float32).T)
    bout = jnp.zeros((1, OP), jnp.float32).at[:, :out_num].set(
        b_out.astype(jnp.float32)[None, :])
    args += [wout, bout]
    in_specs += [pl.BlockSpec(wout.shape, lambda i: (0, 0)),
                 pl.BlockSpec(bout.shape, lambda i: (0, 0))]

    kernel = _make_kernel(L, H, B, BP, N)
    out_flat = pl.pallas_call(
        kernel,
        out_shape=jax.ShapeDtypeStruct((B * N, OP), jnp.float32),
        grid_spec=pltpu.PrefetchScalarGridSpec(
            num_scalar_prefetch=0,
            grid=(1,),
            in_specs=in_specs,
            out_specs=pl.BlockSpec((B * N, OP), lambda i: (0, 0)),
            scratch_shapes=[
                pltpu.VMEM((N * BP, 4 * GP), jnp.float32),   # hoisted gate slab
                pltpu.VMEM((N * BP, H), jnp.float32),        # top-layer h sequence
            ],
        ),
        compiler_params=pltpu.CompilerParams(
            dimension_semantics=("arbitrary",)),
    )(*args)

    # (B*N, OP) batch-major rows -> (B, N, 1, out_num)
    out = out_flat.reshape(B, N, OP)[:, :, :out_num]
    return out[:, :, None, :]


def init_params(key, input_num, hid_num, layers_num, out_num):
    """Synthetic init mimicking PyTorch uniform(-1/sqrt(H), 1/sqrt(H)); raw layout."""
    H = hid_num
    params = {"lstm": []}
    k = key
    bound = 1.0 / jnp.sqrt(jnp.float32(H))
    for l in range(layers_num):
        in_l = input_num if l == 0 else H
        k, k1, k2, k3, k4 = jax.random.split(k, 5)
        w_ih = jax.random.uniform(k1, (4 * H, in_l), jnp.float32, -bound, bound)
        w_hh = jax.random.uniform(k2, (4 * H, H), jnp.float32, -bound, bound)
        b_ih = jax.random.uniform(k3, (4 * H,), jnp.float32, -bound, bound)
        b_hh = jax.random.uniform(k4, (4 * H,), jnp.float32, -bound, bound)
        params["lstm"].append((w_ih, w_hh, b_ih, b_hh))
    lin_in = out_num * 6                                     # == hid_num
    lb = 1.0 / jnp.sqrt(jnp.float32(lin_in))
    k, k1, k2 = jax.random.split(k, 3)
    w_out = jax.random.uniform(k1, (out_num, lin_in), jnp.float32, -lb, lb)
    b_out = jax.random.uniform(k2, (out_num,), jnp.float32, -lb, lb)
    params["out"] = (w_out, b_out)
    return params


def reference_forward(flow_x, graph, params, *, layers_num, hid_num, out_num):
    """Pure-JAX reference replicating the PyTorch forward semantics."""
    B, N, T, F = flow_x.shape
    H = hid_num
    seq = flow_x.reshape(B, N, T * F).astype(jnp.float32)
    for l in range(layers_num):
        w_ih, w_hh, b_ih, b_hh = params["lstm"][l]
        bias = b_ih + b_hh

        def step(carry, x_t, w_ih=w_ih, w_hh=w_hh, bias=bias):
            h, c = carry
            gates = x_t @ w_ih.T + h @ w_hh.T + bias
            i = jax.nn.sigmoid(gates[:, :H])
            f = jax.nn.sigmoid(gates[:, H:2 * H])
            g = jnp.tanh(gates[:, 2 * H:3 * H])
            o = jax.nn.sigmoid(gates[:, 3 * H:])
            c = f * c + i * g
            h = o * jnp.tanh(c)
            return (h, c), h

        h0 = jnp.zeros((B, H), jnp.float32)
        c0 = jnp.zeros((B, H), jnp.float32)
        xs = jnp.transpose(seq, (1, 0, 2))                   # (N, B, D)
        _, hs = lax.scan(step, (h0, c0), xs)
        seq = jnp.transpose(hs, (1, 0, 2))                   # (B, N, H)
    adj = graph[0].astype(jnp.float32)
    a_plus = adj + jnp.eye(N, dtype=adj.dtype)
    deg = a_plus.sum(axis=1)
    d_inv = jnp.where(deg == 0, 0.0, 1.0 / deg)
    adj_hat = jnp.diag(d_inv) @ a_plus
    out1 = jax.nn.relu(jnp.einsum("nm,bmh->bnh", adj_hat, seq))
    w_out, b_out = params["out"]
    out2 = out1 @ w_out.T + b_out
    out3 = jax.nn.relu(jnp.einsum("nm,bmh->bnh", adj_hat, out2))
    return out3[:, :, None, :]


if __name__ == "__main__":
    # Small shapes consistent with the module:
    #   flow_x: (B, N, T, F) -> LSTM input_num = T*F ; hid_num = out_num * 6
    B, N, T, F = 2, 16, 6, 1
    input_num = T * F            # 6
    out_num = 8
    hid_num = out_num * 6        # 48
    layers_num = 2

    key = jax.random.PRNGKey(0)
    k_flow, k_graph, k_param = jax.random.split(key, 3)
    flow_x = jax.random.normal(k_flow, (B, N, T, F), jnp.float32)
    graph = jax.random.uniform(k_graph, (1, N, N), jnp.float32)   # data['graph']
    params = init_params(k_param, input_num, hid_num, layers_num, out_num)

    fwd = functools.partial(gcn_lstm_forward, layers_num=layers_num,
                            hid_num=hid_num, out_num=out_num)
    out = jax.block_until_ready(fwd(flow_x, graph, params))
    assert out.shape == (B, N, 1, out_num), out.shape

    ref = jax.block_until_ready(
        reference_forward(flow_x, graph, params, layers_num=layers_num,
                          hid_num=hid_num, out_num=out_num))
    if not jnp.allclose(out, ref, rtol=2e-3, atol=2e-3):
        raise AssertionError(
            f"mismatch vs reference, max abs diff = {jnp.max(jnp.abs(out - ref))}")
    print("KERNEL_OK")
</pallas_src>

<mosaic_0001>
module attributes {stable_mosaic.version = 11 : i64} {
  func.func @kernel(%arg0: i32, %arg1: memref<128x6xf32, #tpu.memory_space<vmem>>, %arg2: memref<16x16xf32, #tpu.memory_space<vmem>>, %arg3: memref<6x512xf32, #tpu.memory_space<vmem>>, %arg4: memref<1x512xf32, #tpu.memory_space<vmem>>, %arg5: memref<48x1024xf32, #tpu.memory_space<vmem>>, %arg6: memref<48x512xf32, #tpu.memory_space<vmem>>, %arg7: memref<1x512xf32, #tpu.memory_space<vmem>>, %arg8: memref<48x128xf32, #tpu.memory_space<vmem>>, %arg9: memref<1x128xf32, #tpu.memory_space<vmem>>, %arg10: memref<32x128xf32, #tpu.memory_space<vmem>>, %arg11: memref<128x512xf32, #tpu.memory_space<vmem>>, %arg12: memref<128x48xf32, #tpu.memory_space<vmem>>) attributes {dimension_semantics = [#tpu.dimension_semantics<arbitrary>], iteration_bounds = array<i64: 1>, scalar_prefetch = 0 : i64, scratch_operands = 2 : i64, tpu.core_type = #tpu.core_type<tc>, window_params = [{pipeline_mode = #tpu.pipeline_mode<synchronous>, transform_indices = @transform_0, window_bounds = array<i64: 128, 6>}, {pipeline_mode = #tpu.pipeline_mode<synchronous>, transform_indices = @transform_1, window_bounds = array<i64: 16, 16>}, {pipeline_mode = #tpu.pipeline_mode<synchronous>, transform_indices = @transform_2, window_bounds = array<i64: 6, 512>}, {pipeline_mode = #tpu.pipeline_mode<synchronous>, transform_indices = @transform_3, window_bounds = array<i64: 1, 512>}, {pipeline_mode = #tpu.pipeline_mode<synchronous>, transform_indices = @transform_4, window_bounds = array<i64: 48, 1024>}, {pipeline_mode = #tpu.pipeline_mode<synchronous>, transform_indices = @transform_5, window_bounds = array<i64: 48, 512>}, {pipeline_mode = #tpu.pipeline_mode<synchronous>, transform_indices = @transform_6, window_bounds = array<i64: 1, 512>}, {pipeline_mode = #tpu.pipeline_mode<synchronous>, transform_indices = @transform_7, window_bounds = array<i64: 48, 128>}, {pipeline_mode = #tpu.pipeline_mode<synchronous>, transform_indices = @transform_8, window_bounds = array<i64: 1, 128>}, {pipeline_mode = #tpu.pipeline_mode<synchronous>, transform_indices = @transform_9, window_bounds = array<i64: 32, 128>}]} {
    %c0 = arith.constant 0 : index
    %c0_0 = arith.constant 0 : index
    %0 = vector.load %arg1[%c0, %c0_0] : memref<128x6xf32, #tpu.memory_space<vmem>>, vector<128x6xf32>
    %c0_1 = arith.constant 0 : index
    %c0_2 = arith.constant 0 : index
    %1 = vector.load %arg3[%c0_1, %c0_2] : memref<6x512xf32, #tpu.memory_space<vmem>>, vector<6x512xf32>
    %cst = arith.constant dense<0.000000e+00> : vector<128x512xf32>
    %2 = tpu.matmul %0, %1, %cst {dimension_numbers = #tpu.dot_dimension_numbers<[1], [0], [0], [1], [0, 0, 1, 1], [], []>} : vector<128x6xf32>, vector<6x512xf32>, vector<128x512xf32> -> vector<128x512xf32>
    %c0_3 = arith.constant 0 : index
    %c0_4 = arith.constant 0 : index
    %3 = vector.load %arg4[%c0_3, %c0_4] : memref<1x512xf32, #tpu.memory_space<vmem>>, vector<1x512xf32>
    %4 = vector.broadcast %3 : vector<1x512xf32> to vector<128x512xf32>
    %5 = arith.addf %2, %4 : vector<128x512xf32>
    %c0_5 = arith.constant 0 : index
    %c0_6 = arith.constant 0 : index
    %6 = vector.load %arg11[%c0_5, %c0_6] : memref<128x512xf32, #tpu.memory_space<vmem>>, vector<128x512xf32>
    tpu.vector_store %arg11[%c0_5, %c0_6], %5 {strides = array<i32>} : memref<128x512xf32, #tpu.memory_space<vmem>>, vector<128x512xf32>,
    %c0_7 = arith.constant 0 : index
    %c0_8 = arith.constant 0 : index
    %7 = vector.load %arg7[%c0_7, %c0_8] : memref<1x512xf32, #tpu.memory_space<vmem>>, vector<1x512xf32>
    %8 = vector.shape_cast %7 : vector<1x512xf32> to vector<1x512xf32>
    %9 = vector.broadcast %8 : vector<1x512xf32> to vector<8x512xf32>
    %cst_9 = arith.constant 0.000000e+00 : f32
    %10 = vector.broadcast %cst_9 : f32 to vector<8x48xf32>
    %cst_10 = arith.constant 0.000000e+00 : f32
    %11 = vector.broadcast %cst_10 : f32 to vector<8x48xf32>
    %c0_11 = arith.constant 0 : index
    %c0_12 = arith.constant 0 : index
    %12 = vector.load %arg11[%c0_11, %c0_12] : memref<128x512xf32, #tpu.memory_space<vmem>>, vector<8x512xf32>
    %13 = math.tanh %12 : vector<8x512xf32>
    %14 = vector.extract_strided_slice %13 {offsets = [0, 0], sizes = [8, 48], strides = [1, 1]} : vector<8x512xf32> to vector<8x48xf32>
    %cst_13 = arith.constant 5.000000e-01 : f32
    %15 = vector.broadcast %cst_13 : f32 to vector<8x48xf32>
    %16 = arith.mulf %15, %14 : vector<8x48xf32>
    %cst_14 = arith.constant 5.000000e-01 : f32
    %17 = vector.broadcast %cst_14 : f32 to vector<8x48xf32>
    %18 = arith.addf %16, %17 : vector<8x48xf32>
    %19 = vector.extract_strided_slice %13 {offsets = [0, 128], sizes = [8, 48], strides = [1, 1]} : vector<8x512xf32> to vector<8x48xf32>
    %cst_15 = arith.constant 5.000000e-01 : f32
    %20 = vector.broadcast %cst_15 : f32 to vector<8x48xf32>
    %21 = arith.mulf %20, %19 : vector<8x48xf32>
    %cst_16 = arith.constant 5.000000e-01 : f32
    %22 = vector.broadcast %cst_16 : f32 to vector<8x48xf32>
    %23 = arith.addf %21, %22 : vector<8x48xf32>
    %24 = vector.extract_strided_slice %13 {offsets = [0, 256], sizes = [8, 48], strides = [1, 1]} : vector<8x512xf32> to vector<8x48xf32>
    %25 = vector.extract_strided_slice %13 {offsets = [0, 384], sizes = [8, 48], strides = [1, 1]} : vector<8x512xf32> to vector<8x48xf32>
    %cst_17 = arith.constant 5.000000e-01 : f32
    %26 = vector.broadcast %cst_17 : f32 to vector<8x48xf32>
    %27 = arith.mulf %26, %25 : vector<8x48xf32>
    %cst_18 = arith.constant 5.000000e-01 : f32
    %28 = vector.broadcast %cst_18 : f32 to vector<8x48xf32>
    %29 = arith.addf %27, %28 : vector<8x48xf32>
    %30 = arith.mulf %23, %10 : vector<8x48xf32>
    %31 = arith.mulf %18, %24 : vector<8x48xf32>
    %32 = arith.addf %30, %31 : vector<8x48xf32>
    %33 = math.tanh %32 : vector<8x48xf32>
    %34 = arith.mulf %29, %33 : vector<8x48xf32>
    %c0_19 = arith.constant 0 : index
    %c0_20 = arith.constant 0 : index
    %35 = vector.load %arg5[%c0_19, %c0_20] : memref<48x1024xf32, #tpu.memory_space<vmem>>, vector<48x1024xf32>
    %cst_21 = arith.constant dense<0.000000e+00> : vector<8x1024xf32>
    %36 = tpu.matmul %34, %35, %cst_21 {dimension_numbers = #tpu.dot_dimension_numbers<[1], [0], [0], [1], [0, 0, 1, 1], [], []>} : vector<8x48xf32>, vector<48x1024xf32>, vector<8x1024xf32> -> vector<8x1024xf32>
    %37 = vector.extract_strided_slice %36 {offsets = [0, 0], sizes = [8, 512], strides = [1, 1]} : vector<8x1024xf32> to vector<8x512xf32>
    %c8 = arith.constant 8 : index
    %c0_22 = arith.constant 0 : index
    %38 = vector.load %arg11[%c8, %c0_22] : memref<128x512xf32, #tpu.memory_space<vmem>>, vector<8x512xf32>
    %39 = arith.addf %38, %37 : vector<8x512xf32>
    %40 = math.tanh %39 : vector<8x512xf32>
    %41 = vector.extract_strided_slice %40 {offsets = [0, 0], sizes = [8, 48], strides = [1, 1]} : vector<8x512xf32> to vector<8x48xf32>
    %cst_23 = arith.constant 5.000000e-01 : f32
    %42 = vector.broadcast %cst_23 : f32 to vector<8x48xf32>
    %43 = arith.mulf %42, %41 : vector<8x48xf32>
    %cst_24 = arith.constant 5.000000e-01 : f32
    %44 = vector.broadcast %cst_24 : f32 to vector<8x48xf32>
    %45 = arith.addf %43, %44 : vector<8x48xf32>
    %46 = vector.extract_strided_slice %40 {offsets = [0, 128], sizes = [8, 48], strides = [1, 1]} : vector<8x512xf32> to vector<8x48xf32>
    %cst_25 = arith.constant 5.000000e-01 : f32
    %47 = vector.broadcast %cst_25 : f32 to vector<8x48xf32>
    %48 = arith.mulf %47, %46 : vector<8x48xf32>
    %cst_26 = arith.constant 5.000000e-01 : f32
    %49 = vector.broadcast %cst_26 : f32 to vector<8x48xf32>
    %50 = arith.addf %48, %49 : vector<8x48xf32>
    %51 = vector.extract_strided_slice %40 {offsets = [0, 256], sizes = [8, 48], strides = [1, 1]} : vector<8x512xf32> to vector<8x48xf32>
    %52 = vector.extract_strided_slice %40 {offsets = [0, 384], sizes = [8, 48], strides = [1, 1]} : vector<8x512xf32> to vector<8x48xf32>
    %cst_27 = arith.constant 5.000000e-01 : f32
    %53 = vector.broadcast %cst_27 : f32 to vector<8x48xf32>
    %54 = arith.mulf %53, %52 : vector<8x48xf32>
    %cst_28 = arith.constant 5.000000e-01 : f32
    %55 = vector.broadcast %cst_28 : f32 to vector<8x48xf32>
    %56 = arith.addf %54, %55 : vector<8x48xf32>
    %57 = arith.mulf %50, %32 : vector<8x48xf32>
    %58 = arith.mulf %45, %51 : vector<8x48xf32>
    %59 = arith.addf %57, %58 : vector<8x48xf32>
    %60 = math.tanh %59 : vector<8x48xf32>
    %61 = arith.mulf %56, %60 : vector<8x48xf32>
    %62 = vector.extract_strided_slice %36 {offsets = [0, 512], sizes = [8, 512], strides = [1, 1]} : vector<8x1024xf32> to vector<8x512xf32>
    %63 = arith.addf %62, %9 : vector<8x512xf32>
    %64 = math.tanh %63 : vector<8x512xf32>
    %65 = vector.extract_strided_slice %64 {offsets = [0, 0], sizes = [8, 48], strides = [1, 1]} : vector<8x512xf32> to vector<8x48xf32>
    %cst_29 = arith.constant 5.000000e-01 : f32
    %66 = vector.broadcast %cst_29 : f32 to vector<8x48xf32>
    %67 = arith.mulf %66, %65 : vector<8x48xf32>
    %cst_30 = arith.constant 5.000000e-01 : f32
    %68 = vector.broadcast %cst_30 : f32 to vector<8x48xf32>
    %69 = arith.addf %67, %68 : vector<8x48xf32>
    %70 = vector.extract_strided_slice %64 {offsets = [0, 128], sizes = [8, 48], strides = [1, 1]} : vector<8x512xf32> to vector<8x48xf32>
    %cst_31 = arith.constant 5.000000e-01 : f32
    %71 = vector.broadcast %cst_31 : f32 to vector<8x48xf32>
    %72 = arith.mulf %71, %70 : vector<8x48xf32>
    %cst_32 = arith.constant 5.000000e-01 : f32
    %73 = vector.broadcast %cst_32 : f32 to vector<8x48xf32>
    %74 = arith.addf %72, %73 : vector<8x48xf32>
    %75 = vector.extract_strided_slice %64 {offsets = [0, 256], sizes = [8, 48], strides = [1, 1]} : vector<8x512xf32> to vector<8x48xf32>
    %76 = vector.extract_strided_slice %64 {offsets = [0, 384], sizes = [8, 48], strides = [1, 1]} : vector<8x512xf32> to vector<8x48xf32>
    %cst_33 = arith.constant 5.000000e-01 : f32
    %77 = vector.broadcast %cst_33 : f32 to vector<8x48xf32>
    %78 = arith.mulf %77, %76 : vector<8x48xf32>
    %cst_34 = arith.constant 5.000000e-01 : f32
    %79 = vector.broadcast %cst_34 : f32 to vector<8x48xf32>
    %80 = arith.addf %78, %79 : vector<8x48xf32>
    %81 = arith.mulf %74, %11 : vector<8x48xf32>
    %82 = arith.mulf %69, %75 : vector<8x48xf32>
    %83 = arith.addf %81, %82 : vector<8x48xf32>
    %84 = math.tanh %83 : vector<8x48xf32>
    %85 = arith.mulf %80, %84 : vector<8x48xf32>
    %c0_35 = arith.constant 0 : index
    %c0_36 = arith.constant 0 : index
    %86 = vector.load %arg12[%c0_35, %c0_36] : memref<128x48xf32, #tpu.memory_space<vmem>>, vector<8x48xf32>
    tpu.vector_store %arg12[%c0_35, %c0_36], %85 {strides = array<i32>} : memref<128x48xf32, #tpu.memory_space<vmem>>, vector<8x48xf32>,
    %c0_37 = arith.constant 0 : index
    %c0_38 = arith.constant 0 : index
    %87 = vector.load %arg5[%c0_37, %c0_38] : memref<48x1024xf32, #tpu.memory_space<vmem>>, vector<48x1024xf32>
    %cst_39 = arith.constant dense<0.000000e+00> : vector<8x1024xf32>
    %88 = tpu.matmul %61, %87, %cst_39 {dimension_numbers = #tpu.dot_dimension_numbers<[1], [0], [0], [1], [0, 0, 1, 1], [], []>} : vector<8x48xf32>, vector<48x1024xf32>, vector<8x1024xf32> -> vector<8x1024xf32>
    %c0_40 = arith.constant 0 : index
    %c0_41 = arith.constant 0 : index
    %89 = vector.load %arg6[%c0_40, %c0_41] : memref<48x512xf32, #tpu.memory_space<vmem>>, vector<48x512xf32>
    %cst_42 = arith.constant dense<0.000000e+00> : vector<8x512xf32>
    %90 = tpu.matmul %85, %89, %cst_42 {dimension_numbers = #tpu.dot_dimension_numbers<[1], [0], [0], [1], [0, 0, 1, 1], [], []>} : vector<8x48xf32>, vector<48x512xf32>, vector<8x512xf32> -> vector<8x512xf32>
    %91 = vector.extract_strided_slice %88 {offsets = [0, 0], sizes = [8, 512], strides = [1, 1]} : vector<8x1024xf32> to vector<8x512xf32>
    %c16 = arith.constant 16 : index
    %c0_43 = arith.constant 0 : index
    %92 = vector.load %arg11[%c16, %c0_43] : memref<128x512xf32, #tpu.memory_space<vmem>>, vector<8x512xf32>
    %93 = arith.addf %92, %91 : vector<8x512xf32>
    %94 = math.tanh %93 : vector<8x512xf32>
    %95 = vector.extract_strided_slice %94 {offsets = [0, 0], sizes = [8, 48], strides = [1, 1]} : vector<8x512xf32> to vector<8x48xf32>
    %cst_44 = arith.constant 5.000000e-01 : f32
    %96 = vector.broadcast %cst_44 : f32 to vector<8x48xf32>
    %97 = arith.mulf %96, %95 : vector<8x48xf32>
    %cst_45 = arith.constant 5.000000e-01 : f32
    %98 = vector.broadcast %cst_45 : f32 to vector<8x48xf32>
    %99 = arith.addf %97, %98 : vector<8x48xf32>
    %100 = vector.extract_strided_slice %94 {offsets = [0, 128], sizes = [8, 48], strides = [1, 1]} : vector<8x512xf32> to vector<8x48xf32>
    %cst_46 = arith.constant 5.000000e-01 : f32
    %101 = vector.broadcast %cst_46 : f32 to vector<8x48xf32>
    %102 = arith.mulf %101, %100 : vector<8x48xf32>
    %cst_47 = arith.constant 5.000000e-01 : f32
    %103 = vector.broadcast %cst_47 : f32 to vector<8x48xf32>
    %104 = arith.addf %102, %103 : vector<8x48xf32>
    %105 = vector.extract_strided_slice %94 {offsets = [0, 256], sizes = [8, 48], strides = [1, 1]} : vector<8x512xf32> to vector<8x48xf32>
    %106 = vector.extract_strided_slice %94 {offsets = [0, 384], sizes = [8, 48], strides = [1, 1]} : vector<8x512xf32> to vector<8x48xf32>
    %cst_48 = arith.constant 5.000000e-01 : f32
    %107 = vector.broadcast %cst_48 : f32 to vector<8x48xf32>
    %108 = arith.mulf %107, %106 : vector<8x48xf32>
    %cst_49 = arith.constant 5.000000e-01 : f32
    %109 = vector.broadcast %cst_49 : f32 to vector<8x48xf32>
    %110 = arith.addf %108, %109 : vector<8x48xf32>
    %111 = arith.mulf %104, %59 : vector<8x48xf32>
    %112 = arith.mulf %99, %105 : vector<8x48xf32>
    %113 = arith.addf %111, %112 : vector<8x48xf32>
    %114 = math.tanh %113 : vector<8x48xf32>
    %115 = arith.mulf %110, %114 : vector<8x48xf32>
    %116 = vector.extract_strided_slice %88 {offsets = [0, 512], sizes = [8, 512], strides = [1, 1]} : vector<8x1024xf32> to vector<8x512xf32>
    %117 = arith.addf %116, %9 : vector<8x512xf32>
    %118 = arith.addf %117, %90 : vector<8x512xf32>
    %119 = math.tanh %118 : vector<8x512xf32>
    %120 = vector.extract_strided_slice %119 {offsets = [0, 0], sizes = [8, 48], strides = [1, 1]} : vector<8x512xf32> to vector<8x48xf32>
    %cst_50 = arith.constant 5.000000e-01 : f32
    %121 = vector.broadcast %cst_50 : f32 to vector<8x48xf32>
    %122 = arith.mulf %121, %120 : vector<8x48xf32>
    %cst_51 = arith.constant 5.000000e-01 : f32
    %123 = vector.broadcast %cst_51 : f32 to vector<8x48xf32>
    %124 = arith.addf %122, %123 : vector<8x48xf32>
    %125 = vector.extract_strided_slice %119 {offsets = [0, 128], sizes = [8, 48], strides = [1, 1]} : vector<8x512xf32> to vector<8x48xf32>
    %cst_52 = arith.constant 5.000000e-01 : f32
    %126 = vector.broadcast %cst_52 : f32 to vector<8x48xf32>
    %127 = arith.mulf %126, %125 : vector<8x48xf32>
    %cst_53 = arith.constant 5.000000e-01 : f32
    %128 = vector.broadcast %cst_53 : f32 to vector<8x48xf32>
    %129 = arith.addf %127, %128 : vector<8x48xf32>
    %130 = vector.extract_strided_slice %119 {offsets = [0, 256], sizes = [8, 48], strides = [1, 1]} : vector<8x512xf32> to vector<8x48xf32>
    %131 = vector.extract_strided_slice %119 {offsets = [0, 384], sizes = [8, 48], strides = [1, 1]} : vector<8x512xf32> to vector<8x48xf32>
    %cst_54 = arith.constant 5.000000e-01 : f32
    %132 = vector.broadcast %cst_54 : f32 to vector<8x48xf32>
    %133 = arith.mulf %132, %131 : vector<8x48xf32>
    %cst_55 = arith.constant 5.000000e-01 : f32
    %134 = vector.broadcast %cst_55 : f32 to vector<8x48xf32>
    %135 = arith.addf %133, %134 : vector<8x48xf32>
    %136 = arith.mulf %129, %83 : vector<8x48xf32>
    %137 = arith.mulf %124, %130 : vector<8x48xf32>
    %138 = arith.addf %136, %137 : vector<8x48xf32>
    %139 = math.tanh %138 : vector<8x48xf32>
    %140 = arith.mulf %135, %139 : vector<8x48xf32>
    %c8_56 = arith.constant 8 : index
    %c0_57 = arith.constant 0 : index
    %141 = vector.load %arg12[%c8_56, %c0_57] : memref<128x48xf32, #tpu.memory_space<vmem>>, vector<8x48xf32>
    tpu.vector_store %arg12[%c8_56, %c0_57], %140 {strides = array<i32>} : memref<128x48xf32, #tpu.memory_space<vmem>>, vector<8x48xf32>,
    %c0_58 = arith.constant 0 : index
    %c0_59 = arith.constant 0 : index
    %142 = vector.load %arg5[%c0_58, %c0_59] : memref<48x1024xf32, #tpu.memory_space<vmem>>, vector<48x1024xf32>
    %cst_60 = arith.constant dense<0.000000e+00> : vector<8x1024xf32>
    %143 = tpu.matmul %115, %142, %cst_60 {dimension_numbers = #tpu.dot_dimension_numbers<[1], [0], [0], [1], [0, 0, 1, 1], [], []>} : vector<8x48xf32>, vector<48x1024xf32>, vector<8x1024xf32> -> vector<8x1024xf32>
    %c0_61 = arith.constant 0 : index
    %c0_62 = arith.constant 0 : index
    %144 = vector.load %arg6[%c0_61, %c0_62] : memref<48x512xf32, #tpu.memory_space<vmem>>, vector<48x512xf32>
    %cst_63 = arith.constant dense<0.000000e+00> : vector<8x512xf32>
    %145 = tpu.matmul %140, %144, %cst_63 {dimension_numbers = #tpu.dot_dimension_numbers<[1], [0], [0], [1], [0, 0, 1, 1], [], []>} : vector<8x48xf32>, vector<48x512xf32>, vector<8x512xf32> -> vector<8x512xf32>
    %146 = vector.extract_strided_slice %143 {offsets = [0, 0], sizes = [8, 512], strides = [1, 1]} : vector<8x1024xf32> to vector<8x512xf32>
    %c24 = arith.constant 24 : index
    %c0_64 = arith.constant 0 : index
    %147 = vector.load %arg11[%c24, %c0_64] : memref<128x512xf32, #tpu.memory_space<vmem>>, vector<8x512xf32>
    %148 = arith.addf %147, %146 : vector<8x512xf32>
    %149 = math.tanh %148 : vector<8x512xf32>
    %150 = vector.extract_strided_slice %149 {offsets = [0, 0], sizes = [8, 48], strides = [1, 1]} : vector<8x512xf32> to vector<8x48xf32>
    %cst_65 = arith.constant 5.000000e-01 : f32
    %151 = vector.broadcast %cst_65 : f32 to vector<8x48xf32>
    %152 = arith.mulf %151, %150 : vector<8x48xf32>
    %cst_66 = arith.constant 5.000000e-01 : f32
    %153 = vector.broadcast %cst_66 : f32 to vector<8x48xf32>
    %154 = arith.addf %152, %153 : vector<8x48xf32>
    %155 = vector.extract_strided_slice %149 {offsets = [0, 128], sizes = [8, 48], strides = [1, 1]} : vector<8x512xf32> to vector<8x48xf32>
    %cst_67 = arith.constant 5.000000e-01 : f32
    %156 = vector.broadcast %cst_67 : f32 to vector<8x48xf32>
    %157 = arith.mulf %156, %155 : vector<8x48xf32>
    %cst_68 = arith.constant 5.000000e-01 : f32
    %158 = vector.broadcast %cst_68 : f32 to vector<8x48xf32>
    %159 = arith.addf %157, %158 : vector<8x48xf32>
    %160 = vector.extract_strided_slice %149 {offsets = [0, 256], sizes = [8, 48], strides = [1, 1]} : vector<8x512xf32> to vector<8x48xf32>
    %161 = vector.extract_strided_slice %149 {offsets = [0, 384], sizes = [8, 48], strides = [1, 1]} : vector<8x512xf32> to vector<8x48xf32>
    %cst_69 = arith.constant 5.000000e-01 : f32
    %162 = vector.broadcast %cst_69 : f32 to vector<8x48xf32>
    %163 = arith.mulf %162, %161 : vector<8x48xf32>
    %cst_70 = arith.constant 5.000000e-01 : f32
    %164 = vector.broadcast %cst_70 : f32 to vector<8x48xf32>
    %165 = arith.addf %163, %164 : vector<8x48xf32>
    %166 = arith.mulf %159, %113 : vector<8x48xf32>
    %167 = arith.mulf %154, %160 : vector<8x48xf32>
    %168 = arith.addf %166, %167 : vector<8x48xf32>
    %169 = math.tanh %168 : vector<8x48xf32>
    %170 = arith.mulf %165, %169 : vector<8x48xf32>
    %171 = vector.extract_strided_slice %143 {offsets = [0, 512], sizes = [8, 512], strides = [1, 1]} : vector<8x1024xf32> to vector<8x512xf32>
    %172 = arith.addf %171, %9 : vector<8x512xf32>
    %173 = arith.addf %172, %145 : vector<8x512xf32>
    %174 = math.tanh %173 : vector<8x512xf32>
    %175 = vector.extract_strided_slice %174 {offsets = [0, 0], sizes = [8, 48], strides = [1, 1]} : vector<8x512xf32> to vector<8x48xf32>
    %cst_71 = arith.constant 5.000000e-01 : f32
    %176 = vector.broadcast %cst_71 : f32 to vector<8x48xf32>
    %177 = arith.mulf %176, %175 : vector<8x48xf32>
    %cst_72 = arith.constant 5.000000e-01 : f32
    %178 = vector.broadcast %cst_72 : f32 to vector<8x48xf32>
    %179 = arith.addf %177, %178 : vector<8x48xf32>
    %180 = vector.extract_strided_slice %174 {offsets = [0, 128], sizes = [8, 48], strides = [1, 1]} : vector<8x512xf32> to vector<8x48xf32>
    %cst_73 = arith.constant 5.000000e-01 : f32
    %181 = vector.broadcast %cst_73 : f32 to vector<8x48xf32>
    %182 = arith.mulf %181, %180 : vector<8x48xf32>
    %cst_74 = arith.constant 5.000000e-01 : f32
    %183 = vector.broadcast %cst_74 : f32 to vector<8x48xf32>
    %184 = arith.addf %182, %183 : vector<8x48xf32>
    %185 = vector.extract_strided_slice %174 {offsets = [0, 256], sizes = [8, 48], strides = [1, 1]} : vector<8x512xf32> to vector<8x48xf32>
    %186 = vector.extract_strided_slice %174 {offsets = [0, 384], sizes = [8, 48], strides = [1, 1]} : vector<8x512xf32> to vector<8x48xf32>
    %cst_75 = arith.constant 5.000000e-01 : f32
    %187 = vector.broadcast %cst_75 : f32 to vector<8x48xf32>
    %188 = arith.mulf %187, %186 : vector<8x48xf32>
    %cst_76 = arith.constant 5.000000e-01 : f32
    %189 = vector.broadcast %cst_76 : f32 to vector<8x48xf32>
    %190 = arith.addf %188, %189 : vector<8x48xf32>
    %191 = arith.mulf %184, %138 : vector<8x48xf32>
    %192 = arith.mulf %179, %185 : vector<8x48xf32>
    %193 = arith.addf %191, %192 : vector<8x48xf32>
    %194 = math.tanh %193 : vector<8x48xf32>
    %195 = arith.mulf %190, %194 : vector<8x48xf32>
    %c16_77 = arith.constant 16 : index
    %c0_78 = arith.constant 0 : index
    %196 = vector.load %arg12[%c16_77, %c0_78] : memref<128x48xf32, #tpu.memory_space<vmem>>, vector<8x48xf32>
    tpu.vector_store %arg12[%c16_77, %c0_78], %195 {strides = array<i32>} : memref<128x48xf32, #tpu.memory_space<vmem>>, vector<8x48xf32>,
    %c0_79 = arith.constant 0 : index
    %c0_80 = arith.constant 0 : index
    %197 = vector.load %arg5[%c0_79, %c0_80] : memref<48x1024xf32, #tpu.memory_space<vmem>>, vector<48x1024xf32>
    %cst_81 = arith.constant dense<0.000000e+00> : vector<8x1024xf32>
    %198 = tpu.matmul %170, %197, %cst_81 {dimension_numbers = #tpu.dot_dimension_numbers<[1], [0], [0], [1], [0, 0, 1, 1], [], []>} : vector<8x48xf32>, vector<48x1024xf32>, vector<8x1024xf32> -> vector<8x1024xf32>
    %c0_82 = arith.constant 0 : index
    %c0_83 = arith.constant 0 : index
    %199 = vector.load %arg6[%c0_82, %c0_83] : memref<48x512xf32, #tpu.memory_space<vmem>>, vector<48x512xf32>
    %cst_84 = arith.constant dense<0.000000e+00> : vector<8x512xf32>
    %200 = tpu.matmul %195, %199, %cst_84 {dimension_numbers = #tpu.dot_dimension_numbers<[1], [0], [0], [1], [0, 0, 1, 1], [], []>} : vector<8x48xf32>, vector<48x512xf32>, vector<8x512xf32> -> vector<8x512xf32>
    %201 = vector.extract_strided_slice %198 {offsets = [0, 0], sizes = [8, 512], strides = [1, 1]} : vector<8x1024xf32> to vector<8x512xf32>
    %c32 = arith.constant 32 : index
    %c0_85 = arith.constant 0 : index
    %202 = vector.load %arg11[%c32, %c0_85] : memref<128x512xf32, #tpu.memory_space<vmem>>, vector<8x512xf32>
    %203 = arith.addf %202, %201 : vector<8x512xf32>
    %204 = math.tanh %203 : vector<8x512xf32>
    %205 = vector.extract_strided_slice %204 {offsets = [0, 0], sizes = [8, 48], strides = [1, 1]} : vector<8x512xf32> to vector<8x48xf32>
    %cst_86 = arith.constant 5.000000e-01 : f32
    %206 = vector.broadcast %cst_86 : f32 to vector<8x48xf32>
    %207 = arith.mulf %206, %205 : vector<8x48xf32>
    %cst_87 = arith.constant 5.000000e-01 : f32
    %208 = vector.broadcast %cst_87 : f32 to vector<8x48xf32>
    %209 = arith.addf %207, %208 : vector<8x48xf32>
    %210 = vector.extract_strided_slice %204 {offsets = [0, 128], sizes = [8, 48], strides = [1, 1]} : vector<8x512xf32> to vector<8x48xf32>
    %cst_88 = arith.constant 5.000000e-01 : f32
    %211 = vector.broadcast %cst_88 : f32 to vector<8x48xf32>
    %212 = arith.mulf %211, %210 : vector<8x48xf32>
    %cst_89 = arith.constant 5.000000e-01 : f32
    %213 = vector.broadcast %cst_89 : f32 to vector<8x48xf32>
    %214 = arith.addf %212, %213 : vector<8x48xf32>
    %215 = vector.extract_strided_slice %204 {offsets = [0, 256], sizes = [8, 48], strides = [1, 1]} : vector<8x512xf32> to vector<8x48xf32>
    %216 = vector.extract_strided_slice %204 {offsets = [0, 384], sizes = [8, 48], strides = [1, 1]} : vector<8x512xf32> to vector<8x48xf32>
    %cst_90 = arith.constant 5.000000e-01 : f32
    %217 = vector.broadcast %cst_90 : f32 to vector<8x48xf32>
    %218 = arith.mulf %217, %216 : vector<8x48xf32>
    %cst_91 = arith.constant 5.000000e-01 : f32
    %219 = vector.broadcast %cst_91 : f32 to vector<8x48xf32>
    %220 = arith.addf %218, %219 : vector<8x48xf32>
    %221 = arith.mulf %214, %168 : vector<8x48xf32>
    %222 = arith.mulf %209, %215 : vector<8x48xf32>
    %223 = arith.addf %221, %222 : vector<8x48xf32>
    %224 = math.tanh %223 : vector<8x48xf32>
    %225 = arith.mulf %220, %224 : vector<8x48xf32>
    %226 = vector.extract_strided_slice %198 {offsets = [0, 512], sizes = [8, 512], strides = [1, 1]} : vector<8x1024xf32> to vector<8x512xf32>
    %227 = arith.addf %226, %9 : vector<8x512xf32>
    %228 = arith.addf %227, %200 : vector<8x512xf32>
    %229 = math.tanh %228 : vector<8x512xf32>
    %230 = vector.extract_strided_slice %229 {offsets = [0, 0], sizes = [8, 48], strides = [1, 1]} : vector<8x512xf32> to vector<8x48xf32>
    %cst_92 = arith.constant 5.000000e-01 : f32
    %231 = vector.broadcast %cst_92 : f32 to vector<8x48xf32>
    %232 = arith.mulf %231, %230 : vector<8x48xf32>
    %cst_93 = arith.constant 5.000000e-01 : f32
    %233 = vector.broadcast %cst_93 : f32 to vector<8x48xf32>
    %234 = arith.addf %232, %233 : vector<8x48xf32>
    %235 = vector.extract_strided_slice %229 {offsets = [0, 128], sizes = [8, 48], strides = [1, 1]} : vector<8x512xf32> to vector<8x48xf32>
    %cst_94 = arith.constant 5.000000e-01 : f32
    %236 = vector.broadcast %cst_94 : f32 to vector<8x48xf32>
    %237 = arith.mulf %236, %235 : vector<8x48xf32>
    %cst_95 = arith.constant 5.000000e-01 : f32
    %238 = vector.broadcast %cst_95 : f32 to vector<8x48xf32>
    %239 = arith.addf %237, %238 : vector<8x48xf32>
    %240 = vector.extract_strided_slice %229 {offsets = [0, 256], sizes = [8, 48], strides = [1, 1]} : vector<8x512xf32> to vector<8x48xf32>
    %241 = vector.extract_strided_slice %229 {offsets = [0, 384], sizes = [8, 48], strides = [1, 1]} : vector<8x512xf32> to vector<8x48xf32>
    %cst_96 = arith.constant 5.000000e-01 : f32
    %242 = vector.broadcast %cst_96 : f32 to vector<8x48xf32>
    %243 = arith.mulf %242, %241 : vector<8x48xf32>
    %cst_97 = arith.constant 5.000000e-01 : f32
    %244 = vector.broadcast %cst_97 : f32 to vector<8x48xf32>
    %245 = arith.addf %243, %244 : vector<8x48xf32>
    %246 = arith.mulf %239, %193 : vector<8x48xf32>
    %247 = arith.mulf %234, %240 : vector<8x48xf32>
    %248 = arith.addf %246, %247 : vector<8x48xf32>
    %249 = math.tanh %248 : vector<8x48xf32>
    %250 = arith.mulf %245, %249 : vector<8x48xf32>
    %c24_98 = arith.constant 24 : index
    %c0_99 = arith.constant 0 : index
    %251 = vector.load %arg12[%c24_98, %c0_99] : memref<128x48xf32, #tpu.memory_space<vmem>>, vector<8x48xf32>
    tpu.vector_store %arg12[%c24_98, %c0_99], %250 {strides = array<i32>} : memref<128x48xf32, #tpu.memory_space<vmem>>, vector<8x48xf32>,
    %c0_100 = arith.constant 0 : index
    %c0_101 = arith.constant 0 : index
    %252 = vector.load %arg5[%c0_100, %c0_101] : memref<48x1024xf32, #tpu.memory_space<vmem>>, vector<48x1024xf32>
    %cst_102 = arith.constant dense<0.000000e+00> : vector<8x1024xf32>
    %253 = tpu.matmul %225, %252, %cst_102 {dimension_numbers = #tpu.dot_dimension_numbers<[1], [0], [0], [1], [0, 0, 1, 1], [], []>} : vector<8x48xf32>, vector<48x1024xf32>, vector<8x1024xf32> -> vector<8x1024xf32>
    %c0_103 = arith.constant 0 : index
    %c0_104 = arith.constant 0 : index
    %254 = vector.load %arg6[%c0_103, %c0_104] : memref<48x512xf32, #tpu.memory_space<vmem>>, vector<48x512xf32>
    %cst_105 = arith.constant dense<0.000000e+00> : vector<8x512xf32>
    %255 = tpu.matmul %250, %254, %cst_105 {dimension_numbers = #tpu.dot_dimension_numbers<[1], [0], [0], [1], [0, 0, 1, 1], [], []>} : vector<8x48xf32>, vector<48x512xf32>, vector<8x512xf32> -> vector<8x512xf32>
    %256 = vector.extract_strided_slice %253 {offsets = [0, 0], sizes = [8, 512], strides = [1, 1]} : vector<8x1024xf32> to vector<8x512xf32>
    %c40 = arith.constant 40 : index
    %c0_106 = arith.constant 0 : index
    %257 = vector.load %arg11[%c40, %c0_106] : memref<128x512xf32, #tpu.memory_space<vmem>>, vector<8x512xf32>
    %258 = arith.addf %257, %256 : vector<8x512xf32>
    %259 = math.tanh %258 : vector<8x512xf32>
    %260 = vector.extract_strided_slice %259 {offsets = [0, 0], sizes = [8, 48], strides = [1, 1]} : vector<8x512xf32> to vector<8x48xf32>
    %cst_107 = arith.constant 5.000000e-01 : f32
    %261 = vector.broadcast %cst_107 : f32 to vector<8x48xf32>
    %262 = arith.mulf %261, %260 : vector<8x48xf32>
    %cst_108 = arith.constant 5.000000e-01 : f32
    %263 = vector.broadcast %cst_108 : f32 to vector<8x48xf32>
    %264 = arith.addf %262, %263 : vector<8x48xf32>
    %265 = vector.extract_strided_slice %259 {offsets = [0, 128], sizes = [8, 48], strides = [1, 1]} : vector<8x512xf32> to vector<8x48xf32>
    %cst_109 = arith.constant 5.000000e-01 : f32
    %266 = vector.broadcast %cst_109 : f32 to vector<8x48xf32>
    %267 = arith.mulf %266, %265 : vector<8x48xf32>
    %cst_110 = arith.constant 5.000000e-01 : f32
    %268 = vector.broadcast %cst_110 : f32 to vector<8x48xf32>
    %269 = arith.addf %267, %268 : vector<8x48xf32>
    %270 = vector.extract_strided_slice %259 {offsets = [0, 256], sizes = [8, 48], strides = [1, 1]} : vector<8x512xf32> to vector<8x48xf32>
    %271 = vector.extract_strided_slice %259 {offsets = [0, 384], sizes = [8, 48], strides = [1, 1]} : vector<8x512xf32> to vector<8x48xf32>
    %cst_111 = arith.constant 5.000000e-01 : f32
    %272 = vector.broadcast %cst_111 : f32 to vector<8x48xf32>
    %273 = arith.mulf %272, %271 : vector<8x48xf32>
    %cst_112 = arith.constant 5.000000e-01 : f32
    %274 = vector.broadcast %cst_112 : f32 to vector<8x48xf32>
    %275 = arith.addf %273, %274 : vector<8x48xf32>
    %276 = arith.mulf %269, %223 : vector<8x48xf32>
    %277 = arith.mulf %264, %270 : vector<8x48xf32>
    %278 = arith.addf %276, %277 : vector<8x48xf32>
    %279 = math.tanh %278 : vector<8x48xf32>
    %280 = arith.mulf %275, %279 : vector<8x48xf32>
    %281 = vector.extract_strided_slice %253 {offsets = [0, 512], sizes = [8, 512], strides = [1, 1]} : vector<8x1024xf32> to vector<8x512xf32>
    %282 = arith.addf %281, %9 : vector<8x512xf32>
    %283 = arith.addf %282, %255 : vector<8x512xf32>
    %284 = math.tanh %283 : vector<8x512xf32>
    %285 = vector.extract_strided_slice %284 {offsets = [0, 0], sizes = [8, 48], strides = [1, 1]} : vector<8x512xf32> to vector<8x48xf32>
    %cst_113 = arith.constant 5.000000e-01 : f32
    %286 = vector.broadcast %cst_113 : f32 to vector<8x48xf32>
    %287 = arith.mulf %286, %285 : vector<8x48xf32>
    %cst_114 = arith.constant 5.000000e-01 : f32
    %288 = vector.broadcast %cst_114 : f32 to vector<8x48xf32>
    %289 = arith.addf %287, %288 : vector<8x48xf32>
    %290 = vector.extract_strided_slice %284 {offsets = [0, 128], sizes = [8, 48], strides = [1, 1]} : vector<8x512xf32> to vector<8x48xf32>
    %cst_115 = arith.constant 5.000000e-01 : f32
    %291 = vector.broadcast %cst_115 : f32 to vector<8x48xf32>
    %292 = arith.mulf %291, %290 : vector<8x48xf32>
    %cst_116 = arith.constant 5.000000e-01 : f32
    %293 = vector.broadcast %cst_116 : f32 to vector<8x48xf32>
    %294 = arith.addf %292, %293 : vector<8x48xf32>
    %295 = vector.extract_strided_slice %284 {offsets = [0, 256], sizes = [8, 48], strides = [1, 1]} : vector<8x512xf32> to vector<8x48xf32>
    %296 = vector.extract_strided_slice %284 {offsets = [0, 384], sizes = [8, 48], strides = [1, 1]} : vector<8x512xf32> to vector<8x48xf32>
    %cst_117 = arith.constant 5.000000e-01 : f32
    %297 = vector.broadcast %cst_117 : f32 to vector<8x48xf32>
    %298 = arith.mulf %297, %296 : vector<8x48xf32>
    %cst_118 = arith.constant 5.000000e-01 : f32
    %299 = vector.broadcast %cst_118 : f32 to vector<8x48xf32>
    %300 = arith.addf %298, %299 : vector<8x48xf32>
    %301 = arith.mulf %294, %248 : vector<8x48xf32>
    %302 = arith.mulf %289, %295 : vector<8x48xf32>
    %303 = arith.addf %301, %302 : vector<8x48xf32>
    %304 = math.tanh %303 : vector<8x48xf32>
    %305 = arith.mulf %300, %304 : vector<8x48xf32>
    %c32_119 = arith.constant 32 : index
    %c0_120 = arith.constant 0 : index
    %306 = vector.load %arg12[%c32_119, %c0_120] : memref<128x48xf32, #tpu.memory_space<vmem>>, vector<8x48xf32>
    tpu.vector_store %arg12[%c32_119, %c0_120], %305 {strides = array<i32>} : memref<128x48xf32, #tpu.memory_space<vmem>>, vector<8x48xf32>,
    %c0_121 = arith.constant 0 : index
    %c0_122 = arith.constant 0 : index
    %307 = vector.load %arg5[%c0_121, %c0_122] : memref<48x1024xf32, #tpu.memory_space<vmem>>, vector<48x1024xf32>
    %cst_123 = arith.constant dense<0.000000e+00> : vector<8x1024xf32>
    %308 = tpu.matmul %280, %307, %cst_123 {dimension_numbers = #tpu.dot_dimension_numbers<[1], [0], [0], [1], [0, 0, 1, 1], [], []>} : vector<8x48xf32>, vector<48x1024xf32>, vector<8x1024xf32> -> vector<8x1024xf32>
    %c0_124 = arith.constant 0 : index
    %c0_125 = arith.constant 0 : index
    %309 = vector.load %arg6[%c0_124, %c0_125] : memref<48x512xf32, #tpu.memory_space<vmem>>, vector<48x512xf32>
    %cst_126 = arith.constant dense<0.000000e+00> : vector<8x512xf32>
    %310 = tpu.matmul %305, %309, %cst_126 {dimension_numbers = #tpu.dot_dimension_numbers<[1], [0], [0], [1], [0, 0, 1, 1], [], []>} : vector<8x48xf32>, vector<48x512xf32>, vector<8x512xf32> -> vector<8x512xf32>
    %311 = vector.extract_strided_slice %308 {offsets = [0, 0], sizes = [8, 512], strides = [1, 1]} : vector<8x1024xf32> to vector<8x512xf32>
    %c48 = arith.constant 48 : index
    %c0_127 = arith.constant 0 : index
    %312 = vector.load %arg11[%c48, %c0_127] : memref<128x512xf32, #tpu.memory_space<vmem>>, vector<8x512xf32>
    %313 = arith.addf %312, %311 : vector<8x512xf32>
    %314 = math.tanh %313 : vector<8x512xf32>
    %315 = vector.extract_strided_slice %314 {offsets = [0, 0], sizes = [8, 48], strides = [1, 1]} : vector<8x512xf32> to vector<8x48xf32>
    %cst_128 = arith.constant 5.000000e-01 : f32
    %316 = vector.broadcast %cst_128 : f32 to vector<8x48xf32>
    %317 = arith.mulf %316, %315 : vector<8x48xf32>
    %cst_129 = arith.constant 5.000000e-01 : f32
    %318 = vector.broadcast %cst_129 : f32 to vector<8x48xf32>
    %319 = arith.addf %317, %318 : vector<8x48xf32>
    %320 = vector.extract_strided_slice %314 {offsets = [0, 128], sizes = [8, 48], strides = [1, 1]} : vector<8x512xf32> to vector<8x48xf32>
    %cst_130 = arith.constant 5.000000e-01 : f32
    %321 = vector.broadcast %cst_130 : f32 to vector<8x48xf32>
    %322 = arith.mulf %321, %320 : vector<8x48xf32>
    %cst_131 = arith.constant 5.000000e-01 : f32
    %323 = vector.broadcast %cst_131 : f32 to vector<8x48xf32>
    %324 = arith.addf %322, %323 : vector<8x48xf32>
    %325 = vector.extract_strided_slice %314 {offsets = [0, 256], sizes = [8, 48], strides = [1, 1]} : vector<8x512xf32> to vector<8x48xf32>
    %326 = vector.extract_strided_slice %314 {offsets = [0, 384], sizes = [8, 48], strides = [1, 1]} : vector<8x512xf32> to vector<8x48xf32>
    %cst_132 = arith.constant 5.000000e-01 : f32
    %327 = vector.broadcast %cst_132 : f32 to vector<8x48xf32>
    %328 = arith.mulf %327, %326 : vector<8x48xf32>
    %cst_133 = arith.constant 5.000000e-01 : f32
    %329 = vector.broadcast %cst_133 : f32 to vector<8x48xf32>
    %330 = arith.addf %328, %329 : vector<8x48xf32>
    %331 = arith.mulf %324, %278 : vector<8x48xf32>
    %332 = arith.mulf %319, %325 : vector<8x48xf32>
    %333 = arith.addf %331, %332 : vector<8x48xf32>
    %334 = math.tanh %333 : vector<8x48xf32>
    %335 = arith.mulf %330, %334 : vector<8x48xf32>
    %336 = vector.extract_strided_slice %308 {offsets = [0, 512], sizes = [8, 512], strides = [1, 1]} : vector<8x1024xf32> to vector<8x512xf32>
    %337 = arith.addf %336, %9 : vector<8x512xf32>
    %338 = arith.addf %337, %310 : vector<8x512xf32>
    %339 = math.tanh %338 : vector<8x512xf32>
    %340 = vector.extract_strided_slice %339 {offsets = [0, 0], sizes = [8, 48], strides = [1, 1]} : vector<8x512xf32> to vector<8x48xf32>
    %cst_134 = arith.constant 5.000000e-01 : f32
    %341 = vector.broadcast %cst_134 : f32 to vector<8x48xf32>
    %342 = arith.mulf %341, %340 : vector<8x48xf32>
    %cst_135 = arith.constant 5.000000e-01 : f32
    %343 = vector.broadcast %cst_135 : f32 to vector<8x48xf32>
    %344 = arith.addf %342, %343 : vector<8x48xf32>
    %345 = vector.extract_strided_slice %339 {offsets = [0, 128], sizes = [8, 48], strides = [1, 1]} : vector<8x512xf32> to vector<8x48xf32>
    %cst_136 = arith.constant 5.000000e-01 : f32
    %346 = vector.broadcast %cst_136 : f32 to vector<8x48xf32>
    %347 = arith.mulf %346, %345 : vector<8x48xf32>
    %cst_137 = arith.constant 5.000000e-01 : f32
    %348 = vector.broadcast %cst_137 : f32 to vector<8x48xf32>
    %349 = arith.addf %347, %348 : vector<8x48xf32>
    %350 = vector.extract_strided_slice %339 {offsets = [0, 256], sizes = [8, 48], strides = [1, 1]} : vector<8x512xf32> to vector<8x48xf32>
    %351 = vector.extract_strided_slice %339 {offsets = [0, 384], sizes = [8, 48], strides = [1, 1]} : vector<8x512xf32> to vector<8x48xf32>
    %cst_138 = arith.constant 5.000000e-01 : f32
    %352 = vector.broadcast %cst_138 : f32 to vector<8x48xf32>
    %353 = arith.mulf %352, %351 : vector<8x48xf32>
    %cst_139 = arith.constant 5.000000e-01 : f32
    %354 = vector.broadcast %cst_139 : f32 to vector<8x48xf32>
    %355 = arith.addf %353, %354 : vector<8x48xf32>
    %356 = arith.mulf %349, %303 : vector<8x48xf32>
    %357 = arith.mulf %344, %350 : vector<8x48xf32>
    %358 = arith.addf %356, %357 : vector<8x48xf32>
    %359 = math.tanh %358 : vector<8x48xf32>
    %360 = arith.mulf %355, %359 : vector<8x48xf32>
    %c40_140 = arith.constant 40 : index
    %c0_141 = arith.constant 0 : index
    %361 = vector.load %arg12[%c40_140, %c0_141] : memref<128x48xf32, #tpu.memory_space<vmem>>, vector<8x48xf32>
    tpu.vector_store %arg12[%c40_140, %c0_141], %360 {strides = array<i32>} : memref<128x48xf32, #tpu.memory_space<vmem>>, vector<8x48xf32>,
    %c0_142 = arith.constant 0 : index
    %c0_143 = arith.constant 0 : index
    %362 = vector.load %arg5[%c0_142, %c0_143] : memref<48x1024xf32, #tpu.memory_space<vmem>>, vector<48x1024xf32>
    %cst_144 = arith.constant dense<0.000000e+00> : vector<8x1024xf32>
    %363 = tpu.matmul %335, %362, %cst_144 {dimension_numbers = #tpu.dot_dimension_numbers<[1], [0], [0], [1], [0, 0, 1, 1], [], []>} : vector<8x48xf32>, vector<48x1024xf32>, vector<8x1024xf32> -> vector<8x1024xf32>
    %c0_145 = arith.constant 0 : index
    %c0_146 = arith.constant 0 : index
    %364 = vector.load %arg6[%c0_145, %c0_146] : memref<48x512xf32, #tpu.memory_space<vmem>>, vector<48x512xf32>
    %cst_147 = arith.constant dense<0.000000e+00> : vector<8x512xf32>
    %365 = tpu.matmul %360, %364, %cst_147 {dimension_numbers = #tpu.dot_dimension_numbers<[1], [0], [0], [1], [0, 0, 1, 1], [], []>} : vector<8x48xf32>, vector<48x512xf32>, vector<8x512xf32> -> vector<8x512xf32>
    %366 = vector.extract_strided_slice %363 {offsets = [0, 0], sizes = [8, 512], strides = [1, 1]} : vector<8x1024xf32> to vector<8x512xf32>
    %c56 = arith.constant 56 : index
    %c0_148 = arith.constant 0 : index
    %367 = vector.load %arg11[%c56, %c0_148] : memref<128x512xf32, #tpu.memory_space<vmem>>, vector<8x512xf32>
    %368 = arith.addf %367, %366 : vector<8x512xf32>
    %369 = math.tanh %368 : vector<8x512xf32>
    %370 = vector.extract_strided_slice %369 {offsets = [0, 0], sizes = [8, 48], strides = [1, 1]} : vector<8x512xf32> to vector<8x48xf32>
    %cst_149 = arith.constant 5.000000e-01 : f32
    %371 = vector.broadcast %cst_149 : f32 to vector<8x48xf32>
    %372 = arith.mulf %371, %370 : vector<8x48xf32>
    %cst_150 = arith.constant 5.000000e-01 : f32
    %373 = vector.broadcast %cst_150 : f32 to vector<8x48xf32>
    %374 = arith.addf %372, %373 : vector<8x48xf32>
    %375 = vector.extract_strided_slice %369 {offsets = [0, 128], sizes = [8, 48], strides = [1, 1]} : vector<8x512xf32> to vector<8x48xf32>
    %cst_151 = arith.constant 5.000000e-01 : f32
    %376 = vector.broadcast %cst_151 : f32 to vector<8x48xf32>
    %377 = arith.mulf %376, %375 : vector<8x48xf32>
    %cst_152 = arith.constant 5.000000e-01 : f32
    %378 = vector.broadcast %cst_152 : f32 to vector<8x48xf32>
    %379 = arith.addf %377, %378 : vector<8x48xf32>
    %380 = vector.extract_strided_slice %369 {offsets = [0, 256], sizes = [8, 48], strides = [1, 1]} : vector<8x512xf32> to vector<8x48xf32>
    %381 = vector.extract_strided_slice %369 {offsets = [0, 384], sizes = [8, 48], strides = [1, 1]} : vector<8x512xf32> to vector<8x48xf32>
    %cst_153 = arith.constant 5.000000e-01 : f32
    %382 = vector.broadcast %cst_153 : f32 to vector<8x48xf32>
    %383 = arith.mulf %382, %381 : vector<8x48xf32>
    %cst_154 = arith.constant 5.000000e-01 : f32
    %384 = vector.broadcast %cst_154 : f32 to vector<8x48xf32>
    %385 = arith.addf %383, %384 : vector<8x48xf32>
    %386 = arith.mulf %379, %333 : vector<8x48xf32>
    %387 = arith.mulf %374, %380 : vector<8x48xf32>
    %388 = arith.addf %386, %387 : vector<8x48xf32>
    %389 = math.tanh %388 : vector<8x48xf32>
    %390 = arith.mulf %385, %389 : vector<8x48xf32>
    %391 = vector.extract_strided_slice %363 {offsets = [0, 512], sizes = [8, 512], strides = [1, 1]} : vector<8x1024xf32> to vector<8x512xf32>
    %392 = arith.addf %391, %9 : vector<8x512xf32>
    %393 = arith.addf %392, %365 : vector<8x512xf32>
    %394 = math.tanh %393 : vector<8x512xf32>
    %395 = vector.extract_strided_slice %394 {offsets = [0, 0], sizes = [8, 48], strides = [1, 1]} : vector<8x512xf32> to vector<8x48xf32>
    %cst_155 = arith.constant 5.000000e-01 : f32
    %396 = vector.broadcast %cst_155 : f32 to vector<8x48xf32>
    %397 = arith.mulf %396, %395 : vector<8x48xf32>
    %cst_156 = arith.constant 5.000000e-01 : f32
    %398 = vector.broadcast %cst_156 : f32 to vector<8x48xf32>
    %399 = arith.addf %397, %398 : vector<8x48xf32>
    %400 = vector.extract_strided_slice %394 {offsets = [0, 128], sizes = [8, 48], strides = [1, 1]} : vector<8x512xf32> to vector<8x48xf32>
    %cst_157 = arith.constant 5.000000e-01 : f32
    %401 = vector.broadcast %cst_157 : f32 to vector<8x48xf32>
    %402 = arith.mulf %401, %400 : vector<8x48xf32>
    %cst_158 = arith.constant 5.000000e-01 : f32
    %403 = vector.broadcast %cst_158 : f32 to vector<8x48xf32>
    %404 = arith.addf %402, %403 : vector<8x48xf32>
    %405 = vector.extract_strided_slice %394 {offsets = [0, 256], sizes = [8, 48], strides = [1, 1]} : vector<8x512xf32> to vector<8x48xf32>
    %406 = vector.extract_strided_slice %394 {offsets = [0, 384], sizes = [8, 48], strides = [1, 1]} : vector<8x512xf32> to vector<8x48xf32>
    %cst_159 = arith.constant 5.000000e-01 : f32
    %407 = vector.broadcast %cst_159 : f32 to vector<8x48xf32>
    %408 = arith.mulf %407, %406 : vector<8x48xf32>
    %cst_160 = arith.constant 5.000000e-01 : f32
    %409 = vector.broadcast %cst_160 : f32 to vector<8x48xf32>
    %410 = arith.addf %408, %409 : vector<8x48xf32>
    %411 = arith.mulf %404, %358 : vector<8x48xf32>
    %412 = arith.mulf %399, %405 : vector<8x48xf32>
    %413 = arith.addf %411, %412 : vector<8x48xf32>
    %414 = math.tanh %413 : vector<8x48xf32>
    %415 = arith.mulf %410, %414 : vector<8x48xf32>
    %c48_161 = arith.constant 48 : index
    %c0_162 = arith.constant 0 : index
    %416 = vector.load %arg12[%c48_161, %c0_162] : memref<128x48xf32, #tpu.memory_space<vmem>>, vector<8x48xf32>
    tpu.vector_store %arg12[%c48_161, %c0_162], %415 {strides = array<i32>} : memref<128x48xf32, #tpu.memory_space<vmem>>, vector<8x48xf32>,
    %c0_163 = arith.constant 0 : index
    %c0_164 = arith.constant 0 : index
    %417 = vector.load %arg5[%c0_163, %c0_164] : memref<48x1024xf32, #tpu.memory_space<vmem>>, vector<48x1024xf32>
    %cst_165 = arith.constant dense<0.000000e+00> : vector<8x1024xf32>
    %418 = tpu.matmul %390, %417, %cst_165 {dimension_numbers = #tpu.dot_dimension_numbers<[1], [0], [0], [1], [0, 0, 1, 1], [], []>} : vector<8x48xf32>, vector<48x1024xf32>, vector<8x1024xf32> -> vector<8x1024xf32>
    %c0_166 = arith.constant 0 : index
    %c0_167 = arith.constant 0 : index
    %419 = vector.load %arg6[%c0_166, %c0_167] : memref<48x512xf32, #tpu.memory_space<vmem>>, vector<48x512xf32>
    %cst_168 = arith.constant dense<0.000000e+00> : vector<8x512xf32>
    %420 = tpu.matmul %415, %419, %cst_168 {dimension_numbers = #tpu.dot_dimension_numbers<[1], [0], [0], [1], [0, 0, 1, 1], [], []>} : vector<8x48xf32>, vector<48x512xf32>, vector<8x512xf32> -> vector<8x512xf32>
    %421 = vector.extract_strided_slice %418 {offsets = [0, 0], sizes = [8, 512], strides = [1, 1]} : vector<8x1024xf32> to vector<8x512xf32>
    %c64 = arith.constant 64 : index
    %c0_169 = arith.constant 0 : index
    %422 = vector.load %arg11[%c64, %c0_169] : memref<128x512xf32, #tpu.memory_space<vmem>>, vector<8x512xf32>
    %423 = arith.addf %422, %421 : vector<8x512xf32>
    %424 = math.tanh %423 : vector<8x512xf32>
    %425 = vector.extract_strided_slice %424 {offsets = [0, 0], sizes = [8, 48], strides = [1, 1]} : vector<8x512xf32> to vector<8x48xf32>
    %cst_170 = arith.constant 5.000000e-01 : f32
    %426 = vector.broadcast %cst_170 : f32 to vector<8x48xf32>
    %427 = arith.mulf %426, %425 : vector<8x48xf32>
    %cst_171 = arith.constant 5.000000e-01 : f32
    %428 = vector.broadcast %cst_171 : f32 to vector<8x48xf32>
    %429 = arith.addf %427, %428 : vector<8x48xf32>
    %430 = vector.extract_strided_slice %424 {offsets = [0, 128], sizes = [8, 48], strides = [1, 1]} : vector<8x512xf32> to vector<8x48xf32>
    %cst_172 = arith.constant 5.000000e-01 : f32
    %431 = vector.broadcast %cst_172 : f32 to vector<8x48xf32>
    %432 = arith.mulf %431, %430 : vector<8x48xf32>
    %cst_173 = arith.constant 5.000000e-01 : f32
    %433 = vector.broadcast %cst_173 : f32 to vector<8x48xf32>
    %434 = arith.addf %432, %433 : vector<8x48xf32>
    %435 = vector.extract_strided_slice %424 {offsets = [0, 256], sizes = [8, 48], strides = [1, 1]} : vector<8x512xf32> to vector<8x48xf32>
    %436 = vector.extract_strided_slice %424 {offsets = [0, 384], sizes = [8, 48], strides = [1, 1]} : vector<8x512xf32> to vector<8x48xf32>
    %cst_174 = arith.constant 5.000000e-01 : f32
    %437 = vector.broadcast %cst_174 : f32 to vector<8x48xf32>
    %438 = arith.mulf %437, %436 : vector<8x48xf32>
    %cst_175 = arith.constant 5.000000e-01 : f32
    %439 = vector.broadcast %cst_175 : f32 to vector<8x48xf32>
    %440 = arith.addf %438, %439 : vector<8x48xf32>
    %441 = arith.mulf %434, %388 : vector<8x48xf32>
    %442 = arith.mulf %429, %435 : vector<8x48xf32>
    %443 = arith.addf %441, %442 : vector<8x48xf32>
    %444 = math.tanh %443 : vector<8x48xf32>
    %445 = arith.mulf %440, %444 : vector<8x48xf32>
    %446 = vector.extract_strided_slice %418 {offsets = [0, 512], sizes = [8, 512], strides = [1, 1]} : vector<8x1024xf32> to vector<8x512xf32>
    %447 = arith.addf %446, %9 : vector<8x512xf32>
    %448 = arith.addf %447, %420 : vector<8x512xf32>
    %449 = math.tanh %448 : vector<8x512xf32>
    %450 = vector.extract_strided_slice %449 {offsets = [0, 0], sizes = [8, 48], strides = [1, 1]} : vector<8x512xf32> to vector<8x48xf32>
    %cst_176 = arith.constant 5.000000e-01 : f32
    %451 = vector.broadcast %cst_176 : f32 to vector<8x48xf32>
    %452 = arith.mulf %451, %450 : vector<8x48xf32>
    %cst_177 = arith.constant 5.000000e-01 : f32
    %453 = vector.broadcast %cst_177 : f32 to vector<8x48xf32>
    %454 = arith.addf %452, %453 : vector<8x48xf32>
    %455 = vector.extract_strided_slice %449 {offsets = [0, 128], sizes = [8, 48], strides = [1, 1]} : vector<8x512xf32> to vector<8x48xf32>
    %cst_178 = arith.constant 5.000000e-01 : f32
    %456 = vector.broadcast %cst_178 : f32 to vector<8x48xf32>
    %457 = arith.mulf %456, %455 : vector<8x48xf32>
    %cst_179 = arith.constant 5.000000e-01 : f32
    %458 = vector.broadcast %cst_179 : f32 to vector<8x48xf32>
    %459 = arith.addf %457, %458 : vector<8x48xf32>
    %460 = vector.extract_strided_slice %449 {offsets = [0, 256], sizes = [8, 48], strides = [1, 1]} : vector<8x512xf32> to vector<8x48xf32>
    %461 = vector.extract_strided_slice %449 {offsets = [0, 384], sizes = [8, 48], strides = [1, 1]} : vector<8x512xf32> to vector<8x48xf32>
    %cst_180 = arith.constant 5.000000e-01 : f32
    %462 = vector.broadcast %cst_180 : f32 to vector<8x48xf32>
    %463 = arith.mulf %462, %461 : vector<8x48xf32>
    %cst_181 = arith.constant 5.000000e-01 : f32
    %464 = vector.broadcast %cst_181 : f32 to vector<8x48xf32>
    %465 = arith.addf %463, %464 : vector<8x48xf32>
    %466 = arith.mulf %459, %413 : vector<8x48xf32>
    %467 = arith.mulf %454, %460 : vector<8x48xf32>
    %468 = arith.addf %466, %467 : vector<8x48xf32>
    %469 = math.tanh %468 : vector<8x48xf32>
    %470 = arith.mulf %465, %469 : vector<8x48xf32>
    %c56_182 = arith.constant 56 : index
    %c0_183 = arith.constant 0 : index
    %471 = vector.load %arg12[%c56_182, %c0_183] : memref<128x48xf32, #tpu.memory_space<vmem>>, vector<8x48xf32>
    tpu.vector_store %arg12[%c56_182, %c0_183], %470 {strides = array<i32>} : memref<128x48xf32, #tpu.memory_space<vmem>>, vector<8x48xf32>,
    %c0_184 = arith.constant 0 : index
    %c0_185 = arith.constant 0 : index
    %472 = vector.load %arg5[%c0_184, %c0_185] : memref<48x1024xf32, #tpu.memory_space<vmem>>, vector<48x1024xf32>
    %cst_186 = arith.constant dense<0.000000e+00> : vector<8x1024xf32>
    %473 = tpu.matmul %445, %472, %cst_186 {dimension_numbers = #tpu.dot_dimension_numbers<[1], [0], [0], [1], [0, 0, 1, 1], [], []>} : vector<8x48xf32>, vector<48x1024xf32>, vector<8x1024xf32> -> vector<8x1024xf32>
    %c0_187 = arith.constant 0 : index
    %c0_188 = arith.constant 0 : index
    %474 = vector.load %arg6[%c0_187, %c0_188] : memref<48x512xf32, #tpu.memory_space<vmem>>, vector<48x512xf32>
    %cst_189 = arith.constant dense<0.000000e+00> : vector<8x512xf32>
    %475 = tpu.matmul %470, %474, %cst_189 {dimension_numbers = #tpu.dot_dimension_numbers<[1], [0], [0], [1], [0, 0, 1, 1], [], []>} : vector<8x48xf32>, vector<48x512xf32>, vector<8x512xf32> -> vector<8x512xf32>
    %476 = vector.extract_strided_slice %473 {offsets = [0, 0], sizes = [8, 512], strides = [1, 1]} : vector<8x1024xf32> to vector<8x512xf32>
    %c72 = arith.constant 72 : index
    %c0_190 = arith.constant 0 : index
    %477 = vector.load %arg11[%c72, %c0_190] : memref<128x512xf32, #tpu.memory_space<vmem>>, vector<8x512xf32>
    %478 = arith.addf %477, %476 : vector<8x512xf32>
    %479 = math.tanh %478 : vector<8x512xf32>
    %480 = vector.extract_strided_slice %479 {offsets = [0, 0], sizes = [8, 48], strides = [1, 1]} : vector<8x512xf32> to vector<8x48xf32>
    %cst_191 = arith.constant 5.000000e-01 : f32
    %481 = vector.broadcast %cst_191 : f32 to vector<8x48xf32>
    %482 = arith.mulf %481, %480 : vector<8x48xf32>
    %cst_192 = arith.constant 5.000000e-01 : f32
    %483 = vector.broadcast %cst_192 : f32 to vector<8x48xf32>
    %484 = arith.addf %482, %483 : vector<8x48xf32>
    %485 = vector.extract_strided_slice %479 {offsets = [0, 128], sizes = [8, 48], strides = [1, 1]} : vector<8x512xf32> to vector<8x48xf32>
    %cst_193 = arith.constant 5.000000e-01 : f32
    %486 = vector.broadcast %cst_193 : f32 to vector<8x48xf32>
    %487 = arith.mulf %486, %485 : vector<8x48xf32>
    %cst_194 = arith.constant 5.000000e-01 : f32
    %488 = vector.broadcast %cst_194 : f32 to vector<8x48xf32>
    %489 = arith.addf %487, %488 : vector<8x48xf32>
    %490 = vector.extract_strided_slice %479 {offsets = [0, 256], sizes = [8, 48], strides = [1, 1]} : vector<8x512xf32> to vector<8x48xf32>
    %491 = vector.extract_strided_slice %479 {offsets = [0, 384], sizes = [8, 48], strides = [1, 1]} : vector<8x512xf32> to vector<8x48xf32>
    %cst_195 = arith.constant 5.000000e-01 : f32
    %492 = vector.broadcast %cst_195 : f32 to vector<8x48xf32>
    %493 = arith.mulf %492, %491 : vector<8x48xf32>
    %cst_196 = arith.constant 5.000000e-01 : f32
    %494 = vector.broadcast %cst_196 : f32 to vector<8x48xf32>
    %495 = arith.addf %493, %494 : vector<8x48xf32>
    %496 = arith.mulf %489, %443 : vector<8x48xf32>
    %497 = arith.mulf %484, %490 : vector<8x48xf32>
    %498 = arith.addf %496, %497 : vector<8x48xf32>
    %499 = math.tanh %498 : vector<8x48xf32>
    %500 = arith.mulf %495, %499 : vector<8x48xf32>
    %501 = vector.extract_strided_slice %473 {offsets = [0, 512], sizes = [8, 512], strides = [1, 1]} : vector<8x1024xf32> to vector<8x512xf32>
    %502 = arith.addf %501, %9 : vector<8x512xf32>
    %503 = arith.addf %502, %475 : vector<8x512xf32>
    %504 = math.tanh %503 : vector<8x512xf32>
    %505 = vector.extract_strided_slice %504 {offsets = [0, 0], sizes = [8, 48], strides = [1, 1]} : vector<8x512xf32> to vector<8x48xf32>
    %cst_197 = arith.constant 5.000000e-01 : f32
    %506 = vector.broadcast %cst_197 : f32 to vector<8x48xf32>
    %507 = arith.mulf %506, %505 : vector<8x48xf32>
    %cst_198 = arith.constant 5.000000e-01 : f32
    %508 = vector.broadcast %cst_198 : f32 to vector<8x48xf32>
    %509 = arith.addf %507, %508 : vector<8x48xf32>
    %510 = vector.extract_strided_slice %504 {offsets = [0, 128], sizes = [8, 48], strides = [1, 1]} : vector<8x512xf32> to vector<8x48xf32>
    %cst_199 = arith.constant 5.000000e-01 : f32
    %511 = vector.broadcast %cst_199 : f32 to vector<8x48xf32>
    %512 = arith.mulf %511, %510 : vector<8x48xf32>
    %cst_200 = arith.constant 5.000000e-01 : f32
    %513 = vector.broadcast %cst_200 : f32 to vector<8x48xf32>
    %514 = arith.addf %512, %513 : vector<8x48xf32>
    %515 = vector.extract_strided_slice %504 {offsets = [0, 256], sizes = [8, 48], strides = [1, 1]} : vector<8x512xf32> to vector<8x48xf32>
    %516 = vector.extract_strided_slice %504 {offsets = [0, 384], sizes = [8, 48], strides = [1, 1]} : vector<8x512xf32> to vector<8x48xf32>
    %cst_201 = arith.constant 5.000000e-01 : f32
    %517 = vector.broadcast %cst_201 : f32 to vector<8x48xf32>
    %518 = arith.mulf %517, %516 : vector<8x48xf32>
    %cst_202 = arith.constant 5.000000e-01 : f32
    %519 = vector.broadcast %cst_202 : f32 to vector<8x48xf32>
    %520 = arith.addf %518, %519 : vector<8x48xf32>
    %521 = arith.mulf %514, %468 : vector<8x48xf32>
    %522 = arith.mulf %509, %515 : vector<8x48xf32>
    %523 = arith.addf %521, %522 : vector<8x48xf32>
    %524 = math.tanh %523 : vector<8x48xf32>
    %525 = arith.mulf %520, %524 : vector<8x48xf32>
    %c64_203 = arith.constant 64 : index
    %c0_204 = arith.constant 0 : index
    %526 = vector.load %arg12[%c64_203, %c0_204] : memref<128x48xf32, #tpu.memory_space<vmem>>, vector<8x48xf32>
    tpu.vector_store %arg12[%c64_203, %c0_204], %525 {strides = array<i32>} : memref<128x48xf32, #tpu.memory_space<vmem>>, vector<8x48xf32>,
    %c0_205 = arith.constant 0 : index
    %c0_206 = arith.constant 0 : index
    %527 = vector.load %arg5[%c0_205, %c0_206] : memref<48x1024xf32, #tpu.memory_space<vmem>>, vector<48x1024xf32>
    %cst_207 = arith.constant dense<0.000000e+00> : vector<8x1024xf32>
    %528 = tpu.matmul %500, %527, %cst_207 {dimension_numbers = #tpu.dot_dimension_numbers<[1], [0], [0], [1], [0, 0, 1, 1], [], []>} : vector<8x48xf32>, vector<48x1024xf32>, vector<8x1024xf32> -> vector<8x1024xf32>
    %c0_208 = arith.constant 0 : index
    %c0_209 = arith.constant 0 : index
    %529 = vector.load %arg6[%c0_208, %c0_209] : memref<48x512xf32, #tpu.memory_space<vmem>>, vector<48x512xf32>
    %cst_210 = arith.constant dense<0.000000e+00> : vector<8x512xf32>
    %530 = tpu.matmul %525, %529, %cst_210 {dimension_numbers = #tpu.dot_dimension_numbers<[1], [0], [0], [1], [0, 0, 1, 1], [], []>} : vector<8x48xf32>, vector<48x512xf32>, vector<8x512xf32> -> vector<8x512xf32>
    %531 = vector.extract_strided_slice %528 {offsets = [0, 0], sizes = [8, 512], strides = [1, 1]} : vector<8x1024xf32> to vector<8x512xf32>
    %c80 = arith.constant 80 : index
    %c0_211 = arith.constant 0 : index
    %532 = vector.load %arg11[%c80, %c0_211] : memref<128x512xf32, #tpu.memory_space<vmem>>, vector<8x512xf32>
    %533 = arith.addf %532, %531 : vector<8x512xf32>
    %534 = math.tanh %533 : vector<8x512xf32>
    %535 = vector.extract_strided_slice %534 {offsets = [0, 0], sizes = [8, 48], strides = [1, 1]} : vector<8x512xf32> to vector<8x48xf32>
    %cst_212 = arith.constant 5.000000e-01 : f32
    %536 = vector.broadcast %cst_212 : f32 to vector<8x48xf32>
    %537 = arith.mulf %536, %535 : vector<8x48xf32>
    %cst_213 = arith.constant 5.000000e-01 : f32
    %538 = vector.broadcast %cst_213 : f32 to vector<8x48xf32>
    %539 = arith.addf %537, %538 : vector<8x48xf32>
    %540 = vector.extract_strided_slice %534 {offsets = [0, 128], sizes = [8, 48], strides = [1, 1]} : vector<8x512xf32> to vector<8x48xf32>
    %cst_214 = arith.constant 5.000000e-01 : f32
    %541 = vector.broadcast %cst_214 : f32 to vector<8x48xf32>
    %542 = arith.mulf %541, %540 : vector<8x48xf32>
    %cst_215 = arith.constant 5.000000e-01 : f32
    %543 = vector.broadcast %cst_215 : f32 to vector<8x48xf32>
    %544 = arith.addf %542, %543 : vector<8x48xf32>
    %545 = vector.extract_strided_slice %534 {offsets = [0, 256], sizes = [8, 48], strides = [1, 1]} : vector<8x512xf32> to vector<8x48xf32>
    %546 = vector.extract_strided_slice %534 {offsets = [0, 384], sizes = [8, 48], strides = [1, 1]} : vector<8x512xf32> to vector<8x48xf32>
    %cst_216 = arith.constant 5.000000e-01 : f32
    %547 = vector.broadcast %cst_216 : f32 to vector<8x48xf32>
    %548 = arith.mulf %547, %546 : vector<8x48xf32>
    %cst_217 = arith.constant 5.000000e-01 : f32
    %549 = vector.broadcast %cst_217 : f32 to vector<8x48xf32>
    %550 = arith.addf %548, %549 : vector<8x48xf32>
    %551 = arith.mulf %544, %498 : vector<8x48xf32>
    %552 = arith.mulf %539, %545 : vector<8x48xf32>
    %553 = arith.addf %551, %552 : vector<8x48xf32>
    %554 = math.tanh %553 : vector<8x48xf32>
    %555 = arith.mulf %550, %554 : vector<8x48xf32>
    %556 = vector.extract_strided_slice %528 {offsets = [0, 512], sizes = [8, 512], strides = [1, 1]} : vector<8x1024xf32> to vector<8x512xf32>
    %557 = arith.addf %556, %9 : vector<8x512xf32>
    %558 = arith.addf %557, %530 : vector<8x512xf32>
    %559 = math.tanh %558 : vector<8x512xf32>
    %560 = vector.extract_strided_slice %559 {offsets = [0, 0], sizes = [8, 48], strides = [1, 1]} : vector<8x512xf32> to vector<8x48xf32>
    %cst_218 = arith.constant 5.000000e-01 : f32
    %561 = vector.broadcast %cst_218 : f32 to vector<8x48xf32>
    %562 = arith.mulf %561, %560 : vector<8x48xf32>
    %cst_219 = arith.constant 5.000000e-01 : f32
    %563 = vector.broadcast %cst_219 : f32 to vector<8x48xf32>
    %564 = arith.addf %562, %563 : vector<8x48xf32>
    %565 = vector.extract_strided_slice %559 {offsets = [0, 128], sizes = [8, 48], strides = [1, 1]} : vector<8x512xf32> to vector<8x48xf32>
    %cst_220 = arith.constant 5.000000e-01 : f32
    %566 = vector.broadcast %cst_220 : f32 to vector<8x48xf32>
    %567 = arith.mulf %566, %565 : vector<8x48xf32>
    %cst_221 = arith.constant 5.000000e-01 : f32
    %568 = vector.broadcast %cst_221 : f32 to vector<8x48xf32>
    %569 = arith.addf %567, %568 : vector<8x48xf32>
    %570 = vector.extract_strided_slice %559 {offsets = [0, 256], sizes = [8, 48], strides = [1, 1]} : vector<8x512xf32> to vector<8x48xf32>
    %571 = vector.extract_strided_slice %559 {offsets = [0, 384], sizes = [8, 48], strides = [1, 1]} : vector<8x512xf32> to vector<8x48xf32>
    %cst_222 = arith.constant 5.000000e-01 : f32
    %572 = vector.broadcast %cst_222 : f32 to vector<8x48xf32>
    %573 = arith.mulf %572, %571 : vector<8x48xf32>
    %cst_223 = arith.constant 5.000000e-01 : f32
    %574 = vector.broadcast %cst_223 : f32 to vector<8x48xf32>
    %575 = arith.addf %573, %574 : vector<8x48xf32>
    %576 = arith.mulf %569, %523 : vector<8x48xf32>
    %577 = arith.mulf %564, %570 : vector<8x48xf32>
    %578 = arith.addf %576, %577 : vector<8x48xf32>
    %579 = math.tanh %578 : vector<8x48xf32>
    %580 = arith.mulf %575, %579 : vector<8x48xf32>
    %c72_224 = arith.constant 72 : index
    %c0_225 = arith.constant 0 : index
    %581 = vector.load %arg12[%c72_224, %c0_225] : memref<128x48xf32, #tpu.memory_space<vmem>>, vector<8x48xf32>
    tpu.vector_store %arg12[%c72_224, %c0_225], %580 {strides = array<i32>} : memref<128x48xf32, #tpu.memory_space<vmem>>, vector<8x48xf32>,
    %c0_226 = arith.constant 0 : index
    %c0_227 = arith.constant 0 : index
    %582 = vector.load %arg5[%c0_226, %c0_227] : memref<48x1024xf32, #tpu.memory_space<vmem>>, vector<48x1024xf32>
    %cst_228 = arith.constant dense<0.000000e+00> : vector<8x1024xf32>
    %583 = tpu.matmul %555, %582, %cst_228 {dimension_numbers = #tpu.dot_dimension_numbers<[1], [0], [0], [1], [0, 0, 1, 1], [], []>} : vector<8x48xf32>, vector<48x1024xf32>, vector<8x1024xf32> -> vector<8x1024xf32>
    %c0_229 = arith.constant 0 : index
    %c0_230 = arith.constant 0 : index
    %584 = vector.load %arg6[%c0_229, %c0_230] : memref<48x512xf32, #tpu.memory_space<vmem>>, vector<48x512xf32>
    %cst_231 = arith.constant dense<0.000000e+00> : vector<8x512xf32>
    %585 = tpu.matmul %580, %584, %cst_231 {dimension_numbers = #tpu.dot_dimension_numbers<[1], [0], [0], [1], [0, 0, 1, 1], [], []>} : vector<8x48xf32>, vector<48x512xf32>, vector<8x512xf32> -> vector<8x512xf32>
    %586 = vector.extract_strided_slice %583 {offsets = [0, 0], sizes = [8, 512], strides = [1, 1]} : vector<8x1024xf32> to vector<8x512xf32>
    %c88 = arith.constant 88 : index
    %c0_232 = arith.constant 0 : index
    %587 = vector.load %arg11[%c88, %c0_232] : memref<128x512xf32, #tpu.memory_space<vmem>>, vector<8x512xf32>
    %588 = arith.addf %587, %586 : vector<8x512xf32>
    %589 = math.tanh %588 : vector<8x512xf32>
    %590 = vector.extract_strided_slice %589 {offsets = [0, 0], sizes = [8, 48], strides = [1, 1]} : vector<8x512xf32> to vector<8x48xf32>
    %cst_233 = arith.constant 5.000000e-01 : f32
    %591 = vector.broadcast %cst_233 : f32 to vector<8x48xf32>
    %592 = arith.mulf %591, %590 : vector<8x48xf32>
    %cst_234 = arith.constant 5.000000e-01 : f32
    %593 = vector.broadcast %cst_234 : f32 to vector<8x48xf32>
    %594 = arith.addf %592, %593 : vector<8x48xf32>
    %595 = vector.extract_strided_slice %589 {offsets = [0, 128], sizes = [8, 48], strides = [1, 1]} : vector<8x512xf32> to vector<8x48xf32>
    %cst_235 = arith.constant 5.000000e-01 : f32
    %596 = vector.broadcast %cst_235 : f32 to vector<8x48xf32>
    %597 = arith.mulf %596, %595 : vector<8x48xf32>
    %cst_236 = arith.constant 5.000000e-01 : f32
    %598 = vector.broadcast %cst_236 : f32 to vector<8x48xf32>
    %599 = arith.addf %597, %598 : vector<8x48xf32>
    %600 = vector.extract_strided_slice %589 {offsets = [0, 256], sizes = [8, 48], strides = [1, 1]} : vector<8x512xf32> to vector<8x48xf32>
    %601 = vector.extract_strided_slice %589 {offsets = [0, 384], sizes = [8, 48], strides = [1, 1]} : vector<8x512xf32> to vector<8x48xf32>
    %cst_237 = arith.constant 5.000000e-01 : f32
    %602 = vector.broadcast %cst_237 : f32 to vector<8x48xf32>
    %603 = arith.mulf %602, %601 : vector<8x48xf32>
    %cst_238 = arith.constant 5.000000e-01 : f32
    %604 = vector.broadcast %cst_238 : f32 to vector<8x48xf32>
    %605 = arith.addf %603, %604 : vector<8x48xf32>
    %606 = arith.mulf %599, %553 : vector<8x48xf32>
    %607 = arith.mulf %594, %600 : vector<8x48xf32>
    %608 = arith.addf %606, %607 : vector<8x48xf32>
    %609 = math.tanh %608 : vector<8x48xf32>
    %610 = arith.mulf %605, %609 : vector<8x48xf32>
    %611 = vector.extract_strided_slice %583 {offsets = [0, 512], sizes = [8, 512], strides = [1, 1]} : vector<8x1024xf32> to vector<8x512xf32>
    %612 = arith.addf %611, %9 : vector<8x512xf32>
    %613 = arith.addf %612, %585 : vector<8x512xf32>
    %614 = math.tanh %613 : vector<8x512xf32>
    %615 = vector.extract_strided_slice %614 {offsets = [0, 0], sizes = [8, 48], strides = [1, 1]} : vector<8x512xf32> to vector<8x48xf32>
    %cst_239 = arith.constant 5.000000e-01 : f32
    %616 = vector.broadcast %cst_239 : f32 to vector<8x48xf32>
    %617 = arith.mulf %616, %615 : vector<8x48xf32>
    %cst_240 = arith.constant 5.000000e-01 : f32
    %618 = vector.broadcast %cst_240 : f32 to vector<8x48xf32>
    %619 = arith.addf %617, %618 : vector<8x48xf32>
    %620 = vector.extract_strided_slice %614 {offsets = [0, 128], sizes = [8, 48], strides = [1, 1]} : vector<8x512xf32> to vector<8x48xf32>
    %cst_241 = arith.constant 5.000000e-01 : f32
    %621 = vector.broadcast %cst_241 : f32 to vector<8x48xf32>
    %622 = arith.mulf %621, %620 : vector<8x48xf32>
    %cst_242 = arith.constant 5.000000e-01 : f32
    %623 = vector.broadcast %cst_242 : f32 to vector<8x48xf32>
    %624 = arith.addf %622, %623 : vector<8x48xf32>
    %625 = vector.extract_strided_slice %614 {offsets = [0, 256], sizes = [8, 48], strides = [1, 1]} : vector<8x512xf32> to vector<8x48xf32>
    %626 = vector.extract_strided_slice %614 {offsets = [0, 384], sizes = [8, 48], strides = [1, 1]} : vector<8x512xf32> to vector<8x48xf32>
    %cst_243 = arith.constant 5.000000e-01 : f32
    %627 = vector.broadcast %cst_243 : f32 to vector<8x48xf32>
    %628 = arith.mulf %627, %626 : vector<8x48xf32>
    %cst_244 = arith.constant 5.000000e-01 : f32
    %629 = vector.broadcast %cst_244 : f32 to vector<8x48xf32>
    %630 = arith.addf %628, %629 : vector<8x48xf32>
    %631 = arith.mulf %624, %578 : vector<8x48xf32>
    %632 = arith.mulf %619, %625 : vector<8x48xf32>
    %633 = arith.addf %631, %632 : vector<8x48xf32>
    %634 = math.tanh %633 : vector<8x48xf32>
    %635 = arith.mulf %630, %634 : vector<8x48xf32>
    %c80_245 = arith.constant 80 : index
    %c0_246 = arith.constant 0 : index
    %636 = vector.load %arg12[%c80_245, %c0_246] : memref<128x48xf32, #tpu.memory_space<vmem>>, vector<8x48xf32>
    tpu.vector_store %arg12[%c80_245, %c0_246], %635 {strides = array<i32>} : memref<128x48xf32, #tpu.memory_space<vmem>>, vector<8x48xf32>,
    %c0_247 = arith.constant 0 : index
    %c0_248 = arith.constant 0 : index
    %637 = vector.load %arg5[%c0_247, %c0_248] : memref<48x1024xf32, #tpu.memory_space<vmem>>, vector<48x1024xf32>
    %cst_249 = arith.constant dense<0.000000e+00> : vector<8x1024xf32>
    %638 = tpu.matmul %610, %637, %cst_249 {dimension_numbers = #tpu.dot_dimension_numbers<[1], [0], [0], [1], [0, 0, 1, 1], [], []>} : vector<8x48xf32>, vector<48x1024xf32>, vector<8x1024xf32> -> vector<8x1024xf32>
    %c0_250 = arith.constant 0 : index
    %c0_251 = arith.constant 0 : index
    %639 = vector.load %arg6[%c0_250, %c0_251] : memref<48x512xf32, #tpu.memory_space<vmem>>, vector<48x512xf32>
    %cst_252 = arith.constant dense<0.000000e+00> : vector<8x512xf32>
    %640 = tpu.matmul %635, %639, %cst_252 {dimension_numbers = #tpu.dot_dimension_numbers<[1], [0], [0], [1], [0, 0, 1, 1], [], []>} : vector<8x48xf32>, vector<48x512xf32>, vector<8x512xf32> -> vector<8x512xf32>
    %641 = vector.extract_strided_slice %638 {offsets = [0, 0], sizes = [8, 512], strides = [1, 1]} : vector<8x1024xf32> to vector<8x512xf32>
    %c96 = arith.constant 96 : index
    %c0_253 = arith.constant 0 : index
    %642 = vector.load %arg11[%c96, %c0_253] : memref<128x512xf32, #tpu.memory_space<vmem>>, vector<8x512xf32>
    %643 = arith.addf %642, %641 : vector<8x512xf32>
    %644 = math.tanh %643 : vector<8x512xf32>
    %645 = vector.extract_strided_slice %644 {offsets = [0, 0], sizes = [8, 48], strides = [1, 1]} : vector<8x512xf32> to vector<8x48xf32>
    %cst_254 = arith.constant 5.000000e-01 : f32
    %646 = vector.broadcast %cst_254 : f32 to vector<8x48xf32>
    %647 = arith.mulf %646, %645 : vector<8x48xf32>
    %cst_255 = arith.constant 5.000000e-01 : f32
    %648 = vector.broadcast %cst_255 : f32 to vector<8x48xf32>
    %649 = arith.addf %647, %648 : vector<8x48xf32>
    %650 = vector.extract_strided_slice %644 {offsets = [0, 128], sizes = [8, 48], strides = [1, 1]} : vector<8x512xf32> to vector<8x48xf32>
    %cst_256 = arith.constant 5.000000e-01 : f32
    %651 = vector.broadcast %cst_256 : f32 to vector<8x48xf32>
    %652 = arith.mulf %651, %650 : vector<8x48xf32>
    %cst_257 = arith.constant 5.000000e-01 : f32
    %653 = vector.broadcast %cst_257 : f32 to vector<8x48xf32>
    %654 = arith.addf %652, %653 : vector<8x48xf32>
    %655 = vector.extract_strided_slice %644 {offsets = [0, 256], sizes = [8, 48], strides = [1, 1]} : vector<8x512xf32> to vector<8x48xf32>
    %656 = vector.extract_strided_slice %644 {offsets = [0, 384], sizes = [8, 48], strides = [1, 1]} : vector<8x512xf32> to vector<8x48xf32>
    %cst_258 = arith.constant 5.000000e-01 : f32
    %657 = vector.broadcast %cst_258 : f32 to vector<8x48xf32>
    %658 = arith.mulf %657, %656 : vector<8x48xf32>
    %cst_259 = arith.constant 5.000000e-01 : f32
    %659 = vector.broadcast %cst_259 : f32 to vector<8x48xf32>
    %660 = arith.addf %658, %659 : vector<8x48xf32>
    %661 = arith.mulf %654, %608 : vector<8x48xf32>
    %662 = arith.mulf %649, %655 : vector<8x48xf32>
    %663 = arith.addf %661, %662 : vector<8x48xf32>
    %664 = math.tanh %663 : vector<8x48xf32>
    %665 = arith.mulf %660, %664 : vector<8x48xf32>
    %666 = vector.extract_strided_slice %638 {offsets = [0, 512], sizes = [8, 512], strides = [1, 1]} : vector<8x1024xf32> to vector<8x512xf32>
    %667 = arith.addf %666, %9 : vector<8x512xf32>
    %668 = arith.addf %667, %640 : vector<8x512xf32>
    %669 = math.tanh %668 : vector<8x512xf32>
    %670 = vector.extract_strided_slice %669 {offsets = [0, 0], sizes = [8, 48], strides = [1, 1]} : vector<8x512xf32> to vector<8x48xf32>
    %cst_260 = arith.constant 5.000000e-01 : f32
    %671 = vector.broadcast %cst_260 : f32 to vector<8x48xf32>
    %672 = arith.mulf %671, %670 : vector<8x48xf32>
    %cst_261 = arith.constant 5.000000e-01 : f32
    %673 = vector.broadcast %cst_261 : f32 to vector<8x48xf32>
    %674 = arith.addf %672, %673 : vector<8x48xf32>
    %675 = vector.extract_strided_slice %669 {offsets = [0, 128], sizes = [8, 48], strides = [1, 1]} : vector<8x512xf32> to vector<8x48xf32>
    %cst_262 = arith.constant 5.000000e-01 : f32
    %676 = vector.broadcast %cst_262 : f32 to vector<8x48xf32>
    %677 = arith.mulf %676, %675 : vector<8x48xf32>
    %cst_263 = arith.constant 5.000000e-01 : f32
    %678 = vector.broadcast %cst_263 : f32 to vector<8x48xf32>
    %679 = arith.addf %677, %678 : vector<8x48xf32>
    %680 = vector.extract_strided_slice %669 {offsets = [0, 256], sizes = [8, 48], strides = [1, 1]} : vector<8x512xf32> to vector<8x48xf32>
    %681 = vector.extract_strided_slice %669 {offsets = [0, 384], sizes = [8, 48], strides = [1, 1]} : vector<8x512xf32> to vector<8x48xf32>
    %cst_264 = arith.constant 5.000000e-01 : f32
    %682 = vector.broadcast %cst_264 : f32 to vector<8x48xf32>
    %683 = arith.mulf %682, %681 : vector<8x48xf32>
    %cst_265 = arith.constant 5.000000e-01 : f32
    %684 = vector.broadcast %cst_265 : f32 to vector<8x48xf32>
    %685 = arith.addf %683, %684 : vector<8x48xf32>
    %686 = arith.mulf %679, %633 : vector<8x48xf32>
    %687 = arith.mulf %674, %680 : vector<8x48xf32>
    %688 = arith.addf %686, %687 : vector<8x48xf32>
    %689 = math.tanh %688 : vector<8x48xf32>
    %690 = arith.mulf %685, %689 : vector<8x48xf32>
    %c88_266 = arith.constant 88 : index
    %c0_267 = arith.constant 0 : index
    %691 = vector.load %arg12[%c88_266, %c0_267] : memref<128x48xf32, #tpu.memory_space<vmem>>, vector<8x48xf32>
    tpu.vector_store %arg12[%c88_266, %c0_267], %690 {strides = array<i32>} : memref<128x48xf32, #tpu.memory_space<vmem>>, vector<8x48xf32>,
    %c0_268 = arith.constant 0 : index
    %c0_269 = arith.constant 0 : index
    %692 = vector.load %arg5[%c0_268, %c0_269] : memref<48x1024xf32, #tpu.memory_space<vmem>>, vector<48x1024xf32>
    %cst_270 = arith.constant dense<0.000000e+00> : vector<8x1024xf32>
    %693 = tpu.matmul %665, %692, %cst_270 {dimension_numbers = #tpu.dot_dimension_numbers<[1], [0], [0], [1], [0, 0, 1, 1], [], []>} : vector<8x48xf32>, vector<48x1024xf32>, vector<8x1024xf32> -> vector<8x1024xf32>
    %c0_271 = arith.constant 0 : index
    %c0_272 = arith.constant 0 : index
    %694 = vector.load %arg6[%c0_271, %c0_272] : memref<48x512xf32, #tpu.memory_space<vmem>>, vector<48x512xf32>
    %cst_273 = arith.constant dense<0.000000e+00> : vector<8x512xf32>
    %695 = tpu.matmul %690, %694, %cst_273 {dimension_numbers = #tpu.dot_dimension_numbers<[1], [0], [0], [1], [0, 0, 1, 1], [], []>} : vector<8x48xf32>, vector<48x512xf32>, vector<8x512xf32> -> vector<8x512xf32>
    %696 = vector.extract_strided_slice %693 {offsets = [0, 0], sizes = [8, 512], strides = [1, 1]} : vector<8x1024xf32> to vector<8x512xf32>
    %c104 = arith.constant 104 : index
    %c0_274 = arith.constant 0 : index
    %697 = vector.load %arg11[%c104, %c0_274] : memref<128x512xf32, #tpu.memory_space<vmem>>, vector<8x512xf32>
    %698 = arith.addf %697, %696 : vector<8x512xf32>
    %699 = math.tanh %698 : vector<8x512xf32>
    %700 = vector.extract_strided_slice %699 {offsets = [0, 0], sizes = [8, 48], strides = [1, 1]} : vector<8x512xf32> to vector<8x48xf32>
    %cst_275 = arith.constant 5.000000e-01 : f32
    %701 = vector.broadcast %cst_275 : f32 to vector<8x48xf32>
    %702 = arith.mulf %701, %700 : vector<8x48xf32>
    %cst_276 = arith.constant 5.000000e-01 : f32
    %703 = vector.broadcast %cst_276 : f32 to vector<8x48xf32>
    %704 = arith.addf %702, %703 : vector<8x48xf32>
    %705 = vector.extract_strided_slice %699 {offsets = [0, 128], sizes = [8, 48], strides = [1, 1]} : vector<8x512xf32> to vector<8x48xf32>
    %cst_277 = arith.constant 5.000000e-01 : f32
    %706 = vector.broadcast %cst_277 : f32 to vector<8x48xf32>
    %707 = arith.mulf %706, %705 : vector<8x48xf32>
    %cst_278 = arith.constant 5.000000e-01 : f32
    %708 = vector.broadcast %cst_278 : f32 to vector<8x48xf32>
    %709 = arith.addf %707, %708 : vector<8x48xf32>
    %710 = vector.extract_strided_slice %699 {offsets = [0, 256], sizes = [8, 48], strides = [1, 1]} : vector<8x512xf32> to vector<8x48xf32>
    %711 = vector.extract_strided_slice %699 {offsets = [0, 384], sizes = [8, 48], strides = [1, 1]} : vector<8x512xf32> to vector<8x48xf32>
    %cst_279 = arith.constant 5.000000e-01 : f32
    %712 = vector.broadcast %cst_279 : f32 to vector<8x48xf32>
    %713 = arith.mulf %712, %711 : vector<8x48xf32>
    %cst_280 = arith.constant 5.000000e-01 : f32
    %714 = vector.broadcast %cst_280 : f32 to vector<8x48xf32>
    %715 = arith.addf %713, %714 : vector<8x48xf32>
    %716 = arith.mulf %709, %663 : vector<8x48xf32>
    %717 = arith.mulf %704, %710 : vector<8x48xf32>
    %718 = arith.addf %716, %717 : vector<8x48xf32>
    %719 = math.tanh %718 : vector<8x48xf32>
    %720 = arith.mulf %715, %719 : vector<8x48xf32>
    %721 = vector.extract_strided_slice %693 {offsets = [0, 512], sizes = [8, 512], strides = [1, 1]} : vector<8x1024xf32> to vector<8x512xf32>
    %722 = arith.addf %721, %9 : vector<8x512xf32>
    %723 = arith.addf %722, %695 : vector<8x512xf32>
    %724 = math.tanh %723 : vector<8x512xf32>
    %725 = vector.extract_strided_slice %724 {offsets = [0, 0], sizes = [8, 48], strides = [1, 1]} : vector<8x512xf32> to vector<8x48xf32>
    %cst_281 = arith.constant 5.000000e-01 : f32
    %726 = vector.broadcast %cst_281 : f32 to vector<8x48xf32>
    %727 = arith.mulf %726, %725 : vector<8x48xf32>
    %cst_282 = arith.constant 5.000000e-01 : f32
    %728 = vector.broadcast %cst_282 : f32 to vector<8x48xf32>
    %729 = arith.addf %727, %728 : vector<8x48xf32>
    %730 = vector.extract_strided_slice %724 {offsets = [0, 128], sizes = [8, 48], strides = [1, 1]} : vector<8x512xf32> to vector<8x48xf32>
    %cst_283 = arith.constant 5.000000e-01 : f32
    %731 = vector.broadcast %cst_283 : f32 to vector<8x48xf32>
    %732 = arith.mulf %731, %730 : vector<8x48xf32>
    %cst_284 = arith.constant 5.000000e-01 : f32
    %733 = vector.broadcast %cst_284 : f32 to vector<8x48xf32>
    %734 = arith.addf %732, %733 : vector<8x48xf32>
    %735 = vector.extract_strided_slice %724 {offsets = [0, 256], sizes = [8, 48], strides = [1, 1]} : vector<8x512xf32> to vector<8x48xf32>
    %736 = vector.extract_strided_slice %724 {offsets = [0, 384], sizes = [8, 48], strides = [1, 1]} : vector<8x512xf32> to vector<8x48xf32>
    %cst_285 = arith.constant 5.000000e-01 : f32
    %737 = vector.broadcast %cst_285 : f32 to vector<8x48xf32>
    %738 = arith.mulf %737, %736 : vector<8x48xf32>
    %cst_286 = arith.constant 5.000000e-01 : f32
    %739 = vector.broadcast %cst_286 : f32 to vector<8x48xf32>
    %740 = arith.addf %738, %739 : vector<8x48xf32>
    %741 = arith.mulf %734, %688 : vector<8x48xf32>
    %742 = arith.mulf %729, %735 : vector<8x48xf32>
    %743 = arith.addf %741, %742 : vector<8x48xf32>
    %744 = math.tanh %743 : vector<8x48xf32>
    %745 = arith.mulf %740, %744 : vector<8x48xf32>
    %c96_287 = arith.constant 96 : index
    %c0_288 = arith.constant 0 : index
    %746 = vector.load %arg12[%c96_287, %c0_288] : memref<128x48xf32, #tpu.memory_space<vmem>>, vector<8x48xf32>
    tpu.vector_store %arg12[%c96_287, %c0_288], %745 {strides = array<i32>} : memref<128x48xf32, #tpu.memory_space<vmem>>, vector<8x48xf32>,
    %c0_289 = arith.constant 0 : index
    %c0_290 = arith.constant 0 : index
    %747 = vector.load %arg5[%c0_289, %c0_290] : memref<48x1024xf32, #tpu.memory_space<vmem>>, vector<48x1024xf32>
    %cst_291 = arith.constant dense<0.000000e+00> : vector<8x1024xf32>
    %748 = tpu.matmul %720, %747, %cst_291 {dimension_numbers = #tpu.dot_dimension_numbers<[1], [0], [0], [1], [0, 0, 1, 1], [], []>} : vector<8x48xf32>, vector<48x1024xf32>, vector<8x1024xf32> -> vector<8x1024xf32>
    %c0_292 = arith.constant 0 : index
    %c0_293 = arith.constant 0 : index
    %749 = vector.load %arg6[%c0_292, %c0_293] : memref<48x512xf32, #tpu.memory_space<vmem>>, vector<48x512xf32>
    %cst_294 = arith.constant dense<0.000000e+00> : vector<8x512xf32>
    %750 = tpu.matmul %745, %749, %cst_294 {dimension_numbers = #tpu.dot_dimension_numbers<[1], [0], [0], [1], [0, 0, 1, 1], [], []>} : vector<8x48xf32>, vector<48x512xf32>, vector<8x512xf32> -> vector<8x512xf32>
    %751 = vector.extract_strided_slice %748 {offsets = [0, 0], sizes = [8, 512], strides = [1, 1]} : vector<8x1024xf32> to vector<8x512xf32>
    %c112 = arith.constant 112 : index
    %c0_295 = arith.constant 0 : index
    %752 = vector.load %arg11[%c112, %c0_295] : memref<128x512xf32, #tpu.memory_space<vmem>>, vector<8x512xf32>
    %753 = arith.addf %752, %751 : vector<8x512xf32>
    %754 = math.tanh %753 : vector<8x512xf32>
    %755 = vector.extract_strided_slice %754 {offsets = [0, 0], sizes = [8, 48], strides = [1, 1]} : vector<8x512xf32> to vector<8x48xf32>
    %cst_296 = arith.constant 5.000000e-01 : f32
    %756 = vector.broadcast %cst_296 : f32 to vector<8x48xf32>
    %757 = arith.mulf %756, %755 : vector<8x48xf32>
    %cst_297 = arith.constant 5.000000e-01 : f32
    %758 = vector.broadcast %cst_297 : f32 to vector<8x48xf32>
    %759 = arith.addf %757, %758 : vector<8x48xf32>
    %760 = vector.extract_strided_slice %754 {offsets = [0, 128], sizes = [8, 48], strides = [1, 1]} : vector<8x512xf32> to vector<8x48xf32>
    %cst_298 = arith.constant 5.000000e-01 : f32
    %761 = vector.broadcast %cst_298 : f32 to vector<8x48xf32>
    %762 = arith.mulf %761, %760 : vector<8x48xf32>
    %cst_299 = arith.constant 5.000000e-01 : f32
    %763 = vector.broadcast %cst_299 : f32 to vector<8x48xf32>
    %764 = arith.addf %762, %763 : vector<8x48xf32>
    %765 = vector.extract_strided_slice %754 {offsets = [0, 256], sizes = [8, 48], strides = [1, 1]} : vector<8x512xf32> to vector<8x48xf32>
    %766 = vector.extract_strided_slice %754 {offsets = [0, 384], sizes = [8, 48], strides = [1, 1]} : vector<8x512xf32> to vector<8x48xf32>
    %cst_300 = arith.constant 5.000000e-01 : f32
    %767 = vector.broadcast %cst_300 : f32 to vector<8x48xf32>
    %768 = arith.mulf %767, %766 : vector<8x48xf32>
    %cst_301 = arith.constant 5.000000e-01 : f32
    %769 = vector.broadcast %cst_301 : f32 to vector<8x48xf32>
    %770 = arith.addf %768, %769 : vector<8x48xf32>
    %771 = arith.mulf %764, %718 : vector<8x48xf32>
    %772 = arith.mulf %759, %765 : vector<8x48xf32>
    %773 = arith.addf %771, %772 : vector<8x48xf32>
    %774 = math.tanh %773 : vector<8x48xf32>
    %775 = arith.mulf %770, %774 : vector<8x48xf32>
    %776 = vector.extract_strided_slice %748 {offsets = [0, 512], sizes = [8, 512], strides = [1, 1]} : vector<8x1024xf32> to vector<8x512xf32>
    %777 = arith.addf %776, %9 : vector<8x512xf32>
    %778 = arith.addf %777, %750 : vector<8x512xf32>
    %779 = math.tanh %778 : vector<8x512xf32>
    %780 = vector.extract_strided_slice %779 {offsets = [0, 0], sizes = [8, 48], strides = [1, 1]} : vector<8x512xf32> to vector<8x48xf32>
    %cst_302 = arith.constant 5.000000e-01 : f32
    %781 = vector.broadcast %cst_302 : f32 to vector<8x48xf32>
    %782 = arith.mulf %781, %780 : vector<8x48xf32>
    %cst_303 = arith.constant 5.000000e-01 : f32
    %783 = vector.broadcast %cst_303 : f32 to vector<8x48xf32>
    %784 = arith.addf %782, %783 : vector<8x48xf32>
    %785 = vector.extract_strided_slice %779 {offsets = [0, 128], sizes = [8, 48], strides = [1, 1]} : vector<8x512xf32> to vector<8x48xf32>
    %cst_304 = arith.constant 5.000000e-01 : f32
    %786 = vector.broadcast %cst_304 : f32 to vector<8x48xf32>
    %787 = arith.mulf %786, %785 : vector<8x48xf32>
    %cst_305 = arith.constant 5.000000e-01 : f32
    %788 = vector.broadcast %cst_305 : f32 to vector<8x48xf32>
    %789 = arith.addf %787, %788 : vector<8x48xf32>
    %790 = vector.extract_strided_slice %779 {offsets = [0, 256], sizes = [8, 48], strides = [1, 1]} : vector<8x512xf32> to vector<8x48xf32>
    %791 = vector.extract_strided_slice %779 {offsets = [0, 384], sizes = [8, 48], strides = [1, 1]} : vector<8x512xf32> to vector<8x48xf32>
    %cst_306 = arith.constant 5.000000e-01 : f32
    %792 = vector.broadcast %cst_306 : f32 to vector<8x48xf32>
    %793 = arith.mulf %792, %791 : vector<8x48xf32>
    %cst_307 = arith.constant 5.000000e-01 : f32
    %794 = vector.broadcast %cst_307 : f32 to vector<8x48xf32>
    %795 = arith.addf %793, %794 : vector<8x48xf32>
    %796 = arith.mulf %789, %743 : vector<8x48xf32>
    %797 = arith.mulf %784, %790 : vector<8x48xf32>
    %798 = arith.addf %796, %797 : vector<8x48xf32>
    %799 = math.tanh %798 : vector<8x48xf32>
    %800 = arith.mulf %795, %799 : vector<8x48xf32>
    %c104_308 = arith.constant 104 : index
    %c0_309 = arith.constant 0 : index
    %801 = vector.load %arg12[%c104_308, %c0_309] : memref<128x48xf32, #tpu.memory_space<vmem>>, vector<8x48xf32>
    tpu.vector_store %arg12[%c104_308, %c0_309], %800 {strides = array<i32>} : memref<128x48xf32, #tpu.memory_space<vmem>>, vector<8x48xf32>,
    %c0_310 = arith.constant 0 : index
    %c0_311 = arith.constant 0 : index
    %802 = vector.load %arg5[%c0_310, %c0_311] : memref<48x1024xf32, #tpu.memory_space<vmem>>, vector<48x1024xf32>
    %cst_312 = arith.constant dense<0.000000e+00> : vector<8x1024xf32>
    %803 = tpu.matmul %775, %802, %cst_312 {dimension_numbers = #tpu.dot_dimension_numbers<[1], [0], [0], [1], [0, 0, 1, 1], [], []>} : vector<8x48xf32>, vector<48x1024xf32>, vector<8x1024xf32> -> vector<8x1024xf32>
    %c0_313 = arith.constant 0 : index
    %c0_314 = arith.constant 0 : index
    %804 = vector.load %arg6[%c0_313, %c0_314] : memref<48x512xf32, #tpu.memory_space<vmem>>, vector<48x512xf32>
    %cst_315 = arith.constant dense<0.000000e+00> : vector<8x512xf32>
    %805 = tpu.matmul %800, %804, %cst_315 {dimension_numbers = #tpu.dot_dimension_numbers<[1], [0], [0], [1], [0, 0, 1, 1], [], []>} : vector<8x48xf32>, vector<48x512xf32>, vector<8x512xf32> -> vector<8x512xf32>
    %806 = vector.extract_strided_slice %803 {offsets = [0, 0], sizes = [8, 512], strides = [1, 1]} : vector<8x1024xf32> to vector<8x512xf32>
    %c120 = arith.constant 120 : index
    %c0_316 = arith.constant 0 : index
    %807 = vector.load %arg11[%c120, %c0_316] : memref<128x512xf32, #tpu.memory_space<vmem>>, vector<8x512xf32>
    %808 = arith.addf %807, %806 : vector<8x512xf32>
    %809 = math.tanh %808 : vector<8x512xf32>
    %810 = vector.extract_strided_slice %809 {offsets = [0, 0], sizes = [8, 48], strides = [1, 1]} : vector<8x512xf32> to vector<8x48xf32>
    %cst_317 = arith.constant 5.000000e-01 : f32
    %811 = vector.broadcast %cst_317 : f32 to vector<8x48xf32>
    %812 = arith.mulf %811, %810 : vector<8x48xf32>
    %cst_318 = arith.constant 5.000000e-01 : f32
    %813 = vector.broadcast %cst_318 : f32 to vector<8x48xf32>
    %814 = arith.addf %812, %813 : vector<8x48xf32>
    %815 = vector.extract_strided_slice %809 {offsets = [0, 128], sizes = [8, 48], strides = [1, 1]} : vector<8x512xf32> to vector<8x48xf32>
    %cst_319 = arith.constant 5.000000e-01 : f32
    %816 = vector.broadcast %cst_319 : f32 to vector<8x48xf32>
    %817 = arith.mulf %816, %815 : vector<8x48xf32>
    %cst_320 = arith.constant 5.000000e-01 : f32
    %818 = vector.broadcast %cst_320 : f32 to vector<8x48xf32>
    %819 = arith.addf %817, %818 : vector<8x48xf32>
    %820 = vector.extract_strided_slice %809 {offsets = [0, 256], sizes = [8, 48], strides = [1, 1]} : vector<8x512xf32> to vector<8x48xf32>
    %821 = vector.extract_strided_slice %809 {offsets = [0, 384], sizes = [8, 48], strides = [1, 1]} : vector<8x512xf32> to vector<8x48xf32>
    %cst_321 = arith.constant 5.000000e-01 : f32
    %822 = vector.broadcast %cst_321 : f32 to vector<8x48xf32>
    %823 = arith.mulf %822, %821 : vector<8x48xf32>
    %cst_322 = arith.constant 5.000000e-01 : f32
    %824 = vector.broadcast %cst_322 : f32 to vector<8x48xf32>
    %825 = arith.addf %823, %824 : vector<8x48xf32>
    %826 = arith.mulf %819, %773 : vector<8x48xf32>
    %827 = arith.mulf %814, %820 : vector<8x48xf32>
    %828 = arith.addf %826, %827 : vector<8x48xf32>
    %829 = math.tanh %828 : vector<8x48xf32>
    %830 = arith.mulf %825, %829 : vector<8x48xf32>
    %831 = vector.extract_strided_slice %803 {offsets = [0, 512], sizes = [8, 512], strides = [1, 1]} : vector<8x1024xf32> to vector<8x512xf32>
    %832 = arith.addf %831, %9 : vector<8x512xf32>
    %833 = arith.addf %832, %805 : vector<8x512xf32>
    %834 = math.tanh %833 : vector<8x512xf32>
    %835 = vector.extract_strided_slice %834 {offsets = [0, 0], sizes = [8, 48], strides = [1, 1]} : vector<8x512xf32> to vector<8x48xf32>
    %cst_323 = arith.constant 5.000000e-01 : f32
    %836 = vector.broadcast %cst_323 : f32 to vector<8x48xf32>
    %837 = arith.mulf %836, %835 : vector<8x48xf32>
    %cst_324 = arith.constant 5.000000e-01 : f32
    %838 = vector.broadcast %cst_324 : f32 to vector<8x48xf32>
    %839 = arith.addf %837, %838 : vector<8x48xf32>
    %840 = vector.extract_strided_slice %834 {offsets = [0, 128], sizes = [8, 48], strides = [1, 1]} : vector<8x512xf32> to vector<8x48xf32>
    %cst_325 = arith.constant 5.000000e-01 : f32
    %841 = vector.broadcast %cst_325 : f32 to vector<8x48xf32>
    %842 = arith.mulf %841, %840 : vector<8x48xf32>
    %cst_326 = arith.constant 5.000000e-01 : f32
    %843 = vector.broadcast %cst_326 : f32 to vector<8x48xf32>
    %844 = arith.addf %842, %843 : vector<8x48xf32>
    %845 = vector.extract_strided_slice %834 {offsets = [0, 256], sizes = [8, 48], strides = [1, 1]} : vector<8x512xf32> to vector<8x48xf32>
    %846 = vector.extract_strided_slice %834 {offsets = [0, 384], sizes = [8, 48], strides = [1, 1]} : vector<8x512xf32> to vector<8x48xf32>
    %cst_327 = arith.constant 5.000000e-01 : f32
    %847 = vector.broadcast %cst_327 : f32 to vector<8x48xf32>
    %848 = arith.mulf %847, %846 : vector<8x48xf32>
    %cst_328 = arith.constant 5.000000e-01 : f32
    %849 = vector.broadcast %cst_328 : f32 to vector<8x48xf32>
    %850 = arith.addf %848, %849 : vector<8x48xf32>
    %851 = arith.mulf %844, %798 : vector<8x48xf32>
    %852 = arith.mulf %839, %845 : vector<8x48xf32>
    %853 = arith.addf %851, %852 : vector<8x48xf32>
    %854 = math.tanh %853 : vector<8x48xf32>
    %855 = arith.mulf %850, %854 : vector<8x48xf32>
    %c112_329 = arith.constant 112 : index
    %c0_330 = arith.constant 0 : index
    %856 = vector.load %arg12[%c112_329, %c0_330] : memref<128x48xf32, #tpu.memory_space<vmem>>, vector<8x48xf32>
    tpu.vector_store %arg12[%c112_329, %c0_330], %855 {strides = array<i32>} : memref<128x48xf32, #tpu.memory_space<vmem>>, vector<8x48xf32>,
    %c0_331 = arith.constant 0 : index
    %c0_332 = arith.constant 0 : index
    %857 = vector.load %arg5[%c0_331, %c0_332] : memref<48x1024xf32, #tpu.memory_space<vmem>>, vector<48x1024xf32>
    %cst_333 = arith.constant dense<0.000000e+00> : vector<8x1024xf32>
    %858 = tpu.matmul %830, %857, %cst_333 {dimension_numbers = #tpu.dot_dimension_numbers<[1], [0], [0], [1], [0, 0, 1, 1], [], []>} : vector<8x48xf32>, vector<48x1024xf32>, vector<8x1024xf32> -> vector<8x1024xf32>
    %c0_334 = arith.constant 0 : index
    %c0_335 = arith.constant 0 : index
    %859 = vector.load %arg6[%c0_334, %c0_335] : memref<48x512xf32, #tpu.memory_space<vmem>>, vector<48x512xf32>
    %cst_336 = arith.constant dense<0.000000e+00> : vector<8x512xf32>
    %860 = tpu.matmul %855, %859, %cst_336 {dimension_numbers = #tpu.dot_dimension_numbers<[1], [0], [0], [1], [0, 0, 1, 1], [], []>} : vector<8x48xf32>, vector<48x512xf32>, vector<8x512xf32> -> vector<8x512xf32>
    %861 = vector.extract_strided_slice %858 {offsets = [0, 512], sizes = [8, 512], strides = [1, 1]} : vector<8x1024xf32> to vector<8x512xf32>
    %862 = arith.addf %861, %9 : vector<8x512xf32>
    %863 = arith.addf %862, %860 : vector<8x512xf32>
    %864 = math.tanh %863 : vector<8x512xf32>
    %865 = vector.extract_strided_slice %864 {offsets = [0, 0], sizes = [8, 48], strides = [1, 1]} : vector<8x512xf32> to vector<8x48xf32>
    %cst_337 = arith.constant 5.000000e-01 : f32
    %866 = vector.broadcast %cst_337 : f32 to vector<8x48xf32>
    %867 = arith.mulf %866, %865 : vector<8x48xf32>
    %cst_338 = arith.constant 5.000000e-01 : f32
    %868 = vector.broadcast %cst_338 : f32 to vector<8x48xf32>
    %869 = arith.addf %867, %868 : vector<8x48xf32>
    %870 = vector.extract_strided_slice %864 {offsets = [0, 128], sizes = [8, 48], strides = [1, 1]} : vector<8x512xf32> to vector<8x48xf32>
    %cst_339 = arith.constant 5.000000e-01 : f32
    %871 = vector.broadcast %cst_339 : f32 to vector<8x48xf32>
    %872 = arith.mulf %871, %870 : vector<8x48xf32>
    %cst_340 = arith.constant 5.000000e-01 : f32
    %873 = vector.broadcast %cst_340 : f32 to vector<8x48xf32>
    %874 = arith.addf %872, %873 : vector<8x48xf32>
    %875 = vector.extract_strided_slice %864 {offsets = [0, 256], sizes = [8, 48], strides = [1, 1]} : vector<8x512xf32> to vector<8x48xf32>
    %876 = vector.extract_strided_slice %864 {offsets = [0, 384], sizes = [8, 48], strides = [1, 1]} : vector<8x512xf32> to vector<8x48xf32>
    %cst_341 = arith.constant 5.000000e-01 : f32
    %877 = vector.broadcast %cst_341 : f32 to vector<8x48xf32>
    %878 = arith.mulf %877, %876 : vector<8x48xf32>
    %cst_342 = arith.constant 5.000000e-01 : f32
    %879 = vector.broadcast %cst_342 : f32 to vector<8x48xf32>
    %880 = arith.addf %878, %879 : vector<8x48xf32>
    %881 = arith.mulf %874, %853 : vector<8x48xf32>
    %882 = arith.mulf %869, %875 : vector<8x48xf32>
    %883 = arith.addf %881, %882 : vector<8x48xf32>
    %884 = math.tanh %883 : vector<8x48xf32>
    %885 = arith.mulf %880, %884 : vector<8x48xf32>
    %c120_343 = arith.constant 120 : index
    %c0_344 = arith.constant 0 : index
    %886 = vector.load %arg12[%c120_343, %c0_344] : memref<128x48xf32, #tpu.memory_space<vmem>>, vector<8x48xf32>
    tpu.vector_store %arg12[%c120_343, %c0_344], %885 {strides = array<i32>} : memref<128x48xf32, #tpu.memory_space<vmem>>, vector<8x48xf32>,
    %c0_345 = arith.constant 0 : index
    %c0_346 = arith.constant 0 : index
    %887 = vector.load %arg2[%c0_345, %c0_346] : memref<16x16xf32, #tpu.memory_space<vmem>>, vector<16x16xf32>
    %c0_347 = arith.constant 0 : index
    %c0_348 = arith.constant 0 : index
    %888 = vector.load %arg8[%c0_347, %c0_348] : memref<48x128xf32, #tpu.memory_space<vmem>>, vector<48x128xf32>
    %c0_349 = arith.constant 0 : index
    %c0_350 = arith.constant 0 : index
    %889 = vector.load %arg9[%c0_349, %c0_350] : memref<1x128xf32, #tpu.memory_space<vmem>>, vector<1x128xf32>
    %c0_351 = arith.constant 0 : index
    %c0_352 = arith.constant 0 : index
    %890 = tpu.strided_load %arg12[%c0_351, %c0_352] {strides = array<i32: 8, 1>} : memref<128x48xf32, #tpu.memory_space<vmem>>, vector<16x48xf32>
    %cst_353 = arith.constant dense<0.000000e+00> : vector<16x48xf32>
    %891 = tpu.matmul %887, %890, %cst_353 {dimension_numbers = #tpu.dot_dimension_numbers<[1], [0], [0], [1], [0, 0, 1, 1], [], []>} : vector<16x16xf32>, vector<16x48xf32>, vector<16x48xf32> -> vector<16x48xf32>
    %cst_354 = arith.constant 0.000000e+00 : f32
    %892 = vector.broadcast %cst_354 : f32 to vector<16x48xf32>
    %893 = arith.maximumf %891, %892 : vector<16x48xf32>
    %cst_355 = arith.constant dense<0.000000e+00> : vector<16x128xf32>
    %894 = tpu.matmul %893, %888, %cst_355 {dimension_numbers = #tpu.dot_dimension_numbers<[1], [0], [0], [1], [0, 0, 1, 1], [], []>} : vector<16x48xf32>, vector<48x128xf32>, vector<16x128xf32> -> vector<16x128xf32>
    %895 = vector.broadcast %889 : vector<1x128xf32> to vector<16x128xf32>
    %896 = arith.addf %894, %895 : vector<16x128xf32>
    %cst_356 = arith.constant dense<0.000000e+00> : vector<16x128xf32>
    %897 = tpu.matmul %887, %896, %cst_356 {dimension_numbers = #tpu.dot_dimension_numbers<[1], [0], [0], [1], [0, 0, 1, 1], [], []>} : vector<16x16xf32>, vector<16x128xf32>, vector<16x128xf32> -> vector<16x128xf32>
    %cst_357 = arith.constant 0.000000e+00 : f32
    %898 = vector.broadcast %cst_357 : f32 to vector<16x128xf32>
    %899 = arith.maximumf %897, %898 : vector<16x128xf32>
    %c0_358 = arith.constant 0 : index
    %c0_359 = arith.constant 0 : index
    %900 = vector.load %arg10[%c0_358, %c0_359] : memref<32x128xf32, #tpu.memory_space<vmem>>, vector<16x128xf32>
    tpu.vector_store %arg10[%c0_358, %c0_359], %899 {strides = array<i32>} : memref<32x128xf32, #tpu.memory_space<vmem>>, vector<16x128xf32>,
    %c1 = arith.constant 1 : index
    %c0_360 = arith.constant 0 : index
    %901 = tpu.strided_load %arg12[%c1, %c0_360] {strides = array<i32: 8, 1>} : memref<128x48xf32, #tpu.memory_space<vmem>>, vector<16x48xf32>
    %cst_361 = arith.constant dense<0.000000e+00> : vector<16x48xf32>
    %902 = tpu.matmul %887, %901, %cst_361 {dimension_numbers = #tpu.dot_dimension_numbers<[1], [0], [0], [1], [0, 0, 1, 1], [], []>} : vector<16x16xf32>, vector<16x48xf32>, vector<16x48xf32> -> vector<16x48xf32>
    %cst_362 = arith.constant 0.000000e+00 : f32
    %903 = vector.broadcast %cst_362 : f32 to vector<16x48xf32>
    %904 = arith.maximumf %902, %903 : vector<16x48xf32>
    %cst_363 = arith.constant dense<0.000000e+00> : vector<16x128xf32>
    %905 = tpu.matmul %904, %888, %cst_363 {dimension_numbers = #tpu.dot_dimension_numbers<[1], [0], [0], [1], [0, 0, 1, 1], [], []>} : vector<16x48xf32>, vector<48x128xf32>, vector<16x128xf32> -> vector<16x128xf32>
    %906 = vector.broadcast %889 : vector<1x128xf32> to vector<16x128xf32>
    %907 = arith.addf %905, %906 : vector<16x128xf32>
    %cst_364 = arith.constant dense<0.000000e+00> : vector<16x128xf32>
    %908 = tpu.matmul %887, %907, %cst_364 {dimension_numbers = #tpu.dot_dimension_numbers<[1], [0], [0], [1], [0, 0, 1, 1], [], []>} : vector<16x16xf32>, vector<16x128xf32>, vector<16x128xf32> -> vector<16x128xf32>
    %cst_365 = arith.constant 0.000000e+00 : f32
    %909 = vector.broadcast %cst_365 : f32 to vector<16x128xf32>
    %910 = arith.maximumf %908, %909 : vector<16x128xf32>
    %c16_366 = arith.constant 16 : index
    %c0_367 = arith.constant 0 : index
    %911 = vector.load %arg10[%c16_366, %c0_367] : memref<32x128xf32, #tpu.memory_space<vmem>>, vector<16x128xf32>
    tpu.vector_store %arg10[%c16_366, %c0_367], %910 {strides = array<i32>} : memref<32x128xf32, #tpu.memory_space<vmem>>, vector<16x128xf32>,
    return
  }
  func.func @transform_0(%arg0: i32) -> (i32, i32) {
    %c0_i32 = arith.constant 0 : i32
    %c0_i32_0 = arith.constant 0 : i32
    %c0_i32_1 = arith.constant 0 : i32
    return %c0_i32, %c0_i32_0 : i32, i32
  }
  func.func @transform_1(%arg0: i32) -> (i32, i32) {
    %c0_i32 = arith.constant 0 : i32
    %c0_i32_0 = arith.constant 0 : i32
    %c0_i32_1 = arith.constant 0 : i32
    return %c0_i32, %c0_i32_0 : i32, i32
  }
  func.func @transform_2(%arg0: i32) -> (i32, i32) {
    %c0_i32 = arith.constant 0 : i32
    %c0_i32_0 = arith.constant 0 : i32
    %c0_i32_1 = arith.constant 0 : i32
    return %c0_i32, %c0_i32_0 : i32, i32
  }
  func.func @transform_3(%arg0: i32) -> (i32, i32) {
    %c0_i32 = arith.constant 0 : i32
    %c0_i32_0 = arith.constant 0 : i32
    %c0_i32_1 = arith.constant 0 : i32
    return %c0_i32, %c0_i32_0 : i32, i32
  }
  func.func @transform_4(%arg0: i32) -> (i32, i32) {
    %c0_i32 = arith.constant 0 : i32
    %c0_i32_0 = arith.constant 0 : i32
    %c0_i32_1 = arith.constant 0 : i32
    return %c0_i32, %c0_i32_0 : i32, i32
  }
  func.func @transform_5(%arg0: i32) -> (i32, i32) {
    %c0_i32 = arith.constant 0 : i32
    %c0_i32_0 = arith.constant 0 : i32
    %c0_i32_1 = arith.constant 0 : i32
    return %c0_i32, %c0_i32_0 : i32, i32
  }
  func.func @transform_6(%arg0: i32) -> (i32, i32) {
    %c0_i32 = arith.constant 0 : i32
    %c0_i32_0 = arith.constant 0 : i32
    %c0_i32_1 = arith.constant 0 : i32
    return %c0_i32, %c0_i32_0 : i32, i32
  }
  func.func @transform_7(%arg0: i32) -> (i32, i32) {
    %c0_i32 = arith.constant 0 : i32
    %c0_i32_0 = arith.constant 0 : i32
    %c0_i32_1 = arith.constant 0 : i32
    return %c0_i32, %c0_i32_0 : i32, i32
  }
  func.func @transform_8(%arg0: i32) -> (i32, i32) {
    %c0_i32 = arith.constant 0 : i32
    %c0_i32_0 = arith.constant 0 : i32
    %c0_i32_1 = arith.constant 0 : i32
    return %c0_i32, %c0_i32_0 : i32, i32
  }
  func.func @transform_9(%arg0: i32) -> (i32, i32) {
    %c0_i32 = arith.constant 0 : i32
    %c0_i32_0 = arith.constant 0 : i32
    %c0_i32_1 = arith.constant 0 : i32
    return %c0_i32, %c0_i32_0 : i32, i32
  }
}

</mosaic_0001>

<llo_original>
// kernel: tpu_custom_call.1
$region0: #{tpu_custom_call.1}
  #allocation0 [shape = 'u32[]', space=smem, size = 0x4, offset = 0x4, fixed_abs, tag = 'smem constant byte address 0x4 - core index']
  #allocation1 [shape = 'u32[144,128]{1,0:T(1,128)}', space=vmem, size = 0x12000, scoped, tag = 'internal scratch']
  #allocation2 [shape = 'f32[128,512]{1,0:T(8,128)}', space=vmem, size = 0x40000, scoped, tag = 'scratch operand']
  #allocation3 [shape = 'f32[128,48]{1,0:T(8,128)}', space=vmem, size = 0x10000, scoped, tag = 'scratch operand']
  %s0 = inlined_call_operand.vmem [shape: f32[128,6], index: 0, kind: input, shape index: {}]
  %s1 = inlined_call_operand.vmem [shape: f32[16,16], index: 1, kind: input, shape index: {}]
  %s2 = inlined_call_operand.vmem [shape: f32[6,512], index: 2, kind: input, shape index: {}]
  %s3 = inlined_call_operand.vmem [shape: f32[1,512], index: 3, kind: input, shape index: {}]
  %s4 = inlined_call_operand.hbm [shape: f32[48,1024], index: 4, kind: input, shape index: {}]
  %s5 = inlined_call_operand.hbm [shape: f32[48,512], index: 5, kind: input, shape index: {}]
  %s6 = inlined_call_operand.vmem [shape: f32[1,512], index: 6, kind: input, shape index: {}]
  %s7 = inlined_call_operand.vmem [shape: f32[48,128], index: 7, kind: input, shape index: {}]
  %s8 = inlined_call_operand.vmem [shape: f32[1,128], index: 8, kind: input, shape index: {}]
  %s9 = inlined_call_operand.hbm [shape: f32[32,128], index: 9, kind: output, shape index: {}]
  %s10 = sld [smem:[#allocation0]]
  $region54: #{tpu_custom_call.1} parent=0
    _
  %s12 = ssub.s32 1, %s10
  %s13 = scalar_select 0, %s12, %s10
  $region1: #{tpu_custom_call.1} parent=0
    #allocation4 [shape = 'u8[196608]{0}', space=vmem, size = 0x30000, scoped, tag = 'input window, operand 4, single buffered']
    #allocation5 [shape = 's32[1]{0}', space=sflag, size = 0x4, scoped, tag = 'scoped memory for tpu_custom_call.1']
    #allocation6 [shape = 's32[1]{0}', space=sflag, size = 0x4, scoped, tag = 'scoped memory for tpu_custom_call.1']
    #allocation7 [shape = 'u8[98304]{0}', space=vmem, size = 0x18000, scoped, tag = 'input window, operand 5, single buffered']
    #allocation8 [shape = 's32[1]{0}', space=sflag, size = 0x4, scoped, tag = 'scoped memory for tpu_custom_call.1']
    #allocation9 [shape = 'u8[16384]{0}', space=vmem, size = 0x4000, scoped, tag = 'output window, operand 0, single buffered']
    %14 = vsyncpa [#allocation5], 0
    %15 = vsyncpa [#allocation8], 0
    %16 = vsyncpa [#allocation6], 0
    // Predicated region
    $region2: #{tpu_custom_call.1} parent=1 // pred_check
      _
    $region3: #{tpu_custom_call.1} parent=1 // pred_check_branch
      %18 = sbr.rel (0) target = $region5
    $region4: #{tpu_custom_call.1} parent=1 // pred_region
      _
    $region5: #{tpu_custom_call.1} parent=1 // pred_fallthru
      _
    // Predicated region
    $region6: #{tpu_custom_call.1} parent=1 // pred_check
      _
    $region7: #{tpu_custom_call.1} parent=1 // pred_check_branch
      %20 = sbr.rel (0) target = $region9
    $region8: #{tpu_custom_call.1} parent=1 // pred_region
      _
    $region9: #{tpu_custom_call.1} parent=1 // pred_fallthru
      _
    // Predicated region
    $region10: #{tpu_custom_call.1} parent=1 // pred_check
      _
    $region11: #{tpu_custom_call.1} parent=1 // pred_check_branch
      %22 = sbr.rel (0) target = $region13
    $region12: #{tpu_custom_call.1} parent=1 // pred_region
      _
    $region13: #{tpu_custom_call.1} parent=1 // pred_fallthru
      _
    // Predicated region
    $region14: #{tpu_custom_call.1} parent=1 // pred_check
      _
    $region15: #{tpu_custom_call.1} parent=1 // pred_check_branch
      %24 = sbr.rel (0) target = $region17
    $region16: #{tpu_custom_call.1} parent=1 // pred_region
      _
    $region17: #{tpu_custom_call.1} parent=1 // pred_fallthru
      _
    // Predicated region
    $region18: #{tpu_custom_call.1} parent=1 // pred_check
      _
    $region19: #{tpu_custom_call.1} parent=1 // pred_check_branch
      %26 = sbr.rel (0) target = $region21
    $region20: #{tpu_custom_call.1} parent=1 // pred_region
      %s28 = ssub.s32 6144, 6144
      %29 = vsyncadd [#allocation5], %s28
      %s30 = sshll.u32 [#allocation4], 4
      %s31 = int_to_ptr.vmem [resolvable:$true] %s30
      %36 = dma.hbm_to_vmem [thread:$0]  %s4, 6144, %s31, [#allocation5], 1024, 1024, 64
    $region21: #{tpu_custom_call.1} parent=1 // pred_fallthru
      _
    // Predicated region
    $region22: #{tpu_custom_call.1} parent=1 // pred_check
      _
    $region23: #{tpu_custom_call.1} parent=1 // pred_check_branch
      %38 = sbr.rel (0) target = $region25
    $region24: #{tpu_custom_call.1} parent=1 // pred_region
      %s40 = ssub.s32 3072, 3072
      %41 = vsyncadd [#allocation8], %s40
      %s42 = sshll.u32 [#allocation7], 4
      %s43 = int_to_ptr.vmem [resolvable:$true] %s42
      %48 = dma.hbm_to_vmem [thread:$0]  %s5, 3072, %s43, [#allocation8], 512, 512, 32
    $region25: #{tpu_custom_call.1} parent=1 // pred_fallthru
      _
    // Predicated region
    $region26: #{tpu_custom_call.1} parent=1 // pred_check
      _
    $region27: #{tpu_custom_call.1} parent=1 // pred_check_branch
      %50 = sbr.rel (0) target = $region29
    $region28: #{tpu_custom_call.1} parent=1 // pred_region
      _
    $region29: #{tpu_custom_call.1} parent=1 // pred_fallthru
      _
    // Predicated region
    $region30: #{tpu_custom_call.1} parent=1 // pred_check
      _
    $region31: #{tpu_custom_call.1} parent=1 // pred_check_branch
      %52 = sbr.rel (0) target = $region33
    $region32: #{tpu_custom_call.1} parent=1 // pred_region
      _
    $region33: #{tpu_custom_call.1} parent=1 // pred_fallthru
      _
    // Predicated region
    $region34: #{tpu_custom_call.1} parent=1 // pred_check
      _
    $region35: #{tpu_custom_call.1} parent=1 // pred_check_branch
      %54 = sbr.rel (0) target = $region37
    $region36: #{tpu_custom_call.1} parent=1 // pred_region
      _
    $region37: #{tpu_custom_call.1} parent=1 // pred_fallthru
      _
    // Predicated region
    $region38: #{tpu_custom_call.1} parent=1 // pred_check
      _
    $region39: #{tpu_custom_call.1} parent=1 // pred_check_branch
      %56 = sbr.rel (0) target = $region41
    $region40: #{tpu_custom_call.1} parent=1 // pred_region
      %57 = dma.done [#allocation5], 6144
    $region41: #{tpu_custom_call.1} parent=1 // pred_fallthru
      _
    // Predicated region
    $region42: #{tpu_custom_call.1} parent=1 // pred_check
      _
    $region43: #{tpu_custom_call.1} parent=1 // pred_check_branch
      %59 = sbr.rel (0) target = $region45
    $region44: #{tpu_custom_call.1} parent=1 // pred_region
      %60 = dma.done [#allocation8], 3072
    $region45: #{tpu_custom_call.1} parent=1 // pred_fallthru
      _
    %v61 = vld [vmem:[%s0] sm:$0xff]
    %v62 = vld [vmem:[%s0 + $0x8] sm:$0xff]
    %v63 = vld [vmem:[%s0 + $0x10] sm:$0xff]
    %v64 = vld [vmem:[%s0 + $0x18] sm:$0xff]
    %v65 = vld [vmem:[%s0 + $0x20] sm:$0xff]
    %v66 = vld [vmem:[%s0 + $0x28] sm:$0xff]
    %v67 = vld [vmem:[%s0 + $0x30] sm:$0xff]
    %v68 = vld [vmem:[%s0 + $0x38] sm:$0xff]
    %v69 = vld [vmem:[%s0 + $0x40] sm:$0xff]
    %v70 = vld [vmem:[%s0 + $0x48] sm:$0xff]
    %v71 = vld [vmem:[%s0 + $0x50] sm:$0xff]
    %v72 = vld [vmem:[%s0 + $0x58] sm:$0xff]
    %v73 = vld [vmem:[%s0 + $0x60] sm:$0xff]
    %v74 = vld [vmem:[%s0 + $0x68] sm:$0xff]
    %v75 = vld [vmem:[%s0 + $0x70] sm:$0xff]
    %v76 = vld [vmem:[%s0 + $0x78] sm:$0xff]
    %v77 = vld [vmem:[%s2] sm:$0x3f]
    %v78 = vld [vmem:[%s2 + $0x8] sm:$0x3f]
    %v79 = vld [vmem:[%s2 + $0x10] sm:$0x3f]
    %v80 = vld [vmem:[%s2 + $0x18] sm:$0x3f]
    %v81 = vld [vmem:[%s3] sm:$0xf]
    %v83 = vlaneseq
    %v84 = vshrl.u32 %v83, 7
    %v85 = vsub.s32 0, %v84
    %v86 = vrot.slane %v81, %v85
    %v87 = vlaneseq
    %v88 = vshrl.u32 %v87, 7
    %v89 = vsub.s32 1, %v88
    %v90 = vrot.slane %v81, %v89
    %v91 = vlaneseq
    %v92 = vshrl.u32 %v91, 7
    %v93 = vsub.s32 2, %v92
    %v94 = vrot.slane %v81, %v93
    %v95 = vlaneseq
    %v96 = vshrl.u32 %v95, 7
    %v97 = vsub.s32 3, %v96
    %v98 = vrot.slane %v81, %v97
    %vm103 = vcmask 48128
    %v105 = vsel %vm103, %v61, 0
    %v108 = vsel %vm103, %v62, 0
    %v111 = vsel %vm103, %v63, 0
    %v114 = vsel %vm103, %v64, 0
    %v117 = vsel %vm103, %v65, 0
    %v120 = vsel %vm103, %v66, 0
    %v123 = vsel %vm103, %v67, 0
    %v126 = vsel %vm103, %v68, 0
    %v129 = vsel %vm103, %v69, 0
    %v132 = vsel %vm103, %v70, 0
    %v135 = vsel %vm103, %v71, 0
    %v138 = vsel %vm103, %v72, 0
    %v141 = vsel %vm103, %v73, 0
    %v144 = vsel %vm103, %v74, 0
    %v147 = vsel %vm103, %v75, 0
    %v150 = vsel %vm103, %v76, 0
    %vm152 = vcmask 1045504
    %v154 = vsel %vm152, %v77, 0
    %v157 = vsel %vm152, %v78, 0
    %v160 = vsel %vm152, %v79, 0
    %v163 = vsel %vm152, %v80, 0
    %165 = vmatprep.subr.mxu0 %v157
    %166 = vmatpush1.msra.mxu0 %v154
    %167 = vmatprep.subr.mxu0 0.0
    %168 = vmatpush1.msra.mxu0 0.0
    %169 = vmatprep.subr.mxu0 0.0
    %170 = vmatpush1.msra.mxu0 0.0
    %171 = vmatprep.subr.mxu0 0.0
    %172 = vmatpush1.msra.mxu0 0.0
    %173 = vmatprep.subr.mxu0 0.0
    %174 = vmatpush1.msra.mxu0 0.0
    %175 = vmatprep.subr.mxu0 0.0
    %176 = vmatpush1.msra.mxu0 0.0
    %177 = vmatprep.subr.mxu0 0.0
    %178 = vmatpush1.msra.mxu0 0.0
    %179 = vmatprep.subr.mxu0 0.0
    %180 = vmatpush1.msra.mxu0 0.0
    %181 = vmatprep.subr.mxu0 0.0
    %182 = vmatpush1.msra.mxu0 0.0
    %183 = vmatprep.subr.mxu0 0.0
    %184 = vmatpush1.msra.mxu0 0.0
    %185 = vmatprep.subr.mxu0 0.0
    %186 = vmatpush1.msra.mxu0 0.0
    %187 = vmatprep.subr.mxu0 0.0
    %188 = vmatpush1.msra.mxu0 0.0
    %189 = vmatprep.subr.mxu0 0.0
    %190 = vmatpush1.msra.mxu0 0.0
    %191 = vmatprep.subr.mxu0 0.0
    %192 = vmatpush1.msra.mxu0 0.0
    %193 = vmatprep.subr.mxu0 0.0
    %194 = vmatpush1.msra.mxu0 0.0
    %195 = vmatprep.subr.mxu0 0.0
    %196 = vmatpush1.msra.mxu0 0.0
    %197 = vmatprep.subr.mxu0 0.0
    %198 = vmatpush1.msra.mxu0 0.0
    %199 = vmatprep.subr.mxu0 0.0
    %200 = vmatpush1.msra.mxu0 0.0
    %201 = vmatprep.subr.mxu0 0.0
    %202 = vmatpush1.msra.mxu0 0.0
    %203 = vmatprep.subr.mxu0 0.0
    %204 = vmatpush1.msra.mxu0 0.0
    %205 = vmatprep.subr.mxu0 0.0
    %206 = vmatpush1.msra.mxu0 0.0
    %207 = vmatprep.subr.mxu0 0.0
    %208 = vmatpush1.msra.mxu0 0.0
    %209 = vmatprep.subr.mxu0 0.0
    %210 = vmatpush1.msra.mxu0 0.0
    %211 = vmatprep.subr.mxu0 0.0
    %212 = vmatpush1.msra.mxu0 0.0
    %213 = vmatprep.subr.mxu0 0.0
    %214 = vmatpush1.msra.mxu0 0.0
    %215 = vmatprep.subr.mxu0 0.0
    %216 = vmatpush1.msra.mxu0 0.0
    %217 = vmatprep.subr.mxu0 0.0
    %218 = vmatpush1.msra.mxu0 0.0
    %219 = vmatprep.subr.mxu0 0.0
    %220 = vmatpush1.msra.mxu0 0.0
    %221 = vmatprep.subr.mxu0 0.0
    %222 = vmatpush1.msra.mxu0 0.0
    %223 = vmatprep.subr.mxu0 0.0
    %224 = vmatpush1.msra.mxu0 0.0
    %225 = vmatprep.subr.mxu0 0.0
    %226 = vmatpush1.msra.mxu0 0.0
    %227 = vmatprep.subr.mxu0 0.0
    %228 = vmatpush1.msra.mxu0 0.0
    %229 = vmatprep.mubr.f32.mxu0 0.0
    %230 = vmatmul.mubr.f32.gmra.mrb[0].mxu0 %v105
    %v231 = vpop.f32.mrb[0].mxu0
    %v232 = vadd.f32 %v86, %v231
    %v233 = vpop.f32.mrb[0].mxu0
    %v234 = vadd.f32 %v90, %v233
    %235 = vmatprep.mubr.f32.mxu0 0.0
    %236 = vmatmul.mubr.f32.gmra.mrb[0].mxu0 %v108
    %v237 = vpop.f32.mrb[0].mxu0
    %v238 = vadd.f32 %v86, %v237
    %v239 = vpop.f32.mrb[0].mxu0
    %v240 = vadd.f32 %v90, %v239
    %241 = vmatprep.mubr.f32.mxu0 0.0
    %242 = vmatmul.mubr.f32.gmra.mrb[0].mxu0 %v111
    %v243 = vpop.f32.mrb[0].mxu0
    %v244 = vadd.f32 %v86, %v243
    %v245 = vpop.f32.mrb[0].mxu0
    %v246 = vadd.f32 %v90, %v245
    %247 = vmatprep.mubr.f32.mxu0 0.0
    %248 = vmatmul.mubr.f32.gmra.mrb[0].mxu0 %v114
    %v249 = vpop.f32.mrb[0].mxu0
    %v250 = vadd.f32 %v86, %v249
    %v251 = vpop.f32.mrb[0].mxu0
    %v252 = vadd.f32 %v90, %v251
    %253 = vmatprep.mubr.f32.mxu0 0.0
    %254 = vmatmul.mubr.f32.gmra.mrb[0].mxu0 %v117
    %v255 = vpop.f32.mrb[0].mxu0
    %v256 = vadd.f32 %v86, %v255
    %v257 = vpop.f32.mrb[0].mxu0
    %v258 = vadd.f32 %v90, %v257
    %259 = vmatprep.mubr.f32.mxu0 0.0
    %260 = vmatmul.mubr.f32.gmra.mrb[0].mxu0 %v120
    %v261 = vpop.f32.mrb[0].mxu0
    %v262 = vadd.f32 %v86, %v261
    %v263 = vpop.f32.mrb[0].mxu0
    %v264 = vadd.f32 %v90, %v263
    %265 = vmatprep.mubr.f32.mxu0 0.0
    %266 = vmatmul.mubr.f32.gmra.mrb[0].mxu0 %v123
    %v267 = vpop.f32.mrb[0].mxu0
    %v268 = vadd.f32 %v86, %v267
    %v269 = vpop.f32.mrb[0].mxu0
    %v270 = vadd.f32 %v90, %v269
    %271 = vmatprep.mubr.f32.mxu0 0.0
    %272 = vmatmul.mubr.f32.gmra.mrb[0].mxu0 %v126
    %v273 = vpop.f32.mrb[0].mxu0
    %v274 = vadd.f32 %v86, %v273
    %v275 = vpop.f32.mrb[0].mxu0
    %v276 = vadd.f32 %v90, %v275
    %277 = vmatprep.mubr.f32.mxu0 0.0
    %278 = vmatmul.mubr.f32.gmra.mrb[0].mxu0 %v129
    %v279 = vpop.f32.mrb[0].mxu0
    %v280 = vadd.f32 %v86, %v279
    %v281 = vpop.f32.mrb[0].mxu0
    %v282 = vadd.f32 %v90, %v281
    %283 = vmatprep.mubr.f32.mxu0 0.0
    %284 = vmatmul.mubr.f32.gmra.mrb[0].mxu0 %v132
    %v285 = vpop.f32.mrb[0].mxu0
    %v286 = vadd.f32 %v86, %v285
    %v287 = vpop.f32.mrb[0].mxu0
    %v288 = vadd.f32 %v90, %v287
    %289 = vmatprep.mubr.f32.mxu0 0.0
    %290 = vmatmul.mubr.f32.gmra.mrb[0].mxu0 %v135
    %v291 = vpop.f32.mrb[0].mxu0
    %v292 = vadd.f32 %v86, %v291
    %v293 = vpop.f32.mrb[0].mxu0
    %v294 = vadd.f32 %v90, %v293
    %295 = vmatprep.mubr.f32.mxu0 0.0
    %296 = vmatmul.mubr.f32.gmra.mrb[0].mxu0 %v138
    %v297 = vpop.f32.mrb[0].mxu0
    %v298 = vadd.f32 %v86, %v297
    %v299 = vpop.f32.mrb[0].mxu0
    %v300 = vadd.f32 %v90, %v299
    %301 = vmatprep.mubr.f32.mxu0 0.0
    %302 = vmatmul.mubr.f32.gmra.mrb[0].mxu0 %v141
    %v303 = vpop.f32.mrb[0].mxu0
    %v304 = vadd.f32 %v86, %v303
    %v305 = vpop.f32.mrb[0].mxu0
    %v306 = vadd.f32 %v90, %v305
    %307 = vmatprep.mubr.f32.mxu0 0.0
    %308 = vmatmul.mubr.f32.gmra.mrb[0].mxu0 %v144
    %v309 = vpop.f32.mrb[0].mxu0
    %v310 = vadd.f32 %v86, %v309
    %v311 = vpop.f32.mrb[0].mxu0
    %v312 = vadd.f32 %v90, %v311
    %313 = vmatprep.mubr.f32.mxu0 0.0
    %314 = vmatmul.mubr.f32.gmra.mrb[0].mxu0 %v147
    %v315 = vpop.f32.mrb[0].mxu0
    %v316 = vadd.f32 %v86, %v315
    %v317 = vpop.f32.mrb[0].mxu0
    %v318 = vadd.f32 %v90, %v317
    %319 = vmatprep.mubr.f32.mxu0 0.0
    %320 = vmatmul.mubr.f32.gmra.mrb[0].mxu0 %v150
    %v321 = vpop.f32.mrb[0].mxu0
    %v322 = vadd.f32 %v86, %v321
    %v323 = vpop.f32.mrb[0].mxu0
    %v324 = vadd.f32 %v90, %v323
    %325 = vdwg.mxu0
    %326 = vmatprep.subr.mxu0 %v163
    %327 = vmatpush1.msra.mxu0 %v160
    %328 = vmatprep.subr.mxu0 0.0
    %329 = vmatpush1.msra.mxu0 0.0
    %330 = vmatprep.subr.mxu0 0.0
    %331 = vmatpush1.msra.mxu0 0.0
    %332 = vmatprep.subr.mxu0 0.0
    %333 = vmatpush1.msra.mxu0 0.0
    %334 = vmatprep.subr.mxu0 0.0
    %335 = vmatpush1.msra.mxu0 0.0
    %336 = vmatprep.subr.mxu0 0.0
    %337 = vmatpush1.msra.mxu0 0.0
    %338 = vmatprep.subr.mxu0 0.0
    %339 = vmatpush1.msra.mxu0 0.0
    %340 = vmatprep.subr.mxu0 0.0
    %341 = vmatpush1.msra.mxu0 0.0
    %342 = vmatprep.subr.mxu0 0.0
    %343 = vmatpush1.msra.mxu0 0.0
    %344 = vmatprep.subr.mxu0 0.0
    %345 = vmatpush1.msra.mxu0 0.0
    %346 = vmatprep.subr.mxu0 0.0
    %347 = vmatpush1.msra.mxu0 0.0
    %348 = vmatprep.subr.mxu0 0.0
    %349 = vmatpush1.msra.mxu0 0.0
    %350 = vmatprep.subr.mxu0 0.0
    %351 = vmatpush1.msra.mxu0 0.0
    %352 = vmatprep.subr.mxu0 0.0
    %353 = vmatpush1.msra.mxu0 0.0
    %354 = vmatprep.subr.mxu0 0.0
    %355 = vmatpush1.msra.mxu0 0.0
    %356 = vmatprep.subr.mxu0 0.0
    %357 = vmatpush1.msra.mxu0 0.0
    %358 = vmatprep.subr.mxu0 0.0
    %359 = vmatpush1.msra.mxu0 0.0
    %360 = vmatprep.subr.mxu0 0.0
    %361 = vmatpush1.msra.mxu0 0.0
    %362 = vmatprep.subr.mxu0 0.0
    %363 = vmatpush1.msra.mxu0 0.0
    %364 = vmatprep.subr.mxu0 0.0
    %365 = vmatpush1.msra.mxu0 0.0
    %366 = vmatprep.subr.mxu0 0.0
    %367 = vmatpush1.msra.mxu0 0.0
    %368 = vmatprep.subr.mxu0 0.0
    %369 = vmatpush1.msra.mxu0 0.0
    %370 = vmatprep.subr.mxu0 0.0
    %371 = vmatpush1.msra.mxu0 0.0
    %372 = vmatprep.subr.mxu0 0.0
    %373 = vmatpush1.msra.mxu0 0.0
    %374 = vmatprep.subr.mxu0 0.0
    %375 = vmatpush1.msra.mxu0 0.0
    %376 = vmatprep.subr.mxu0 0.0
    %377 = vmatpush1.msra.mxu0 0.0
    %378 = vmatprep.subr.mxu0 0.0
    %379 = vmatpush1.msra.mxu0 0.0
    %380 = vmatprep.subr.mxu0 0.0
    %381 = vmatpush1.msra.mxu0 0.0
    %382 = vmatprep.subr.mxu0 0.0
    %383 = vmatpush1.msra.mxu0 0.0
    %384 = vmatprep.subr.mxu0 0.0
    %385 = vmatpush1.msra.mxu0 0.0
    %386 = vmatprep.subr.mxu0 0.0
    %387 = vmatpush1.msra.mxu0 0.0
    %388 = vmatprep.subr.mxu0 0.0
    %389 = vmatpush1.msra.mxu0 0.0
    %390 = vmatprep.mubr.f32.mxu0 0.0
    %391 = vmatmul.mubr.f32.gmra.mrb[0].mxu0 %v105
    %v392 = vpop.f32.mrb[0].mxu0
    %v393 = vadd.f32 %v94, %v392
    %v394 = vpop.f32.mrb[0].mxu0
    %v395 = vadd.f32 %v98, %v394
    %396 = vmatprep.mubr.f32.mxu0 0.0
    %397 = vmatmul.mubr.f32.gmra.mrb[0].mxu0 %v108
    %v398 = vpop.f32.mrb[0].mxu0
    %v399 = vadd.f32 %v94, %v398
    %v400 = vpop.f32.mrb[0].mxu0
    %v401 = vadd.f32 %v98, %v400
    %402 = vmatprep.mubr.f32.mxu0 0.0
    %403 = vmatmul.mubr.f32.gmra.mrb[0].mxu0 %v111
    %v404 = vpop.f32.mrb[0].mxu0
    %v405 = vadd.f32 %v94, %v404
    %v406 = vpop.f32.mrb[0].mxu0
    %v407 = vadd.f32 %v98, %v406
    %408 = vmatprep.mubr.f32.mxu0 0.0
    %409 = vmatmul.mubr.f32.gmra.mrb[0].mxu0 %v114
    %v410 = vpop.f32.mrb[0].mxu0
    %v411 = vadd.f32 %v94, %v410
    %v412 = vpop.f32.mrb[0].mxu0
    %v413 = vadd.f32 %v98, %v412
    %414 = vmatprep.mubr.f32.mxu0 0.0
    %415 = vmatmul.mubr.f32.gmra.mrb[0].mxu0 %v117
    %v416 = vpop.f32.mrb[0].mxu0
    %v417 = vadd.f32 %v94, %v416
    %v418 = vpop.f32.mrb[0].mxu0
    %v419 = vadd.f32 %v98, %v418
    %420 = vmatprep.mubr.f32.mxu0 0.0
    %421 = vmatmul.mubr.f32.gmra.mrb[0].mxu0 %v120
    %v422 = vpop.f32.mrb[0].mxu0
    %v423 = vadd.f32 %v94, %v422
    %v424 = vpop.f32.mrb[0].mxu0
    %v425 = vadd.f32 %v98, %v424
    %426 = vmatprep.mubr.f32.mxu0 0.0
    %427 = vmatmul.mubr.f32.gmra.mrb[0].mxu0 %v123
    %v428 = vpop.f32.mrb[0].mxu0
    %v429 = vadd.f32 %v94, %v428
    %v430 = vpop.f32.mrb[0].mxu0
    %v431 = vadd.f32 %v98, %v430
    %432 = vmatprep.mubr.f32.mxu0 0.0
    %433 = vmatmul.mubr.f32.gmra.mrb[0].mxu0 %v126
    %v434 = vpop.f32.mrb[0].mxu0
    %v435 = vadd.f32 %v94, %v434
    %v436 = vpop.f32.mrb[0].mxu0
    %v437 = vadd.f32 %v98, %v436
    %438 = vmatprep.mubr.f32.mxu0 0.0
    %439 = vmatmul.mubr.f32.gmra.mrb[0].mxu0 %v129
    %v440 = vpop.f32.mrb[0].mxu0
    %v441 = vadd.f32 %v94, %v440
    %v442 = vpop.f32.mrb[0].mxu0
    %v443 = vadd.f32 %v98, %v442
    %444 = vmatprep.mubr.f32.mxu0 0.0
    %445 = vmatmul.mubr.f32.gmra.mrb[0].mxu0 %v132
    %v446 = vpop.f32.mrb[0].mxu0
    %v447 = vadd.f32 %v94, %v446
    %v448 = vpop.f32.mrb[0].mxu0
    %v449 = vadd.f32 %v98, %v448
    %450 = vmatprep.mubr.f32.mxu0 0.0
    %451 = vmatmul.mubr.f32.gmra.mrb[0].mxu0 %v135
    %v452 = vpop.f32.mrb[0].mxu0
    %v453 = vadd.f32 %v94, %v452
    %v454 = vpop.f32.mrb[0].mxu0
    %v455 = vadd.f32 %v98, %v454
    %456 = vmatprep.mubr.f32.mxu0 0.0
    %457 = vmatmul.mubr.f32.gmra.mrb[0].mxu0 %v138
    %v458 = vpop.f32.mrb[0].mxu0
    %v459 = vadd.f32 %v94, %v458
    %v460 = vpop.f32.mrb[0].mxu0
    %v461 = vadd.f32 %v98, %v460
    %462 = vmatprep.mubr.f32.mxu0 0.0
    %463 = vmatmul.mubr.f32.gmra.mrb[0].mxu0 %v141
    %v464 = vpop.f32.mrb[0].mxu0
    %v465 = vadd.f32 %v94, %v464
    %v466 = vpop.f32.mrb[0].mxu0
    %v467 = vadd.f32 %v98, %v466
    %468 = vmatprep.mubr.f32.mxu0 0.0
    %469 = vmatmul.mubr.f32.gmra.mrb[0].mxu0 %v144
    %v470 = vpop.f32.mrb[0].mxu0
    %v471 = vadd.f32 %v94, %v470
    %v472 = vpop.f32.mrb[0].mxu0
    %v473 = vadd.f32 %v98, %v472
    %474 = vmatprep.mubr.f32.mxu0 0.0
    %475 = vmatmul.mubr.f32.gmra.mrb[0].mxu0 %v147
    %v476 = vpop.f32.mrb[0].mxu0
    %v477 = vadd.f32 %v94, %v476
    %v478 = vpop.f32.mrb[0].mxu0
    %v479 = vadd.f32 %v98, %v478
    %480 = vmatprep.mubr.f32.mxu0 0.0
    %481 = vmatmul.mubr.f32.gmra.mrb[0].mxu0 %v150
    %v482 = vpop.f32.mrb[0].mxu0
    %v483 = vadd.f32 %v94, %v482
    %v484 = vpop.f32.mrb[0].mxu0
    %v485 = vadd.f32 %v98, %v484
    %486 = vdwg.mxu0
    %487 = vst [vmem:[#allocation2] sm:$0xff] %v232
    %488 = vst [vmem:[#allocation2 + $0x8] sm:$0xff] %v234
    %489 = vst [vmem:[#allocation2 + $0x10] sm:$0xff] %v393
    %490 = vst [vmem:[#allocation2 + $0x18] sm:$0xff] %v395
    %491 = vst [vmem:[#allocation2 + $0x20] sm:$0xff] %v238
    %492 = vst [vmem:[#allocation2 + $0x28] sm:$0xff] %v240
    %493 = vst [vmem:[#allocation2 + $0x30] sm:$0xff] %v399
    %494 = vst [vmem:[#allocation2 + $0x38] sm:$0xff] %v401
    %495 = vst [vmem:[#allocation2 + $0x40] sm:$0xff] %v244
    %496 = vst [vmem:[#allocation2 + $0x48] sm:$0xff] %v246
    %497 = vst [vmem:[#allocation2 + $0x50] sm:$0xff] %v405
    %498 = vst [vmem:[#allocation2 + $0x58] sm:$0xff] %v407
    %499 = vst [vmem:[#allocation2 + $0x60] sm:$0xff] %v250
    %500 = vst [vmem:[#allocation2 + $0x68] sm:$0xff] %v252
    %501 = vst [vmem:[#allocation2 + $0x70] sm:$0xff] %v411
    %502 = vst [vmem:[#allocation2 + $0x78] sm:$0xff] %v413
    %503 = vst [vmem:[#allocation2 + $0x80] sm:$0xff] %v256
    %504 = vst [vmem:[#allocation2 + $0x88] sm:$0xff] %v258
    %505 = vst [vmem:[#allocation2 + $0x90] sm:$0xff] %v417
    %506 = vst [vmem:[#allocation2 + $0x98] sm:$0xff] %v419
    %507 = vst [vmem:[#allocation2 + $0xa0] sm:$0xff] %v262
    %508 = vst [vmem:[#allocation2 + $0xa8] sm:$0xff] %v264
    %509 = vst [vmem:[#allocation2 + $0xb0] sm:$0xff] %v423
    %510 = vst [vmem:[#allocation2 + $0xb8] sm:$0xff] %v425
    %511 = vst [vmem:[#allocation2 + $0xc0] sm:$0xff] %v268
    %512 = vst [vmem:[#allocation2 + $0xc8] sm:$0xff] %v270
    %513 = vst [vmem:[#allocation2 + $0xd0] sm:$0xff] %v429
    %514 = vst [vmem:[#allocation2 + $0xd8] sm:$0xff] %v431
    %515 = vst [vmem:[#allocation2 + $0xe0] sm:$0xff] %v274
    %516 = vst [vmem:[#allocation2 + $0xe8] sm:$0xff] %v276
    %517 = vst [vmem:[#allocation2 + $0xf0] sm:$0xff] %v435
    %518 = vst [vmem:[#allocation2 + $0xf8] sm:$0xff] %v437
    %519 = vst [vmem:[#allocation2 + $0x100] sm:$0xff] %v280
    %520 = vst [vmem:[#allocation2 + $0x108] sm:$0xff] %v282
    %521 = vst [vmem:[#allocation2 + $0x110] sm:$0xff] %v441
    %522 = vst [vmem:[#allocation2 + $0x118] sm:$0xff] %v443
    %523 = vst [vmem:[#allocation2 + $0x120] sm:$0xff] %v286
    %524 = vst [vmem:[#allocation2 + $0x128] sm:$0xff] %v288
    %525 = vst [vmem:[#allocation2 + $0x130] sm:$0xff] %v447
    %526 = vst [vmem:[#allocation2 + $0x138] sm:$0xff] %v449
    %527 = vst [vmem:[#allocation2 + $0x140] sm:$0xff] %v292
    %528 = vst [vmem:[#allocation2 + $0x148] sm:$0xff] %v294
    %529 = vst [vmem:[#allocation2 + $0x150] sm:$0xff] %v453
    %530 = vst [vmem:[#allocation2 + $0x158] sm:$0xff] %v455
    %531 = vst [vmem:[#allocation2 + $0x160] sm:$0xff] %v298
    %532 = vst [vmem:[#allocation2 + $0x168] sm:$0xff] %v300
    %533 = vst [vmem:[#allocation2 + $0x170] sm:$0xff] %v459
    %534 = vst [vmem:[#allocation2 + $0x178] sm:$0xff] %v461
    %535 = vst [vmem:[#allocation2 + $0x180] sm:$0xff] %v304
    %536 = vst [vmem:[#allocation2 + $0x188] sm:$0xff] %v306
    %537 = vst [vmem:[#allocation2 + $0x190] sm:$0xff] %v465
    %538 = vst [vmem:[#allocation2 + $0x198] sm:$0xff] %v467
    %539 = vst [vmem:[#allocation2 + $0x1a0] sm:$0xff] %v310
    %540 = vst [vmem:[#allocation2 + $0x1a8] sm:$0xff] %v312
    %541 = vst [vmem:[#allocation2 + $0x1b0] sm:$0xff] %v471
    %542 = vst [vmem:[#allocation2 + $0x1b8] sm:$0xff] %v473
    %543 = vst [vmem:[#allocation2 + $0x1c0] sm:$0xff] %v316
    %544 = vst [vmem:[#allocation2 + $0x1c8] sm:$0xff] %v318
    %545 = vst [vmem:[#allocation2 + $0x1d0] sm:$0xff] %v477
    %546 = vst [vmem:[#allocation2 + $0x1d8] sm:$0xff] %v479
    %547 = vst [vmem:[#allocation2 + $0x1e0] sm:$0xff] %v322
    %548 = vst [vmem:[#allocation2 + $0x1e8] sm:$0xff] %v324
    %549 = vst [vmem:[#allocation2 + $0x1f0] sm:$0xff] %v483
    %550 = vst [vmem:[#allocation2 + $0x1f8] sm:$0xff] %v485
    %v551 = vld [vmem:[%s6] sm:$0xf]
    %v553 = vlaneseq
    %v554 = vshrl.u32 %v553, 7
    %v555 = vsub.s32 0, %v554
    %v556 = vrot.slane %v551, %v555
    %v557 = vlaneseq
    %v558 = vshrl.u32 %v557, 7
    %v559 = vsub.s32 1, %v558
    %v560 = vrot.slane %v551, %v559
    %v561 = vlaneseq
    %v562 = vshrl.u32 %v561, 7
    %v563 = vsub.s32 2, %v562
    %v564 = vrot.slane %v551, %v563
    %v565 = vlaneseq
    %v566 = vshrl.u32 %v565, 7
    %v567 = vsub.s32 3, %v566
    %v568 = vrot.slane %v551, %v567
    %v573 = vld [vmem:[#allocation2] sm:$0xff]
    %v574 = vld [vmem:[#allocation2 + $0x8] sm:$0xff]
    %v575 = vld [vmem:[#allocation2 + $0x10] sm:$0xff]
    %v576 = vld [vmem:[#allocation2 + $0x18] sm:$0xff]
    %v577 = vtanh.pop %v573
    %v578 = vtanh.pop %v574
    %v579 = vtanh.pop %v575
    %v580 = vtanh.pop %v576
    %v581 = vmul.f32 %v577, 0.5
    %v582 = vadd.f32 %v581, 0.5
    %v583 = vmul.f32 %v578, 0.5
    %v584 = vadd.f32 %v583, 0.5
    %v585 = vmul.f32 %v580, 0.5
    %v586 = vadd.f32 %v585, 0.5
    %v587 = vmul.f32 %v584, 0.0
    %v588 = vmul.f32 %v582, %v579
    %v589 = vadd.f32 %v587, %v588
    %v590 = vtanh.pop %v589
    %v591 = vmul.f32 %v586, %v590
    %v592 = vld [vmem:[#allocation4] sm:$0xff]
    %v593 = vld [vmem:[#allocation4 + $0x8] sm:$0xff]
    %v594 = vld [vmem:[#allocation4 + $0x10] sm:$0xff]
    %v595 = vld [vmem:[#allocation4 + $0x18] sm:$0xff]
    %v596 = vld [vmem:[#allocation4 + $0x20] sm:$0xff]
    %v597 = vld [vmem:[#allocation4 + $0x28] sm:$0xff]
    %v598 = vld [vmem:[#allocation4 + $0x30] sm:$0xff]
    %v599 = vld [vmem:[#allocation4 + $0x38] sm:$0xff]
    %v600 = vld [vmem:[#allocation4 + $0x40] sm:$0xff]
    %v601 = vld [vmem:[#allocation4 + $0x48] sm:$0xff]
    %v602 = vld [vmem:[#allocation4 + $0x50] sm:$0xff]
    %v603 = vld [vmem:[#allocation4 + $0x58] sm:$0xff]
    %v604 = vld [vmem:[#allocation4 + $0x60] sm:$0xff]
    %v605 = vld [vmem:[#allocation4 + $0x68] sm:$0xff]
    %v606 = vld [vmem:[#allocation4 + $0x70] sm:$0xff]
    %v607 = vld [vmem:[#allocation4 + $0x78] sm:$0xff]
    %v608 = vld [vmem:[#allocation4 + $0x80] sm:$0xff]
    %v609 = vld [vmem:[#allocation4 + $0x88] sm:$0xff]
    %v610 = vld [vmem:[#allocation4 + $0x90] sm:$0xff]
    %v611 = vld [vmem:[#allocation4 + $0x98] sm:$0xff]
    %v612 = vld [vmem:[#allocation4 + $0xa0] sm:$0xff]
    %v613 = vld [vmem:[#allocation4 + $0xa8] sm:$0xff]
    %v614 = vld [vmem:[#allocation4 + $0xb0] sm:$0xff]
    %v615 = vld [vmem:[#allocation4 + $0xb8] sm:$0xff]
    %v616 = vld [vmem:[#allocation4 + $0xc0] sm:$0xff]
    %v617 = vld [vmem:[#allocation4 + $0xc8] sm:$0xff]
    %v618 = vld [vmem:[#allocation4 + $0xd0] sm:$0xff]
    %v619 = vld [vmem:[#allocation4 + $0xd8] sm:$0xff]
    %v620 = vld [vmem:[#allocation4 + $0xe0] sm:$0xff]
    %v621 = vld [vmem:[#allocation4 + $0xe8] sm:$0xff]
    %v622 = vld [vmem:[#allocation4 + $0xf0] sm:$0xff]
    %v623 = vld [vmem:[#allocation4 + $0xf8] sm:$0xff]
    %v624 = vld [vmem:[#allocation4 + $0x100] sm:$0xff]
    %v625 = vld [vmem:[#allocation4 + $0x108] sm:$0xff]
    %v626 = vld [vmem:[#allocation4 + $0x110] sm:$0xff]
    %v627 = vld [vmem:[#allocation4 + $0x118] sm:$0xff]
    %v628 = vld [vmem:[#allocation4 + $0x120] sm:$0xff]
    %v629 = vld [vmem:[#allocation4 + $0x128] sm:$0xff]
    %v630 = vld [vmem:[#allocation4 + $0x130] sm:$0xff]
    %v631 = vld [vmem:[#allocation4 + $0x138] sm:$0xff]
    %v632 = vld [vmem:[#allocation4 + $0x140] sm:$0xff]
    %v633 = vld [vmem:[#allocation4 + $0x148] sm:$0xff]
    %v634 = vld [vmem:[#allocation4 + $0x150] sm:$0xff]
    %v635 = vld [vmem:[#allocation4 + $0x158] sm:$0xff]
    %v636 = vld [vmem:[#allocation4 + $0x160] sm:$0xff]
    %v637 = vld [vmem:[#allocation4 + $0x168] sm:$0xff]
    %v638 = vld [vmem:[#allocation4 + $0x170] sm:$0xff]
    %v639 = vld [vmem:[#allocation4 + $0x178] sm:$0xff]
    %vm640 = vcmask 392192
    %v642 = vsel %vm640, %v591, 0
    %644 = vmatprep.subr.mxu0 %v593
    %645 = vmatpush1.msra.mxu0 %v592
    %646 = vmatprep.subr.mxu0 %v601
    %647 = vmatpush1.msra.mxu0 %v600
    %648 = vmatprep.subr.mxu0 %v609
    %649 = vmatpush1.msra.mxu0 %v608
    %650 = vmatprep.subr.mxu0 %v617
    %651 = vmatpush1.msra.mxu0 %v616
    %652 = vmatprep.subr.mxu0 %v625
    %653 = vmatpush1.msra.mxu0 %v624
    %654 = vmatprep.subr.mxu0 %v633
    %655 = vmatpush1.msra.mxu0 %v632
    %656 = vmatprep.subr.mxu0 0.0
    %657 = vmatpush1.msra.mxu0 0.0
    %658 = vmatprep.subr.mxu0 0.0
    %659 = vmatpush1.msra.mxu0 0.0
    %660 = vmatprep.subr.mxu0 0.0
    %661 = vmatpush1.msra.mxu0 0.0
    %662 = vmatprep.subr.mxu0 0.0
    %663 = vmatpush1.msra.mxu0 0.0
    %664 = vmatprep.subr.mxu0 0.0
    %665 = vmatpush1.msra.mxu0 0.0
    %666 = vmatprep.subr.mxu0 0.0
    %667 = vmatpush1.msra.mxu0 0.0
    %668 = vmatprep.subr.mxu0 0.0
    %669 = vmatpush1.msra.mxu0 0.0
    %670 = vmatprep.subr.mxu0 0.0
    %671 = vmatpush1.msra.mxu0 0.0
    %672 = vmatprep.subr.mxu0 0.0
    %673 = vmatpush1.msra.mxu0 0.0
    %674 = vmatprep.subr.mxu0 0.0
    %675 = vmatpush1.msra.mxu0 0.0
    %676 = vmatprep.subr.mxu0 0.0
    %677 = vmatpush1.msra.mxu0 0.0
    %678 = vmatprep.subr.mxu0 0.0
    %679 = vmatpush1.msra.mxu0 0.0
    %680 = vmatprep.subr.mxu0 0.0
    %681 = vmatpush1.msra.mxu0 0.0
    %682 = vmatprep.subr.mxu0 0.0
    %683 = vmatpush1.msra.mxu0 0.0
    %684 = vmatprep.subr.mxu0 0.0
    %685 = vmatpush1.msra.mxu0 0.0
    %686 = vmatprep.subr.mxu0 0.0
    %687 = vmatpush1.msra.mxu0 0.0
    %688 = vmatprep.subr.mxu0 0.0
    %689 = vmatpush1.msra.mxu0 0.0
    %690 = vmatprep.subr.mxu0 0.0
    %691 = vmatpush1.msra.mxu0 0.0
    %692 = vmatprep.subr.mxu0 0.0
    %693 = vmatpush1.msra.mxu0 0.0
    %694 = vmatprep.subr.mxu0 0.0
    %695 = vmatpush1.msra.mxu0 0.0
    %696 = vmatprep.subr.mxu0 0.0
    %697 = vmatpush1.msra.mxu0 0.0
    %698 = vmatprep.subr.mxu0 0.0
    %699 = vmatpush1.msra.mxu0 0.0
    %700 = vmatprep.subr.mxu0 0.0
    %701 = vmatpush1.msra.mxu0 0.0
    %702 = vmatprep.subr.mxu0 0.0
    %703 = vmatpush1.msra.mxu0 0.0
    %704 = vmatprep.subr.mxu0 0.0
    %705 = vmatpush1.msra.mxu0 0.0
    %706 = vmatprep.subr.mxu0 0.0
    %707 = vmatpush1.msra.mxu0 0.0
    %708 = vmatprep.mubr.f32.mxu0 0.0
    %709 = vmatmul.mubr.f32.gmra.mrb[0].mxu0 %v642
    %v710 = vpop.f32.mrb[0].mxu0
    %v711 = vadd.f32 0.0, %v710
    %v712 = vpop.f32.mrb[0].mxu0
    %v713 = vadd.f32 0.0, %v712
    %714 = vdwg.mxu0
    %715 = vmatprep.subr.mxu0 %v595
    %716 = vmatpush1.msra.mxu0 %v594
    %717 = vmatprep.subr.mxu0 %v603
    %718 = vmatpush1.msra.mxu0 %v602
    %719 = vmatprep.subr.mxu0 %v611
    %720 = vmatpush1.msra.mxu0 %v610
    %721 = vmatprep.subr.mxu0 %v619
    %722 = vmatpush1.msra.mxu0 %v618
    %723 = vmatprep.subr.mxu0 %v627
    %724 = vmatpush1.msra.mxu0 %v626
    %725 = vmatprep.subr.mxu0 %v635
    %726 = vmatpush1.msra.mxu0 %v634
    %727 = vmatprep.subr.mxu0 0.0
    %728 = vmatpush1.msra.mxu0 0.0
    %729 = vmatprep.subr.mxu0 0.0
    %730 = vmatpush1.msra.mxu0 0.0
    %731 = vmatprep.subr.mxu0 0.0
    %732 = vmatpush1.msra.mxu0 0.0
    %733 = vmatprep.subr.mxu0 0.0
    %734 = vmatpush1.msra.mxu0 0.0
    %735 = vmatprep.subr.mxu0 0.0
    %736 = vmatpush1.msra.mxu0 0.0
    %737 = vmatprep.subr.mxu0 0.0
    %738 = vmatpush1.msra.mxu0 0.0
    %739 = vmatprep.subr.mxu0 0.0
    %740 = vmatpush1.msra.mxu0 0.0
    %741 = vmatprep.subr.mxu0 0.0
    %742 = vmatpush1.msra.mxu0 0.0
    %743 = vmatprep.subr.mxu0 0.0
    %744 = vmatpush1.msra.mxu0 0.0
    %745 = vmatprep.subr.mxu0 0.0
    %746 = vmatpush1.msra.mxu0 0.0
    %747 = vmatprep.subr.mxu0 0.0
    %748 = vmatpush1.msra.mxu0 0.0
    %749 = vmatprep.subr.mxu0 0.0
    %750 = vmatpush1.msra.mxu0 0.0
    %751 = vmatprep.subr.mxu0 0.0
    %752 = vmatpush1.msra.mxu0 0.0
    %753 = vmatprep.subr.mxu0 0.0
    %754 = vmatpush1.msra.mxu0 0.0
    %755 = vmatprep.subr.mxu0 0.0
    %756 = vmatpush1.msra.mxu0 0.0
    %757 = vmatprep.subr.mxu0 0.0
    %758 = vmatpush1.msra.mxu0 0.0
    %759 = vmatprep.subr.mxu0 0.0
    %760 = vmatpush1.msra.mxu0 0.0
    %761 = vmatprep.subr.mxu0 0.0
    %762 = vmatpush1.msra.mxu0 0.0
    %763 = vmatprep.subr.mxu0 0.0
    %764 = vmatpush1.msra.mxu0 0.0
    %765 = vmatprep.subr.mxu0 0.0
    %766 = vmatpush1.msra.mxu0 0.0
    %767 = vmatprep.subr.mxu0 0.0
    %768 = vmatpush1.msra.mxu0 0.0
    %769 = vmatprep.subr.mxu0 0.0
    %770 = vmatpush1.msra.mxu0 0.0
    %771 = vmatprep.subr.mxu0 0.0
    %772 = vmatpush1.msra.mxu0 0.0
    %773 = vmatprep.subr.mxu0 0.0
    %774 = vmatpush1.msra.mxu0 0.0
    %775 = vmatprep.subr.mxu0 0.0
    %776 = vmatpush1.msra.mxu0 0.0
    %777 = vmatprep.subr.mxu0 0.0
    %778 = vmatpush1.msra.mxu0 0.0
    %779 = vmatprep.mubr.f32.mxu0 0.0
    %780 = vmatmul.mubr.f32.gmra.mrb[0].mxu0 %v642
    %v781 = vpop.f32.mrb[0].mxu0
    %v782 = vadd.f32 0.0, %v781
    %v783 = vpop.f32.mrb[0].mxu0
    %v784 = vadd.f32 0.0, %v783
    %785 = vdwg.mxu0
    %786 = vmatprep.subr.mxu0 %v597
    %787 = vmatpush1.msra.mxu0 %v596
    %788 = vmatprep.subr.mxu0 %v605
    %789 = vmatpush1.msra.mxu0 %v604
    %790 = vmatprep.subr.mxu0 %v613
    %791 = vmatpush1.msra.mxu0 %v612
    %792 = vmatprep.subr.mxu0 %v621
    %793 = vmatpush1.msra.mxu0 %v620
    %794 = vmatprep.subr.mxu0 %v629
    %795 = vmatpush1.msra.mxu0 %v628
    %796 = vmatprep.subr.mxu0 %v637
    %797 = vmatpush1.msra.mxu0 %v636
    %798 = vmatprep.subr.mxu0 0.0
    %799 = vmatpush1.msra.mxu0 0.0
    %800 = vmatprep.subr.mxu0 0.0
    %801 = vmatpush1.msra.mxu0 0.0
    %802 = vmatprep.subr.mxu0 0.0
    %803 = vmatpush1.msra.mxu0 0.0
    %804 = vmatprep.subr.mxu0 0.0
    %805 = vmatpush1.msra.mxu0 0.0
    %806 = vmatprep.subr.mxu0 0.0
    %807 = vmatpush1.msra.mxu0 0.0
    %808 = vmatprep.subr.mxu0 0.0
    %809 = vmatpush1.msra.mxu0 0.0
    %810 = vmatprep.subr.mxu0 0.0
    %811 = vmatpush1.msra.mxu0 0.0
    %812 = vmatprep.subr.mxu0 0.0
    %813 = vmatpush1.msra.mxu0 0.0
    %814 = vmatprep.subr.mxu0 0.0
    %815 = vmatpush1.msra.mxu0 0.0
    %816 = vmatprep.subr.mxu0 0.0
    %817 = vmatpush1.msra.mxu0 0.0
    %818 = vmatprep.subr.mxu0 0.0
    %819 = vmatpush1.msra.mxu0 0.0
    %820 = vmatprep.subr.mxu0 0.0
    %821 = vmatpush1.msra.mxu0 0.0
    %822 = vmatprep.subr.mxu0 0.0
    %823 = vmatpush1.msra.mxu0 0.0
    %824 = vmatprep.subr.mxu0 0.0
    %825 = vmatpush1.msra.mxu0 0.0
    %826 = vmatprep.subr.mxu0 0.0
    %827 = vmatpush1.msra.mxu0 0.0
    %828 = vmatprep.subr.mxu0 0.0
    %829 = vmatpush1.msra.mxu0 0.0
    %830 = vmatprep.subr.mxu0 0.0
    %831 = vmatpush1.msra.mxu0 0.0
    %832 = vmatprep.subr.mxu0 0.0
    %833 = vmatpush1.msra.mxu0 0.0
    %834 = vmatprep.subr.mxu0 0.0
    %835 = vmatpush1.msra.mxu0 0.0
    %836 = vmatprep.subr.mxu0 0.0
    %837 = vmatpush1.msra.mxu0 0.0
    %838 = vmatprep.subr.mxu0 0.0
    %839 = vmatpush1.msra.mxu0 0.0
    %840 = vmatprep.subr.mxu0 0.0
    %841 = vmatpush1.msra.mxu0 0.0
    %842 = vmatprep.subr.mxu0 0.0
    %843 = vmatpush1.msra.mxu0 0.0
    %844 = vmatprep.subr.mxu0 0.0
    %845 = vmatpush1.msra.mxu0 0.0
    %846 = vmatprep.subr.mxu0 0.0
    %847 = vmatpush1.msra.mxu0 0.0
    %848 = vmatprep.subr.mxu0 0.0
    %849 = vmatpush1.msra.mxu0 0.0
    %850 = vmatprep.mubr.f32.mxu0 0.0
    %851 = vmatmul.mubr.f32.gmra.mrb[0].mxu0 %v642
    %v852 = vpop.f32.mrb[0].mxu0
    %v853 = vadd.f32 0.0, %v852
    %v854 = vpop.f32.mrb[0].mxu0
    %v855 = vadd.f32 0.0, %v854
    %856 = vdwg.mxu0
    %857 = vmatprep.subr.mxu0 %v599
    %858 = vmatpush1.msra.mxu0 %v598
    %859 = vmatprep.subr.mxu0 %v607
    %860 = vmatpush1.msra.mxu0 %v606
    %861 = vmatprep.subr.mxu0 %v615
    %862 = vmatpush1.msra.mxu0 %v614
    %863 = vmatprep.subr.mxu0 %v623
    %864 = vmatpush1.msra.mxu0 %v622
    %865 = vmatprep.subr.mxu0 %v631
    %866 = vmatpush1.msra.mxu0 %v630
    %867 = vmatprep.subr.mxu0 %v639
    %868 = vmatpush1.msra.mxu0 %v638
    %869 = vmatprep.subr.mxu0 0.0
    %870 = vmatpush1.msra.mxu0 0.0
    %871 = vmatprep.subr.mxu0 0.0
    %872 = vmatpush1.msra.mxu0 0.0
    %873 = vmatprep.subr.mxu0 0.0
    %874 = vmatpush1.msra.mxu0 0.0
    %875 = vmatprep.subr.mxu0 0.0
    %876 = vmatpush1.msra.mxu0 0.0
    %877 = vmatprep.subr.mxu0 0.0
    %878 = vmatpush1.msra.mxu0 0.0
    %879 = vmatprep.subr.mxu0 0.0
    %880 = vmatpush1.msra.mxu0 0.0
    %881 = vmatprep.subr.mxu0 0.0
    %882 = vmatpush1.msra.mxu0 0.0
    %883 = vmatprep.subr.mxu0 0.0
    %884 = vmatpush1.msra.mxu0 0.0
    %885 = vmatprep.subr.mxu0 0.0
    %886 = vmatpush1.msra.mxu0 0.0
    %887 = vmatprep.subr.mxu0 0.0
    %888 = vmatpush1.msra.mxu0 0.0
    %889 = vmatprep.subr.mxu0 0.0
    %890 = vmatpush1.msra.mxu0 0.0
    %891 = vmatprep.subr.mxu0 0.0
    %892 = vmatpush1.msra.mxu0 0.0
    %893 = vmatprep.subr.mxu0 0.0
    %894 = vmatpush1.msra.mxu0 0.0
    %895 = vmatprep.subr.mxu0 0.0
    %896 = vmatpush1.msra.mxu0 0.0
    %897 = vmatprep.subr.mxu0 0.0
    %898 = vmatpush1.msra.mxu0 0.0
    %899 = vmatprep.subr.mxu0 0.0
    %900 = vmatpush1.msra.mxu0 0.0
    %901 = vmatprep.subr.mxu0 0.0
    %902 = vmatpush1.msra.mxu0 0.0
    %903 = vmatprep.subr.mxu0 0.0
    %904 = vmatpush1.msra.mxu0 0.0
    %905 = vmatprep.subr.mxu0 0.0
    %906 = vmatpush1.msra.mxu0 0.0
    %907 = vmatprep.subr.mxu0 0.0
    %908 = vmatpush1.msra.mxu0 0.0
    %909 = vmatprep.subr.mxu0 0.0
    %910 = vmatpush1.msra.mxu0 0.0
    %911 = vmatprep.subr.mxu0 0.0
    %912 = vmatpush1.msra.mxu0 0.0
    %913 = vmatprep.subr.mxu0 0.0
    %914 = vmatpush1.msra.mxu0 0.0
    %915 = vmatprep.subr.mxu0 0.0
    %916 = vmatpush1.msra.mxu0 0.0
    %917 = vmatprep.subr.mxu0 0.0
    %918 = vmatpush1.msra.mxu0 0.0
    %919 = vmatprep.subr.mxu0 0.0
    %920 = vmatpush1.msra.mxu0 0.0
    %921 = vmatprep.mubr.f32.mxu0 0.0
    %922 = vmatmul.mubr.f32.gmra.mrb[0].mxu0 %v642
    %v923 = vpop.f32.mrb[0].mxu0
    %v924 = vadd.f32 0.0, %v923
    %v925 = vpop.f32.mrb[0].mxu0
    %v926 = vadd.f32 0.0, %v925
    %927 = vdwg.mxu0
    %v928 = vld [vmem:[#allocation2 + $0x20] sm:$0xff]
    %v929 = vld [vmem:[#allocation2 + $0x28] sm:$0xff]
    %v930 = vld [vmem:[#allocation2 + $0x30] sm:$0xff]
    %v931 = vld [vmem:[#allocation2 + $0x38] sm:$0xff]
    %v932 = vadd.f32 %v928, %v711
    %v933 = vadd.f32 %v929, %v713
    %v934 = vadd.f32 %v930, %v782
    %v935 = vadd.f32 %v931, %v784
    %v936 = vtanh.pop %v932
    %v937 = vtanh.pop %v933
    %v938 = vtanh.pop %v934
    %v939 = vtanh.pop %v935
    %v940 = vmul.f32 %v936, 0.5
    %v941 = vadd.f32 %v940, 0.5
    %v942 = vmul.f32 %v937, 0.5
    %v943 = vadd.f32 %v942, 0.5
    %v944 = vmul.f32 %v939, 0.5
    %v945 = vadd.f32 %v944, 0.5
    %v946 = vmul.f32 %v943, %v589
    %v947 = vmul.f32 %v941, %v938
    %v948 = vadd.f32 %v946, %v947
    %v949 = vtanh.pop %v948
    %v950 = vmul.f32 %v945, %v949
    %v951 = vadd.f32 %v853, %v556
    %v952 = vadd.f32 %v855, %v560
    %v953 = vadd.f32 %v924, %v564
    %v954 = vadd.f32 %v926, %v568
    %v955 = vtanh.pop %v951
    %v956 = vtanh.pop %v952
    %v957 = vtanh.pop %v953
    %v958 = vtanh.pop %v954
    %v959 = vmul.f32 %v955, 0.5
    %v960 = vadd.f32 %v959, 0.5
    %v961 = vmul.f32 %v956, 0.5
    %v962 = vadd.f32 %v961, 0.5
    %v963 = vmul.f32 %v958, 0.5
    %v964 = vadd.f32 %v963, 0.5
    %v965 = vmul.f32 %v962, 0.0
    %v966 = vmul.f32 %v960, %v957
    %v967 = vadd.f32 %v965, %v966
    %v968 = vtanh.pop %v967
    %v969 = vmul.f32 %v964, %v968
    %970 = vst.msk [vmem:[#allocation3] sm:$0xff] %vm640, %v969
    %v971 = vld [vmem:[#allocation4] sm:$0xff]
    %v972 = vld [vmem:[#allocation4 + $0x8] sm:$0xff]
    %v973 = vld [vmem:[#allocation4 + $0x10] sm:$0xff]
    %v974 = vld [vmem:[#allocation4 + $0x18] sm:$0xff]
    %v975 = vld [vmem:[#allocation4 + $0x20] sm:$0xff]
    %v976 = vld [vmem:[#allocation4 + $0x28] sm:$0xff]
    %v977 = vld [vmem:[#allocation4 + $0x30] sm:$0xff]
    %v978 = vld [vmem:[#allocation4 + $0x38] sm:$0xff]
    %v979 = vld [vmem:[#allocation4 + $0x40] sm:$0xff]
    %v980 = vld [vmem:[#allocation4 + $0x48] sm:$0xff]
    %v981 = vld [vmem:[#allocation4 + $0x50] sm:$0xff]
    %v982 = vld [vmem:[#allocation4 + $0x58] sm:$0xff]
    %v983 = vld [vmem:[#allocation4 + $0x60] sm:$0xff]
    %v984 = vld [vmem:[#allocation4 + $0x68] sm:$0xff]
    %v985 = vld [vmem:[#allocation4 + $0x70] sm:$0xff]
    %v986 = vld [vmem:[#allocation4 + $0x78] sm:$0xff]
    %v987 = vld [vmem:[#allocation4 + $0x80] sm:$0xff]
    %v988 = vld [vmem:[#allocation4 + $0x88] sm:$0xff]
    %v989 = vld [vmem:[#allocation4 + $0x90] sm:$0xff]
    %v990 = vld [vmem:[#allocation4 + $0x98] sm:$0xff]
    %v991 = vld [vmem:[#allocation4 + $0xa0] sm:$0xff]
    %v992 = vld [vmem:[#allocation4 + $0xa8] sm:$0xff]
    %v993 = vld [vmem:[#allocation4 + $0xb0] sm:$0xff]
    %v994 = vld [vmem:[#allocation4 + $0xb8] sm:$0xff]
    %v995 = vld [vmem:[#allocation4 + $0xc0] sm:$0xff]
    %v996 = vld [vmem:[#allocation4 + $0xc8] sm:$0xff]
    %v997 = vld [vmem:[#allocation4 + $0xd0] sm:$0xff]
    %v998 = vld [vmem:[#allocation4 + $0xd8] sm:$0xff]
    %v999 = vld [vmem:[#allocation4 + $0xe0] sm:$0xff]
    %v1000 = vld [vmem:[#allocation4 + $0xe8] sm:$0xff]
    %v1001 = vld [vmem:[#allocation4 + $0xf0] sm:$0xff]
    %v1002 = vld [vmem:[#allocation4 + $0xf8] sm:$0xff]
    %v1003 = vld [vmem:[#allocation4 + $0x100] sm:$0xff]
    %v1004 = vld [vmem:[#allocation4 + $0x108] sm:$0xff]
    %v1005 = vld [vmem:[#allocation4 + $0x110] sm:$0xff]
    %v1006 = vld [vmem:[#allocation4 + $0x118] sm:$0xff]
    %v1007 = vld [vmem:[#allocation4 + $0x120] sm:$0xff]
    %v1008 = vld [vmem:[#allocation4 + $0x128] sm:$0xff]
    %v1009 = vld [vmem:[#allocation4 + $0x130] sm:$0xff]
    %v1010 = vld [vmem:[#allocation4 + $0x138] sm:$0xff]
    %v1011 = vld [vmem:[#allocation4 + $0x140] sm:$0xff]
    %v1012 = vld [vmem:[#allocation4 + $0x148] sm:$0xff]
    %v1013 = vld [vmem:[#allocation4 + $0x150] sm:$0xff]
    %v1014 = vld [vmem:[#allocation4 + $0x158] sm:$0xff]
    %v1015 = vld [vmem:[#allocation4 + $0x160] sm:$0xff]
    %v1016 = vld [vmem:[#allocation4 + $0x168] sm:$0xff]
    %v1017 = vld [vmem:[#allocation4 + $0x170] sm:$0xff]
    %v1018 = vld [vmem:[#allocation4 + $0x178] sm:$0xff]
    %v1020 = vsel %vm640, %v950, 0
    %1022 = vmatprep.subr.mxu0 %v972
    %1023 = vmatpush1.msra.mxu0 %v971
    %1024 = vmatprep.subr.mxu0 %v980
    %1025 = vmatpush1.msra.mxu0 %v979
    %1026 = vmatprep.subr.mxu0 %v988
    %1027 = vmatpush1.msra.mxu0 %v987
    %1028 = vmatprep.subr.mxu0 %v996
    %1029 = vmatpush1.msra.mxu0 %v995
    %1030 = vmatprep.subr.mxu0 %v1004
    %1031 = vmatpush1.msra.mxu0 %v1003
    %1032 = vmatprep.subr.mxu0 %v1012
    %1033 = vmatpush1.msra.mxu0 %v1011
    %1034 = vmatprep.subr.mxu0 0.0
    %1035 = vmatpush1.msra.mxu0 0.0
    %1036 = vmatprep.subr.mxu0 0.0
    %1037 = vmatpush1.msra.mxu0 0.0
    %1038 = vmatprep.subr.mxu0 0.0
    %1039 = vmatpush1.msra.mxu0 0.0
    %1040 = vmatprep.subr.mxu0 0.0
    %1041 = vmatpush1.msra.mxu0 0.0
    %1042 = vmatprep.subr.mxu0 0.0
    %1043 = vmatpush1.msra.mxu0 0.0
    %1044 = vmatprep.subr.mxu0 0.0
    %1045 = vmatpush1.msra.mxu0 0.0
    %1046 = vmatprep.subr.mxu0 0.0
    %1047 = vmatpush1.msra.mxu0 0.0
    %1048 = vmatprep.subr.mxu0 0.0
    %1049 = vmatpush1.msra.mxu0 0.0
    %1050 = vmatprep.subr.mxu0 0.0
    %1051 = vmatpush1.msra.mxu0 0.0
    %1052 = vmatprep.subr.mxu0 0.0
    %1053 = vmatpush1.msra.mxu0 0.0
    %1054 = vmatprep.subr.mxu0 0.0
    %1055 = vmatpush1.msra.mxu0 0.0
    %1056 = vmatprep.subr.mxu0 0.0
    %1057 = vmatpush1.msra.mxu0 0.0
    %1058 = vmatprep.subr.mxu0 0.0
    %1059 = vmatpush1.msra.mxu0 0.0
    %1060 = vmatprep.subr.mxu0 0.0
    %1061 = vmatpush1.msra.mxu0 0.0
    %1062 = vmatprep.subr.mxu0 0.0
    %1063 = vmatpush1.msra.mxu0 0.0
    %1064 = vmatprep.subr.mxu0 0.0
    %1065 = vmatpush1.msra.mxu0 0.0
    %1066 = vmatprep.subr.mxu0 0.0
    %1067 = vmatpush1.msra.mxu0 0.0
    %1068 = vmatprep.subr.mxu0 0.0
    %1069 = vmatpush1.msra.mxu0 0.0
    %1070 = vmatprep.subr.mxu0 0.0
    %1071 = vmatpush1.msra.mxu0 0.0
    %1072 = vmatprep.subr.mxu0 0.0
    %1073 = vmatpush1.msra.mxu0 0.0
    %1074 = vmatprep.subr.mxu0 0.0
    %1075 = vmatpush1.msra.mxu0 0.0
    %1076 = vmatprep.subr.mxu0 0.0
    %1077 = vmatpush1.msra.mxu0 0.0
    %1078 = vmatprep.subr.mxu0 0.0
    %1079 = vmatpush1.msra.mxu0 0.0
    %1080 = vmatprep.subr.mxu0 0.0
    %1081 = vmatpush1.msra.mxu0 0.0
    %1082 = vmatprep.subr.mxu0 0.0
    %1083 = vmatpush1.msra.mxu0 0.0
    %1084 = vmatprep.subr.mxu0 0.0
    %1085 = vmatpush1.msra.mxu0 0.0
    %1086 = vmatprep.mubr.f32.mxu0 0.0
    %1087 = vmatmul.mubr.f32.gmra.mrb[0].mxu0 %v1020
    %v1088 = vpop.f32.mrb[0].mxu0
    %v1089 = vadd.f32 0.0, %v1088
    %v1090 = vpop.f32.mrb[0].mxu0
    %v1091 = vadd.f32 0.0, %v1090
    %1092 = vdwg.mxu0
    %1093 = vmatprep.subr.mxu0 %v974
    %1094 = vmatpush1.msra.mxu0 %v973
    %1095 = vmatprep.subr.mxu0 %v982
    %1096 = vmatpush1.msra.mxu0 %v981
    %1097 = vmatprep.subr.mxu0 %v990
    %1098 = vmatpush1.msra.mxu0 %v989
    %1099 = vmatprep.subr.mxu0 %v998
    %1100 = vmatpush1.msra.mxu0 %v997
    %1101 = vmatprep.subr.mxu0 %v1006
    %1102 = vmatpush1.msra.mxu0 %v1005
    %1103 = vmatprep.subr.mxu0 %v1014
    %1104 = vmatpush1.msra.mxu0 %v1013
    %1105 = vmatprep.subr.mxu0 0.0
    %1106 = vmatpush1.msra.mxu0 0.0
    %1107 = vmatprep.subr.mxu0 0.0
    %1108 = vmatpush1.msra.mxu0 0.0
    %1109 = vmatprep.subr.mxu0 0.0
    %1110 = vmatpush1.msra.mxu0 0.0
    %1111 = vmatprep.subr.mxu0 0.0
    %1112 = vmatpush1.msra.mxu0 0.0
    %1113 = vmatprep.subr.mxu0 0.0
    %1114 = vmatpush1.msra.mxu0 0.0
    %1115 = vmatprep.subr.mxu0 0.0
    %1116 = vmatpush1.msra.mxu0 0.0
    %1117 = vmatprep.subr.mxu0 0.0
    %1118 = vmatpush1.msra.mxu0 0.0
    %1119 = vmatprep.subr.mxu0 0.0
    %1120 = vmatpush1.msra.mxu0 0.0
    %1121 = vmatprep.subr.mxu0 0.0
    %1122 = vmatpush1.msra.mxu0 0.0
    %1123 = vmatprep.subr.mxu0 0.0
    %1124 = vmatpush1.msra.mxu0 0.0
    %1125 = vmatprep.subr.mxu0 0.0
    %1126 = vmatpush1.msra.mxu0 0.0
    %1127 = vmatprep.subr.mxu0 0.0
    %1128 = vmatpush1.msra.mxu0 0.0
    %1129 = vmatprep.subr.mxu0 0.0
    %1130 = vmatpush1.msra.mxu0 0.0
    %1131 = vmatprep.subr.mxu0 0.0
    %1132 = vmatpush1.msra.mxu0 0.0
    %1133 = vmatprep.subr.mxu0 0.0
    %1134 = vmatpush1.msra.mxu0 0.0
    %1135 = vmatprep.subr.mxu0 0.0
    %1136 = vmatpush1.msra.mxu0 0.0
    %1137 = vmatprep.subr.mxu0 0.0
    %1138 = vmatpush1.msra.mxu0 0.0
    %1139 = vmatprep.subr.mxu0 0.0
    %1140 = vmatpush1.msra.mxu0 0.0
    %1141 = vmatprep.subr.mxu0 0.0
    %1142 = vmatpush1.msra.mxu0 0.0
    %1143 = vmatprep.subr.mxu0 0.0
    %1144 = vmatpush1.msra.mxu0 0.0
    %1145 = vmatprep.subr.mxu0 0.0
    %1146 = vmatpush1.msra.mxu0 0.0
    %1147 = vmatprep.subr.mxu0 0.0
    %1148 = vmatpush1.msra.mxu0 0.0
    %1149 = vmatprep.subr.mxu0 0.0
    %1150 = vmatpush1.msra.mxu0 0.0
    %1151 = vmatprep.subr.mxu0 0.0
    %1152 = vmatpush1.msra.mxu0 0.0
    %1153 = vmatprep.subr.mxu0 0.0
    %1154 = vmatpush1.msra.mxu0 0.0
    %1155 = vmatprep.subr.mxu0 0.0
    %1156 = vmatpush1.msra.mxu0 0.0
    %1157 = vmatprep.mubr.f32.mxu0 0.0
    %1158 = vmatmul.mubr.f32.gmra.mrb[0].mxu0 %v1020
    %v1159 = vpop.f32.mrb[0].mxu0
    %v1160 = vadd.f32 0.0, %v1159
    %v1161 = vpop.f32.mrb[0].mxu0
    %v1162 = vadd.f32 0.0, %v1161
    %1163 = vdwg.mxu0
    %1164 = vmatprep.subr.mxu0 %v976
    %1165 = vmatpush1.msra.mxu0 %v975
    %1166 = vmatprep.subr.mxu0 %v984
    %1167 = vmatpush1.msra.mxu0 %v983
    %1168 = vmatprep.subr.mxu0 %v992
    %1169 = vmatpush1.msra.mxu0 %v991
    %1170 = vmatprep.subr.mxu0 %v1000
    %1171 = vmatpush1.msra.mxu0 %v999
    %1172 = vmatprep.subr.mxu0 %v1008
    %1173 = vmatpush1.msra.mxu0 %v1007
    %1174 = vmatprep.subr.mxu0 %v1016
    %1175 = vmatpush1.msra.mxu0 %v1015
    %1176 = vmatprep.subr.mxu0 0.0
    %1177 = vmatpush1.msra.mxu0 0.0
    %1178 = vmatprep.subr.mxu0 0.0
    %1179 = vmatpush1.msra.mxu0 0.0
    %1180 = vmatprep.subr.mxu0 0.0
    %1181 = vmatpush1.msra.mxu0 0.0
    %1182 = vmatprep.subr.mxu0 0.0
    %1183 = vmatpush1.msra.mxu0 0.0
    %1184 = vmatprep.subr.mxu0 0.0
    %1185 = vmatpush1.msra.mxu0 0.0
    %1186 = vmatprep.subr.mxu0 0.0
    %1187 = vmatpush1.msra.mxu0 0.0
    %1188 = vmatprep.subr.mxu0 0.0
    %1189 = vmatpush1.msra.mxu0 0.0
    %1190 = vmatprep.subr.mxu0 0.0
    %1191 = vmatpush1.msra.mxu0 0.0
    %1192 = vmatprep.subr.mxu0 0.0
    %1193 = vmatpush1.msra.mxu0 0.0
    %1194 = vmatprep.subr.mxu0 0.0
    %1195 = vmatpush1.msra.mxu0 0.0
    %1196 = vmatprep.subr.mxu0 0.0
    %1197 = vmatpush1.msra.mxu0 0.0
    %1198 = vmatprep.subr.mxu0 0.0
    %1199 = vmatpush1.msra.mxu0 0.0
    %1200 = vmatprep.subr.mxu0 0.0
    %1201 = vmatpush1.msra.mxu0 0.0
    %1202 = vmatprep.subr.mxu0 0.0
    %1203 = vmatpush1.msra.mxu0 0.0
    %1204 = vmatprep.subr.mxu0 0.0
    %1205 = vmatpush1.msra.mxu0 0.0
    %1206 = vmatprep.subr.mxu0 0.0
    %1207 = vmatpush1.msra.mxu0 0.0
    %1208 = vmatprep.subr.mxu0 0.0
    %1209 = vmatpush1.msra.mxu0 0.0
    %1210 = vmatprep.subr.mxu0 0.0
    %1211 = vmatpush1.msra.mxu0 0.0
    %1212 = vmatprep.subr.mxu0 0.0
    %1213 = vmatpush1.msra.mxu0 0.0
    %1214 = vmatprep.subr.mxu0 0.0
    %1215 = vmatpush1.msra.mxu0 0.0
    %1216 = vmatprep.subr.mxu0 0.0
    %1217 = vmatpush1.msra.mxu0 0.0
    %1218 = vmatprep.subr.mxu0 0.0
    %1219 = vmatpush1.msra.mxu0 0.0
    %1220 = vmatprep.subr.mxu0 0.0
    %1221 = vmatpush1.msra.mxu0 0.0
    %1222 = vmatprep.subr.mxu0 0.0
    %1223 = vmatpush1.msra.mxu0 0.0
    %1224 = vmatprep.subr.mxu0 0.0
    %1225 = vmatpush1.msra.mxu0 0.0
    %1226 = vmatprep.subr.mxu0 0.0
    %1227 = vmatpush1.msra.mxu0 0.0
    %1228 = vmatprep.mubr.f32.mxu0 0.0
    %1229 = vmatmul.mubr.f32.gmra.mrb[0].mxu0 %v1020
    %v1230 = vpop.f32.mrb[0].mxu0
    %v1231 = vadd.f32 0.0, %v1230
    %v1232 = vpop.f32.mrb[0].mxu0
    %v1233 = vadd.f32 0.0, %v1232
    %1234 = vdwg.mxu0
    %1235 = vmatprep.subr.mxu0 %v978
    %1236 = vmatpush1.msra.mxu0 %v977
    %1237 = vmatprep.subr.mxu0 %v986
    %1238 = vmatpush1.msra.mxu0 %v985
    %1239 = vmatprep.subr.mxu0 %v994
    %1240 = vmatpush1.msra.mxu0 %v993
    %1241 = vmatprep.subr.mxu0 %v1002
    %1242 = vmatpush1.msra.mxu0 %v1001
    %1243 = vmatprep.subr.mxu0 %v1010
    %1244 = vmatpush1.msra.mxu0 %v1009
    %1245 = vmatprep.subr.mxu0 %v1018
    %1246 = vmatpush1.msra.mxu0 %v1017
    %1247 = vmatprep.subr.mxu0 0.0
    %1248 = vmatpush1.msra.mxu0 0.0
    %1249 = vmatprep.subr.mxu0 0.0
    %1250 = vmatpush1.msra.mxu0 0.0
    %1251 = vmatprep.subr.mxu0 0.0
    %1252 = vmatpush1.msra.mxu0 0.0
    %1253 = vmatprep.subr.mxu0 0.0
    %1254 = vmatpush1.msra.mxu0 0.0
    %1255 = vmatprep.subr.mxu0 0.0
    %1256 = vmatpush1.msra.mxu0 0.0
    %1257 = vmatprep.subr.mxu0 0.0
    %1258 = vmatpush1.msra.mxu0 0.0
    %1259 = vmatprep.subr.mxu0 0.0
    %1260 = vmatpush1.msra.mxu0 0.0
    %1261 = vmatprep.subr.mxu0 0.0
    %1262 = vmatpush1.msra.mxu0 0.0
    %1263 = vmatprep.subr.mxu0 0.0
    %1264 = vmatpush1.msra.mxu0 0.0
    %1265 = vmatprep.subr.mxu0 0.0
    %1266 = vmatpush1.msra.mxu0 0.0
    %1267 = vmatprep.subr.mxu0 0.0
    %1268 = vmatpush1.msra.mxu0 0.0
    %1269 = vmatprep.subr.mxu0 0.0
    %1270 = vmatpush1.msra.mxu0 0.0
    %1271 = vmatprep.subr.mxu0 0.0
    %1272 = vmatpush1.msra.mxu0 0.0
    %1273 = vmatprep.subr.mxu0 0.0
    %1274 = vmatpush1.msra.mxu0 0.0
    %1275 = vmatprep.subr.mxu0 0.0
    %1276 = vmatpush1.msra.mxu0 0.0
    %1277 = vmatprep.subr.mxu0 0.0
    %1278 = vmatpush1.msra.mxu0 0.0
    %1279 = vmatprep.subr.mxu0 0.0
    %1280 = vmatpush1.msra.mxu0 0.0
    %1281 = vmatprep.subr.mxu0 0.0
    %1282 = vmatpush1.msra.mxu0 0.0
    %1283 = vmatprep.subr.mxu0 0.0
    %1284 = vmatpush1.msra.mxu0 0.0
    %1285 = vmatprep.subr.mxu0 0.0
    %1286 = vmatpush1.msra.mxu0 0.0
    %1287 = vmatprep.subr.mxu0 0.0
    %1288 = vmatpush1.msra.mxu0 0.0
    %1289 = vmatprep.subr.mxu0 0.0
    %1290 = vmatpush1.msra.mxu0 0.0
    %1291 = vmatprep.subr.mxu0 0.0
    %1292 = vmatpush1.msra.mxu0 0.0
    %1293 = vmatprep.subr.mxu0 0.0
    %1294 = vmatpush1.msra.mxu0 0.0
    %1295 = vmatprep.subr.mxu0 0.0
    %1296 = vmatpush1.msra.mxu0 0.0
    %1297 = vmatprep.subr.mxu0 0.0
    %1298 = vmatpush1.msra.mxu0 0.0
    %1299 = vmatprep.mubr.f32.mxu0 0.0
    %1300 = vmatmul.mubr.f32.gmra.mrb[0].mxu0 %v1020
    %v1301 = vpop.f32.mrb[0].mxu0
    %v1302 = vadd.f32 0.0, %v1301
    %v1303 = vpop.f32.mrb[0].mxu0
    %v1304 = vadd.f32 0.0, %v1303
    %1305 = vdwg.mxu0
    %v1306 = vld [vmem:[#allocation7] sm:$0xff]
    %v1307 = vld [vmem:[#allocation7 + $0x8] sm:$0xff]
    %v1308 = vld [vmem:[#allocation7 + $0x10] sm:$0xff]
    %v1309 = vld [vmem:[#allocation7 + $0x18] sm:$0xff]
    %v1310 = vld [vmem:[#allocation7 + $0x20] sm:$0xff]
    %v1311 = vld [vmem:[#allocation7 + $0x28] sm:$0xff]
    %v1312 = vld [vmem:[#allocation7 + $0x30] sm:$0xff]
    %v1313 = vld [vmem:[#allocation7 + $0x38] sm:$0xff]
    %v1314 = vld [vmem:[#allocation7 + $0x40] sm:$0xff]
    %v1315 = vld [vmem:[#allocation7 + $0x48] sm:$0xff]
    %v1316 = vld [vmem:[#allocation7 + $0x50] sm:$0xff]
    %v1317 = vld [vmem:[#allocation7 + $0x58] sm:$0xff]
    %v1318 = vld [vmem:[#allocation7 + $0x60] sm:$0xff]
    %v1319 = vld [vmem:[#allocation7 + $0x68] sm:$0xff]
    %v1320 = vld [vmem:[#allocation7 + $0x70] sm:$0xff]
    %v1321 = vld [vmem:[#allocation7 + $0x78] sm:$0xff]
    %v1322 = vld [vmem:[#allocation7 + $0x80] sm:$0xff]
    %v1323 = vld [vmem:[#allocation7 + $0x88] sm:$0xff]
    %v1324 = vld [vmem:[#allocation7 + $0x90] sm:$0xff]
    %v1325 = vld [vmem:[#allocation7 + $0x98] sm:$0xff]
    %v1326 = vld [vmem:[#allocation7 + $0xa0] sm:$0xff]
    %v1327 = vld [vmem:[#allocation7 + $0xa8] sm:$0xff]
    %v1328 = vld [vmem:[#allocation7 + $0xb0] sm:$0xff]
    %v1329 = vld [vmem:[#allocation7 + $0xb8] sm:$0xff]
    %v1331 = vsel %vm640, %v969, 0
    %1333 = vmatprep.subr.mxu0 %v1307
    %1334 = vmatpush1.msra.mxu0 %v1306
    %1335 = vmatprep.subr.mxu0 %v1311
    %1336 = vmatpush1.msra.mxu0 %v1310
    %1337 = vmatprep.subr.mxu0 %v1315
    %1338 = vmatpush1.msra.mxu0 %v1314
    %1339 = vmatprep.subr.mxu0 %v1319
    %1340 = vmatpush1.msra.mxu0 %v1318
    %1341 = vmatprep.subr.mxu0 %v1323
    %1342 = vmatpush1.msra.mxu0 %v1322
    %1343 = vmatprep.subr.mxu0 %v1327
    %1344 = vmatpush1.msra.mxu0 %v1326
    %1345 = vmatprep.subr.mxu0 0.0
    %1346 = vmatpush1.msra.mxu0 0.0
    %1347 = vmatprep.subr.mxu0 0.0
    %1348 = vmatpush1.msra.mxu0 0.0
    %1349 = vmatprep.subr.mxu0 0.0
    %1350 = vmatpush1.msra.mxu0 0.0
    %1351 = vmatprep.subr.mxu0 0.0
    %1352 = vmatpush1.msra.mxu0 0.0
    %1353 = vmatprep.subr.mxu0 0.0
    %1354 = vmatpush1.msra.mxu0 0.0
    %1355 = vmatprep.subr.mxu0 0.0
    %1356 = vmatpush1.msra.mxu0 0.0
    %1357 = vmatprep.subr.mxu0 0.0
    %1358 = vmatpush1.msra.mxu0 0.0
    %1359 = vmatprep.subr.mxu0 0.0
    %1360 = vmatpush1.msra.mxu0 0.0
    %1361 = vmatprep.subr.mxu0 0.0
    %1362 = vmatpush1.msra.mxu0 0.0
    %1363 = vmatprep.subr.mxu0 0.0
    %1364 = vmatpush1.msra.mxu0 0.0
    %1365 = vmatprep.subr.mxu0 0.0
    %1366 = vmatpush1.msra.mxu0 0.0
    %1367 = vmatprep.subr.mxu0 0.0
    %1368 = vmatpush1.msra.mxu0 0.0
    %1369 = vmatprep.subr.mxu0 0.0
    %1370 = vmatpush1.msra.mxu0 0.0
    %1371 = vmatprep.subr.mxu0 0.0
    %1372 = vmatpush1.msra.mxu0 0.0
    %1373 = vmatprep.subr.mxu0 0.0
    %1374 = vmatpush1.msra.mxu0 0.0
    %1375 = vmatprep.subr.mxu0 0.0
    %1376 = vmatpush1.msra.mxu0 0.0
    %1377 = vmatprep.subr.mxu0 0.0
    %1378 = vmatpush1.msra.mxu0 0.0
    %1379 = vmatprep.subr.mxu0 0.0
    %1380 = vmatpush1.msra.mxu0 0.0
    %1381 = vmatprep.subr.mxu0 0.0
    %1382 = vmatpush1.msra.mxu0 0.0
    %1383 = vmatprep.subr.mxu0 0.0
    %1384 = vmatpush1.msra.mxu0 0.0
    %1385 = vmatprep.subr.mxu0 0.0
    %1386 = vmatpush1.msra.mxu0 0.0
    %1387 = vmatprep.subr.mxu0 0.0
    %1388 = vmatpush1.msra.mxu0 0.0
    %1389 = vmatprep.subr.mxu0 0.0
    %1390 = vmatpush1.msra.mxu0 0.0
    %1391 = vmatprep.subr.mxu0 0.0
    %1392 = vmatpush1.msra.mxu0 0.0
    %1393 = vmatprep.subr.mxu0 0.0
    %1394 = vmatpush1.msra.mxu0 0.0
    %1395 = vmatprep.subr.mxu0 0.0
    %1396 = vmatpush1.msra.mxu0 0.0
    %1397 = vmatprep.mubr.f32.mxu0 0.0
    %1398 = vmatmul.mubr.f32.gmra.mrb[0].mxu0 %v1331
    %v1399 = vpop.f32.mrb[0].mxu0
    %v1400 = vadd.f32 0.0, %v1399
    %v1401 = vpop.f32.mrb[0].mxu0
    %v1402 = vadd.f32 0.0, %v1401
    %1403 = vdwg.mxu0
    %1404 = vmatprep.subr.mxu0 %v1309
    %1405 = vmatpush1.msra.mxu0 %v1308
    %1406 = vmatprep.subr.mxu0 %v1313
    %1407 = vmatpush1.msra.mxu0 %v1312
    %1408 = vmatprep.subr.mxu0 %v1317
    %1409 = vmatpush1.msra.mxu0 %v1316
    %1410 = vmatprep.subr.mxu0 %v1321
    %1411 = vmatpush1.msra.mxu0 %v1320
    %1412 = vmatprep.subr.mxu0 %v1325
    %1413 = vmatpush1.msra.mxu0 %v1324
    %1414 = vmatprep.subr.mxu0 %v1329
    %1415 = vmatpush1.msra.mxu0 %v1328
    %1416 = vmatprep.subr.mxu0 0.0
    %1417 = vmatpush1.msra.mxu0 0.0
    %1418 = vmatprep.subr.mxu0 0.0
    %1419 = vmatpush1.msra.mxu0 0.0
    %1420 = vmatprep.subr.mxu0 0.0
    %1421 = vmatpush1.msra.mxu0 0.0
    %1422 = vmatprep.subr.mxu0 0.0
    %1423 = vmatpush1.msra.mxu0 0.0
    %1424 = vmatprep.subr.mxu0 0.0
    %1425 = vmatpush1.msra.mxu0 0.0
    %1426 = vmatprep.subr.mxu0 0.0
    %1427 = vmatpush1.msra.mxu0 0.0
    %1428 = vmatprep.subr.mxu0 0.0
    %1429 = vmatpush1.msra.mxu0 0.0
    %1430 = vmatprep.subr.mxu0 0.0
    %1431 = vmatpush1.msra.mxu0 0.0
    %1432 = vmatprep.subr.mxu0 0.0
    %1433 = vmatpush1.msra.mxu0 0.0
    %1434 = vmatprep.subr.mxu0 0.0
    %1435 = vmatpush1.msra.mxu0 0.0
    %1436 = vmatprep.subr.mxu0 0.0
    %1437 = vmatpush1.msra.mxu0 0.0
    %1438 = vmatprep.subr.mxu0 0.0
    %1439 = vmatpush1.msra.mxu0 0.0
    %1440 = vmatprep.subr.mxu0 0.0
    %1441 = vmatpush1.msra.mxu0 0.0
    %1442 = vmatprep.subr.mxu0 0.0
    %1443 = vmatpush1.msra.mxu0 0.0
    %1444 = vmatprep.subr.mxu0 0.0
    %1445 = vmatpush1.msra.mxu0 0.0
    %1446 = vmatprep.subr.mxu0 0.0
    %1447 = vmatpush1.msra.mxu0 0.0
    %1448 = vmatprep.subr.mxu0 0.0
    %1449 = vmatpush1.msra.mxu0 0.0
    %1450 = vmatprep.subr.mxu0 0.0
    %1451 = vmatpush1.msra.mxu0 0.0
    %1452 = vmatprep.subr.mxu0 0.0
    %1453 = vmatpush1.msra.mxu0 0.0
    %1454 = vmatprep.subr.mxu0 0.0
    %1455 = vmatpush1.msra.mxu0 0.0
    %1456 = vmatprep.subr.mxu0 0.0
    %1457 = vmatpush1.msra.mxu0 0.0
    %1458 = vmatprep.subr.mxu0 0.0
    %1459 = vmatpush1.msra.mxu0 0.0
    %1460 = vmatprep.subr.mxu0 0.0
    %1461 = vmatpush1.msra.mxu0 0.0
    %1462 = vmatprep.subr.mxu0 0.0
    %1463 = vmatpush1.msra.mxu0 0.0
    %1464 = vmatprep.subr.mxu0 0.0
    %1465 = vmatpush1.msra.mxu0 0.0
    %1466 = vmatprep.subr.mxu0 0.0
    %1467 = vmatpush1.msra.mxu0 0.0
    %1468 = vmatprep.mubr.f32.mxu0 0.0
    %1469 = vmatmul.mubr.f32.gmra.mrb[0].mxu0 %v1331
    %v1470 = vpop.f32.mrb[0].mxu0
    %v1471 = vadd.f32 0.0, %v1470
    %v1472 = vpop.f32.mrb[0].mxu0
    %v1473 = vadd.f32 0.0, %v1472
    %1474 = vdwg.mxu0
    %v1475 = vld [vmem:[#allocation2 + $0x40] sm:$0xff]
    %v1476 = vld [vmem:[#allocation2 + $0x48] sm:$0xff]
    %v1477 = vld [vmem:[#allocation2 + $0x50] sm:$0xff]
    %v1478 = vld [vmem:[#allocation2 + $0x58] sm:$0xff]
    %v1479 = vadd.f32 %v1475, %v1089
    %v1480 = vadd.f32 %v1476, %v1091
    %v1481 = vadd.f32 %v1477, %v1160
    %v1482 = vadd.f32 %v1478, %v1162
    %v1483 = vtanh.pop %v1479
    %v1484 = vtanh.pop %v1480
    %v1485 = vtanh.pop %v1481
    %v1486 = vtanh.pop %v1482
    %v1487 = vmul.f32 %v1483, 0.5
    %v1488 = vadd.f32 %v1487, 0.5
    %v1489 = vmul.f32 %v1484, 0.5
    %v1490 = vadd.f32 %v1489, 0.5
    %v1491 = vmul.f32 %v1486, 0.5
    %v1492 = vadd.f32 %v1491, 0.5
    %v1493 = vmul.f32 %v1490, %v948
    %v1494 = vmul.f32 %v1488, %v1485
    %v1495 = vadd.f32 %v1493, %v1494
    %v1496 = vtanh.pop %v1495
    %v1497 = vmul.f32 %v1492, %v1496
    %v1498 = vadd.f32 %v1231, %v556
    %v1499 = vadd.f32 %v1233, %v560
    %v1500 = vadd.f32 %v1302, %v564
    %v1501 = vadd.f32 %v1304, %v568
    %v1502 = vadd.f32 %v1498, %v1400
    %v1503 = vadd.f32 %v1499, %v1402
    %v1504 = vadd.f32 %v1500, %v1471
    %v1505 = vadd.f32 %v1501, %v1473
    %v1506 = vtanh.pop %v1502
    %v1507 = vtanh.pop %v1503
    %v1508 = vtanh.pop %v1504
    %v1509 = vtanh.pop %v1505
    %v1510 = vmul.f32 %v1506, 0.5
    %v1511 = vadd.f32 %v1510, 0.5
    %v1512 = vmul.f32 %v1507, 0.5
    %v1513 = vadd.f32 %v1512, 0.5
    %v1514 = vmul.f32 %v1509, 0.5
    %v1515 = vadd.f32 %v1514, 0.5
    %v1516 = vmul.f32 %v1513, %v967
    %v1517 = vmul.f32 %v1511, %v1508
    %v1518 = vadd.f32 %v1516, %v1517
    %v1519 = vtanh.pop %v1518
    %v1520 = vmul.f32 %v1515, %v1519
    %1521 = vst.msk [vmem:[#allocation3 + $0x8] sm:$0xff] %vm640, %v1520
    %v1522 = vld [vmem:[#allocation4] sm:$0xff]
    %v1523 = vld [vmem:[#allocation4 + $0x8] sm:$0xff]
    %v1524 = vld [vmem:[#allocation4 + $0x10] sm:$0xff]
    %v1525 = vld [vmem:[#allocation4 + $0x18] sm:$0xff]
    %v1526 = vld [vmem:[#allocation4 + $0x20] sm:$0xff]
    %v1527 = vld [vmem:[#allocation4 + $0x28] sm:$0xff]
    %v1528 = vld [vmem:[#allocation4 + $0x30] sm:$0xff]
    %v1529 = vld [vmem:[#allocation4 + $0x38] sm:$0xff]
    %v1530 = vld [vmem:[#allocation4 + $0x40] sm:$0xff]
    %v1531 = vld [vmem:[#allocation4 + $0x48] sm:$0xff]
    %v1532 = vld [vmem:[#allocation4 + $0x50] sm:$0xff]
    %v1533 = vld [vmem:[#allocation4 + $0x58] sm:$0xff]
    %v1534 = vld [vmem:[#allocation4 + $0x60] sm:$0xff]
    %v1535 = vld [vmem:[#allocation4 + $0x68] sm:$0xff]
    %v1536 = vld [vmem:[#allocation4 + $0x70] sm:$0xff]
    %v1537 = vld [vmem:[#allocation4 + $0x78] sm:$0xff]
    %v1538 = vld [vmem:[#allocation4 + $0x80] sm:$0xff]
    %v1539 = vld [vmem:[#allocation4 + $0x88] sm:$0xff]
    %v1540 = vld [vmem:[#allocation4 + $0x90] sm:$0xff]
    %v1541 = vld [vmem:[#allocation4 + $0x98] sm:$0xff]
    %v1542 = vld [vmem:[#allocation4 + $0xa0] sm:$0xff]
    %v1543 = vld [vmem:[#allocation4 + $0xa8] sm:$0xff]
    %v1544 = vld [vmem:[#allocation4 + $0xb0] sm:$0xff]
    %v1545 = vld [vmem:[#allocation4 + $0xb8] sm:$0xff]
    %v1546 = vld [vmem:[#allocation4 + $0xc0] sm:$0xff]
    %v1547 = vld [vmem:[#allocation4 + $0xc8] sm:$0xff]
    %v1548 = vld [vmem:[#allocation4 + $0xd0] sm:$0xff]
    %v1549 = vld [vmem:[#allocation4 + $0xd8] sm:$0xff]
    %v1550 = vld [vmem:[#allocation4 + $0xe0] sm:$0xff]
    %v1551 = vld [vmem:[#allocation4 + $0xe8] sm:$0xff]
    %v1552 = vld [vmem:[#allocation4 + $0xf0] sm:$0xff]
    %v1553 = vld [vmem:[#allocation4 + $0xf8] sm:$0xff]
    %v1554 = vld [vmem:[#allocation4 + $0x100] sm:$0xff]
    %v1555 = vld [vmem:[#allocation4 + $0x108] sm:$0xff]
    %v1556 = vld [vmem:[#allocation4 + $0x110] sm:$0xff]
    %v1557 = vld [vmem:[#allocation4 + $0x118] sm:$0xff]
    %v1558 = vld [vmem:[#allocation4 + $0x120] sm:$0xff]
    %v1559 = vld [vmem:[#allocation4 + $0x128] sm:$0xff]
    %v1560 = vld [vmem:[#allocation4 + $0x130] sm:$0xff]
    %v1561 = vld [vmem:[#allocation4 + $0x138] sm:$0xff]
    %v1562 = vld [vmem:[#allocation4 + $0x140] sm:$0xff]
    %v1563 = vld [vmem:[#allocation4 + $0x148] sm:$0xff]
    %v1564 = vld [vmem:[#allocation4 + $0x150] sm:$0xff]
    %v1565 = vld [vmem:[#allocation4 + $0x158] sm:$0xff]
    %v1566 = vld [vmem:[#allocation4 + $0x160] sm:$0xff]
    %v1567 = vld [vmem:[#allocation4 + $0x168] sm:$0xff]
    %v1568 = vld [vmem:[#allocation4 + $0x170] sm:$0xff]
    %v1569 = vld [vmem:[#allocation4 + $0x178] sm:$0xff]
    %v1571 = vsel %vm640, %v1497, 0
    %1573 = vmatprep.subr.mxu0 %v1523
    %1574 = vmatpush1.msra.mxu0 %v1522
    %1575 = vmatprep.subr.mxu0 %v1531
    %1576 = vmatpush1.msra.mxu0 %v1530
    %1577 = vmatprep.subr.mxu0 %v1539
    %1578 = vmatpush1.msra.mxu0 %v1538
    %1579 = vmatprep.subr.mxu0 %v1547
    %1580 = vmatpush1.msra.mxu0 %v1546
    %1581 = vmatprep.subr.mxu0 %v1555
    %1582 = vmatpush1.msra.mxu0 %v1554
    %1583 = vmatprep.subr.mxu0 %v1563
    %1584 = vmatpush1.msra.mxu0 %v1562
    %1585 = vmatprep.subr.mxu0 0.0
    %1586 = vmatpush1.msra.mxu0 0.0
    %1587 = vmatprep.subr.mxu0 0.0
    %1588 = vmatpush1.msra.mxu0 0.0
    %1589 = vmatprep.subr.mxu0 0.0
    %1590 = vmatpush1.msra.mxu0 0.0
    %1591 = vmatprep.subr.mxu0 0.0
    %1592 = vmatpush1.msra.mxu0 0.0
    %1593 = vmatprep.subr.mxu0 0.0
    %1594 = vmatpush1.msra.mxu0 0.0
    %1595 = vmatprep.subr.mxu0 0.0
    %1596 = vmatpush1.msra.mxu0 0.0
    %1597 = vmatprep.subr.mxu0 0.0
    %1598 = vmatpush1.msra.mxu0 0.0
    %1599 = vmatprep.subr.mxu0 0.0
    %1600 = vmatpush1.msra.mxu0 0.0
    %1601 = vmatprep.subr.mxu0 0.0
    %1602 = vmatpush1.msra.mxu0 0.0
    %1603 = vmatprep.subr.mxu0 0.0
    %1604 = vmatpush1.msra.mxu0 0.0
    %1605 = vmatprep.subr.mxu0 0.0
    %1606 = vmatpush1.msra.mxu0 0.0
    %1607 = vmatprep.subr.mxu0 0.0
    %1608 = vmatpush1.msra.mxu0 0.0
    %1609 = vmatprep.subr.mxu0 0.0
    %1610 = vmatpush1.msra.mxu0 0.0
    %1611 = vmatprep.subr.mxu0 0.0
    %1612 = vmatpush1.msra.mxu0 0.0
    %1613 = vmatprep.subr.mxu0 0.0
    %1614 = vmatpush1.msra.mxu0 0.0
    %1615 = vmatprep.subr.mxu0 0.0
    %1616 = vmatpush1.msra.mxu0 0.0
    %1617 = vmatprep.subr.mxu0 0.0
    %1618 = vmatpush1.msra.mxu0 0.0
    %1619 = vmatprep.subr.mxu0 0.0
    %1620 = vmatpush1.msra.mxu0 0.0
    %1621 = vmatprep.subr.mxu0 0.0
    %1622 = vmatpush1.msra.mxu0 0.0
    %1623 = vmatprep.subr.mxu0 0.0
    %1624 = vmatpush1.msra.mxu0 0.0
    %1625 = vmatprep.subr.mxu0 0.0
    %1626 = vmatpush1.msra.mxu0 0.0
    %1627 = vmatprep.subr.mxu0 0.0
    %1628 = vmatpush1.msra.mxu0 0.0
    %1629 = vmatprep.subr.mxu0 0.0
    %1630 = vmatpush1.msra.mxu0 0.0
    %1631 = vmatprep.subr.mxu0 0.0
    %1632 = vmatpush1.msra.mxu0 0.0
    %1633 = vmatprep.subr.mxu0 0.0
    %1634 = vmatpush1.msra.mxu0 0.0
    %1635 = vmatprep.subr.mxu0 0.0
    %1636 = vmatpush1.msra.mxu0 0.0
    %1637 = vmatprep.mubr.f32.mxu0 0.0
    %1638 = vmatmul.mubr.f32.gmra.mrb[0].mxu0 %v1571
    %v1639 = vpop.f32.mrb[0].mxu0
    %v1640 = vadd.f32 0.0, %v1639
    %v1641 = vpop.f32.mrb[0].mxu0
    %v1642 = vadd.f32 0.0, %v1641
    %1643 = vdwg.mxu0
    %1644 = vmatprep.subr.mxu0 %v1525
    %1645 = vmatpush1.msra.mxu0 %v1524
    %1646 = vmatprep.subr.mxu0 %v1533
    %1647 = vmatpush1.msra.mxu0 %v1532
    %1648 = vmatprep.subr.mxu0 %v1541
    %1649 = vmatpush1.msra.mxu0 %v1540
    %1650 = vmatprep.subr.mxu0 %v1549
    %1651 = vmatpush1.msra.mxu0 %v1548
    %1652 = vmatprep.subr.mxu0 %v1557
    %1653 = vmatpush1.msra.mxu0 %v1556
    %1654 = vmatprep.subr.mxu0 %v1565
    %1655 = vmatpush1.msra.mxu0 %v1564
    %1656 = vmatprep.subr.mxu0 0.0
    %1657 = vmatpush1.msra.mxu0 0.0
    %1658 = vmatprep.subr.mxu0 0.0
    %1659 = vmatpush1.msra.mxu0 0.0
    %1660 = vmatprep.subr.mxu0 0.0
    %1661 = vmatpush1.msra.mxu0 0.0
    %1662 = vmatprep.subr.mxu0 0.0
    %1663 = vmatpush1.msra.mxu0 0.0
    %1664 = vmatprep.subr.mxu0 0.0
    %1665 = vmatpush1.msra.mxu0 0.0
    %1666 = vmatprep.subr.mxu0 0.0
    %1667 = vmatpush1.msra.mxu0 0.0
    %1668 = vmatprep.subr.mxu0 0.0
    %1669 = vmatpush1.msra.mxu0 0.0
    %1670 = vmatprep.subr.mxu0 0.0
    %1671 = vmatpush1.msra.mxu0 0.0
    %1672 = vmatprep.subr.mxu0 0.0
    %1673 = vmatpush1.msra.mxu0 0.0
    %1674 = vmatprep.subr.mxu0 0.0
    %1675 = vmatpush1.msra.mxu0 0.0
    %1676 = vmatprep.subr.mxu0 0.0
    %1677 = vmatpush1.msra.mxu0 0.0
    %1678 = vmatprep.subr.mxu0 0.0
    %1679 = vmatpush1.msra.mxu0 0.0
    %1680 = vmatprep.subr.mxu0 0.0
    %1681 = vmatpush1.msra.mxu0 0.0
    %1682 = vmatprep.subr.mxu0 0.0
    %1683 = vmatpush1.msra.mxu0 0.0
    %1684 = vmatprep.subr.mxu0 0.0
    %1685 = vmatpush1.msra.mxu0 0.0
    %1686 = vmatprep.subr.mxu0 0.0
    %1687 = vmatpush1.msra.mxu0 0.0
    %1688 = vmatprep.subr.mxu0 0.0
    %1689 = vmatpush1.msra.mxu0 0.0
    %1690 = vmatprep.subr.mxu0 0.0
    %1691 = vmatpush1.msra.mxu0 0.0
    %1692 = vmatprep.subr.mxu0 0.0
    %1693 = vmatpush1.msra.mxu0 0.0
    %1694 = vmatprep.subr.mxu0 0.0
    %1695 = vmatpush1.msra.mxu0 0.0
    %1696 = vmatprep.subr.mxu0 0.0
    %1697 = vmatpush1.msra.mxu0 0.0
    %1698 = vmatprep.subr.mxu0 0.0
    %1699 = vmatpush1.msra.mxu0 0.0
    %1700 = vmatprep.subr.mxu0 0.0
    %1701 = vmatpush1.msra.mxu0 0.0
    %1702 = vmatprep.subr.mxu0 0.0
    %1703 = vmatpush1.msra.mxu0 0.0
    %1704 = vmatprep.subr.mxu0 0.0
    %1705 = vmatpush1.msra.mxu0 0.0
    %1706 = vmatprep.subr.mxu0 0.0
    %1707 = vmatpush1.msra.mxu0 0.0
    %1708 = vmatprep.mubr.f32.mxu0 0.0
    %1709 = vmatmul.mubr.f32.gmra.mrb[0].mxu0 %v1571
    %v1710 = vpop.f32.mrb[0].mxu0
    %v1711 = vadd.f32 0.0, %v1710
    %v1712 = vpop.f32.mrb[0].mxu0
    %v1713 = vadd.f32 0.0, %v1712
    %1714 = vdwg.mxu0
    %1715 = vmatprep.subr.mxu0 %v1527
    %1716 = vmatpush1.msra.mxu0 %v1526
    %1717 = vmatprep.subr.mxu0 %v1535
    %1718 = vmatpush1.msra.mxu0 %v1534
    %1719 = vmatprep.subr.mxu0 %v1543
    %1720 = vmatpush1.msra.mxu0 %v1542
    %1721 = vmatprep.subr.mxu0 %v1551
    %1722 = vmatpush1.msra.mxu0 %v1550
    %1723 = vmatprep.subr.mxu0 %v1559
    %1724 = vmatpush1.msra.mxu0 %v1558
    %1725 = vmatprep.subr.mxu0 %v1567
    %1726 = vmatpush1.msra.mxu0 %v1566
    %1727 = vmatprep.subr.mxu0 0.0
    %1728 = vmatpush1.msra.mxu0 0.0
    %1729 = vmatprep.subr.mxu0 0.0
    %1730 = vmatpush1.msra.mxu0 0.0
    %1731 = vmatprep.subr.mxu0 0.0
    %1732 = vmatpush1.msra.mxu0 0.0
    %1733 = vmatprep.subr.mxu0 0.0
    %1734 = vmatpush1.msra.mxu0 0.0
    %1735 = vmatprep.subr.mxu0 0.0
    %1736 = vmatpush1.msra.mxu0 0.0
    %1737 = vmatprep.subr.mxu0 0.0
    %1738 = vmatpush1.msra.mxu0 0.0
    %1739 = vmatprep.subr.mxu0 0.0
    %1740 = vmatpush1.msra.mxu0 0.0
    %1741 = vmatprep.subr.mxu0 0.0
    %1742 = vmatpush1.msra.mxu0 0.0
    %1743 = vmatprep.subr.mxu0 0.0
    %1744 = vmatpush1.msra.mxu0 0.0
    %1745 = vmatprep.subr.mxu0 0.0
    %1746 = vmatpush1.msra.mxu0 0.0
    %1747 = vmatprep.subr.mxu0 0.0
    %1748 = vmatpush1.msra.mxu0 0.0
    %1749 = vmatprep.subr.mxu0 0.0
    %1750 = vmatpush1.msra.mxu0 0.0
    %1751 = vmatprep.subr.mxu0 0.0
    %1752 = vmatpush1.msra.mxu0 0.0
    %1753 = vmatprep.subr.mxu0 0.0
    %1754 = vmatpush1.msra.mxu0 0.0
    %1755 = vmatprep.subr.mxu0 0.0
    %1756 = vmatpush1.msra.mxu0 0.0
    %1757 = vmatprep.subr.mxu0 0.0
    %1758 = vmatpush1.msra.mxu0 0.0
    %1759 = vmatprep.subr.mxu0 0.0
    %1760 = vmatpush1.msra.mxu0 0.0
    %1761 = vmatprep.subr.mxu0 0.0
    %1762 = vmatpush1.msra.mxu0 0.0
    %1763 = vmatprep.subr.mxu0 0.0
    %1764 = vmatpush1.msra.mxu0 0.0
    %1765 = vmatprep.subr.mxu0 0.0
    %1766 = vmatpush1.msra.mxu0 0.0
    %1767 = vmatprep.subr.mxu0 0.0
    %1768 = vmatpush1.msra.mxu0 0.0
    %1769 = vmatprep.subr.mxu0 0.0
    %1770 = vmatpush1.msra.mxu0 0.0
    %1771 = vmatprep.subr.mxu0 0.0
    %1772 = vmatpush1.msra.mxu0 0.0
    %1773 = vmatprep.subr.mxu0 0.0
    %1774 = vmatpush1.msra.mxu0 0.0
    %1775 = vmatprep.subr.mxu0 0.0
    %1776 = vmatpush1.msra.mxu0 0.0
    %1777 = vmatprep.subr.mxu0 0.0
    %1778 = vmatpush1.msra.mxu0 0.0
    %1779 = vmatprep.mubr.f32.mxu0 0.0
    %1780 = vmatmul.mubr.f32.gmra.mrb[0].mxu0 %v1571
    %v1781 = vpop.f32.mrb[0].mxu0
    %v1782 = vadd.f32 0.0, %v1781
    %v1783 = vpop.f32.mrb[0].mxu0
    %v1784 = vadd.f32 0.0, %v1783
    %1785 = vdwg.mxu0
    %1786 = vmatprep.subr.mxu0 %v1529
    %1787 = vmatpush1.msra.mxu0 %v1528
    %1788 = vmatprep.subr.mxu0 %v1537
    %1789 = vmatpush1.msra.mxu0 %v1536
    %1790 = vmatprep.subr.mxu0 %v1545
    %1791 = vmatpush1.msra.mxu0 %v1544
    %1792 = vmatprep.subr.mxu0 %v1553
    %1793 = vmatpush1.msra.mxu0 %v1552
    %1794 = vmatprep.subr.mxu0 %v1561
    %1795 = vmatpush1.msra.mxu0 %v1560
    %1796 = vmatprep.subr.mxu0 %v1569
    %1797 = vmatpush1.msra.mxu0 %v1568
    %1798 = vmatprep.subr.mxu0 0.0
    %1799 = vmatpush1.msra.mxu0 0.0
    %1800 = vmatprep.subr.mxu0 0.0
    %1801 = vmatpush1.msra.mxu0 0.0
    %1802 = vmatprep.subr.mxu0 0.0
    %1803 = vmatpush1.msra.mxu0 0.0
    %1804 = vmatprep.subr.mxu0 0.0
    %1805 = vmatpush1.msra.mxu0 0.0
    %1806 = vmatprep.subr.mxu0 0.0
    %1807 = vmatpush1.msra.mxu0 0.0
    %1808 = vmatprep.subr.mxu0 0.0
    %1809 = vmatpush1.msra.mxu0 0.0
    %1810 = vmatprep.subr.mxu0 0.0
    %1811 = vmatpush1.msra.mxu0 0.0
    %1812 = vmatprep.subr.mxu0 0.0
    %1813 = vmatpush1.msra.mxu0 0.0
    %1814 = vmatprep.subr.mxu0 0.0
    %1815 = vmatpush1.msra.mxu0 0.0
    %1816 = vmatprep.subr.mxu0 0.0
    %1817 = vmatpush1.msra.mxu0 0.0
    %1818 = vmatprep.subr.mxu0 0.0
    %1819 = vmatpush1.msra.mxu0 0.0
    %1820 = vmatprep.subr.mxu0 0.0
    %1821 = vmatpush1.msra.mxu0 0.0
    %1822 = vmatprep.subr.mxu0 0.0
    %1823 = vmatpush1.msra.mxu0 0.0
    %1824 = vmatprep.subr.mxu0 0.0
    %1825 = vmatpush1.msra.mxu0 0.0
    %1826 = vmatprep.subr.mxu0 0.0
    %1827 = vmatpush1.msra.mxu0 0.0
    %1828 = vmatprep.subr.mxu0 0.0
    %1829 = vmatpush1.msra.mxu0 0.0
    %1830 = vmatprep.subr.mxu0 0.0
    %1831 = vmatpush1.msra.mxu0 0.0
    %1832 = vmatprep.subr.mxu0 0.0
    %1833 = vmatpush1.msra.mxu0 0.0
    %1834 = vmatprep.subr.mxu0 0.0
    %1835 = vmatpush1.msra.mxu0 0.0
    %1836 = vmatprep.subr.mxu0 0.0
    %1837 = vmatpush1.msra.mxu0 0.0
    %1838 = vmatprep.subr.mxu0 0.0
    %1839 = vmatpush1.msra.mxu0 0.0
    %1840 = vmatprep.subr.mxu0 0.0
    %1841 = vmatpush1.msra.mxu0 0.0
    %1842 = vmatprep.subr.mxu0 0.0
    %1843 = vmatpush1.msra.mxu0 0.0
    %1844 = vmatprep.subr.mxu0 0.0
    %1845 = vmatpush1.msra.mxu0 0.0
    %1846 = vmatprep.subr.mxu0 0.0
    %1847 = vmatpush1.msra.mxu0 0.0
    %1848 = vmatprep.subr.mxu0 0.0
    %1849 = vmatpush1.msra.mxu0 0.0
    %1850 = vmatprep.mubr.f32.mxu0 0.0
    %1851 = vmatmul.mubr.f32.gmra.mrb[0].mxu0 %v1571
    %v1852 = vpop.f32.mrb[0].mxu0
    %v1853 = vadd.f32 0.0, %v1852
    %v1854 = vpop.f32.mrb[0].mxu0
    %v1855 = vadd.f32 0.0, %v1854
    %1856 = vdwg.mxu0
    %v1857 = vld [vmem:[#allocation7] sm:$0xff]
    %v1858 = vld [vmem:[#allocation7 + $0x8] sm:$0xff]
    %v1859 = vld [vmem:[#allocation7 + $0x10] sm:$0xff]
    %v1860 = vld [vmem:[#allocation7 + $0x18] sm:$0xff]
    %v1861 = vld [vmem:[#allocation7 + $0x20] sm:$0xff]
    %v1862 = vld [vmem:[#allocation7 + $0x28] sm:$0xff]
    %v1863 = vld [vmem:[#allocation7 + $0x30] sm:$0xff]
    %v1864 = vld [vmem:[#allocation7 + $0x38] sm:$0xff]
    %v1865 = vld [vmem:[#allocation7 + $0x40] sm:$0xff]
    %v1866 = vld [vmem:[#allocation7 + $0x48] sm:$0xff]
    %v1867 = vld [vmem:[#allocation7 + $0x50] sm:$0xff]
    %v1868 = vld [vmem:[#allocation7 + $0x58] sm:$0xff]
    %v1869 = vld [vmem:[#allocation7 + $0x60] sm:$0xff]
    %v1870 = vld [vmem:[#allocation7 + $0x68] sm:$0xff]
    %v1871 = vld [vmem:[#allocation7 + $0x70] sm:$0xff]
    %v1872 = vld [vmem:[#allocation7 + $0x78] sm:$0xff]
    %v1873 = vld [vmem:[#allocation7 + $0x80] sm:$0xff]
    %v1874 = vld [vmem:[#allocation7 + $0x88] sm:$0xff]
    %v1875 = vld [vmem:[#allocation7 + $0x90] sm:$0xff]
    %v1876 = vld [vmem:[#allocation7 + $0x98] sm:$0xff]
    %v1877 = vld [vmem:[#allocation7 + $0xa0] sm:$0xff]
    %v1878 = vld [vmem:[#allocation7 + $0xa8] sm:$0xff]
    %v1879 = vld [vmem:[#allocation7 + $0xb0] sm:$0xff]
    %v1880 = vld [vmem:[#allocation7 + $0xb8] sm:$0xff]
    %v1882 = vsel %vm640, %v1520, 0
    %1884 = vmatprep.subr.mxu0 %v1858
    %1885 = vmatpush1.msra.mxu0 %v1857
    %1886 = vmatprep.subr.mxu0 %v1862
    %1887 = vmatpush1.msra.mxu0 %v1861
    %1888 = vmatprep.subr.mxu0 %v1866
    %1889 = vmatpush1.msra.mxu0 %v1865
    %1890 = vmatprep.subr.mxu0 %v1870
    %1891 = vmatpush1.msra.mxu0 %v1869
    %1892 = vmatprep.subr.mxu0 %v1874
    %1893 = vmatpush1.msra.mxu0 %v1873
    %1894 = vmatprep.subr.mxu0 %v1878
    %1895 = vmatpush1.msra.mxu0 %v1877
    %1896 = vmatprep.subr.mxu0 0.0
    %1897 = vmatpush1.msra.mxu0 0.0
    %1898 = vmatprep.subr.mxu0 0.0
    %1899 = vmatpush1.msra.mxu0 0.0
    %1900 = vmatprep.subr.mxu0 0.0
    %1901 = vmatpush1.msra.mxu0 0.0
    %1902 = vmatprep.subr.mxu0 0.0
    %1903 = vmatpush1.msra.mxu0 0.0
    %1904 = vmatprep.subr.mxu0 0.0
    %1905 = vmatpush1.msra.mxu0 0.0
    %1906 = vmatprep.subr.mxu0 0.0
    %1907 = vmatpush1.msra.mxu0 0.0
    %1908 = vmatprep.subr.mxu0 0.0
    %1909 = vmatpush1.msra.mxu0 0.0
    %1910 = vmatprep.subr.mxu0 0.0
    %1911 = vmatpush1.msra.mxu0 0.0
    %1912 = vmatprep.subr.mxu0 0.0
    %1913 = vmatpush1.msra.mxu0 0.0
    %1914 = vmatprep.subr.mxu0 0.0
    %1915 = vmatpush1.msra.mxu0 0.0
    %1916 = vmatprep.subr.mxu0 0.0
    %1917 = vmatpush1.msra.mxu0 0.0
    %1918 = vmatprep.subr.mxu0 0.0
    %1919 = vmatpush1.msra.mxu0 0.0
    %1920 = vmatprep.subr.mxu0 0.0
    %1921 = vmatpush1.msra.mxu0 0.0
    %1922 = vmatprep.subr.mxu0 0.0
    %1923 = vmatpush1.msra.mxu0 0.0
    %1924 = vmatprep.subr.mxu0 0.0
    %1925 = vmatpush1.msra.mxu0 0.0
    %1926 = vmatprep.subr.mxu0 0.0
    %1927 = vmatpush1.msra.mxu0 0.0
    %1928 = vmatprep.subr.mxu0 0.0
    %1929 = vmatpush1.msra.mxu0 0.0
    %1930 = vmatprep.subr.mxu0 0.0
    %1931 = vmatpush1.msra.mxu0 0.0
    %1932 = vmatprep.subr.mxu0 0.0
    %1933 = vmatpush1.msra.mxu0 0.0
    %1934 = vmatprep.subr.mxu0 0.0
    %1935 = vmatpush1.msra.mxu0 0.0
    %1936 = vmatprep.subr.mxu0 0.0
    %1937 = vmatpush1.msra.mxu0 0.0
    %1938 = vmatprep.subr.mxu0 0.0
    %1939 = vmatpush1.msra.mxu0 0.0
    %1940 = vmatprep.subr.mxu0 0.0
    %1941 = vmatpush1.msra.mxu0 0.0
    %1942 = vmatprep.subr.mxu0 0.0
    %1943 = vmatpush1.msra.mxu0 0.0
    %1944 = vmatprep.subr.mxu0 0.0
    %1945 = vmatpush1.msra.mxu0 0.0
    %1946 = vmatprep.subr.mxu0 0.0
    %1947 = vmatpush1.msra.mxu0 0.0
    %1948 = vmatprep.mubr.f32.mxu0 0.0
    %1949 = vmatmul.mubr.f32.gmra.mrb[0].mxu0 %v1882
    %v1950 = vpop.f32.mrb[0].mxu0
    %v1951 = vadd.f32 0.0, %v1950
    %v1952 = vpop.f32.mrb[0].mxu0
    %v1953 = vadd.f32 0.0, %v1952
    %1954 = vdwg.mxu0
    %1955 = vmatprep.subr.mxu0 %v1860
    %1956 = vmatpush1.msra.mxu0 %v1859
    %1957 = vmatprep.subr.mxu0 %v1864
    %1958 = vmatpush1.msra.mxu0 %v1863
    %1959 = vmatprep.subr.mxu0 %v1868
    %1960 = vmatpush1.msra.mxu0 %v1867
    %1961 = vmatprep.subr.mxu0 %v1872
    %1962 = vmatpush1.msra.mxu0 %v1871
    %1963 = vmatprep.subr.mxu0 %v1876
    %1964 = vmatpush1.msra.mxu0 %v1875
    %1965 = vmatprep.subr.mxu0 %v1880
    %1966 = vmatpush1.msra.mxu0 %v1879
    %1967 = vmatprep.subr.mxu0 0.0
    %1968 = vmatpush1.msra.mxu0 0.0
    %1969 = vmatprep.subr.mxu0 0.0
    %1970 = vmatpush1.msra.mxu0 0.0
    %1971 = vmatprep.subr.mxu0 0.0
    %1972 = vmatpush1.msra.mxu0 0.0
    %1973 = vmatprep.subr.mxu0 0.0
    %1974 = vmatpush1.msra.mxu0 0.0
    %1975 = vmatprep.subr.mxu0 0.0
    %1976 = vmatpush1.msra.mxu0 0.0
    %1977 = vmatprep.subr.mxu0 0.0
    %1978 = vmatpush1.msra.mxu0 0.0
    %1979 = vmatprep.subr.mxu0 0.0
    %1980 = vmatpush1.msra.mxu0 0.0
    %1981 = vmatprep.subr.mxu0 0.0
    %1982 = vmatpush1.msra.mxu0 0.0
    %1983 = vmatprep.subr.mxu0 0.0
    %1984 = vmatpush1.msra.mxu0 0.0
    %1985 = vmatprep.subr.mxu0 0.0
    %1986 = vmatpush1.msra.mxu0 0.0
    %1987 = vmatprep.subr.mxu0 0.0
    %1988 = vmatpush1.msra.mxu0 0.0
    %1989 = vmatprep.subr.mxu0 0.0
    %1990 = vmatpush1.msra.mxu0 0.0
    %1991 = vmatprep.subr.mxu0 0.0
    %1992 = vmatpush1.msra.mxu0 0.0
    %1993 = vmatprep.subr.mxu0 0.0
    %1994 = vmatpush1.msra.mxu0 0.0
    %1995 = vmatprep.subr.mxu0 0.0
    %1996 = vmatpush1.msra.mxu0 0.0
    %1997 = vmatprep.subr.mxu0 0.0
    %1998 = vmatpush1.msra.mxu0 0.0
    %1999 = vmatprep.subr.mxu0 0.0
    %2000 = vmatpush1.msra.mxu0 0.0
    %2001 = vmatprep.subr.mxu0 0.0
    %2002 = vmatpush1.msra.mxu0 0.0
    %2003 = vmatprep.subr.mxu0 0.0
    %2004 = vmatpush1.msra.mxu0 0.0
    %2005 = vmatprep.subr.mxu0 0.0
    %2006 = vmatpush1.msra.mxu0 0.0
    %2007 = vmatprep.subr.mxu0 0.0
    %2008 = vmatpush1.msra.mxu0 0.0
    %2009 = vmatprep.subr.mxu0 0.0
    %2010 = vmatpush1.msra.mxu0 0.0
    %2011 = vmatprep.subr.mxu0 0.0
    %2012 = vmatpush1.msra.mxu0 0.0
    %2013 = vmatprep.subr.mxu0 0.0
    %2014 = vmatpush1.msra.mxu0 0.0
    %2015 = vmatprep.subr.mxu0 0.0
    %2016 = vmatpush1.msra.mxu0 0.0
    %2017 = vmatprep.subr.mxu0 0.0
    %2018 = vmatpush1.msra.mxu0 0.0
    %2019 = vmatprep.mubr.f32.mxu0 0.0
    %2020 = vmatmul.mubr.f32.gmra.mrb[0].mxu0 %v1882
    %v2021 = vpop.f32.mrb[0].mxu0
    %v2022 = vadd.f32 0.0, %v2021
    %v2023 = vpop.f32.mrb[0].mxu0
    %v2024 = vadd.f32 0.0, %v2023
    %2025 = vdwg.mxu0
    %v2026 = vld [vmem:[#allocation2 + $0x60] sm:$0xff]
    %v2027 = vld [vmem:[#allocation2 + $0x68] sm:$0xff]
    %v2028 = vld [vmem:[#allocation2 + $0x70] sm:$0xff]
    %v2029 = vld [vmem:[#allocation2 + $0x78] sm:$0xff]
    %v2030 = vadd.f32 %v2026, %v1640
    %v2031 = vadd.f32 %v2027, %v1642
    %v2032 = vadd.f32 %v2028, %v1711
    %v2033 = vadd.f32 %v2029, %v1713
    %v2034 = vtanh.pop %v2030
    %v2035 = vtanh.pop %v2031
    %v2036 = vtanh.pop %v2032
    %v2037 = vtanh.pop %v2033
    %v2038 = vmul.f32 %v2034, 0.5
    %v2039 = vadd.f32 %v2038, 0.5
    %v2040 = vmul.f32 %v2035, 0.5
    %v2041 = vadd.f32 %v2040, 0.5
    %v2042 = vmul.f32 %v2037, 0.5
    %v2043 = vadd.f32 %v2042, 0.5
    %v2044 = vmul.f32 %v2041, %v1495
    %v2045 = vmul.f32 %v2039, %v2036
    %v2046 = vadd.f32 %v2044, %v2045
    %v2047 = vtanh.pop %v2046
    %v2048 = vmul.f32 %v2043, %v2047
    %v2049 = vadd.f32 %v1782, %v556
    %v2050 = vadd.f32 %v1784, %v560
    %v2051 = vadd.f32 %v1853, %v564
    %v2052 = vadd.f32 %v1855, %v568
    %v2053 = vadd.f32 %v2049, %v1951
    %v2054 = vadd.f32 %v2050, %v1953
    %v2055 = vadd.f32 %v2051, %v2022
    %v2056 = vadd.f32 %v2052, %v2024
    %v2057 = vtanh.pop %v2053
    %v2058 = vtanh.pop %v2054
    %v2059 = vtanh.pop %v2055
    %v2060 = vtanh.pop %v2056
    %v2061 = vmul.f32 %v2057, 0.5
    %v2062 = vadd.f32 %v2061, 0.5
    %v2063 = vmul.f32 %v2058, 0.5
    %v2064 = vadd.f32 %v2063, 0.5
    %v2065 = vmul.f32 %v2060, 0.5
    %v2066 = vadd.f32 %v2065, 0.5
    %v2067 = vmul.f32 %v2064, %v1518
    %v2068 = vmul.f32 %v2062, %v2059
    %v2069 = vadd.f32 %v2067, %v2068
    %v2070 = vtanh.pop %v2069
    %v2071 = vmul.f32 %v2066, %v2070
    %2072 = vst.msk [vmem:[#allocation3 + $0x10] sm:$0xff] %vm640, %v2071
    %v2073 = vld [vmem:[#allocation4] sm:$0xff]
    %v2074 = vld [vmem:[#allocation4 + $0x8] sm:$0xff]
    %v2075 = vld [vmem:[#allocation4 + $0x10] sm:$0xff]
    %v2076 = vld [vmem:[#allocation4 + $0x18] sm:$0xff]
    %v2077 = vld [vmem:[#allocation4 + $0x20] sm:$0xff]
    %v2078 = vld [vmem:[#allocation4 + $0x28] sm:$0xff]
    %v2079 = vld [vmem:[#allocation4 + $0x30] sm:$0xff]
    %v2080 = vld [vmem:[#allocation4 + $0x38] sm:$0xff]
    %v2081 = vld [vmem:[#allocation4 + $0x40] sm:$0xff]
    %v2082 = vld [vmem:[#allocation4 + $0x48] sm:$0xff]
    %v2083 = vld [vmem:[#allocation4 + $0x50] sm:$0xff]
    %v2084 = vld [vmem:[#allocation4 + $0x58] sm:$0xff]
    %v2085 = vld [vmem:[#allocation4 + $0x60] sm:$0xff]
    %v2086 = vld [vmem:[#allocation4 + $0x68] sm:$0xff]
    %v2087 = vld [vmem:[#allocation4 + $0x70] sm:$0xff]
    %v2088 = vld [vmem:[#allocation4 + $0x78] sm:$0xff]
    %v2089 = vld [vmem:[#allocation4 + $0x80] sm:$0xff]
    %v2090 = vld [vmem:[#allocation4 + $0x88] sm:$0xff]
    %v2091 = vld [vmem:[#allocation4 + $0x90] sm:$0xff]
    %v2092 = vld [vmem:[#allocation4 + $0x98] sm:$0xff]
    %v2093 = vld [vmem:[#allocation4 + $0xa0] sm:$0xff]
    %v2094 = vld [vmem:[#allocation4 + $0xa8] sm:$0xff]
    %v2095 = vld [vmem:[#allocation4 + $0xb0] sm:$0xff]
    %v2096 = vld [vmem:[#allocation4 + $0xb8] sm:$0xff]
    %v2097 = vld [vmem:[#allocation4 + $0xc0] sm:$0xff]
    %v2098 = vld [vmem:[#allocation4 + $0xc8] sm:$0xff]
    %v2099 = vld [vmem:[#allocation4 + $0xd0] sm:$0xff]
    %v2100 = vld [vmem:[#allocation4 + $0xd8] sm:$0xff]
    %v2101 = vld [vmem:[#allocation4 + $0xe0] sm:$0xff]
    %v2102 = vld [vmem:[#allocation4 + $0xe8] sm:$0xff]
    %v2103 = vld [vmem:[#allocation4 + $0xf0] sm:$0xff]
    %v2104 = vld [vmem:[#allocation4 + $0xf8] sm:$0xff]
    %v2105 = vld [vmem:[#allocation4 + $0x100] sm:$0xff]
    %v2106 = vld [vmem:[#allocation4 + $0x108] sm:$0xff]
    %v2107 = vld [vmem:[#allocation4 + $0x110] sm:$0xff]
    %v2108 = vld [vmem:[#allocation4 + $0x118] sm:$0xff]
    %v2109 = vld [vmem:[#allocation4 + $0x120] sm:$0xff]
    %v2110 = vld [vmem:[#allocation4 + $0x128] sm:$0xff]
    %v2111 = vld [vmem:[#allocation4 + $0x130] sm:$0xff]
    %v2112 = vld [vmem:[#allocation4 + $0x138] sm:$0xff]
    %v2113 = vld [vmem:[#allocation4 + $0x140] sm:$0xff]
    %v2114 = vld [vmem:[#allocation4 + $0x148] sm:$0xff]
    %v2115 = vld [vmem:[#allocation4 + $0x150] sm:$0xff]
    %v2116 = vld [vmem:[#allocation4 + $0x158] sm:$0xff]
    %v2117 = vld [vmem:[#allocation4 + $0x160] sm:$0xff]
    %v2118 = vld [vmem:[#allocation4 + $0x168] sm:$0xff]
    %v2119 = vld [vmem:[#allocation4 + $0x170] sm:$0xff]
    %v2120 = vld [vmem:[#allocation4 + $0x178] sm:$0xff]
    %v2122 = vsel %vm640, %v2048, 0
    %2124 = vmatprep.subr.mxu0 %v2074
    %2125 = vmatpush1.msra.mxu0 %v2073
    %2126 = vmatprep.subr.mxu0 %v2082
    %2127 = vmatpush1.msra.mxu0 %v2081
    %2128 = vmatprep.subr.mxu0 %v2090
    %2129 = vmatpush1.msra.mxu0 %v2089
    %2130 = vmatprep.subr.mxu0 %v2098
    %2131 = vmatpush1.msra.mxu0 %v2097
    %2132 = vmatprep.subr.mxu0 %v2106
    %2133 = vmatpush1.msra.mxu0 %v2105
    %2134 = vmatprep.subr.mxu0 %v2114
    %2135 = vmatpush1.msra.mxu0 %v2113
    %2136 = vmatprep.subr.mxu0 0.0
    %2137 = vmatpush1.msra.mxu0 0.0
    %2138 = vmatprep.subr.mxu0 0.0
    %2139 = vmatpush1.msra.mxu0 0.0
    %2140 = vmatprep.subr.mxu0 0.0
    %2141 = vmatpush1.msra.mxu0 0.0
    %2142 = vmatprep.subr.mxu0 0.0
    %2143 = vmatpush1.msra.mxu0 0.0
    %2144 = vmatprep.subr.mxu0 0.0
    %2145 = vmatpush1.msra.mxu0 0.0
    %2146 = vmatprep.subr.mxu0 0.0
    %2147 = vmatpush1.msra.mxu0 0.0
    %2148 = vmatprep.subr.mxu0 0.0
    %2149 = vmatpush1.msra.mxu0 0.0
    %2150 = vmatprep.subr.mxu0 0.0
    %2151 = vmatpush1.msra.mxu0 0.0
    %2152 = vmatprep.subr.mxu0 0.0
    %2153 = vmatpush1.msra.mxu0 0.0
    %2154 = vmatprep.subr.mxu0 0.0
    %2155 = vmatpush1.msra.mxu0 0.0
    %2156 = vmatprep.subr.mxu0 0.0
    %2157 = vmatpush1.msra.mxu0 0.0
    %2158 = vmatprep.subr.mxu0 0.0
    %2159 = vmatpush1.msra.mxu0 0.0
    %2160 = vmatprep.subr.mxu0 0.0
    %2161 = vmatpush1.msra.mxu0 0.0
    %2162 = vmatprep.subr.mxu0 0.0
    %2163 = vmatpush1.msra.mxu0 0.0
    %2164 = vmatprep.subr.mxu0 0.0
    %2165 = vmatpush1.msra.mxu0 0.0
    %2166 = vmatprep.subr.mxu0 0.0
    %2167 = vmatpush1.msra.mxu0 0.0
    %2168 = vmatprep.subr.mxu0 0.0
    %2169 = vmatpush1.msra.mxu0 0.0
    %2170 = vmatprep.subr.mxu0 0.0
    %2171 = vmatpush1.msra.mxu0 0.0
    %2172 = vmatprep.subr.mxu0 0.0
    %2173 = vmatpush1.msra.mxu0 0.0
    %2174 = vmatprep.subr.mxu0 0.0
    %2175 = vmatpush1.msra.mxu0 0.0
    %2176 = vmatprep.subr.mxu0 0.0
    %2177 = vmatpush1.msra.mxu0 0.0
    %2178 = vmatprep.subr.mxu0 0.0
    %2179 = vmatpush1.msra.mxu0 0.0
    %2180 = vmatprep.subr.mxu0 0.0
    %2181 = vmatpush1.msra.mxu0 0.0
    %2182 = vmatprep.subr.mxu0 0.0
    %2183 = vmatpush1.msra.mxu0 0.0
    %2184 = vmatprep.subr.mxu0 0.0
    %2185 = vmatpush1.msra.mxu0 0.0
    %2186 = vmatprep.subr.mxu0 0.0
    %2187 = vmatpush1.msra.mxu0 0.0
    %2188 = vmatprep.mubr.f32.mxu0 0.0
    %2189 = vmatmul.mubr.f32.gmra.mrb[0].mxu0 %v2122
    %v2190 = vpop.f32.mrb[0].mxu0
    %v2191 = vadd.f32 0.0, %v2190
    %v2192 = vpop.f32.mrb[0].mxu0
    %v2193 = vadd.f32 0.0, %v2192
    %2194 = vdwg.mxu0
    %2195 = vmatprep.subr.mxu0 %v2076
    %2196 = vmatpush1.msra.mxu0 %v2075
    %2197 = vmatprep.subr.mxu0 %v2084
    %2198 = vmatpush1.msra.mxu0 %v2083
    %2199 = vmatprep.subr.mxu0 %v2092
    %2200 = vmatpush1.msra.mxu0 %v2091
    %2201 = vmatprep.subr.mxu0 %v2100
    %2202 = vmatpush1.msra.mxu0 %v2099
    %2203 = vmatprep.subr.mxu0 %v2108
    %2204 = vmatpush1.msra.mxu0 %v2107
    %2205 = vmatprep.subr.mxu0 %v2116
    %2206 = vmatpush1.msra.mxu0 %v2115
    %2207 = vmatprep.subr.mxu0 0.0
    %2208 = vmatpush1.msra.mxu0 0.0
    %2209 = vmatprep.subr.mxu0 0.0
    %2210 = vmatpush1.msra.mxu0 0.0
    %2211 = vmatprep.subr.mxu0 0.0
    %2212 = vmatpush1.msra.mxu0 0.0
    %2213 = vmatprep.subr.mxu0 0.0
    %2214 = vmatpush1.msra.mxu0 0.0
    %2215 = vmatprep.subr.mxu0 0.0
    %2216 = vmatpush1.msra.mxu0 0.0
    %2217 = vmatprep.subr.mxu0 0.0
    %2218 = vmatpush1.msra.mxu0 0.0
    %2219 = vmatprep.subr.mxu0 0.0
    %2220 = vmatpush1.msra.mxu0 0.0
    %2221 = vmatprep.subr.mxu0 0.0
    %2222 = vmatpush1.msra.mxu0 0.0
    %2223 = vmatprep.subr.mxu0 0.0
    %2224 = vmatpush1.msra.mxu0 0.0
    %2225 = vmatprep.subr.mxu0 0.0
    %2226 = vmatpush1.msra.mxu0 0.0
    %2227 = vmatprep.subr.mxu0 0.0
    %2228 = vmatpush1.msra.mxu0 0.0
    %2229 = vmatprep.subr.mxu0 0.0
    %2230 = vmatpush1.msra.mxu0 0.0
    %2231 = vmatprep.subr.mxu0 0.0
    %2232 = vmatpush1.msra.mxu0 0.0
    %2233 = vmatprep.subr.mxu0 0.0
    %2234 = vmatpush1.msra.mxu0 0.0
    %2235 = vmatprep.subr.mxu0 0.0
    %2236 = vmatpush1.msra.mxu0 0.0
    %2237 = vmatprep.subr.mxu0 0.0
    %2238 = vmatpush1.msra.mxu0 0.0
    %2239 = vmatprep.subr.mxu0 0.0
    %2240 = vmatpush1.msra.mxu0 0.0
    %2241 = vmatprep.subr.mxu0 0.0
    %2242 = vmatpush1.msra.mxu0 0.0
    %2243 = vmatprep.subr.mxu0 0.0
    %2244 = vmatpush1.msra.mxu0 0.0
    %2245 = vmatprep.subr.mxu0 0.0
    %2246 = vmatpush1.msra.mxu0 0.0
    %2247 = vmatprep.subr.mxu0 0.0
    %2248 = vmatpush1.msra.mxu0 0.0
    %2249 = vmatprep.subr.mxu0 0.0
    %2250 = vmatpush1.msra.mxu0 0.0
    %2251 = vmatprep.subr.mxu0 0.0
    %2252 = vmatpush1.msra.mxu0 0.0
    %2253 = vmatprep.subr.mxu0 0.0
    %2254 = vmatpush1.msra.mxu0 0.0
    %2255 = vmatprep.subr.mxu0 0.0
    %2256 = vmatpush1.msra.mxu0 0.0
    %2257 = vmatprep.subr.mxu0 0.0
    %2258 = vmatpush1.msra.mxu0 0.0
    %2259 = vmatprep.mubr.f32.mxu0 0.0
    %2260 = vmatmul.mubr.f32.gmra.mrb[0].mxu0 %v2122
    %v2261 = vpop.f32.mrb[0].mxu0
    %v2262 = vadd.f32 0.0, %v2261
    %v2263 = vpop.f32.mrb[0].mxu0
    %v2264 = vadd.f32 0.0, %v2263
    %2265 = vdwg.mxu0
    %2266 = vmatprep.subr.mxu0 %v2078
    %2267 = vmatpush1.msra.mxu0 %v2077
    %2268 = vmatprep.subr.mxu0 %v2086
    %2269 = vmatpush1.msra.mxu0 %v2085
    %2270 = vmatprep.subr.mxu0 %v2094
    %2271 = vmatpush1.msra.mxu0 %v2093
    %2272 = vmatprep.subr.mxu0 %v2102
    %2273 = vmatpush1.msra.mxu0 %v2101
    %2274 = vmatprep.subr.mxu0 %v2110
    %2275 = vmatpush1.msra.mxu0 %v2109
    %2276 = vmatprep.subr.mxu0 %v2118
    %2277 = vmatpush1.msra.mxu0 %v2117
    %2278 = vmatprep.subr.mxu0 0.0
    %2279 = vmatpush1.msra.mxu0 0.0
    %2280 = vmatprep.subr.mxu0 0.0
    %2281 = vmatpush1.msra.mxu0 0.0
    %2282 = vmatprep.subr.mxu0 0.0
    %2283 = vmatpush1.msra.mxu0 0.0
    %2284 = vmatprep.subr.mxu0 0.0
    %2285 = vmatpush1.msra.mxu0 0.0
    %2286 = vmatprep.subr.mxu0 0.0
    %2287 = vmatpush1.msra.mxu0 0.0
    %2288 = vmatprep.subr.mxu0 0.0
    %2289 = vmatpush1.msra.mxu0 0.0
    %2290 = vmatprep.subr.mxu0 0.0
    %2291 = vmatpush1.msra.mxu0 0.0
    %2292 = vmatprep.subr.mxu0 0.0
    %2293 = vmatpush1.msra.mxu0 0.0
    %2294 = vmatprep.subr.mxu0 0.0
    %2295 = vmatpush1.msra.mxu0 0.0
    %2296 = vmatprep.subr.mxu0 0.0
    %2297 = vmatpush1.msra.mxu0 0.0
    %2298 = vmatprep.subr.mxu0 0.0
    %2299 = vmatpush1.msra.mxu0 0.0
    %2300 = vmatprep.subr.mxu0 0.0
    %2301 = vmatpush1.msra.mxu0 0.0
    %2302 = vmatprep.subr.mxu0 0.0
    %2303 = vmatpush1.msra.mxu0 0.0
    %2304 = vmatprep.subr.mxu0 0.0
    %2305 = vmatpush1.msra.mxu0 0.0
    %2306 = vmatprep.subr.mxu0 0.0
    %2307 = vmatpush1.msra.mxu0 0.0
    %2308 = vmatprep.subr.mxu0 0.0
    %2309 = vmatpush1.msra.mxu0 0.0
    %2310 = vmatprep.subr.mxu0 0.0
    %2311 = vmatpush1.msra.mxu0 0.0
    %2312 = vmatprep.subr.mxu0 0.0
    %2313 = vmatpush1.msra.mxu0 0.0
    %2314 = vmatprep.subr.mxu0 0.0
    %2315 = vmatpush1.msra.mxu0 0.0
    %2316 = vmatprep.subr.mxu0 0.0
    %2317 = vmatpush1.msra.mxu0 0.0
    %2318 = vmatprep.subr.mxu0 0.0
    %2319 = vmatpush1.msra.mxu0 0.0
    %2320 = vmatprep.subr.mxu0 0.0
    %2321 = vmatpush1.msra.mxu0 0.0
    %2322 = vmatprep.subr.mxu0 0.0
    %2323 = vmatpush1.msra.mxu0 0.0
    %2324 = vmatprep.subr.mxu0 0.0
    %2325 = vmatpush1.msra.mxu0 0.0
    %2326 = vmatprep.subr.mxu0 0.0
    %2327 = vmatpush1.msra.mxu0 0.0
    %2328 = vmatprep.subr.mxu0 0.0
    %2329 = vmatpush1.msra.mxu0 0.0
    %2330 = vmatprep.mubr.f32.mxu0 0.0
    %2331 = vmatmul.mubr.f32.gmra.mrb[0].mxu0 %v2122
    %v2332 = vpop.f32.mrb[0].mxu0
    %v2333 = vadd.f32 0.0, %v2332
    %v2334 = vpop.f32.mrb[0].mxu0
    %v2335 = vadd.f32 0.0, %v2334
    %2336 = vdwg.mxu0
    %2337 = vmatprep.subr.mxu0 %v2080
    %2338 = vmatpush1.msra.mxu0 %v2079
    %2339 = vmatprep.subr.mxu0 %v2088
    %2340 = vmatpush1.msra.mxu0 %v2087
    %2341 = vmatprep.subr.mxu0 %v2096
    %2342 = vmatpush1.msra.mxu0 %v2095
    %2343 = vmatprep.subr.mxu0 %v2104
    %2344 = vmatpush1.msra.mxu0 %v2103
    %2345 = vmatprep.subr.mxu0 %v2112
    %2346 = vmatpush1.msra.mxu0 %v2111
    %2347 = vmatprep.subr.mxu0 %v2120
    %2348 = vmatpush1.msra.mxu0 %v2119
    %2349 = vmatprep.subr.mxu0 0.0
    %2350 = vmatpush1.msra.mxu0 0.0
    %2351 = vmatprep.subr.mxu0 0.0
    %2352 = vmatpush1.msra.mxu0 0.0
    %2353 = vmatprep.subr.mxu0 0.0
    %2354 = vmatpush1.msra.mxu0 0.0
    %2355 = vmatprep.subr.mxu0 0.0
    %2356 = vmatpush1.msra.mxu0 0.0
    %2357 = vmatprep.subr.mxu0 0.0
    %2358 = vmatpush1.msra.mxu0 0.0
    %2359 = vmatprep.subr.mxu0 0.0
    %2360 = vmatpush1.msra.mxu0 0.0
    %2361 = vmatprep.subr.mxu0 0.0
    %2362 = vmatpush1.msra.mxu0 0.0
    %2363 = vmatprep.subr.mxu0 0.0
    %2364 = vmatpush1.msra.mxu0 0.0
    %2365 = vmatprep.subr.mxu0 0.0
    %2366 = vmatpush1.msra.mxu0 0.0
    %2367 = vmatprep.subr.mxu0 0.0
    %2368 = vmatpush1.msra.mxu0 0.0
    %2369 = vmatprep.subr.mxu0 0.0
    %2370 = vmatpush1.msra.mxu0 0.0
    %2371 = vmatprep.subr.mxu0 0.0
    %2372 = vmatpush1.msra.mxu0 0.0
    %2373 = vmatprep.subr.mxu0 0.0
    %2374 = vmatpush1.msra.mxu0 0.0
    %2375 = vmatprep.subr.mxu0 0.0
    %2376 = vmatpush1.msra.mxu0 0.0
    %2377 = vmatprep.subr.mxu0 0.0
    %2378 = vmatpush1.msra.mxu0 0.0
    %2379 = vmatprep.subr.mxu0 0.0
    %2380 = vmatpush1.msra.mxu0 0.0
    %2381 = vmatprep.subr.mxu0 0.0
    %2382 = vmatpush1.msra.mxu0 0.0
    %2383 = vmatprep.subr.mxu0 0.0
    %2384 = vmatpush1.msra.mxu0 0.0
    %2385 = vmatprep.subr.mxu0 0.0
    %2386 = vmatpush1.msra.mxu0 0.0
    %2387 = vmatprep.subr.mxu0 0.0
    %2388 = vmatpush1.msra.mxu0 0.0
    %2389 = vmatprep.subr.mxu0 0.0
    %2390 = vmatpush1.msra.mxu0 0.0
    %2391 = vmatprep.subr.mxu0 0.0
    %2392 = vmatpush1.msra.mxu0 0.0
    %2393 = vmatprep.subr.mxu0 0.0
    %2394 = vmatpush1.msra.mxu0 0.0
    %2395 = vmatprep.subr.mxu0 0.0
    %2396 = vmatpush1.msra.mxu0 0.0
    %2397 = vmatprep.subr.mxu0 0.0
    %2398 = vmatpush1.msra.mxu0 0.0
    %2399 = vmatprep.subr.mxu0 0.0
    %2400 = vmatpush1.msra.mxu0 0.0
    %2401 = vmatprep.mubr.f32.mxu0 0.0
    %2402 = vmatmul.mubr.f32.gmra.mrb[0].mxu0 %v2122
    %v2403 = vpop.f32.mrb[0].mxu0
    %v2404 = vadd.f32 0.0, %v2403
    %v2405 = vpop.f32.mrb[0].mxu0
    %v2406 = vadd.f32 0.0, %v2405
    %2407 = vdwg.mxu0
    %v2408 = vld [vmem:[#allocation7] sm:$0xff]
    %v2409 = vld [vmem:[#allocation7 + $0x8] sm:$0xff]
    %v2410 = vld [vmem:[#allocation7 + $0x10] sm:$0xff]
    %v2411 = vld [vmem:[#allocation7 + $0x18] sm:$0xff]
    %v2412 = vld [vmem:[#allocation7 + $0x20] sm:$0xff]
    %v2413 = vld [vmem:[#allocation7 + $0x28] sm:$0xff]
    %v2414 = vld [vmem:[#allocation7 + $0x30] sm:$0xff]
    %v2415 = vld [vmem:[#allocation7 + $0x38] sm:$0xff]
    %v2416 = vld [vmem:[#allocation7 + $0x40] sm:$0xff]
    %v2417 = vld [vmem:[#allocation7 + $0x48] sm:$0xff]
    %v2418 = vld [vmem:[#allocation7 + $0x50] sm:$0xff]
    %v2419 = vld [vmem:[#allocation7 + $0x58] sm:$0xff]
    %v2420 = vld [vmem:[#allocation7 + $0x60] sm:$0xff]
    %v2421 = vld [vmem:[#allocation7 + $0x68] sm:$0xff]
    %v2422 = vld [vmem:[#allocation7 + $0x70] sm:$0xff]
    %v2423 = vld [vmem:[#allocation7 + $0x78] sm:$0xff]
    %v2424 = vld [vmem:[#allocation7 + $0x80] sm:$0xff]
    %v2425 = vld [vmem:[#allocation7 + $0x88] sm:$0xff]
    %v2426 = vld [vmem:[#allocation7 + $0x90] sm:$0xff]
    %v2427 = vld [vmem:[#allocation7 + $0x98] sm:$0xff]
    %v2428 = vld [vmem:[#allocation7 + $0xa0] sm:$0xff]
    %v2429 = vld [vmem:[#allocation7 + $0xa8] sm:$0xff]
    %v2430 = vld [vmem:[#allocation7 + $0xb0] sm:$0xff]
    %v2431 = vld [vmem:[#allocation7 + $0xb8] sm:$0xff]
    %v2433 = vsel %vm640, %v2071, 0
    %2435 = vmatprep.subr.mxu0 %v2409
    %2436 = vmatpush1.msra.mxu0 %v2408
    %2437 = vmatprep.subr.mxu0 %v2413
    %2438 = vmatpush1.msra.mxu0 %v2412
    %2439 = vmatprep.subr.mxu0 %v2417
    %2440 = vmatpush1.msra.mxu0 %v2416
    %2441 = vmatprep.subr.mxu0 %v2421
    %2442 = vmatpush1.msra.mxu0 %v2420
    %2443 = vmatprep.subr.mxu0 %v2425
    %2444 = vmatpush1.msra.mxu0 %v2424
    %2445 = vmatprep.subr.mxu0 %v2429
    %2446 = vmatpush1.msra.mxu0 %v2428
    %2447 = vmatprep.subr.mxu0 0.0
    %2448 = vmatpush1.msra.mxu0 0.0
    %2449 = vmatprep.subr.mxu0 0.0
    %2450 = vmatpush1.msra.mxu0 0.0
    %2451 = vmatprep.subr.mxu0 0.0
    %2452 = vmatpush1.msra.mxu0 0.0
    %2453 = vmatprep.subr.mxu0 0.0
    %2454 = vmatpush1.msra.mxu0 0.0
    %2455 = vmatprep.subr.mxu0 0.0
    %2456 = vmatpush1.msra.mxu0 0.0
    %2457 = vmatprep.subr.mxu0 0.0
    %2458 = vmatpush1.msra.mxu0 0.0
    %2459 = vmatprep.subr.mxu0 0.0
    %2460 = vmatpush1.msra.mxu0 0.0
    %2461 = vmatprep.subr.mxu0 0.0
    %2462 = vmatpush1.msra.mxu0 0.0
    %2463 = vmatprep.subr.mxu0 0.0
    %2464 = vmatpush1.msra.mxu0 0.0
    %2465 = vmatprep.subr.mxu0 0.0
    %2466 = vmatpush1.msra.mxu0 0.0
    %2467 = vmatprep.subr.mxu0 0.0
    %2468 = vmatpush1.msra.mxu0 0.0
    %2469 = vmatprep.subr.mxu0 0.0
    %2470 = vmatpush1.msra.mxu0 0.0
    %2471 = vmatprep.subr.mxu0 0.0
    %2472 = vmatpush1.msra.mxu0 0.0
    %2473 = vmatprep.subr.mxu0 0.0
    %2474 = vmatpush1.msra.mxu0 0.0
    %2475 = vmatprep.subr.mxu0 0.0
    %2476 = vmatpush1.msra.mxu0 0.0
    %2477 = vmatprep.subr.mxu0 0.0
    %2478 = vmatpush1.msra.mxu0 0.0
    %2479 = vmatprep.subr.mxu0 0.0
    %2480 = vmatpush1.msra.mxu0 0.0
    %2481 = vmatprep.subr.mxu0 0.0
    %2482 = vmatpush1.msra.mxu0 0.0
    %2483 = vmatprep.subr.mxu0 0.0
    %2484 = vmatpush1.msra.mxu0 0.0
    %2485 = vmatprep.subr.mxu0 0.0
    %2486 = vmatpush1.msra.mxu0 0.0
    %2487 = vmatprep.subr.mxu0 0.0
    %2488 = vmatpush1.msra.mxu0 0.0
    %2489 = vmatprep.subr.mxu0 0.0
    %2490 = vmatpush1.msra.mxu0 0.0
    %2491 = vmatprep.subr.mxu0 0.0
    %2492 = vmatpush1.msra.mxu0 0.0
    %2493 = vmatprep.subr.mxu0 0.0
    %2494 = vmatpush1.msra.mxu0 0.0
    %2495 = vmatprep.subr.mxu0 0.0
    %2496 = vmatpush1.msra.mxu0 0.0
    %2497 = vmatprep.subr.mxu0 0.0
    %2498 = vmatpush1.msra.mxu0 0.0
    %2499 = vmatprep.mubr.f32.mxu0 0.0
    %2500 = vmatmul.mubr.f32.gmra.mrb[0].mxu0 %v2433
    %v2501 = vpop.f32.mrb[0].mxu0
    %v2502 = vadd.f32 0.0, %v2501
    %v2503 = vpop.f32.mrb[0].mxu0
    %v2504 = vadd.f32 0.0, %v2503
    %2505 = vdwg.mxu0
    %2506 = vmatprep.subr.mxu0 %v2411
    %2507 = vmatpush1.msra.mxu0 %v2410
    %2508 = vmatprep.subr.mxu0 %v2415
    %2509 = vmatpush1.msra.mxu0 %v2414
    %2510 = vmatprep.subr.mxu0 %v2419
    %2511 = vmatpush1.msra.mxu0 %v2418
    %2512 = vmatprep.subr.mxu0 %v2423
    %2513 = vmatpush1.msra.mxu0 %v2422
    %2514 = vmatprep.subr.mxu0 %v2427
    %2515 = vmatpush1.msra.mxu0 %v2426
    %2516 = vmatprep.subr.mxu0 %v2431
    %2517 = vmatpush1.msra.mxu0 %v2430
    %2518 = vmatprep.subr.mxu0 0.0
    %2519 = vmatpush1.msra.mxu0 0.0
    %2520 = vmatprep.subr.mxu0 0.0
    %2521 = vmatpush1.msra.mxu0 0.0
    %2522 = vmatprep.subr.mxu0 0.0
    %2523 = vmatpush1.msra.mxu0 0.0
    %2524 = vmatprep.subr.mxu0 0.0
    %2525 = vmatpush1.msra.mxu0 0.0
    %2526 = vmatprep.subr.mxu0 0.0
    %2527 = vmatpush1.msra.mxu0 0.0
    %2528 = vmatprep.subr.mxu0 0.0
    %2529 = vmatpush1.msra.mxu0 0.0
    %2530 = vmatprep.subr.mxu0 0.0
    %2531 = vmatpush1.msra.mxu0 0.0
    %2532 = vmatprep.subr.mxu0 0.0
    %2533 = vmatpush1.msra.mxu0 0.0
    %2534 = vmatprep.subr.mxu0 0.0
    %2535 = vmatpush1.msra.mxu0 0.0
    %2536 = vmatprep.subr.mxu0 0.0
    %2537 = vmatpush1.msra.mxu0 0.0
    %2538 = vmatprep.subr.mxu0 0.0
    %2539 = vmatpush1.msra.mxu0 0.0
    %2540 = vmatprep.subr.mxu0 0.0
    %2541 = vmatpush1.msra.mxu0 0.0
    %2542 = vmatprep.subr.mxu0 0.0
    %2543 = vmatpush1.msra.mxu0 0.0
    %2544 = vmatprep.subr.mxu0 0.0
    %2545 = vmatpush1.msra.mxu0 0.0
    %2546 = vmatprep.subr.mxu0 0.0
    %2547 = vmatpush1.msra.mxu0 0.0
    %2548 = vmatprep.subr.mxu0 0.0
    %2549 = vmatpush1.msra.mxu0 0.0
    %2550 = vmatprep.subr.mxu0 0.0
    %2551 = vmatpush1.msra.mxu0 0.0
    %2552 = vmatprep.subr.mxu0 0.0
    %2553 = vmatpush1.msra.mxu0 0.0
    %2554 = vmatprep.subr.mxu0 0.0
    %2555 = vmatpush1.msra.mxu0 0.0
    %2556 = vmatprep.subr.mxu0 0.0
    %2557 = vmatpush1.msra.mxu0 0.0
    %2558 = vmatprep.subr.mxu0 0.0
    %2559 = vmatpush1.msra.mxu0 0.0
    %2560 = vmatprep.subr.mxu0 0.0
    %2561 = vmatpush1.msra.mxu0 0.0
    %2562 = vmatprep.subr.mxu0 0.0
    %2563 = vmatpush1.msra.mxu0 0.0
    %2564 = vmatprep.subr.mxu0 0.0
    %2565 = vmatpush1.msra.mxu0 0.0
    %2566 = vmatprep.subr.mxu0 0.0
    %2567 = vmatpush1.msra.mxu0 0.0
    %2568 = vmatprep.subr.mxu0 0.0
    %2569 = vmatpush1.msra.mxu0 0.0
    %2570 = vmatprep.mubr.f32.mxu0 0.0
    %2571 = vmatmul.mubr.f32.gmra.mrb[0].mxu0 %v2433
    %v2572 = vpop.f32.mrb[0].mxu0
    %v2573 = vadd.f32 0.0, %v2572
    %v2574 = vpop.f32.mrb[0].mxu0
    %v2575 = vadd.f32 0.0, %v2574
    %2576 = vdwg.mxu0
    %v2577 = vld [vmem:[#allocation2 + $0x80] sm:$0xff]
    %v2578 = vld [vmem:[#allocation2 + $0x88] sm:$0xff]
    %v2579 = vld [vmem:[#allocation2 + $0x90] sm:$0xff]
    %v2580 = vld [vmem:[#allocation2 + $0x98] sm:$0xff]
    %v2581 = vadd.f32 %v2577, %v2191
    %v2582 = vadd.f32 %v2578, %v2193
    %v2583 = vadd.f32 %v2579, %v2262
    %v2584 = vadd.f32 %v2580, %v2264
    %v2585 = vtanh.pop %v2581
    %v2586 = vtanh.pop %v2582
    %v2587 = vtanh.pop %v2583
    %v2588 = vtanh.pop %v2584
    %v2589 = vmul.f32 %v2585, 0.5
    %v2590 = vadd.f32 %v2589, 0.5
    %v2591 = vmul.f32 %v2586, 0.5
    %v2592 = vadd.f32 %v2591, 0.5
    %v2593 = vmul.f32 %v2588, 0.5
    %v2594 = vadd.f32 %v2593, 0.5
    %v2595 = vmul.f32 %v2592, %v2046
    %v2596 = vmul.f32 %v2590, %v2587
    %v2597 = vadd.f32 %v2595, %v2596
    %v2598 = vtanh.pop %v2597
    %v2599 = vmul.f32 %v2594, %v2598
    %v2600 = vadd.f32 %v2333, %v556
    %v2601 = vadd.f32 %v2335, %v560
    %v2602 = vadd.f32 %v2404, %v564
    %v2603 = vadd.f32 %v2406, %v568
    %v2604 = vadd.f32 %v2600, %v2502
    %v2605 = vadd.f32 %v2601, %v2504
    %v2606 = vadd.f32 %v2602, %v2573
    %v2607 = vadd.f32 %v2603, %v2575
    %v2608 = vtanh.pop %v2604
    %v2609 = vtanh.pop %v2605
    %v2610 = vtanh.pop %v2606
    %v2611 = vtanh.pop %v2607
    %v2612 = vmul.f32 %v2608, 0.5
    %v2613 = vadd.f32 %v2612, 0.5
    %v2614 = vmul.f32 %v2609, 0.5
    %v2615 = vadd.f32 %v2614, 0.5
    %v2616 = vmul.f32 %v2611, 0.5
    %v2617 = vadd.f32 %v2616, 0.5
    %v2618 = vmul.f32 %v2615, %v2069
    %v2619 = vmul.f32 %v2613, %v2610
    %v2620 = vadd.f32 %v2618, %v2619
    %v2621 = vtanh.pop %v2620
    %v2622 = vmul.f32 %v2617, %v2621
    %2623 = vst.msk [vmem:[#allocation3 + $0x18] sm:$0xff] %vm640, %v2622
    %v2624 = vld [vmem:[#allocation4] sm:$0xff]
    %v2625 = vld [vmem:[#allocation4 + $0x8] sm:$0xff]
    %v2626 = vld [vmem:[#allocation4 + $0x10] sm:$0xff]
    %v2627 = vld [vmem:[#allocation4 + $0x18] sm:$0xff]
    %v2628 = vld [vmem:[#allocation4 + $0x20] sm:$0xff]
    %v2629 = vld [vmem:[#allocation4 + $0x28] sm:$0xff]
    %v2630 = vld [vmem:[#allocation4 + $0x30] sm:$0xff]
    %v2631 = vld [vmem:[#allocation4 + $0x38] sm:$0xff]
    %v2632 = vld [vmem:[#allocation4 + $0x40] sm:$0xff]
    %v2633 = vld [vmem:[#allocation4 + $0x48] sm:$0xff]
    %v2634 = vld [vmem:[#allocation4 + $0x50] sm:$0xff]
    %v2635 = vld [vmem:[#allocation4 + $0x58] sm:$0xff]
    %v2636 = vld [vmem:[#allocation4 + $0x60] sm:$0xff]
    %v2637 = vld [vmem:[#allocation4 + $0x68] sm:$0xff]
    %v2638 = vld [vmem:[#allocation4 + $0x70] sm:$0xff]
    %v2639 = vld [vmem:[#allocation4 + $0x78] sm:$0xff]
    %v2640 = vld [vmem:[#allocation4 + $0x80] sm:$0xff]
    %v2641 = vld [vmem:[#allocation4 + $0x88] sm:$0xff]
    %v2642 = vld [vmem:[#allocation4 + $0x90] sm:$0xff]
    %v2643 = vld [vmem:[#allocation4 + $0x98] sm:$0xff]
    %v2644 = vld [vmem:[#allocation4 + $0xa0] sm:$0xff]
    %v2645 = vld [vmem:[#allocation4 + $0xa8] sm:$0xff]
    %v2646 = vld [vmem:[#allocation4 + $0xb0] sm:$0xff]
    %v2647 = vld [vmem:[#allocation4 + $0xb8] sm:$0xff]
    %v2648 = vld [vmem:[#allocation4 + $0xc0] sm:$0xff]
    %v2649 = vld [vmem:[#allocation4 + $0xc8] sm:$0xff]
    %v2650 = vld [vmem:[#allocation4 + $0xd0] sm:$0xff]
    %v2651 = vld [vmem:[#allocation4 + $0xd8] sm:$0xff]
    %v2652 = vld [vmem:[#allocation4 + $0xe0] sm:$0xff]
    %v2653 = vld [vmem:[#allocation4 + $0xe8] sm:$0xff]
    %v2654 = vld [vmem:[#allocation4 + $0xf0] sm:$0xff]
    %v2655 = vld [vmem:[#allocation4 + $0xf8] sm:$0xff]
    %v2656 = vld [vmem:[#allocation4 + $0x100] sm:$0xff]
    %v2657 = vld [vmem:[#allocation4 + $0x108] sm:$0xff]
    %v2658 = vld [vmem:[#allocation4 + $0x110] sm:$0xff]
    %v2659 = vld [vmem:[#allocation4 + $0x118] sm:$0xff]
    %v2660 = vld [vmem:[#allocation4 + $0x120] sm:$0xff]
    %v2661 = vld [vmem:[#allocation4 + $0x128] sm:$0xff]
    %v2662 = vld [vmem:[#allocation4 + $0x130] sm:$0xff]
    %v2663 = vld [vmem:[#allocation4 + $0x138] sm:$0xff]
    %v2664 = vld [vmem:[#allocation4 + $0x140] sm:$0xff]
    %v2665 = vld [vmem:[#allocation4 + $0x148] sm:$0xff]
    %v2666 = vld [vmem:[#allocation4 + $0x150] sm:$0xff]
    %v2667 = vld [vmem:[#allocation4 + $0x158] sm:$0xff]
    %v2668 = vld [vmem:[#allocation4 + $0x160] sm:$0xff]
    %v2669 = vld [vmem:[#allocation4 + $0x168] sm:$0xff]
    %v2670 = vld [vmem:[#allocation4 + $0x170] sm:$0xff]
    %v2671 = vld [vmem:[#allocation4 + $0x178] sm:$0xff]
    %v2673 = vsel %vm640, %v2599, 0
    %2675 = vmatprep.subr.mxu0 %v2625
    %2676 = vmatpush1.msra.mxu0 %v2624
    %2677 = vmatprep.subr.mxu0 %v2633
    %2678 = vmatpush1.msra.mxu0 %v2632
    %2679 = vmatprep.subr.mxu0 %v2641
    %2680 = vmatpush1.msra.mxu0 %v2640
    %2681 = vmatprep.subr.mxu0 %v2649
    %2682 = vmatpush1.msra.mxu0 %v2648
    %2683 = vmatprep.subr.mxu0 %v2657
    %2684 = vmatpush1.msra.mxu0 %v2656
    %2685 = vmatprep.subr.mxu0 %v2665
    %2686 = vmatpush1.msra.mxu0 %v2664
    %2687 = vmatprep.subr.mxu0 0.0
    %2688 = vmatpush1.msra.mxu0 0.0
    %2689 = vmatprep.subr.mxu0 0.0
    %2690 = vmatpush1.msra.mxu0 0.0
    %2691 = vmatprep.subr.mxu0 0.0
    %2692 = vmatpush1.msra.mxu0 0.0
    %2693 = vmatprep.subr.mxu0 0.0
    %2694 = vmatpush1.msra.mxu0 0.0
    %2695 = vmatprep.subr.mxu0 0.0
    %2696 = vmatpush1.msra.mxu0 0.0
    %2697 = vmatprep.subr.mxu0 0.0
    %2698 = vmatpush1.msra.mxu0 0.0
    %2699 = vmatprep.subr.mxu0 0.0
    %2700 = vmatpush1.msra.mxu0 0.0
    %2701 = vmatprep.subr.mxu0 0.0
    %2702 = vmatpush1.msra.mxu0 0.0
    %2703 = vmatprep.subr.mxu0 0.0
    %2704 = vmatpush1.msra.mxu0 0.0
    %2705 = vmatprep.subr.mxu0 0.0
    %2706 = vmatpush1.msra.mxu0 0.0
    %2707 = vmatprep.subr.mxu0 0.0
    %2708 = vmatpush1.msra.mxu0 0.0
    %2709 = vmatprep.subr.mxu0 0.0
    %2710 = vmatpush1.msra.mxu0 0.0
    %2711 = vmatprep.subr.mxu0 0.0
    %2712 = vmatpush1.msra.mxu0 0.0
    %2713 = vmatprep.subr.mxu0 0.0
    %2714 = vmatpush1.msra.mxu0 0.0
    %2715 = vmatprep.subr.mxu0 0.0
    %2716 = vmatpush1.msra.mxu0 0.0
    %2717 = vmatprep.subr.mxu0 0.0
    %2718 = vmatpush1.msra.mxu0 0.0
    %2719 = vmatprep.subr.mxu0 0.0
    %2720 = vmatpush1.msra.mxu0 0.0
    %2721 = vmatprep.subr.mxu0 0.0
    %2722 = vmatpush1.msra.mxu0 0.0
    %2723 = vmatprep.subr.mxu0 0.0
    %2724 = vmatpush1.msra.mxu0 0.0
    %2725 = vmatprep.subr.mxu0 0.0
    %2726 = vmatpush1.msra.mxu0 0.0
    %2727 = vmatprep.subr.mxu0 0.0
    %2728 = vmatpush1.msra.mxu0 0.0
    %2729 = vmatprep.subr.mxu0 0.0
    %2730 = vmatpush1.msra.mxu0 0.0
    %2731 = vmatprep.subr.mxu0 0.0
    %2732 = vmatpush1.msra.mxu0 0.0
    %2733 = vmatprep.subr.mxu0 0.0
    %2734 = vmatpush1.msra.mxu0 0.0
    %2735 = vmatprep.subr.mxu0 0.0
    %2736 = vmatpush1.msra.mxu0 0.0
    %2737 = vmatprep.subr.mxu0 0.0
    %2738 = vmatpush1.msra.mxu0 0.0
    %2739 = vmatprep.mubr.f32.mxu0 0.0
    %2740 = vmatmul.mubr.f32.gmra.mrb[0].mxu0 %v2673
    %v2741 = vpop.f32.mrb[0].mxu0
    %v2742 = vadd.f32 0.0, %v2741
    %v2743 = vpop.f32.mrb[0].mxu0
    %v2744 = vadd.f32 0.0, %v2743
    %2745 = vdwg.mxu0
    %2746 = vmatprep.subr.mxu0 %v2627
    %2747 = vmatpush1.msra.mxu0 %v2626
    %2748 = vmatprep.subr.mxu0 %v2635
    %2749 = vmatpush1.msra.mxu0 %v2634
    %2750 = vmatprep.subr.mxu0 %v2643
    %2751 = vmatpush1.msra.mxu0 %v2642
    %2752 = vmatprep.subr.mxu0 %v2651
    %2753 = vmatpush1.msra.mxu0 %v2650
    %2754 = vmatprep.subr.mxu0 %v2659
    %2755 = vmatpush1.msra.mxu0 %v2658
    %2756 = vmatprep.subr.mxu0 %v2667
    %2757 = vmatpush1.msra.mxu0 %v2666
    %2758 = vmatprep.subr.mxu0 0.0
    %2759 = vmatpush1.msra.mxu0 0.0
    %2760 = vmatprep.subr.mxu0 0.0
    %2761 = vmatpush1.msra.mxu0 0.0
    %2762 = vmatprep.subr.mxu0 0.0
    %2763 = vmatpush1.msra.mxu0 0.0
    %2764 = vmatprep.subr.mxu0 0.0
    %2765 = vmatpush1.msra.mxu0 0.0
    %2766 = vmatprep.subr.mxu0 0.0
    %2767 = vmatpush1.msra.mxu0 0.0
    %2768 = vmatprep.subr.mxu0 0.0
    %2769 = vmatpush1.msra.mxu0 0.0
    %2770 = vmatprep.subr.mxu0 0.0
    %2771 = vmatpush1.msra.mxu0 0.0
    %2772 = vmatprep.subr.mxu0 0.0
    %2773 = vmatpush1.msra.mxu0 0.0
    %2774 = vmatprep.subr.mxu0 0.0
    %2775 = vmatpush1.msra.mxu0 0.0
    %2776 = vmatprep.subr.mxu0 0.0
    %2777 = vmatpush1.msra.mxu0 0.0
    %2778 = vmatprep.subr.mxu0 0.0
    %2779 = vmatpush1.msra.mxu0 0.0
    %2780 = vmatprep.subr.mxu0 0.0
    %2781 = vmatpush1.msra.mxu0 0.0
    %2782 = vmatprep.subr.mxu0 0.0
    %2783 = vmatpush1.msra.mxu0 0.0
    %2784 = vmatprep.subr.mxu0 0.0
    %2785 = vmatpush1.msra.mxu0 0.0
    %2786 = vmatprep.subr.mxu0 0.0
    %2787 = vmatpush1.msra.mxu0 0.0
    %2788 = vmatprep.subr.mxu0 0.0
    %2789 = vmatpush1.msra.mxu0 0.0
    %2790 = vmatprep.subr.mxu0 0.0
    %2791 = vmatpush1.msra.mxu0 0.0
    %2792 = vmatprep.subr.mxu0 0.0
    %2793 = vmatpush1.msra.mxu0 0.0
    %2794 = vmatprep.subr.mxu0 0.0
    %2795 = vmatpush1.msra.mxu0 0.0
    %2796 = vmatprep.subr.mxu0 0.0
    %2797 = vmatpush1.msra.mxu0 0.0
    %2798 = vmatprep.subr.mxu0 0.0
    %2799 = vmatpush1.msra.mxu0 0.0
    %2800 = vmatprep.subr.mxu0 0.0
    %2801 = vmatpush1.msra.mxu0 0.0
    %2802 = vmatprep.subr.mxu0 0.0
    %2803 = vmatpush1.msra.mxu0 0.0
    %2804 = vmatprep.subr.mxu0 0.0
    %2805 = vmatpush1.msra.mxu0 0.0
    %2806 = vmatprep.subr.mxu0 0.0
    %2807 = vmatpush1.msra.mxu0 0.0
    %2808 = vmatprep.subr.mxu0 0.0
    %2809 = vmatpush1.msra.mxu0 0.0
    %2810 = vmatprep.mubr.f32.mxu0 0.0
    %2811 = vmatmul.mubr.f32.gmra.mrb[0].mxu0 %v2673
    %v2812 = vpop.f32.mrb[0].mxu0
    %v2813 = vadd.f32 0.0, %v2812
    %v2814 = vpop.f32.mrb[0].mxu0
    %v2815 = vadd.f32 0.0, %v2814
    %2816 = vdwg.mxu0
    %2817 = vmatprep.subr.mxu0 %v2629
    %2818 = vmatpush1.msra.mxu0 %v2628
    %2819 = vmatprep.subr.mxu0 %v2637
    %2820 = vmatpush1.msra.mxu0 %v2636
    %2821 = vmatprep.subr.mxu0 %v2645
    %2822 = vmatpush1.msra.mxu0 %v2644
    %2823 = vmatprep.subr.mxu0 %v2653
    %2824 = vmatpush1.msra.mxu0 %v2652
    %2825 = vmatprep.subr.mxu0 %v2661
    %2826 = vmatpush1.msra.mxu0 %v2660
    %2827 = vmatprep.subr.mxu0 %v2669
    %2828 = vmatpush1.msra.mxu0 %v2668
    %2829 = vmatprep.subr.mxu0 0.0
    %2830 = vmatpush1.msra.mxu0 0.0
    %2831 = vmatprep.subr.mxu0 0.0
    %2832 = vmatpush1.msra.mxu0 0.0
    %2833 = vmatprep.subr.mxu0 0.0
    %2834 = vmatpush1.msra.mxu0 0.0
    %2835 = vmatprep.subr.mxu0 0.0
    %2836 = vmatpush1.msra.mxu0 0.0
    %2837 = vmatprep.subr.mxu0 0.0
    %2838 = vmatpush1.msra.mxu0 0.0
    %2839 = vmatprep.subr.mxu0 0.0
    %2840 = vmatpush1.msra.mxu0 0.0
    %2841 = vmatprep.subr.mxu0 0.0
    %2842 = vmatpush1.msra.mxu0 0.0
    %2843 = vmatprep.subr.mxu0 0.0
    %2844 = vmatpush1.msra.mxu0 0.0
    %2845 = vmatprep.subr.mxu0 0.0
    %2846 = vmatpush1.msra.mxu0 0.0
    %2847 = vmatprep.subr.mxu0 0.0
    %2848 = vmatpush1.msra.mxu0 0.0
    %2849 = vmatprep.subr.mxu0 0.0
    %2850 = vmatpush1.msra.mxu0 0.0
    %2851 = vmatprep.subr.mxu0 0.0
    %2852 = vmatpush1.msra.mxu0 0.0
    %2853 = vmatprep.subr.mxu0 0.0
    %2854 = vmatpush1.msra.mxu0 0.0
    %2855 = vmatprep.subr.mxu0 0.0
    %2856 = vmatpush1.msra.mxu0 0.0
    %2857 = vmatprep.subr.mxu0 0.0
    %2858 = vmatpush1.msra.mxu0 0.0
    %2859 = vmatprep.subr.mxu0 0.0
    %2860 = vmatpush1.msra.mxu0 0.0
    %2861 = vmatprep.subr.mxu0 0.0
    %2862 = vmatpush1.msra.mxu0 0.0
    %2863 = vmatprep.subr.mxu0 0.0
    %2864 = vmatpush1.msra.mxu0 0.0
    %2865 = vmatprep.subr.mxu0 0.0
    %2866 = vmatpush1.msra.mxu0 0.0
    %2867 = vmatprep.subr.mxu0 0.0
    %2868 = vmatpush1.msra.mxu0 0.0
    %2869 = vmatprep.subr.mxu0 0.0
    %2870 = vmatpush1.msra.mxu0 0.0
    %2871 = vmatprep.subr.mxu0 0.0
    %2872 = vmatpush1.msra.mxu0 0.0
    %2873 = vmatprep.subr.mxu0 0.0
    %2874 = vmatpush1.msra.mxu0 0.0
    %2875 = vmatprep.subr.mxu0 0.0
    %2876 = vmatpush1.msra.mxu0 0.0
    %2877 = vmatprep.subr.mxu0 0.0
    %2878 = vmatpush1.msra.mxu0 0.0
    %2879 = vmatprep.subr.mxu0 0.0
    %2880 = vmatpush1.msra.mxu0 0.0
    %2881 = vmatprep.mubr.f32.mxu0 0.0
    %2882 = vmatmul.mubr.f32.gmra.mrb[0].mxu0 %v2673
    %v2883 = vpop.f32.mrb[0].mxu0
    %v2884 = vadd.f32 0.0, %v2883
    %v2885 = vpop.f32.mrb[0].mxu0
    %v2886 = vadd.f32 0.0, %v2885
    %2887 = vdwg.mxu0
    %2888 = vmatprep.subr.mxu0 %v2631
    %2889 = vmatpush1.msra.mxu0 %v2630
    %2890 = vmatprep.subr.mxu0 %v2639
    %2891 = vmatpush1.msra.mxu0 %v2638
    %2892 = vmatprep.subr.mxu0 %v2647
    %2893 = vmatpush1.msra.mxu0 %v2646
    %2894 = vmatprep.subr.mxu0 %v2655
    %2895 = vmatpush1.msra.mxu0 %v2654
    %2896 = vmatprep.subr.mxu0 %v2663
    %2897 = vmatpush1.msra.mxu0 %v2662
    %2898 = vmatprep.subr.mxu0 %v2671
    %2899 = vmatpush1.msra.mxu0 %v2670
    %2900 = vmatprep.subr.mxu0 0.0
    %2901 = vmatpush1.msra.mxu0 0.0
    %2902 = vmatprep.subr.mxu0 0.0
    %2903 = vmatpush1.msra.mxu0 0.0
    %2904 = vmatprep.subr.mxu0 0.0
    %2905 = vmatpush1.msra.mxu0 0.0
    %2906 = vmatprep.subr.mxu0 0.0
    %2907 = vmatpush1.msra.mxu0 0.0
    %2908 = vmatprep.subr.mxu0 0.0
    %2909 = vmatpush1.msra.mxu0 0.0
    %2910 = vmatprep.subr.mxu0 0.0
    %2911 = vmatpush1.msra.mxu0 0.0
    %2912 = vmatprep.subr.mxu0 0.0
    %2913 = vmatpush1.msra.mxu0 0.0
    %2914 = vmatprep.subr.mxu0 0.0
    %2915 = vmatpush1.msra.mxu0 0.0
    %2916 = vmatprep.subr.mxu0 0.0
    %2917 = vmatpush1.msra.mxu0 0.0
    %2918 = vmatprep.subr.mxu0 0.0
    %2919 = vmatpush1.msra.mxu0 0.0
    %2920 = vmatprep.subr.mxu0 0.0
    %2921 = vmatpush1.msra.mxu0 0.0
    %2922 = vmatprep.subr.mxu0 0.0
    %2923 = vmatpush1.msra.mxu0 0.0
    %2924 = vmatprep.subr.mxu0 0.0
    %2925 = vmatpush1.msra.mxu0 0.0
    %2926 = vmatprep.subr.mxu0 0.0
    %2927 = vmatpush1.msra.mxu0 0.0
    %2928 = vmatprep.subr.mxu0 0.0
    %2929 = vmatpush1.msra.mxu0 0.0
    %2930 = vmatprep.subr.mxu0 0.0
    %2931 = vmatpush1.msra.mxu0 0.0
    %2932 = vmatprep.subr.mxu0 0.0
    %2933 = vmatpush1.msra.mxu0 0.0
    %2934 = vmatprep.subr.mxu0 0.0
    %2935 = vmatpush1.msra.mxu0 0.0
    %2936 = vmatprep.subr.mxu0 0.0
    %2937 = vmatpush1.msra.mxu0 0.0
    %2938 = vmatprep.subr.mxu0 0.0
    %2939 = vmatpush1.msra.mxu0 0.0
    %2940 = vmatprep.subr.mxu0 0.0
    %2941 = vmatpush1.msra.mxu0 0.0
    %2942 = vmatprep.subr.mxu0 0.0
    %2943 = vmatpush1.msra.mxu0 0.0
    %2944 = vmatprep.subr.mxu0 0.0
    %2945 = vmatpush1.msra.mxu0 0.0
    %2946 = vmatprep.subr.mxu0 0.0
    %2947 = vmatpush1.msra.mxu0 0.0
    %2948 = vmatprep.subr.mxu0 0.0
    %2949 = vmatpush1.msra.mxu0 0.0
    %2950 = vmatprep.subr.mxu0 0.0
    %2951 = vmatpush1.msra.mxu0 0.0
    %2952 = vmatprep.mubr.f32.mxu0 0.0
    %2953 = vmatmul.mubr.f32.gmra.mrb[0].mxu0 %v2673
    %v2954 = vpop.f32.mrb[0].mxu0
    %v2955 = vadd.f32 0.0, %v2954
    %v2956 = vpop.f32.mrb[0].mxu0
    %v2957 = vadd.f32 0.0, %v2956
    %2958 = vdwg.mxu0
    %v2959 = vld [vmem:[#allocation7] sm:$0xff]
    %v2960 = vld [vmem:[#allocation7 + $0x8] sm:$0xff]
    %v2961 = vld [vmem:[#allocation7 + $0x10] sm:$0xff]
    %v2962 = vld [vmem:[#allocation7 + $0x18] sm:$0xff]
    %v2963 = vld [vmem:[#allocation7 + $0x20] sm:$0xff]
    %v2964 = vld [vmem:[#allocation7 + $0x28] sm:$0xff]
    %v2965 = vld [vmem:[#allocation7 + $0x30] sm:$0xff]
    %v2966 = vld [vmem:[#allocation7 + $0x38] sm:$0xff]
    %v2967 = vld [vmem:[#allocation7 + $0x40] sm:$0xff]
    %v2968 = vld [vmem:[#allocation7 + $0x48] sm:$0xff]
    %v2969 = vld [vmem:[#allocation7 + $0x50] sm:$0xff]
    %v2970 = vld [vmem:[#allocation7 + $0x58] sm:$0xff]
    %v2971 = vld [vmem:[#allocation7 + $0x60] sm:$0xff]
    %v2972 = vld [vmem:[#allocation7 + $0x68] sm:$0xff]
    %v2973 = vld [vmem:[#allocation7 + $0x70] sm:$0xff]
    %v2974 = vld [vmem:[#allocation7 + $0x78] sm:$0xff]
    %v2975 = vld [vmem:[#allocation7 + $0x80] sm:$0xff]
    %v2976 = vld [vmem:[#allocation7 + $0x88] sm:$0xff]
    %v2977 = vld [vmem:[#allocation7 + $0x90] sm:$0xff]
    %v2978 = vld [vmem:[#allocation7 + $0x98] sm:$0xff]
    %v2979 = vld [vmem:[#allocation7 + $0xa0] sm:$0xff]
    %v2980 = vld [vmem:[#allocation7 + $0xa8] sm:$0xff]
    %v2981 = vld [vmem:[#allocation7 + $0xb0] sm:$0xff]
    %v2982 = vld [vmem:[#allocation7 + $0xb8] sm:$0xff]
    %v2984 = vsel %vm640, %v2622, 0
    %2986 = vmatprep.subr.mxu0 %v2960
    %2987 = vmatpush1.msra.mxu0 %v2959
    %2988 = vmatprep.subr.mxu0 %v2964
    %2989 = vmatpush1.msra.mxu0 %v2963
    %2990 = vmatprep.subr.mxu0 %v2968
    %2991 = vmatpush1.msra.mxu0 %v2967
    %2992 = vmatprep.subr.mxu0 %v2972
    %2993 = vmatpush1.msra.mxu0 %v2971
    %2994 = vmatprep.subr.mxu0 %v2976
    %2995 = vmatpush1.msra.mxu0 %v2975
    %2996 = vmatprep.subr.mxu0 %v2980
    %2997 = vmatpush1.msra.mxu0 %v2979
    %2998 = vmatprep.subr.mxu0 0.0
    %2999 = vmatpush1.msra.mxu0 0.0
    %3000 = vmatprep.subr.mxu0 0.0
    %3001 = vmatpush1.msra.mxu0 0.0
    %3002 = vmatprep.subr.mxu0 0.0
    %3003 = vmatpush1.msra.mxu0 0.0
    %3004 = vmatprep.subr.mxu0 0.0
    %3005 = vmatpush1.msra.mxu0 0.0
    %3006 = vmatprep.subr.mxu0 0.0
    %3007 = vmatpush1.msra.mxu0 0.0
    %3008 = vmatprep.subr.mxu0 0.0
    %3009 = vmatpush1.msra.mxu0 0.0
    %3010 = vmatprep.subr.mxu0 0.0
    %3011 = vmatpush1.msra.mxu0 0.0
    %3012 = vmatprep.subr.mxu0 0.0
    %3013 = vmatpush1.msra.mxu0 0.0
    %3014 = vmatprep.subr.mxu0 0.0
    %3015 = vmatpush1.msra.mxu0 0.0
    %3016 = vmatprep.subr.mxu0 0.0
    %3017 = vmatpush1.msra.mxu0 0.0
    %3018 = vmatprep.subr.mxu0 0.0
    %3019 = vmatpush1.msra.mxu0 0.0
    %3020 = vmatprep.subr.mxu0 0.0
    %3021 = vmatpush1.msra.mxu0 0.0
    %3022 = vmatprep.subr.mxu0 0.0
    %3023 = vmatpush1.msra.mxu0 0.0
    %3024 = vmatprep.subr.mxu0 0.0
    %3025 = vmatpush1.msra.mxu0 0.0
    %3026 = vmatprep.subr.mxu0 0.0
    %3027 = vmatpush1.msra.mxu0 0.0
    %3028 = vmatprep.subr.mxu0 0.0
    %3029 = vmatpush1.msra.mxu0 0.0
    %3030 = vmatprep.subr.mxu0 0.0
    %3031 = vmatpush1.msra.mxu0 0.0
    %3032 = vmatprep.subr.mxu0 0.0
    %3033 = vmatpush1.msra.mxu0 0.0
    %3034 = vmatprep.subr.mxu0 0.0
    %3035 = vmatpush1.msra.mxu0 0.0
    %3036 = vmatprep.subr.mxu0 0.0
    %3037 = vmatpush1.msra.mxu0 0.0
    %3038 = vmatprep.subr.mxu0 0.0
    %3039 = vmatpush1.msra.mxu0 0.0
    %3040 = vmatprep.subr.mxu0 0.0
    %3041 = vmatpush1.msra.mxu0 0.0
    %3042 = vmatprep.subr.mxu0 0.0
    %3043 = vmatpush1.msra.mxu0 0.0
    %3044 = vmatprep.subr.mxu0 0.0
    %3045 = vmatpush1.msra.mxu0 0.0
    %3046 = vmatprep.subr.mxu0 0.0
    %3047 = vmatpush1.msra.mxu0 0.0
    %3048 = vmatprep.subr.mxu0 0.0
    %3049 = vmatpush1.msra.mxu0 0.0
    %3050 = vmatprep.mubr.f32.mxu0 0.0
    %3051 = vmatmul.mubr.f32.gmra.mrb[0].mxu0 %v2984
    %v3052 = vpop.f32.mrb[0].mxu0
    %v3053 = vadd.f32 0.0, %v3052
    %v3054 = vpop.f32.mrb[0].mxu0
    %v3055 = vadd.f32 0.0, %v3054
    %3056 = vdwg.mxu0
    %3057 = vmatprep.subr.mxu0 %v2962
    %3058 = vmatpush1.msra.mxu0 %v2961
    %3059 = vmatprep.subr.mxu0 %v2966
    %3060 = vmatpush1.msra.mxu0 %v2965
    %3061 = vmatprep.subr.mxu0 %v2970
    %3062 = vmatpush1.msra.mxu0 %v2969
    %3063 = vmatprep.subr.mxu0 %v2974
    %3064 = vmatpush1.msra.mxu0 %v2973
    %3065 = vmatprep.subr.mxu0 %v2978
    %3066 = vmatpush1.msra.mxu0 %v2977
    %3067 = vmatprep.subr.mxu0 %v2982
    %3068 = vmatpush1.msra.mxu0 %v2981
    %3069 = vmatprep.subr.mxu0 0.0
    %3070 = vmatpush1.msra.mxu0 0.0
    %3071 = vmatprep.subr.mxu0 0.0
    %3072 = vmatpush1.msra.mxu0 0.0
    %3073 = vmatprep.subr.mxu0 0.0
    %3074 = vmatpush1.msra.mxu0 0.0
    %3075 = vmatprep.subr.mxu0 0.0
    %3076 = vmatpush1.msra.mxu0 0.0
    %3077 = vmatprep.subr.mxu0 0.0
    %3078 = vmatpush1.msra.mxu0 0.0
    %3079 = vmatprep.subr.mxu0 0.0
    %3080 = vmatpush1.msra.mxu0 0.0
    %3081 = vmatprep.subr.mxu0 0.0
    %3082 = vmatpush1.msra.mxu0 0.0
    %3083 = vmatprep.subr.mxu0 0.0
    %3084 = vmatpush1.msra.mxu0 0.0
    %3085 = vmatprep.subr.mxu0 0.0
    %3086 = vmatpush1.msra.mxu0 0.0
    %3087 = vmatprep.subr.mxu0 0.0
    %3088 = vmatpush1.msra.mxu0 0.0
    %3089 = vmatprep.subr.mxu0 0.0
    %3090 = vmatpush1.msra.mxu0 0.0
    %3091 = vmatprep.subr.mxu0 0.0
    %3092 = vmatpush1.msra.mxu0 0.0
    %3093 = vmatprep.subr.mxu0 0.0
    %3094 = vmatpush1.msra.mxu0 0.0
    %3095 = vmatprep.subr.mxu0 0.0
    %3096 = vmatpush1.msra.mxu0 0.0
    %3097 = vmatprep.subr.mxu0 0.0
    %3098 = vmatpush1.msra.mxu0 0.0
    %3099 = vmatprep.subr.mxu0 0.0
    %3100 = vmatpush1.msra.mxu0 0.0
    %3101 = vmatprep.subr.mxu0 0.0
    %3102 = vmatpush1.msra.mxu0 0.0
    %3103 = vmatprep.subr.mxu0 0.0
    %3104 = vmatpush1.msra.mxu0 0.0
    %3105 = vmatprep.subr.mxu0 0.0
    %3106 = vmatpush1.msra.mxu0 0.0
    %3107 = vmatprep.subr.mxu0 0.0
    %3108 = vmatpush1.msra.mxu0 0.0
    %3109 = vmatprep.subr.mxu0 0.0
    %3110 = vmatpush1.msra.mxu0 0.0
    %3111 = vmatprep.subr.mxu0 0.0
    %3112 = vmatpush1.msra.mxu0 0.0
    %3113 = vmatprep.subr.mxu0 0.0
    %3114 = vmatpush1.msra.mxu0 0.0
    %3115 = vmatprep.subr.mxu0 0.0
    %3116 = vmatpush1.msra.mxu0 0.0
    %3117 = vmatprep.subr.mxu0 0.0
    %3118 = vmatpush1.msra.mxu0 0.0
    %3119 = vmatprep.subr.mxu0 0.0
    %3120 = vmatpush1.msra.mxu0 0.0
    %3121 = vmatprep.mubr.f32.mxu0 0.0
    %3122 = vmatmul.mubr.f32.gmra.mrb[0].mxu0 %v2984
    %v3123 = vpop.f32.mrb[0].mxu0
    %v3124 = vadd.f32 0.0, %v3123
    %v3125 = vpop.f32.mrb[0].mxu0
    %v3126 = vadd.f32 0.0, %v3125
    %3127 = vdwg.mxu0
    %v3128 = vld [vmem:[#allocation2 + $0xa0] sm:$0xff]
    %v3129 = vld [vmem:[#allocation2 + $0xa8] sm:$0xff]
    %v3130 = vld [vmem:[#allocation2 + $0xb0] sm:$0xff]
    %v3131 = vld [vmem:[#allocation2 + $0xb8] sm:$0xff]
    %v3132 = vadd.f32 %v3128, %v2742
    %v3133 = vadd.f32 %v3129, %v2744
    %v3134 = vadd.f32 %v3130, %v2813
    %v3135 = vadd.f32 %v3131, %v2815
    %v3136 = vtanh.pop %v3132
    %v3137 = vtanh.pop %v3133
    %v3138 = vtanh.pop %v3134
    %v3139 = vtanh.pop %v3135
    %v3140 = vmul.f32 %v3136, 0.5
    %v3141 = vadd.f32 %v3140, 0.5
    %v3142 = vmul.f32 %v3137, 0.5
    %v3143 = vadd.f32 %v3142, 0.5
    %v3144 = vmul.f32 %v3139, 0.5
    %v3145 = vadd.f32 %v3144, 0.5
    %v3146 = vmul.f32 %v3143, %v2597
    %v3147 = vmul.f32 %v3141, %v3138
    %v3148 = vadd.f32 %v3146, %v3147
    %v3149 = vtanh.pop %v3148
    %v3150 = vmul.f32 %v3145, %v3149
    %v3151 = vadd.f32 %v2884, %v556
    %v3152 = vadd.f32 %v2886, %v560
    %v3153 = vadd.f32 %v2955, %v564
    %v3154 = vadd.f32 %v2957, %v568
    %v3155 = vadd.f32 %v3151, %v3053
    %v3156 = vadd.f32 %v3152, %v3055
    %v3157 = vadd.f32 %v3153, %v3124
    %v3158 = vadd.f32 %v3154, %v3126
    %v3159 = vtanh.pop %v3155
    %v3160 = vtanh.pop %v3156
    %v3161 = vtanh.pop %v3157
    %v3162 = vtanh.pop %v3158
    %v3163 = vmul.f32 %v3159, 0.5
    %v3164 = vadd.f32 %v3163, 0.5
    %v3165 = vmul.f32 %v3160, 0.5
    %v3166 = vadd.f32 %v3165, 0.5
    %v3167 = vmul.f32 %v3162, 0.5
    %v3168 = vadd.f32 %v3167, 0.5
    %v3169 = vmul.f32 %v3166, %v2620
    %v3170 = vmul.f32 %v3164, %v3161
    %v3171 = vadd.f32 %v3169, %v3170
    %v3172 = vtanh.pop %v3171
    %v3173 = vmul.f32 %v3168, %v3172
    %3174 = vst.msk [vmem:[#allocation3 + $0x20] sm:$0xff] %vm640, %v3173
    %v3175 = vld [vmem:[#allocation4] sm:$0xff]
    %v3176 = vld [vmem:[#allocation4 + $0x8] sm:$0xff]
    %v3177 = vld [vmem:[#allocation4 + $0x10] sm:$0xff]
    %v3178 = vld [vmem:[#allocation4 + $0x18] sm:$0xff]
    %v3179 = vld [vmem:[#allocation4 + $0x20] sm:$0xff]
    %v3180 = vld [vmem:[#allocation4 + $0x28] sm:$0xff]
    %v3181 = vld [vmem:[#allocation4 + $0x30] sm:$0xff]
    %v3182 = vld [vmem:[#allocation4 + $0x38] sm:$0xff]
    %v3183 = vld [vmem:[#allocation4 + $0x40] sm:$0xff]
    %v3184 = vld [vmem:[#allocation4 + $0x48] sm:$0xff]
    %v3185 = vld [vmem:[#allocation4 + $0x50] sm:$0xff]
    %v3186 = vld [vmem:[#allocation4 + $0x58] sm:$0xff]
    %v3187 = vld [vmem:[#allocation4 + $0x60] sm:$0xff]
    %v3188 = vld [vmem:[#allocation4 + $0x68] sm:$0xff]
    %v3189 = vld [vmem:[#allocation4 + $0x70] sm:$0xff]
    %v3190 = vld [vmem:[#allocation4 + $0x78] sm:$0xff]
    %v3191 = vld [vmem:[#allocation4 + $0x80] sm:$0xff]
    %v3192 = vld [vmem:[#allocation4 + $0x88] sm:$0xff]
    %v3193 = vld [vmem:[#allocation4 + $0x90] sm:$0xff]
    %v3194 = vld [vmem:[#allocation4 + $0x98] sm:$0xff]
    %v3195 = vld [vmem:[#allocation4 + $0xa0] sm:$0xff]
    %v3196 = vld [vmem:[#allocation4 + $0xa8] sm:$0xff]
    %v3197 = vld [vmem:[#allocation4 + $0xb0] sm:$0xff]
    %v3198 = vld [vmem:[#allocation4 + $0xb8] sm:$0xff]
    %v3199 = vld [vmem:[#allocation4 + $0xc0] sm:$0xff]
    %v3200 = vld [vmem:[#allocation4 + $0xc8] sm:$0xff]
    %v3201 = vld [vmem:[#allocation4 + $0xd0] sm:$0xff]
    %v3202 = vld [vmem:[#allocation4 + $0xd8] sm:$0xff]
    %v3203 = vld [vmem:[#allocation4 + $0xe0] sm:$0xff]
    %v3204 = vld [vmem:[#allocation4 + $0xe8] sm:$0xff]
    %v3205 = vld [vmem:[#allocation4 + $0xf0] sm:$0xff]
    %v3206 = vld [vmem:[#allocation4 + $0xf8] sm:$0xff]
    %v3207 = vld [vmem:[#allocation4 + $0x100] sm:$0xff]
    %v3208 = vld [vmem:[#allocation4 + $0x108] sm:$0xff]
    %v3209 = vld [vmem:[#allocation4 + $0x110] sm:$0xff]
    %v3210 = vld [vmem:[#allocation4 + $0x118] sm:$0xff]
    %v3211 = vld [vmem:[#allocation4 + $0x120] sm:$0xff]
    %v3212 = vld [vmem:[#allocation4 + $0x128] sm:$0xff]
    %v3213 = vld [vmem:[#allocation4 + $0x130] sm:$0xff]
    %v3214 = vld [vmem:[#allocation4 + $0x138] sm:$0xff]
    %v3215 = vld [vmem:[#allocation4 + $0x140] sm:$0xff]
    %v3216 = vld [vmem:[#allocation4 + $0x148] sm:$0xff]
    %v3217 = vld [vmem:[#allocation4 + $0x150] sm:$0xff]
    %v3218 = vld [vmem:[#allocation4 + $0x158] sm:$0xff]
    %v3219 = vld [vmem:[#allocation4 + $0x160] sm:$0xff]
    %v3220 = vld [vmem:[#allocation4 + $0x168] sm:$0xff]
    %v3221 = vld [vmem:[#allocation4 + $0x170] sm:$0xff]
    %v3222 = vld [vmem:[#allocation4 + $0x178] sm:$0xff]
    %v3224 = vsel %vm640, %v3150, 0
    %3226 = vmatprep.subr.mxu0 %v3176
    %3227 = vmatpush1.msra.mxu0 %v3175
    %3228 = vmatprep.subr.mxu0 %v3184
    %3229 = vmatpush1.msra.mxu0 %v3183
    %3230 = vmatprep.subr.mxu0 %v3192
    %3231 = vmatpush1.msra.mxu0 %v3191
    %3232 = vmatprep.subr.mxu0 %v3200
    %3233 = vmatpush1.msra.mxu0 %v3199
    %3234 = vmatprep.subr.mxu0 %v3208
    %3235 = vmatpush1.msra.mxu0 %v3207
    %3236 = vmatprep.subr.mxu0 %v3216
    %3237 = vmatpush1.msra.mxu0 %v3215
    %3238 = vmatprep.subr.mxu0 0.0
    %3239 = vmatpush1.msra.mxu0 0.0
    %3240 = vmatprep.subr.mxu0 0.0
    %3241 = vmatpush1.msra.mxu0 0.0
    %3242 = vmatprep.subr.mxu0 0.0
    %3243 = vmatpush1.msra.mxu0 0.0
    %3244 = vmatprep.subr.mxu0 0.0
    %3245 = vmatpush1.msra.mxu0 0.0
    %3246 = vmatprep.subr.mxu0 0.0
    %3247 = vmatpush1.msra.mxu0 0.0
    %3248 = vmatprep.subr.mxu0 0.0
    %3249 = vmatpush1.msra.mxu0 0.0
    %3250 = vmatprep.subr.mxu0 0.0
    %3251 = vmatpush1.msra.mxu0 0.0
    %3252 = vmatprep.subr.mxu0 0.0
    %3253 = vmatpush1.msra.mxu0 0.0
    %3254 = vmatprep.subr.mxu0 0.0
    %3255 = vmatpush1.msra.mxu0 0.0
    %3256 = vmatprep.subr.mxu0 0.0
    %3257 = vmatpush1.msra.mxu0 0.0
    %3258 = vmatprep.subr.mxu0 0.0
    %3259 = vmatpush1.msra.mxu0 0.0
    %3260 = vmatprep.subr.mxu0 0.0
    %3261 = vmatpush1.msra.mxu0 0.0
    %3262 = vmatprep.subr.mxu0 0.0
    %3263 = vmatpush1.msra.mxu0 0.0
    %3264 = vmatprep.subr.mxu0 0.0
    %3265 = vmatpush1.msra.mxu0 0.0
    %3266 = vmatprep.subr.mxu0 0.0
    %3267 = vmatpush1.msra.mxu0 0.0
    %3268 = vmatprep.subr.mxu0 0.0
    %3269 = vmatpush1.msra.mxu0 0.0
    %3270 = vmatprep.subr.mxu0 0.0
    %3271 = vmatpush1.msra.mxu0 0.0
    %3272 = vmatprep.subr.mxu0 0.0
    %3273 = vmatpush1.msra.mxu0 0.0
    %3274 = vmatprep.subr.mxu0 0.0
    %3275 = vmatpush1.msra.mxu0 0.0
    %3276 = vmatprep.subr.mxu0 0.0
    %3277 = vmatpush1.msra.mxu0 0.0
    %3278 = vmatprep.subr.mxu0 0.0
    %3279 = vmatpush1.msra.mxu0 0.0
    %3280 = vmatprep.subr.mxu0 0.0
    %3281 = vmatpush1.msra.mxu0 0.0
    %3282 = vmatprep.subr.mxu0 0.0
    %3283 = vmatpush1.msra.mxu0 0.0
    %3284 = vmatprep.subr.mxu0 0.0
    %3285 = vmatpush1.msra.mxu0 0.0
    %3286 = vmatprep.subr.mxu0 0.0
    %3287 = vmatpush1.msra.mxu0 0.0
    %3288 = vmatprep.subr.mxu0 0.0
    %3289 = vmatpush1.msra.mxu0 0.0
    %3290 = vmatprep.mubr.f32.mxu0 0.0
    %3291 = vmatmul.mubr.f32.gmra.mrb[0].mxu0 %v3224
    %v3292 = vpop.f32.mrb[0].mxu0
    %v3293 = vadd.f32 0.0, %v3292
    %v3294 = vpop.f32.mrb[0].mxu0
    %v3295 = vadd.f32 0.0, %v3294
    %3296 = vdwg.mxu0
    %3297 = vmatprep.subr.mxu0 %v3178
    %3298 = vmatpush1.msra.mxu0 %v3177
    %3299 = vmatprep.subr.mxu0 %v3186
    %3300 = vmatpush1.msra.mxu0 %v3185
    %3301 = vmatprep.subr.mxu0 %v3194
    %3302 = vmatpush1.msra.mxu0 %v3193
    %3303 = vmatprep.subr.mxu0 %v3202
    %3304 = vmatpush1.msra.mxu0 %v3201
    %3305 = vmatprep.subr.mxu0 %v3210
    %3306 = vmatpush1.msra.mxu0 %v3209
    %3307 = vmatprep.subr.mxu0 %v3218
    %3308 = vmatpush1.msra.mxu0 %v3217
    %3309 = vmatprep.subr.mxu0 0.0
    %3310 = vmatpush1.msra.mxu0 0.0
    %3311 = vmatprep.subr.mxu0 0.0
    %3312 = vmatpush1.msra.mxu0 0.0
    %3313 = vmatprep.subr.mxu0 0.0
    %3314 = vmatpush1.msra.mxu0 0.0
    %3315 = vmatprep.subr.mxu0 0.0
    %3316 = vmatpush1.msra.mxu0 0.0
    %3317 = vmatprep.subr.mxu0 0.0
    %3318 = vmatpush1.msra.mxu0 0.0
    %3319 = vmatprep.subr.mxu0 0.0
    %3320 = vmatpush1.msra.mxu0 0.0
    %3321 = vmatprep.subr.mxu0 0.0
    %3322 = vmatpush1.msra.mxu0 0.0
    %3323 = vmatprep.subr.mxu0 0.0
    %3324 = vmatpush1.msra.mxu0 0.0
    %3325 = vmatprep.subr.mxu0 0.0
    %3326 = vmatpush1.msra.mxu0 0.0
    %3327 = vmatprep.subr.mxu0 0.0
    %3328 = vmatpush1.msra.mxu0 0.0
    %3329 = vmatprep.subr.mxu0 0.0
    %3330 = vmatpush1.msra.mxu0 0.0
    %3331 = vmatprep.subr.mxu0 0.0
    %3332 = vmatpush1.msra.mxu0 0.0
    %3333 = vmatprep.subr.mxu0 0.0
    %3334 = vmatpush1.msra.mxu0 0.0
    %3335 = vmatprep.subr.mxu0 0.0
    %3336 = vmatpush1.msra.mxu0 0.0
    %3337 = vmatprep.subr.mxu0 0.0
    %3338 = vmatpush1.msra.mxu0 0.0
    %3339 = vmatprep.subr.mxu0 0.0
    %3340 = vmatpush1.msra.mxu0 0.0
    %3341 = vmatprep.subr.mxu0 0.0
    %3342 = vmatpush1.msra.mxu0 0.0
    %3343 = vmatprep.subr.mxu0 0.0
    %3344 = vmatpush1.msra.mxu0 0.0
    %3345 = vmatprep.subr.mxu0 0.0
    %3346 = vmatpush1.msra.mxu0 0.0
    %3347 = vmatprep.subr.mxu0 0.0
    %3348 = vmatpush1.msra.mxu0 0.0
    %3349 = vmatprep.subr.mxu0 0.0
    %3350 = vmatpush1.msra.mxu0 0.0
    %3351 = vmatprep.subr.mxu0 0.0
    %3352 = vmatpush1.msra.mxu0 0.0
    %3353 = vmatprep.subr.mxu0 0.0
    %3354 = vmatpush1.msra.mxu0 0.0
    %3355 = vmatprep.subr.mxu0 0.0
    %3356 = vmatpush1.msra.mxu0 0.0
    %3357 = vmatprep.subr.mxu0 0.0
    %3358 = vmatpush1.msra.mxu0 0.0
    %3359 = vmatprep.subr.mxu0 0.0
    %3360 = vmatpush1.msra.mxu0 0.0
    %3361 = vmatprep.mubr.f32.mxu0 0.0
    %3362 = vmatmul.mubr.f32.gmra.mrb[0].mxu0 %v3224
    %v3363 = vpop.f32.mrb[0].mxu0
    %v3364 = vadd.f32 0.0, %v3363
    %v3365 = vpop.f32.mrb[0].mxu0
    %v3366 = vadd.f32 0.0, %v3365
    %3367 = vdwg.mxu0
    %3368 = vmatprep.subr.mxu0 %v3180
    %3369 = vmatpush1.msra.mxu0 %v3179
    %3370 = vmatprep.subr.mxu0 %v3188
    %3371 = vmatpush1.msra.mxu0 %v3187
    %3372 = vmatprep.subr.mxu0 %v3196
    %3373 = vmatpush1.msra.mxu0 %v3195
    %3374 = vmatprep.subr.mxu0 %v3204
    %3375 = vmatpush1.msra.mxu0 %v3203
    %3376 = vmatprep.subr.mxu0 %v3212
    %3377 = vmatpush1.msra.mxu0 %v3211
    %3378 = vmatprep.subr.mxu0 %v3220
    %3379 = vmatpush1.msra.mxu0 %v3219
    %3380 = vmatprep.subr.mxu0 0.0
    %3381 = vmatpush1.msra.mxu0 0.0
    %3382 = vmatprep.subr.mxu0 0.0
    %3383 = vmatpush1.msra.mxu0 0.0
    %3384 = vmatprep.subr.mxu0 0.0
    %3385 = vmatpush1.msra.mxu0 0.0
    %3386 = vmatprep.subr.mxu0 0.0
    %3387 = vmatpush1.msra.mxu0 0.0
    %3388 = vmatprep.subr.mxu0 0.0
    %3389 = vmatpush1.msra.mxu0 0.0
    %3390 = vmatprep.subr.mxu0 0.0
    %3391 = vmatpush1.msra.mxu0 0.0
    %3392 = vmatprep.subr.mxu0 0.0
    %3393 = vmatpush1.msra.mxu0 0.0
    %3394 = vmatprep.subr.mxu0 0.0
    %3395 = vmatpush1.msra.mxu0 0.0
    %3396 = vmatprep.subr.mxu0 0.0
    %3397 = vmatpush1.msra.mxu0 0.0
    %3398 = vmatprep.subr.mxu0 0.0
    %3399 = vmatpush1.msra.mxu0 0.0
    %3400 = vmatprep.subr.mxu0 0.0
    %3401 = vmatpush1.msra.mxu0 0.0
    %3402 = vmatprep.subr.mxu0 0.0
    %3403 = vmatpush1.msra.mxu0 0.0
    %3404 = vmatprep.subr.mxu0 0.0
    %3405 = vmatpush1.msra.mxu0 0.0
    %3406 = vmatprep.subr.mxu0 0.0
    %3407 = vmatpush1.msra.mxu0 0.0
    %3408 = vmatprep.subr.mxu0 0.0
    %3409 = vmatpush1.msra.mxu0 0.0
    %3410 = vmatprep.subr.mxu0 0.0
    %3411 = vmatpush1.msra.mxu0 0.0
    %3412 = vmatprep.subr.mxu0 0.0
    %3413 = vmatpush1.msra.mxu0 0.0
    %3414 = vmatprep.subr.mxu0 0.0
    %3415 = vmatpush1.msra.mxu0 0.0
    %3416 = vmatprep.subr.mxu0 0.0
    %3417 = vmatpush1.msra.mxu0 0.0
    %3418 = vmatprep.subr.mxu0 0.0
    %3419 = vmatpush1.msra.mxu0 0.0
    %3420 = vmatprep.subr.mxu0 0.0
    %3421 = vmatpush1.msra.mxu0 0.0
    %3422 = vmatprep.subr.mxu0 0.0
    %3423 = vmatpush1.msra.mxu0 0.0
    %3424 = vmatprep.subr.mxu0 0.0
    %3425 = vmatpush1.msra.mxu0 0.0
    %3426 = vmatprep.subr.mxu0 0.0
    %3427 = vmatpush1.msra.mxu0 0.0
    %3428 = vmatprep.subr.mxu0 0.0
    %3429 = vmatpush1.msra.mxu0 0.0
    %3430 = vmatprep.subr.mxu0 0.0
    %3431 = vmatpush1.msra.mxu0 0.0
    %3432 = vmatprep.mubr.f32.mxu0 0.0
    %3433 = vmatmul.mubr.f32.gmra.mrb[0].mxu0 %v3224
    %v3434 = vpop.f32.mrb[0].mxu0
    %v3435 = vadd.f32 0.0, %v3434
    %v3436 = vpop.f32.mrb[0].mxu0
    %v3437 = vadd.f32 0.0, %v3436
    %3438 = vdwg.mxu0
    %3439 = vmatprep.subr.mxu0 %v3182
    %3440 = vmatpush1.msra.mxu0 %v3181
    %3441 = vmatprep.subr.mxu0 %v3190
    %3442 = vmatpush1.msra.mxu0 %v3189
    %3443 = vmatprep.subr.mxu0 %v3198
    %3444 = vmatpush1.msra.mxu0 %v3197
    %3445 = vmatprep.subr.mxu0 %v3206
    %3446 = vmatpush1.msra.mxu0 %v3205
    %3447 = vmatprep.subr.mxu0 %v3214
    %3448 = vmatpush1.msra.mxu0 %v3213
    %3449 = vmatprep.subr.mxu0 %v3222
    %3450 = vmatpush1.msra.mxu0 %v3221
    %3451 = vmatprep.subr.mxu0 0.0
    %3452 = vmatpush1.msra.mxu0 0.0
    %3453 = vmatprep.subr.mxu0 0.0
    %3454 = vmatpush1.msra.mxu0 0.0
    %3455 = vmatprep.subr.mxu0 0.0
    %3456 = vmatpush1.msra.mxu0 0.0
    %3457 = vmatprep.subr.mxu0 0.0
    %3458 = vmatpush1.msra.mxu0 0.0
    %3459 = vmatprep.subr.mxu0 0.0
    %3460 = vmatpush1.msra.mxu0 0.0
    %3461 = vmatprep.subr.mxu0 0.0
    %3462 = vmatpush1.msra.mxu0 0.0
    %3463 = vmatprep.subr.mxu0 0.0
    %3464 = vmatpush1.msra.mxu0 0.0
    %3465 = vmatprep.subr.mxu0 0.0
    %3466 = vmatpush1.msra.mxu0 0.0
    %3467 = vmatprep.subr.mxu0 0.0
    %3468 = vmatpush1.msra.mxu0 0.0
    %3469 = vmatprep.subr.mxu0 0.0
    %3470 = vmatpush1.msra.mxu0 0.0
    %3471 = vmatprep.subr.mxu0 0.0
    %3472 = vmatpush1.msra.mxu0 0.0
    %3473 = vmatprep.subr.mxu0 0.0
    %3474 = vmatpush1.msra.mxu0 0.0
    %3475 = vmatprep.subr.mxu0 0.0
    %3476 = vmatpush1.msra.mxu0 0.0
    %3477 = vmatprep.subr.mxu0 0.0
    %3478 = vmatpush1.msra.mxu0 0.0
    %3479 = vmatprep.subr.mxu0 0.0
    %3480 = vmatpush1.msra.mxu0 0.0
    %3481 = vmatprep.subr.mxu0 0.0
    %3482 = vmatpush1.msra.mxu0 0.0
    %3483 = vmatprep.subr.mxu0 0.0
    %3484 = vmatpush1.msra.mxu0 0.0
    %3485 = vmatprep.subr.mxu0 0.0
    %3486 = vmatpush1.msra.mxu0 0.0
    %3487 = vmatprep.subr.mxu0 0.0
    %3488 = vmatpush1.msra.mxu0 0.0
    %3489 = vmatprep.subr.mxu0 0.0
    %3490 = vmatpush1.msra.mxu0 0.0
    %3491 = vmatprep.subr.mxu0 0.0
    %3492 = vmatpush1.msra.mxu0 0.0
    %3493 = vmatprep.subr.mxu0 0.0
    %3494 = vmatpush1.msra.mxu0 0.0
    %3495 = vmatprep.subr.mxu0 0.0
    %3496 = vmatpush1.msra.mxu0 0.0
    %3497 = vmatprep.subr.mxu0 0.0
    %3498 = vmatpush1.msra.mxu0 0.0
    %3499 = vmatprep.subr.mxu0 0.0
    %3500 = vmatpush1.msra.mxu0 0.0
    %3501 = vmatprep.subr.mxu0 0.0
    %3502 = vmatpush1.msra.mxu0 0.0
    %3503 = vmatprep.mubr.f32.mxu0 0.0
    %3504 = vmatmul.mubr.f32.gmra.mrb[0].mxu0 %v3224
    %v3505 = vpop.f32.mrb[0].mxu0
    %v3506 = vadd.f32 0.0, %v3505
    %v3507 = vpop.f32.mrb[0].mxu0
    %v3508 = vadd.f32 0.0, %v3507
    %3509 = vdwg.mxu0
    %v3510 = vld [vmem:[#allocation7] sm:$0xff]
    %v3511 = vld [vmem:[#allocation7 + $0x8] sm:$0xff]
    %v3512 = vld [vmem:[#allocation7 + $0x10] sm:$0xff]
    %v3513 = vld [vmem:[#allocation7 + $0x18] sm:$0xff]
    %v3514 = vld [vmem:[#allocation7 + $0x20] sm:$0xff]
    %v3515 = vld [vmem:[#allocation7 + $0x28] sm:$0xff]
    %v3516 = vld [vmem:[#allocation7 + $0x30] sm:$0xff]
    %v3517 = vld [vmem:[#allocation7 + $0x38] sm:$0xff]
    %v3518 = vld [vmem:[#allocation7 + $0x40] sm:$0xff]
    %v3519 = vld [vmem:[#allocation7 + $0x48] sm:$0xff]
    %v3520 = vld [vmem:[#allocation7 + $0x50] sm:$0xff]
    %v3521 = vld [vmem:[#allocation7 + $0x58] sm:$0xff]
    %v3522 = vld [vmem:[#allocation7 + $0x60] sm:$0xff]
    %v3523 = vld [vmem:[#allocation7 + $0x68] sm:$0xff]
    %v3524 = vld [vmem:[#allocation7 + $0x70] sm:$0xff]
    %v3525 = vld [vmem:[#allocation7 + $0x78] sm:$0xff]
    %v3526 = vld [vmem:[#allocation7 + $0x80] sm:$0xff]
    %v3527 = vld [vmem:[#allocation7 + $0x88] sm:$0xff]
    %v3528 = vld [vmem:[#allocation7 + $0x90] sm:$0xff]
    %v3529 = vld [vmem:[#allocation7 + $0x98] sm:$0xff]
    %v3530 = vld [vmem:[#allocation7 + $0xa0] sm:$0xff]
    %v3531 = vld [vmem:[#allocation7 + $0xa8] sm:$0xff]
    %v3532 = vld [vmem:[#allocation7 + $0xb0] sm:$0xff]
    %v3533 = vld [vmem:[#allocation7 + $0xb8] sm:$0xff]
    %v3535 = vsel %vm640, %v3173, 0
    %3537 = vmatprep.subr.mxu0 %v3511
    %3538 = vmatpush1.msra.mxu0 %v3510
    %3539 = vmatprep.subr.mxu0 %v3515
    %3540 = vmatpush1.msra.mxu0 %v3514
    %3541 = vmatprep.subr.mxu0 %v3519
    %3542 = vmatpush1.msra.mxu0 %v3518
    %3543 = vmatprep.subr.mxu0 %v3523
    %3544 = vmatpush1.msra.mxu0 %v3522
    %3545 = vmatprep.subr.mxu0 %v3527
    %3546 = vmatpush1.msra.mxu0 %v3526
    %3547 = vmatprep.subr.mxu0 %v3531
    %3548 = vmatpush1.msra.mxu0 %v3530
    %3549 = vmatprep.subr.mxu0 0.0
    %3550 = vmatpush1.msra.mxu0 0.0
    %3551 = vmatprep.subr.mxu0 0.0
    %3552 = vmatpush1.msra.mxu0 0.0
    %3553 = vmatprep.subr.mxu0 0.0
    %3554 = vmatpush1.msra.mxu0 0.0
    %3555 = vmatprep.subr.mxu0 0.0
    %3556 = vmatpush1.msra.mxu0 0.0
    %3557 = vmatprep.subr.mxu0 0.0
    %3558 = vmatpush1.msra.mxu0 0.0
    %3559 = vmatprep.subr.mxu0 0.0
    %3560 = vmatpush1.msra.mxu0 0.0
    %3561 = vmatprep.subr.mxu0 0.0
    %3562 = vmatpush1.msra.mxu0 0.0
    %3563 = vmatprep.subr.mxu0 0.0
    %3564 = vmatpush1.msra.mxu0 0.0
    %3565 = vmatprep.subr.mxu0 0.0
    %3566 = vmatpush1.msra.mxu0 0.0
    %3567 = vmatprep.subr.mxu0 0.0
    %3568 = vmatpush1.msra.mxu0 0.0
    %3569 = vmatprep.subr.mxu0 0.0
    %3570 = vmatpush1.msra.mxu0 0.0
    %3571 = vmatprep.subr.mxu0 0.0
    %3572 = vmatpush1.msra.mxu0 0.0
    %3573 = vmatprep.subr.mxu0 0.0
    %3574 = vmatpush1.msra.mxu0 0.0
    %3575 = vmatprep.subr.mxu0 0.0
    %3576 = vmatpush1.msra.mxu0 0.0
    %3577 = vmatprep.subr.mxu0 0.0
    %3578 = vmatpush1.msra.mxu0 0.0
    %3579 = vmatprep.subr.mxu0 0.0
    %3580 = vmatpush1.msra.mxu0 0.0
    %3581 = vmatprep.subr.mxu0 0.0
    %3582 = vmatpush1.msra.mxu0 0.0
    %3583 = vmatprep.subr.mxu0 0.0
    %3584 = vmatpush1.msra.mxu0 0.0
    %3585 = vmatprep.subr.mxu0 0.0
    %3586 = vmatpush1.msra.mxu0 0.0
    %3587 = vmatprep.subr.mxu0 0.0
    %3588 = vmatpush1.msra.mxu0 0.0
    %3589 = vmatprep.subr.mxu0 0.0
    %3590 = vmatpush1.msra.mxu0 0.0
    %3591 = vmatprep.subr.mxu0 0.0
    %3592 = vmatpush1.msra.mxu0 0.0
    %3593 = vmatprep.subr.mxu0 0.0
    %3594 = vmatpush1.msra.mxu0 0.0
    %3595 = vmatprep.subr.mxu0 0.0
    %3596 = vmatpush1.msra.mxu0 0.0
    %3597 = vmatprep.subr.mxu0 0.0
    %3598 = vmatpush1.msra.mxu0 0.0
    %3599 = vmatprep.subr.mxu0 0.0
    %3600 = vmatpush1.msra.mxu0 0.0
    %3601 = vmatprep.mubr.f32.mxu0 0.0
    %3602 = vmatmul.mubr.f32.gmra.mrb[0].mxu0 %v3535
    %v3603 = vpop.f32.mrb[0].mxu0
    %v3604 = vadd.f32 0.0, %v3603
    %v3605 = vpop.f32.mrb[0].mxu0
    %v3606 = vadd.f32 0.0, %v3605
    %3607 = vdwg.mxu0
    %3608 = vmatprep.subr.mxu0 %v3513
    %3609 = vmatpush1.msra.mxu0 %v3512
    %3610 = vmatprep.subr.mxu0 %v3517
    %3611 = vmatpush1.msra.mxu0 %v3516
    %3612 = vmatprep.subr.mxu0 %v3521
    %3613 = vmatpush1.msra.mxu0 %v3520
    %3614 = vmatprep.subr.mxu0 %v3525
    %3615 = vmatpush1.msra.mxu0 %v3524
    %3616 = vmatprep.subr.mxu0 %v3529
    %3617 = vmatpush1.msra.mxu0 %v3528
    %3618 = vmatprep.subr.mxu0 %v3533
    %3619 = vmatpush1.msra.mxu0 %v3532
    %3620 = vmatprep.subr.mxu0 0.0
    %3621 = vmatpush1.msra.mxu0 0.0
    %3622 = vmatprep.subr.mxu0 0.0
    %3623 = vmatpush1.msra.mxu0 0.0
    %3624 = vmatprep.subr.mxu0 0.0
    %3625 = vmatpush1.msra.mxu0 0.0
    %3626 = vmatprep.subr.mxu0 0.0
    %3627 = vmatpush1.msra.mxu0 0.0
    %3628 = vmatprep.subr.mxu0 0.0
    %3629 = vmatpush1.msra.mxu0 0.0
    %3630 = vmatprep.subr.mxu0 0.0
    %3631 = vmatpush1.msra.mxu0 0.0
    %3632 = vmatprep.subr.mxu0 0.0
    %3633 = vmatpush1.msra.mxu0 0.0
    %3634 = vmatprep.subr.mxu0 0.0
    %3635 = vmatpush1.msra.mxu0 0.0
    %3636 = vmatprep.subr.mxu0 0.0
    %3637 = vmatpush1.msra.mxu0 0.0
    %3638 = vmatprep.subr.mxu0 0.0
    %3639 = vmatpush1.msra.mxu0 0.0
    %3640 = vmatprep.subr.mxu0 0.0
    %3641 = vmatpush1.msra.mxu0 0.0
    %3642 = vmatprep.subr.mxu0 0.0
    %3643 = vmatpush1.msra.mxu0 0.0
    %3644 = vmatprep.subr.mxu0 0.0
    %3645 = vmatpush1.msra.mxu0 0.0
    %3646 = vmatprep.subr.mxu0 0.0
    %3647 = vmatpush1.msra.mxu0 0.0
    %3648 = vmatprep.subr.mxu0 0.0
    %3649 = vmatpush1.msra.mxu0 0.0
    %3650 = vmatprep.subr.mxu0 0.0
    %3651 = vmatpush1.msra.mxu0 0.0
    %3652 = vmatprep.subr.mxu0 0.0
    %3653 = vmatpush1.msra.mxu0 0.0
    %3654 = vmatprep.subr.mxu0 0.0
    %3655 = vmatpush1.msra.mxu0 0.0
    %3656 = vmatprep.subr.mxu0 0.0
    %3657 = vmatpush1.msra.mxu0 0.0
    %3658 = vmatprep.subr.mxu0 0.0
    %3659 = vmatpush1.msra.mxu0 0.0
    %3660 = vmatprep.subr.mxu0 0.0
    %3661 = vmatpush1.msra.mxu0 0.0
    %3662 = vmatprep.subr.mxu0 0.0
    %3663 = vmatpush1.msra.mxu0 0.0
    %3664 = vmatprep.subr.mxu0 0.0
    %3665 = vmatpush1.msra.mxu0 0.0
    %3666 = vmatprep.subr.mxu0 0.0
    %3667 = vmatpush1.msra.mxu0 0.0
    %3668 = vmatprep.subr.mxu0 0.0
    %3669 = vmatpush1.msra.mxu0 0.0
    %3670 = vmatprep.subr.mxu0 0.0
    %3671 = vmatpush1.msra.mxu0 0.0
    %3672 = vmatprep.mubr.f32.mxu0 0.0
    %3673 = vmatmul.mubr.f32.gmra.mrb[0].mxu0 %v3535
    %v3674 = vpop.f32.mrb[0].mxu0
    %v3675 = vadd.f32 0.0, %v3674
    %v3676 = vpop.f32.mrb[0].mxu0
    %v3677 = vadd.f32 0.0, %v3676
    %3678 = vdwg.mxu0
    %v3679 = vld [vmem:[#allocation2 + $0xc0] sm:$0xff]
    %v3680 = vld [vmem:[#allocation2 + $0xc8] sm:$0xff]
    %v3681 = vld [vmem:[#allocation2 + $0xd0] sm:$0xff]
    %v3682 = vld [vmem:[#allocation2 + $0xd8] sm:$0xff]
    %v3683 = vadd.f32 %v3679, %v3293
    %v3684 = vadd.f32 %v3680, %v3295
    %v3685 = vadd.f32 %v3681, %v3364
    %v3686 = vadd.f32 %v3682, %v3366
    %v3687 = vtanh.pop %v3683
    %v3688 = vtanh.pop %v3684
    %v3689 = vtanh.pop %v3685
    %v3690 = vtanh.pop %v3686
    %v3691 = vmul.f32 %v3687, 0.5
    %v3692 = vadd.f32 %v3691, 0.5
    %v3693 = vmul.f32 %v3688, 0.5
    %v3694 = vadd.f32 %v3693, 0.5
    %v3695 = vmul.f32 %v3690, 0.5
    %v3696 = vadd.f32 %v3695, 0.5
    %v3697 = vmul.f32 %v3694, %v3148
    %v3698 = vmul.f32 %v3692, %v3689
    %v3699 = vadd.f32 %v3697, %v3698
    %v3700 = vtanh.pop %v3699
    %v3701 = vmul.f32 %v3696, %v3700
    %v3702 = vadd.f32 %v3435, %v556
    %v3703 = vadd.f32 %v3437, %v560
    %v3704 = vadd.f32 %v3506, %v564
    %v3705 = vadd.f32 %v3508, %v568
    %v3706 = vadd.f32 %v3702, %v3604
    %v3707 = vadd.f32 %v3703, %v3606
    %v3708 = vadd.f32 %v3704, %v3675
    %v3709 = vadd.f32 %v3705, %v3677
    %v3710 = vtanh.pop %v3706
    %v3711 = vtanh.pop %v3707
    %v3712 = vtanh.pop %v3708
    %v3713 = vtanh.pop %v3709
    %v3714 = vmul.f32 %v3710, 0.5
    %v3715 = vadd.f32 %v3714, 0.5
    %v3716 = vmul.f32 %v3711, 0.5
    %v3717 = vadd.f32 %v3716, 0.5
    %v3718 = vmul.f32 %v3713, 0.5
    %v3719 = vadd.f32 %v3718, 0.5
    %v3720 = vmul.f32 %v3717, %v3171
    %v3721 = vmul.f32 %v3715, %v3712
    %v3722 = vadd.f32 %v3720, %v3721
    %v3723 = vtanh.pop %v3722
    %v3724 = vmul.f32 %v3719, %v3723
    %3725 = vst.msk [vmem:[#allocation3 + $0x28] sm:$0xff] %vm640, %v3724
    %v3726 = vld [vmem:[#allocation4] sm:$0xff]
    %v3727 = vld [vmem:[#allocation4 + $0x8] sm:$0xff]
    %v3728 = vld [vmem:[#allocation4 + $0x10] sm:$0xff]
    %v3729 = vld [vmem:[#allocation4 + $0x18] sm:$0xff]
    %v3730 = vld [vmem:[#allocation4 + $0x20] sm:$0xff]
    %v3731 = vld [vmem:[#allocation4 + $0x28] sm:$0xff]
    %v3732 = vld [vmem:[#allocation4 + $0x30] sm:$0xff]
    %v3733 = vld [vmem:[#allocation4 + $0x38] sm:$0xff]
    %v3734 = vld [vmem:[#allocation4 + $0x40] sm:$0xff]
    %v3735 = vld [vmem:[#allocation4 + $0x48] sm:$0xff]
    %v3736 = vld [vmem:[#allocation4 + $0x50] sm:$0xff]
    %v3737 = vld [vmem:[#allocation4 + $0x58] sm:$0xff]
    %v3738 = vld [vmem:[#allocation4 + $0x60] sm:$0xff]
    %v3739 = vld [vmem:[#allocation4 + $0x68] sm:$0xff]
    %v3740 = vld [vmem:[#allocation4 + $0x70] sm:$0xff]
    %v3741 = vld [vmem:[#allocation4 + $0x78] sm:$0xff]
    %v3742 = vld [vmem:[#allocation4 + $0x80] sm:$0xff]
    %v3743 = vld [vmem:[#allocation4 + $0x88] sm:$0xff]
    %v3744 = vld [vmem:[#allocation4 + $0x90] sm:$0xff]
    %v3745 = vld [vmem:[#allocation4 + $0x98] sm:$0xff]
    %v3746 = vld [vmem:[#allocation4 + $0xa0] sm:$0xff]
    %v3747 = vld [vmem:[#allocation4 + $0xa8] sm:$0xff]
    %v3748 = vld [vmem:[#allocation4 + $0xb0] sm:$0xff]
    %v3749 = vld [vmem:[#allocation4 + $0xb8] sm:$0xff]
    %v3750 = vld [vmem:[#allocation4 + $0xc0] sm:$0xff]
    %v3751 = vld [vmem:[#allocation4 + $0xc8] sm:$0xff]
    %v3752 = vld [vmem:[#allocation4 + $0xd0] sm:$0xff]
    %v3753 = vld [vmem:[#allocation4 + $0xd8] sm:$0xff]
    %v3754 = vld [vmem:[#allocation4 + $0xe0] sm:$0xff]
    %v3755 = vld [vmem:[#allocation4 + $0xe8] sm:$0xff]
    %v3756 = vld [vmem:[#allocation4 + $0xf0] sm:$0xff]
    %v3757 = vld [vmem:[#allocation4 + $0xf8] sm:$0xff]
    %v3758 = vld [vmem:[#allocation4 + $0x100] sm:$0xff]
    %v3759 = vld [vmem:[#allocation4 + $0x108] sm:$0xff]
    %v3760 = vld [vmem:[#allocation4 + $0x110] sm:$0xff]
    %v3761 = vld [vmem:[#allocation4 + $0x118] sm:$0xff]
    %v3762 = vld [vmem:[#allocation4 + $0x120] sm:$0xff]
    %v3763 = vld [vmem:[#allocation4 + $0x128] sm:$0xff]
    %v3764 = vld [vmem:[#allocation4 + $0x130] sm:$0xff]
    %v3765 = vld [vmem:[#allocation4 + $0x138] sm:$0xff]
    %v3766 = vld [vmem:[#allocation4 + $0x140] sm:$0xff]
    %v3767 = vld [vmem:[#allocation4 + $0x148] sm:$0xff]
    %v3768 = vld [vmem:[#allocation4 + $0x150] sm:$0xff]
    %v3769 = vld [vmem:[#allocation4 + $0x158] sm:$0xff]
    %v3770 = vld [vmem:[#allocation4 + $0x160] sm:$0xff]
    %v3771 = vld [vmem:[#allocation4 + $0x168] sm:$0xff]
    %v3772 = vld [vmem:[#allocation4 + $0x170] sm:$0xff]
    %v3773 = vld [vmem:[#allocation4 + $0x178] sm:$0xff]
    %v3775 = vsel %vm640, %v3701, 0
    %3777 = vmatprep.subr.mxu0 %v3727
    %3778 = vmatpush1.msra.mxu0 %v3726
    %3779 = vmatprep.subr.mxu0 %v3735
    %3780 = vmatpush1.msra.mxu0 %v3734
    %3781 = vmatprep.subr.mxu0 %v3743
    %3782 = vmatpush1.msra.mxu0 %v3742
    %3783 = vmatprep.subr.mxu0 %v3751
    %3784 = vmatpush1.msra.mxu0 %v3750
    %3785 = vmatprep.subr.mxu0 %v3759
    %3786 = vmatpush1.msra.mxu0 %v3758
    %3787 = vmatprep.subr.mxu0 %v3767
    %3788 = vmatpush1.msra.mxu0 %v3766
    %3789 = vmatprep.subr.mxu0 0.0
    %3790 = vmatpush1.msra.mxu0 0.0
    %3791 = vmatprep.subr.mxu0 0.0
    %3792 = vmatpush1.msra.mxu0 0.0
    %3793 = vmatprep.subr.mxu0 0.0
    %3794 = vmatpush1.msra.mxu0 0.0
    %3795 = vmatprep.subr.mxu0 0.0
    %3796 = vmatpush1.msra.mxu0 0.0
    %3797 = vmatprep.subr.mxu0 0.0
    %3798 = vmatpush1.msra.mxu0 0.0
    %3799 = vmatprep.subr.mxu0 0.0
    %3800 = vmatpush1.msra.mxu0 0.0
    %3801 = vmatprep.subr.mxu0 0.0
    %3802 = vmatpush1.msra.mxu0 0.0
    %3803 = vmatprep.subr.mxu0 0.0
    %3804 = vmatpush1.msra.mxu0 0.0
    %3805 = vmatprep.subr.mxu0 0.0
    %3806 = vmatpush1.msra.mxu0 0.0
    %3807 = vmatprep.subr.mxu0 0.0
    %3808 = vmatpush1.msra.mxu0 0.0
    %3809 = vmatprep.subr.mxu0 0.0
    %3810 = vmatpush1.msra.mxu0 0.0
    %3811 = vmatprep.subr.mxu0 0.0
    %3812 = vmatpush1.msra.mxu0 0.0
    %3813 = vmatprep.subr.mxu0 0.0
    %3814 = vmatpush1.msra.mxu0 0.0
    %3815 = vmatprep.subr.mxu0 0.0
    %3816 = vmatpush1.msra.mxu0 0.0
    %3817 = vmatprep.subr.mxu0 0.0
    %3818 = vmatpush1.msra.mxu0 0.0
    %3819 = vmatprep.subr.mxu0 0.0
    %3820 = vmatpush1.msra.mxu0 0.0
    %3821 = vmatprep.subr.mxu0 0.0
    %3822 = vmatpush1.msra.mxu0 0.0
    %3823 = vmatprep.subr.mxu0 0.0
    %3824 = vmatpush1.msra.mxu0 0.0
    %3825 = vmatprep.subr.mxu0 0.0
    %3826 = vmatpush1.msra.mxu0 0.0
    %3827 = vmatprep.subr.mxu0 0.0
    %3828 = vmatpush1.msra.mxu0 0.0
    %3829 = vmatprep.subr.mxu0 0.0
    %3830 = vmatpush1.msra.mxu0 0.0
    %3831 = vmatprep.subr.mxu0 0.0
    %3832 = vmatpush1.msra.mxu0 0.0
    %3833 = vmatprep.subr.mxu0 0.0
    %3834 = vmatpush1.msra.mxu0 0.0
    %3835 = vmatprep.subr.mxu0 0.0
    %3836 = vmatpush1.msra.mxu0 0.0
    %3837 = vmatprep.subr.mxu0 0.0
    %3838 = vmatpush1.msra.mxu0 0.0
    %3839 = vmatprep.subr.mxu0 0.0
    %3840 = vmatpush1.msra.mxu0 0.0
    %3841 = vmatprep.mubr.f32.mxu0 0.0
    %3842 = vmatmul.mubr.f32.gmra.mrb[0].mxu0 %v3775
    %v3843 = vpop.f32.mrb[0].mxu0
    %v3844 = vadd.f32 0.0, %v3843
    %v3845 = vpop.f32.mrb[0].mxu0
    %v3846 = vadd.f32 0.0, %v3845
    %3847 = vdwg.mxu0
    %3848 = vmatprep.subr.mxu0 %v3729
    %3849 = vmatpush1.msra.mxu0 %v3728
    %3850 = vmatprep.subr.mxu0 %v3737
    %3851 = vmatpush1.msra.mxu0 %v3736
    %3852 = vmatprep.subr.mxu0 %v3745
    %3853 = vmatpush1.msra.mxu0 %v3744
    %3854 = vmatprep.subr.mxu0 %v3753
    %3855 = vmatpush1.msra.mxu0 %v3752
    %3856 = vmatprep.subr.mxu0 %v3761
    %3857 = vmatpush1.msra.mxu0 %v3760
    %3858 = vmatprep.subr.mxu0 %v3769
    %3859 = vmatpush1.msra.mxu0 %v3768
    %3860 = vmatprep.subr.mxu0 0.0
    %3861 = vmatpush1.msra.mxu0 0.0
    %3862 = vmatprep.subr.mxu0 0.0
    %3863 = vmatpush1.msra.mxu0 0.0
    %3864 = vmatprep.subr.mxu0 0.0
    %3865 = vmatpush1.msra.mxu0 0.0
    %3866 = vmatprep.subr.mxu0 0.0
    %3867 = vmatpush1.msra.mxu0 0.0
    %3868 = vmatprep.subr.mxu0 0.0
    %3869 = vmatpush1.msra.mxu0 0.0
    %3870 = vmatprep.subr.mxu0 0.0
    %3871 = vmatpush1.msra.mxu0 0.0
    %3872 = vmatprep.subr.mxu0 0.0
    %3873 = vmatpush1.msra.mxu0 0.0
    %3874 = vmatprep.subr.mxu0 0.0
    %3875 = vmatpush1.msra.mxu0 0.0
    %3876 = vmatprep.subr.mxu0 0.0
    %3877 = vmatpush1.msra.mxu0 0.0
    %3878 = vmatprep.subr.mxu0 0.0
    %3879 = vmatpush1.msra.mxu0 0.0
    %3880 = vmatprep.subr.mxu0 0.0
    %3881 = vmatpush1.msra.mxu0 0.0
    %3882 = vmatprep.subr.mxu0 0.0
    %3883 = vmatpush1.msra.mxu0 0.0
    %3884 = vmatprep.subr.mxu0 0.0
    %3885 = vmatpush1.msra.mxu0 0.0
    %3886 = vmatprep.subr.mxu0 0.0
    %3887 = vmatpush1.msra.mxu0 0.0
    %3888 = vmatprep.subr.mxu0 0.0
    %3889 = vmatpush1.msra.mxu0 0.0
    %3890 = vmatprep.subr.mxu0 0.0
    %3891 = vmatpush1.msra.mxu0 0.0
    %3892 = vmatprep.subr.mxu0 0.0
    %3893 = vmatpush1.msra.mxu0 0.0
    %3894 = vmatprep.subr.mxu0 0.0
    %3895 = vmatpush1.msra.mxu0 0.0
    %3896 = vmatprep.subr.mxu0 0.0
    %3897 = vmatpush1.msra.mxu0 0.0
    %3898 = vmatprep.subr.mxu0 0.0
    %3899 = vmatpush1.msra.mxu0 0.0
    %3900 = vmatprep.subr.mxu0 0.0
    %3901 = vmatpush1.msra.mxu0 0.0
    %3902 = vmatprep.subr.mxu0 0.0
    %3903 = vmatpush1.msra.mxu0 0.0
    %3904 = vmatprep.subr.mxu0 0.0
    %3905 = vmatpush1.msra.mxu0 0.0
    %3906 = vmatprep.subr.mxu0 0.0
    %3907 = vmatpush1.msra.mxu0 0.0
    %3908 = vmatprep.subr.mxu0 0.0
    %3909 = vmatpush1.msra.mxu0 0.0
    %3910 = vmatprep.subr.mxu0 0.0
    %3911 = vmatpush1.msra.mxu0 0.0
    %3912 = vmatprep.mubr.f32.mxu0 0.0
    %3913 = vmatmul.mubr.f32.gmra.mrb[0].mxu0 %v3775
    %v3914 = vpop.f32.mrb[0].mxu0
    %v3915 = vadd.f32 0.0, %v3914
    %v3916 = vpop.f32.mrb[0].mxu0
    %v3917 = vadd.f32 0.0, %v3916
    %3918 = vdwg.mxu0
    %3919 = vmatprep.subr.mxu0 %v3731
    %3920 = vmatpush1.msra.mxu0 %v3730
    %3921 = vmatprep.subr.mxu0 %v3739
    %3922 = vmatpush1.msra.mxu0 %v3738
    %3923 = vmatprep.subr.mxu0 %v3747
    %3924 = vmatpush1.msra.mxu0 %v3746
    %3925 = vmatprep.subr.mxu0 %v3755
    %3926 = vmatpush1.msra.mxu0 %v3754
    %3927 = vmatprep.subr.mxu0 %v3763
    %3928 = vmatpush1.msra.mxu0 %v3762
    %3929 = vmatprep.subr.mxu0 %v3771
    %3930 = vmatpush1.msra.mxu0 %v3770
    %3931 = vmatprep.subr.mxu0 0.0
    %3932 = vmatpush1.msra.mxu0 0.0
    %3933 = vmatprep.subr.mxu0 0.0
    %3934 = vmatpush1.msra.mxu0 0.0
    %3935 = vmatprep.subr.mxu0 0.0
    %3936 = vmatpush1.msra.mxu0 0.0
    %3937 = vmatprep.subr.mxu0 0.0
    %3938 = vmatpush1.msra.mxu0 0.0
    %3939 = vmatprep.subr.mxu0 0.0
    %3940 = vmatpush1.msra.mxu0 0.0
    %3941 = vmatprep.subr.mxu0 0.0
    %3942 = vmatpush1.msra.mxu0 0.0
    %3943 = vmatprep.subr.mxu0 0.0
    %3944 = vmatpush1.msra.mxu0 0.0
    %3945 = vmatprep.subr.mxu0 0.0
    %3946 = vmatpush1.msra.mxu0 0.0
    %3947 = vmatprep.subr.mxu0 0.0
    %3948 = vmatpush1.msra.mxu0 0.0
    %3949 = vmatprep.subr.mxu0 0.0
    %3950 = vmatpush1.msra.mxu0 0.0
    %3951 = vmatprep.subr.mxu0 0.0
    %3952 = vmatpush1.msra.mxu0 0.0
    %3953 = vmatprep.subr.mxu0 0.0
    %3954 = vmatpush1.msra.mxu0 0.0
    %3955 = vmatprep.subr.mxu0 0.0
    %3956 = vmatpush1.msra.mxu0 0.0
    %3957 = vmatprep.subr.mxu0 0.0
    %3958 = vmatpush1.msra.mxu0 0.0
    %3959 = vmatprep.subr.mxu0 0.0
    %3960 = vmatpush1.msra.mxu0 0.0
    %3961 = vmatprep.subr.mxu0 0.0
    %3962 = vmatpush1.msra.mxu0 0.0
    %3963 = vmatprep.subr.mxu0 0.0
    %3964 = vmatpush1.msra.mxu0 0.0
    %3965 = vmatprep.subr.mxu0 0.0
    %3966 = vmatpush1.msra.mxu0 0.0
    %3967 = vmatprep.subr.mxu0 0.0
    %3968 = vmatpush1.msra.mxu0 0.0
    %3969 = vmatprep.subr.mxu0 0.0
    %3970 = vmatpush1.msra.mxu0 0.0
    %3971 = vmatprep.subr.mxu0 0.0
    %3972 = vmatpush1.msra.mxu0 0.0
    %3973 = vmatprep.subr.mxu0 0.0
    %3974 = vmatpush1.msra.mxu0 0.0
    %3975 = vmatprep.subr.mxu0 0.0
    %3976 = vmatpush1.msra.mxu0 0.0
    %3977 = vmatprep.subr.mxu0 0.0
    %3978 = vmatpush1.msra.mxu0 0.0
    %3979 = vmatprep.subr.mxu0 0.0
    %3980 = vmatpush1.msra.mxu0 0.0
    %3981 = vmatprep.subr.mxu0 0.0
    %3982 = vmatpush1.msra.mxu0 0.0
    %3983 = vmatprep.mubr.f32.mxu0 0.0
    %3984 = vmatmul.mubr.f32.gmra.mrb[0].mxu0 %v3775
    %v3985 = vpop.f32.mrb[0].mxu0
    %v3986 = vadd.f32 0.0, %v3985
    %v3987 = vpop.f32.mrb[0].mxu0
    %v3988 = vadd.f32 0.0, %v3987
    %3989 = vdwg.mxu0
    %3990 = vmatprep.subr.mxu0 %v3733
    %3991 = vmatpush1.msra.mxu0 %v3732
    %3992 = vmatprep.subr.mxu0 %v3741
    %3993 = vmatpush1.msra.mxu0 %v3740
    %3994 = vmatprep.subr.mxu0 %v3749
    %3995 = vmatpush1.msra.mxu0 %v3748
    %3996 = vmatprep.subr.mxu0 %v3757
    %3997 = vmatpush1.msra.mxu0 %v3756
    %3998 = vmatprep.subr.mxu0 %v3765
    %3999 = vmatpush1.msra.mxu0 %v3764
    %4000 = vmatprep.subr.mxu0 %v3773
    %4001 = vmatpush1.msra.mxu0 %v3772
    %4002 = vmatprep.subr.mxu0 0.0
    %4003 = vmatpush1.msra.mxu0 0.0
    %4004 = vmatprep.subr.mxu0 0.0
    %4005 = vmatpush1.msra.mxu0 0.0
    %4006 = vmatprep.subr.mxu0 0.0
    %4007 = vmatpush1.msra.mxu0 0.0
    %4008 = vmatprep.subr.mxu0 0.0
    %4009 = vmatpush1.msra.mxu0 0.0
    %4010 = vmatprep.subr.mxu0 0.0
    %4011 = vmatpush1.msra.mxu0 0.0
    %4012 = vmatprep.subr.mxu0 0.0
    %4013 = vmatpush1.msra.mxu0 0.0
    %4014 = vmatprep.subr.mxu0 0.0
    %4015 = vmatpush1.msra.mxu0 0.0
    %4016 = vmatprep.subr.mxu0 0.0
    %4017 = vmatpush1.msra.mxu0 0.0
    %4018 = vmatprep.subr.mxu0 0.0
    %4019 = vmatpush1.msra.mxu0 0.0
    %4020 = vmatprep.subr.mxu0 0.0
    %4021 = vmatpush1.msra.mxu0 0.0
    %4022 = vmatprep.subr.mxu0 0.0
    %4023 = vmatpush1.msra.mxu0 0.0
    %4024 = vmatprep.subr.mxu0 0.0
    %4025 = vmatpush1.msra.mxu0 0.0
    %4026 = vmatprep.subr.mxu0 0.0
    %4027 = vmatpush1.msra.mxu0 0.0
    %4028 = vmatprep.subr.mxu0 0.0
    %4029 = vmatpush1.msra.mxu0 0.0
    %4030 = vmatprep.subr.mxu0 0.0
    %4031 = vmatpush1.msra.mxu0 0.0
    %4032 = vmatprep.subr.mxu0 0.0
    %4033 = vmatpush1.msra.mxu0 0.0
    %4034 = vmatprep.subr.mxu0 0.0
    %4035 = vmatpush1.msra.mxu0 0.0
    %4036 = vmatprep.subr.mxu0 0.0
    %4037 = vmatpush1.msra.mxu0 0.0
    %4038 = vmatprep.subr.mxu0 0.0
    %4039 = vmatpush1.msra.mxu0 0.0
    %4040 = vmatprep.subr.mxu0 0.0
    %4041 = vmatpush1.msra.mxu0 0.0
    %4042 = vmatprep.subr.mxu0 0.0
    %4043 = vmatpush1.msra.mxu0 0.0
    %4044 = vmatprep.subr.mxu0 0.0
    %4045 = vmatpush1.msra.mxu0 0.0
    %4046 = vmatprep.subr.mxu0 0.0
    %4047 = vmatpush1.msra.mxu0 0.0
    %4048 = vmatprep.subr.mxu0 0.0
    %4049 = vmatpush1.msra.mxu0 0.0
    %4050 = vmatprep.subr.mxu0 0.0
    %4051 = vmatpush1.msra.mxu0 0.0
    %4052 = vmatprep.subr.mxu0 0.0
    %4053 = vmatpush1.msra.mxu0 0.0
    %4054 = vmatprep.mubr.f32.mxu0 0.0
    %4055 = vmatmul.mubr.f32.gmra.mrb[0].mxu0 %v3775
    %v4056 = vpop.f32.mrb[0].mxu0
    %v4057 = vadd.f32 0.0, %v4056
    %v4058 = vpop.f32.mrb[0].mxu0
    %v4059 = vadd.f32 0.0, %v4058
    %4060 = vdwg.mxu0
    %v4061 = vld [vmem:[#allocation7] sm:$0xff]
    %v4062 = vld [vmem:[#allocation7 + $0x8] sm:$0xff]
    %v4063 = vld [vmem:[#allocation7 + $0x10] sm:$0xff]
    %v4064 = vld [vmem:[#allocation7 + $0x18] sm:$0xff]
    %v4065 = vld [vmem:[#allocation7 + $0x20] sm:$0xff]
    %v4066 = vld [vmem:[#allocation7 + $0x28] sm:$0xff]
    %v4067 = vld [vmem:[#allocation7 + $0x30] sm:$0xff]
    %v4068 = vld [vmem:[#allocation7 + $0x38] sm:$0xff]
    %v4069 = vld [vmem:[#allocation7 + $0x40] sm:$0xff]
    %v4070 = vld [vmem:[#allocation7 + $0x48] sm:$0xff]
    %v4071 = vld [vmem:[#allocation7 + $0x50] sm:$0xff]
    %v4072 = vld [vmem:[#allocation7 + $0x58] sm:$0xff]
    %v4073 = vld [vmem:[#allocation7 + $0x60] sm:$0xff]
    %v4074 = vld [vmem:[#allocation7 + $0x68] sm:$0xff]
    %v4075 = vld [vmem:[#allocation7 + $0x70] sm:$0xff]
    %v4076 = vld [vmem:[#allocation7 + $0x78] sm:$0xff]
    %v4077 = vld [vmem:[#allocation7 + $0x80] sm:$0xff]
    %v4078 = vld [vmem:[#allocation7 + $0x88] sm:$0xff]
    %v4079 = vld [vmem:[#allocation7 + $0x90] sm:$0xff]
    %v4080 = vld [vmem:[#allocation7 + $0x98] sm:$0xff]
    %v4081 = vld [vmem:[#allocation7 + $0xa0] sm:$0xff]
    %v4082 = vld [vmem:[#allocation7 + $0xa8] sm:$0xff]
    %v4083 = vld [vmem:[#allocation7 + $0xb0] sm:$0xff]
    %v4084 = vld [vmem:[#allocation7 + $0xb8] sm:$0xff]
    %v4086 = vsel %vm640, %v3724, 0
    %4088 = vmatprep.subr.mxu0 %v4062
    %4089 = vmatpush1.msra.mxu0 %v4061
    %4090 = vmatprep.subr.mxu0 %v4066
    %4091 = vmatpush1.msra.mxu0 %v4065
    %4092 = vmatprep.subr.mxu0 %v4070
    %4093 = vmatpush1.msra.mxu0 %v4069
    %4094 = vmatprep.subr.mxu0 %v4074
    %4095 = vmatpush1.msra.mxu0 %v4073
    %4096 = vmatprep.subr.mxu0 %v4078
    %4097 = vmatpush1.msra.mxu0 %v4077
    %4098 = vmatprep.subr.mxu0 %v4082
    %4099 = vmatpush1.msra.mxu0 %v4081
    %4100 = vmatprep.subr.mxu0 0.0
    %4101 = vmatpush1.msra.mxu0 0.0
    %4102 = vmatprep.subr.mxu0 0.0
    %4103 = vmatpush1.msra.mxu0 0.0
    %4104 = vmatprep.subr.mxu0 0.0
    %4105 = vmatpush1.msra.mxu0 0.0
    %4106 = vmatprep.subr.mxu0 0.0
    %4107 = vmatpush1.msra.mxu0 0.0
    %4108 = vmatprep.subr.mxu0 0.0
    %4109 = vmatpush1.msra.mxu0 0.0
    %4110 = vmatprep.subr.mxu0 0.0
    %4111 = vmatpush1.msra.mxu0 0.0
    %4112 = vmatprep.subr.mxu0 0.0
    %4113 = vmatpush1.msra.mxu0 0.0
    %4114 = vmatprep.subr.mxu0 0.0
    %4115 = vmatpush1.msra.mxu0 0.0
    %4116 = vmatprep.subr.mxu0 0.0
    %4117 = vmatpush1.msra.mxu0 0.0
    %4118 = vmatprep.subr.mxu0 0.0
    %4119 = vmatpush1.msra.mxu0 0.0
    %4120 = vmatprep.subr.mxu0 0.0
    %4121 = vmatpush1.msra.mxu0 0.0
    %4122 = vmatprep.subr.mxu0 0.0
    %4123 = vmatpush1.msra.mxu0 0.0
    %4124 = vmatprep.subr.mxu0 0.0
    %4125 = vmatpush1.msra.mxu0 0.0
    %4126 = vmatprep.subr.mxu0 0.0
    %4127 = vmatpush1.msra.mxu0 0.0
    %4128 = vmatprep.subr.mxu0 0.0
    %4129 = vmatpush1.msra.mxu0 0.0
    %4130 = vmatprep.subr.mxu0 0.0
    %4131 = vmatpush1.msra.mxu0 0.0
    %4132 = vmatprep.subr.mxu0 0.0
    %4133 = vmatpush1.msra.mxu0 0.0
    %4134 = vmatprep.subr.mxu0 0.0
    %4135 = vmatpush1.msra.mxu0 0.0
    %4136 = vmatprep.subr.mxu0 0.0
    %4137 = vmatpush1.msra.mxu0 0.0
    %4138 = vmatprep.subr.mxu0 0.0
    %4139 = vmatpush1.msra.mxu0 0.0
    %4140 = vmatprep.subr.mxu0 0.0
    %4141 = vmatpush1.msra.mxu0 0.0
    %4142 = vmatprep.subr.mxu0 0.0
    %4143 = vmatpush1.msra.mxu0 0.0
    %4144 = vmatprep.subr.mxu0 0.0
    %4145 = vmatpush1.msra.mxu0 0.0
    %4146 = vmatprep.subr.mxu0 0.0
    %4147 = vmatpush1.msra.mxu0 0.0
    %4148 = vmatprep.subr.mxu0 0.0
    %4149 = vmatpush1.msra.mxu0 0.0
    %4150 = vmatprep.subr.mxu0 0.0
    %4151 = vmatpush1.msra.mxu0 0.0
    %4152 = vmatprep.mubr.f32.mxu0 0.0
    %4153 = vmatmul.mubr.f32.gmra.mrb[0].mxu0 %v4086
    %v4154 = vpop.f32.mrb[0].mxu0
    %v4155 = vadd.f32 0.0, %v4154
    %v4156 = vpop.f32.mrb[0].mxu0
    %v4157 = vadd.f32 0.0, %v4156
    %4158 = vdwg.mxu0
    %4159 = vmatprep.subr.mxu0 %v4064
    %4160 = vmatpush1.msra.mxu0 %v4063
    %4161 = vmatprep.subr.mxu0 %v4068
    %4162 = vmatpush1.msra.mxu0 %v4067
    %4163 = vmatprep.subr.mxu0 %v4072
    %4164 = vmatpush1.msra.mxu0 %v4071
    %4165 = vmatprep.subr.mxu0 %v4076
    %4166 = vmatpush1.msra.mxu0 %v4075
    %4167 = vmatprep.subr.mxu0 %v4080
    %4168 = vmatpush1.msra.mxu0 %v4079
    %4169 = vmatprep.subr.mxu0 %v4084
    %4170 = vmatpush1.msra.mxu0 %v4083
    %4171 = vmatprep.subr.mxu0 0.0
    %4172 = vmatpush1.msra.mxu0 0.0
    %4173 = vmatprep.subr.mxu0 0.0
    %4174 = vmatpush1.msra.mxu0 0.0
    %4175 = vmatprep.subr.mxu0 0.0
    %4176 = vmatpush1.msra.mxu0 0.0
    %4177 = vmatprep.subr.mxu0 0.0
    %4178 = vmatpush1.msra.mxu0 0.0
    %4179 = vmatprep.subr.mxu0 0.0
    %4180 = vmatpush1.msra.mxu0 0.0
    %4181 = vmatprep.subr.mxu0 0.0
    %4182 = vmatpush1.msra.mxu0 0.0
    %4183 = vmatprep.subr.mxu0 0.0
    %4184 = vmatpush1.msra.mxu0 0.0
    %4185 = vmatprep.subr.mxu0 0.0
    %4186 = vmatpush1.msra.mxu0 0.0
    %4187 = vmatprep.subr.mxu0 0.0
    %4188 = vmatpush1.msra.mxu0 0.0
    %4189 = vmatprep.subr.mxu0 0.0
    %4190 = vmatpush1.msra.mxu0 0.0
    %4191 = vmatprep.subr.mxu0 0.0
    %4192 = vmatpush1.msra.mxu0 0.0
    %4193 = vmatprep.subr.mxu0 0.0
    %4194 = vmatpush1.msra.mxu0 0.0
    %4195 = vmatprep.subr.mxu0 0.0
    %4196 = vmatpush1.msra.mxu0 0.0
    %4197 = vmatprep.subr.mxu0 0.0
    %4198 = vmatpush1.msra.mxu0 0.0
    %4199 = vmatprep.subr.mxu0 0.0
    %4200 = vmatpush1.msra.mxu0 0.0
    %4201 = vmatprep.subr.mxu0 0.0
    %4202 = vmatpush1.msra.mxu0 0.0
    %4203 = vmatprep.subr.mxu0 0.0
    %4204 = vmatpush1.msra.mxu0 0.0
    %4205 = vmatprep.subr.mxu0 0.0
    %4206 = vmatpush1.msra.mxu0 0.0
    %4207 = vmatprep.subr.mxu0 0.0
    %4208 = vmatpush1.msra.mxu0 0.0
    %4209 = vmatprep.subr.mxu0 0.0
    %4210 = vmatpush1.msra.mxu0 0.0
    %4211 = vmatprep.subr.mxu0 0.0
    %4212 = vmatpush1.msra.mxu0 0.0
    %4213 = vmatprep.subr.mxu0 0.0
    %4214 = vmatpush1.msra.mxu0 0.0
    %4215 = vmatprep.subr.mxu0 0.0
    %4216 = vmatpush1.msra.mxu0 0.0
    %4217 = vmatprep.subr.mxu0 0.0
    %4218 = vmatpush1.msra.mxu0 0.0
    %4219 = vmatprep.subr.mxu0 0.0
    %4220 = vmatpush1.msra.mxu0 0.0
    %4221 = vmatprep.subr.mxu0 0.0
    %4222 = vmatpush1.msra.mxu0 0.0
    %4223 = vmatprep.mubr.f32.mxu0 0.0
    %4224 = vmatmul.mubr.f32.gmra.mrb[0].mxu0 %v4086
    %v4225 = vpop.f32.mrb[0].mxu0
    %v4226 = vadd.f32 0.0, %v4225
    %v4227 = vpop.f32.mrb[0].mxu0
    %v4228 = vadd.f32 0.0, %v4227
    %4229 = vdwg.mxu0
    %v4230 = vld [vmem:[#allocation2 + $0xe0] sm:$0xff]
    %v4231 = vld [vmem:[#allocation2 + $0xe8] sm:$0xff]
    %v4232 = vld [vmem:[#allocation2 + $0xf0] sm:$0xff]
    %v4233 = vld [vmem:[#allocation2 + $0xf8] sm:$0xff]
    %v4234 = vadd.f32 %v4230, %v3844
    %v4235 = vadd.f32 %v4231, %v3846
    %v4236 = vadd.f32 %v4232, %v3915
    %v4237 = vadd.f32 %v4233, %v3917
    %v4238 = vtanh.pop %v4234
    %v4239 = vtanh.pop %v4235
    %v4240 = vtanh.pop %v4236
    %v4241 = vtanh.pop %v4237
    %v4242 = vmul.f32 %v4238, 0.5
    %v4243 = vadd.f32 %v4242, 0.5
    %v4244 = vmul.f32 %v4239, 0.5
    %v4245 = vadd.f32 %v4244, 0.5
    %v4246 = vmul.f32 %v4241, 0.5
    %v4247 = vadd.f32 %v4246, 0.5
    %v4248 = vmul.f32 %v4245, %v3699
    %v4249 = vmul.f32 %v4243, %v4240
    %v4250 = vadd.f32 %v4248, %v4249
    %v4251 = vtanh.pop %v4250
    %v4252 = vmul.f32 %v4247, %v4251
    %v4253 = vadd.f32 %v3986, %v556
    %v4254 = vadd.f32 %v3988, %v560
    %v4255 = vadd.f32 %v4057, %v564
    %v4256 = vadd.f32 %v4059, %v568
    %v4257 = vadd.f32 %v4253, %v4155
    %v4258 = vadd.f32 %v4254, %v4157
    %v4259 = vadd.f32 %v4255, %v4226
    %v4260 = vadd.f32 %v4256, %v4228
    %v4261 = vtanh.pop %v4257
    %v4262 = vtanh.pop %v4258
    %v4263 = vtanh.pop %v4259
    %v4264 = vtanh.pop %v4260
    %v4265 = vmul.f32 %v4261, 0.5
    %v4266 = vadd.f32 %v4265, 0.5
    %v4267 = vmul.f32 %v4262, 0.5
    %v4268 = vadd.f32 %v4267, 0.5
    %v4269 = vmul.f32 %v4264, 0.5
    %v4270 = vadd.f32 %v4269, 0.5
    %v4271 = vmul.f32 %v4268, %v3722
    %v4272 = vmul.f32 %v4266, %v4263
    %v4273 = vadd.f32 %v4271, %v4272
    %v4274 = vtanh.pop %v4273
    %v4275 = vmul.f32 %v4270, %v4274
    %4276 = vst.msk [vmem:[#allocation3 + $0x30] sm:$0xff] %vm640, %v4275
    %v4277 = vld [vmem:[#allocation4] sm:$0xff]
    %v4278 = vld [vmem:[#allocation4 + $0x8] sm:$0xff]
    %v4279 = vld [vmem:[#allocation4 + $0x10] sm:$0xff]
    %v4280 = vld [vmem:[#allocation4 + $0x18] sm:$0xff]
    %v4281 = vld [vmem:[#allocation4 + $0x20] sm:$0xff]
    %v4282 = vld [vmem:[#allocation4 + $0x28] sm:$0xff]
    %v4283 = vld [vmem:[#allocation4 + $0x30] sm:$0xff]
    %v4284 = vld [vmem:[#allocation4 + $0x38] sm:$0xff]
    %v4285 = vld [vmem:[#allocation4 + $0x40] sm:$0xff]
    %v4286 = vld [vmem:[#allocation4 + $0x48] sm:$0xff]
    %v4287 = vld [vmem:[#allocation4 + $0x50] sm:$0xff]
    %v4288 = vld [vmem:[#allocation4 + $0x58] sm:$0xff]
    %v4289 = vld [vmem:[#allocation4 + $0x60] sm:$0xff]
    %v4290 = vld [vmem:[#allocation4 + $0x68] sm:$0xff]
    %v4291 = vld [vmem:[#allocation4 + $0x70] sm:$0xff]
    %v4292 = vld [vmem:[#allocation4 + $0x78] sm:$0xff]
    %v4293 = vld [vmem:[#allocation4 + $0x80] sm:$0xff]
    %v4294 = vld [vmem:[#allocation4 + $0x88] sm:$0xff]
    %v4295 = vld [vmem:[#allocation4 + $0x90] sm:$0xff]
    %v4296 = vld [vmem:[#allocation4 + $0x98] sm:$0xff]
    %v4297 = vld [vmem:[#allocation4 + $0xa0] sm:$0xff]
    %v4298 = vld [vmem:[#allocation4 + $0xa8] sm:$0xff]
    %v4299 = vld [vmem:[#allocation4 + $0xb0] sm:$0xff]
    %v4300 = vld [vmem:[#allocation4 + $0xb8] sm:$0xff]
    %v4301 = vld [vmem:[#allocation4 + $0xc0] sm:$0xff]
    %v4302 = vld [vmem:[#allocation4 + $0xc8] sm:$0xff]
    %v4303 = vld [vmem:[#allocation4 + $0xd0] sm:$0xff]
    %v4304 = vld [vmem:[#allocation4 + $0xd8] sm:$0xff]
    %v4305 = vld [vmem:[#allocation4 + $0xe0] sm:$0xff]
    %v4306 = vld [vmem:[#allocation4 + $0xe8] sm:$0xff]
    %v4307 = vld [vmem:[#allocation4 + $0xf0] sm:$0xff]
    %v4308 = vld [vmem:[#allocation4 + $0xf8] sm:$0xff]
    %v4309 = vld [vmem:[#allocation4 + $0x100] sm:$0xff]
    %v4310 = vld [vmem:[#allocation4 + $0x108] sm:$0xff]
    %v4311 = vld [vmem:[#allocation4 + $0x110] sm:$0xff]
    %v4312 = vld [vmem:[#allocation4 + $0x118] sm:$0xff]
    %v4313 = vld [vmem:[#allocation4 + $0x120] sm:$0xff]
    %v4314 = vld [vmem:[#allocation4 + $0x128] sm:$0xff]
    %v4315 = vld [vmem:[#allocation4 + $0x130] sm:$0xff]
    %v4316 = vld [vmem:[#allocation4 + $0x138] sm:$0xff]
    %v4317 = vld [vmem:[#allocation4 + $0x140] sm:$0xff]
    %v4318 = vld [vmem:[#allocation4 + $0x148] sm:$0xff]
    %v4319 = vld [vmem:[#allocation4 + $0x150] sm:$0xff]
    %v4320 = vld [vmem:[#allocation4 + $0x158] sm:$0xff]
    %v4321 = vld [vmem:[#allocation4 + $0x160] sm:$0xff]
    %v4322 = vld [vmem:[#allocation4 + $0x168] sm:$0xff]
    %v4323 = vld [vmem:[#allocation4 + $0x170] sm:$0xff]
    %v4324 = vld [vmem:[#allocation4 + $0x178] sm:$0xff]
    %v4326 = vsel %vm640, %v4252, 0
    %4328 = vmatprep.subr.mxu0 %v4278
    %4329 = vmatpush1.msra.mxu0 %v4277
    %4330 = vmatprep.subr.mxu0 %v4286
    %4331 = vmatpush1.msra.mxu0 %v4285
    %4332 = vmatprep.subr.mxu0 %v4294
    %4333 = vmatpush1.msra.mxu0 %v4293
    %4334 = vmatprep.subr.mxu0 %v4302
    %4335 = vmatpush1.msra.mxu0 %v4301
    %4336 = vmatprep.subr.mxu0 %v4310
    %4337 = vmatpush1.msra.mxu0 %v4309
    %4338 = vmatprep.subr.mxu0 %v4318
    %4339 = vmatpush1.msra.mxu0 %v4317
    %4340 = vmatprep.subr.mxu0 0.0
    %4341 = vmatpush1.msra.mxu0 0.0
    %4342 = vmatprep.subr.mxu0 0.0
    %4343 = vmatpush1.msra.mxu0 0.0
    %4344 = vmatprep.subr.mxu0 0.0
    %4345 = vmatpush1.msra.mxu0 0.0
    %4346 = vmatprep.subr.mxu0 0.0
    %4347 = vmatpush1.msra.mxu0 0.0
    %4348 = vmatprep.subr.mxu0 0.0
    %4349 = vmatpush1.msra.mxu0 0.0
    %4350 = vmatprep.subr.mxu0 0.0
    %4351 = vmatpush1.msra.mxu0 0.0
    %4352 = vmatprep.subr.mxu0 0.0
    %4353 = vmatpush1.msra.mxu0 0.0
    %4354 = vmatprep.subr.mxu0 0.0
    %4355 = vmatpush1.msra.mxu0 0.0
    %4356 = vmatprep.subr.mxu0 0.0
    %4357 = vmatpush1.msra.mxu0 0.0
    %4358 = vmatprep.subr.mxu0 0.0
    %4359 = vmatpush1.msra.mxu0 0.0
    %4360 = vmatprep.subr.mxu0 0.0
    %4361 = vmatpush1.msra.mxu0 0.0
    %4362 = vmatprep.subr.mxu0 0.0
    %4363 = vmatpush1.msra.mxu0 0.0
    %4364 = vmatprep.subr.mxu0 0.0
    %4365 = vmatpush1.msra.mxu0 0.0
    %4366 = vmatprep.subr.mxu0 0.0
    %4367 = vmatpush1.msra.mxu0 0.0
    %4368 = vmatprep.subr.mxu0 0.0
    %4369 = vmatpush1.msra.mxu0 0.0
    %4370 = vmatprep.subr.mxu0 0.0
    %4371 = vmatpush1.msra.mxu0 0.0
    %4372 = vmatprep.subr.mxu0 0.0
    %4373 = vmatpush1.msra.mxu0 0.0
    %4374 = vmatprep.subr.mxu0 0.0
    %4375 = vmatpush1.msra.mxu0 0.0
    %4376 = vmatprep.subr.mxu0 0.0
    %4377 = vmatpush1.msra.mxu0 0.0
    %4378 = vmatprep.subr.mxu0 0.0
    %4379 = vmatpush1.msra.mxu0 0.0
    %4380 = vmatprep.subr.mxu0 0.0
    %4381 = vmatpush1.msra.mxu0 0.0
    %4382 = vmatprep.subr.mxu0 0.0
    %4383 = vmatpush1.msra.mxu0 0.0
    %4384 = vmatprep.subr.mxu0 0.0
    %4385 = vmatpush1.msra.mxu0 0.0
    %4386 = vmatprep.subr.mxu0 0.0
    %4387 = vmatpush1.msra.mxu0 0.0
    %4388 = vmatprep.subr.mxu0 0.0
    %4389 = vmatpush1.msra.mxu0 0.0
    %4390 = vmatprep.subr.mxu0 0.0
    %4391 = vmatpush1.msra.mxu0 0.0
    %4392 = vmatprep.mubr.f32.mxu0 0.0
    %4393 = vmatmul.mubr.f32.gmra.mrb[0].mxu0 %v4326
    %v4394 = vpop.f32.mrb[0].mxu0
    %v4395 = vadd.f32 0.0, %v4394
    %v4396 = vpop.f32.mrb[0].mxu0
    %v4397 = vadd.f32 0.0, %v4396
    %4398 = vdwg.mxu0
    %4399 = vmatprep.subr.mxu0 %v4280
    %4400 = vmatpush1.msra.mxu0 %v4279
    %4401 = vmatprep.subr.mxu0 %v4288
    %4402 = vmatpush1.msra.mxu0 %v4287
    %4403 = vmatprep.subr.mxu0 %v4296
    %4404 = vmatpush1.msra.mxu0 %v4295
    %4405 = vmatprep.subr.mxu0 %v4304
    %4406 = vmatpush1.msra.mxu0 %v4303
    %4407 = vmatprep.subr.mxu0 %v4312
    %4408 = vmatpush1.msra.mxu0 %v4311
    %4409 = vmatprep.subr.mxu0 %v4320
    %4410 = vmatpush1.msra.mxu0 %v4319
    %4411 = vmatprep.subr.mxu0 0.0
    %4412 = vmatpush1.msra.mxu0 0.0
    %4413 = vmatprep.subr.mxu0 0.0
    %4414 = vmatpush1.msra.mxu0 0.0
    %4415 = vmatprep.subr.mxu0 0.0
    %4416 = vmatpush1.msra.mxu0 0.0
    %4417 = vmatprep.subr.mxu0 0.0
    %4418 = vmatpush1.msra.mxu0 0.0
    %4419 = vmatprep.subr.mxu0 0.0
    %4420 = vmatpush1.msra.mxu0 0.0
    %4421 = vmatprep.subr.mxu0 0.0
    %4422 = vmatpush1.msra.mxu0 0.0
    %4423 = vmatprep.subr.mxu0 0.0
    %4424 = vmatpush1.msra.mxu0 0.0
    %4425 = vmatprep.subr.mxu0 0.0
    %4426 = vmatpush1.msra.mxu0 0.0
    %4427 = vmatprep.subr.mxu0 0.0
    %4428 = vmatpush1.msra.mxu0 0.0
    %4429 = vmatprep.subr.mxu0 0.0
    %4430 = vmatpush1.msra.mxu0 0.0
    %4431 = vmatprep.subr.mxu0 0.0
    %4432 = vmatpush1.msra.mxu0 0.0
    %4433 = vmatprep.subr.mxu0 0.0
    %4434 = vmatpush1.msra.mxu0 0.0
    %4435 = vmatprep.subr.mxu0 0.0
    %4436 = vmatpush1.msra.mxu0 0.0
    %4437 = vmatprep.subr.mxu0 0.0
    %4438 = vmatpush1.msra.mxu0 0.0
    %4439 = vmatprep.subr.mxu0 0.0
    %4440 = vmatpush1.msra.mxu0 0.0
    %4441 = vmatprep.subr.mxu0 0.0
    %4442 = vmatpush1.msra.mxu0 0.0
    %4443 = vmatprep.subr.mxu0 0.0
    %4444 = vmatpush1.msra.mxu0 0.0
    %4445 = vmatprep.subr.mxu0 0.0
    %4446 = vmatpush1.msra.mxu0 0.0
    %4447 = vmatprep.subr.mxu0 0.0
    %4448 = vmatpush1.msra.mxu0 0.0
    %4449 = vmatprep.subr.mxu0 0.0
    %4450 = vmatpush1.msra.mxu0 0.0
    %4451 = vmatprep.subr.mxu0 0.0
    %4452 = vmatpush1.msra.mxu0 0.0
    %4453 = vmatprep.subr.mxu0 0.0
    %4454 = vmatpush1.msra.mxu0 0.0
    %4455 = vmatprep.subr.mxu0 0.0
    %4456 = vmatpush1.msra.mxu0 0.0
    %4457 = vmatprep.subr.mxu0 0.0
    %4458 = vmatpush1.msra.mxu0 0.0
    %4459 = vmatprep.subr.mxu0 0.0
    %4460 = vmatpush1.msra.mxu0 0.0
    %4461 = vmatprep.subr.mxu0 0.0
    %4462 = vmatpush1.msra.mxu0 0.0
    %4463 = vmatprep.mubr.f32.mxu0 0.0
    %4464 = vmatmul.mubr.f32.gmra.mrb[0].mxu0 %v4326
    %v4465 = vpop.f32.mrb[0].mxu0
    %v4466 = vadd.f32 0.0, %v4465
    %v4467 = vpop.f32.mrb[0].mxu0
    %v4468 = vadd.f32 0.0, %v4467
    %4469 = vdwg.mxu0
    %4470 = vmatprep.subr.mxu0 %v4282
    %4471 = vmatpush1.msra.mxu0 %v4281
    %4472 = vmatprep.subr.mxu0 %v4290
    %4473 = vmatpush1.msra.mxu0 %v4289
    %4474 = vmatprep.subr.mxu0 %v4298
    %4475 = vmatpush1.msra.mxu0 %v4297
    %4476 = vmatprep.subr.mxu0 %v4306
    %4477 = vmatpush1.msra.mxu0 %v4305
    %4478 = vmatprep.subr.mxu0 %v4314
    %4479 = vmatpush1.msra.mxu0 %v4313
    %4480 = vmatprep.subr.mxu0 %v4322
    %4481 = vmatpush1.msra.mxu0 %v4321
    %4482 = vmatprep.subr.mxu0 0.0
    %4483 = vmatpush1.msra.mxu0 0.0
    %4484 = vmatprep.subr.mxu0 0.0
    %4485 = vmatpush1.msra.mxu0 0.0
    %4486 = vmatprep.subr.mxu0 0.0
    %4487 = vmatpush1.msra.mxu0 0.0
    %4488 = vmatprep.subr.mxu0 0.0
    %4489 = vmatpush1.msra.mxu0 0.0
    %4490 = vmatprep.subr.mxu0 0.0
    %4491 = vmatpush1.msra.mxu0 0.0
    %4492 = vmatprep.subr.mxu0 0.0
    %4493 = vmatpush1.msra.mxu0 0.0
    %4494 = vmatprep.subr.mxu0 0.0
    %4495 = vmatpush1.msra.mxu0 0.0
    %4496 = vmatprep.subr.mxu0 0.0
    %4497 = vmatpush1.msra.mxu0 0.0
    %4498 = vmatprep.subr.mxu0 0.0
    %4499 = vmatpush1.msra.mxu0 0.0
    %4500 = vmatprep.subr.mxu0 0.0
    %4501 = vmatpush1.msra.mxu0 0.0
    %4502 = vmatprep.subr.mxu0 0.0
    %4503 = vmatpush1.msra.mxu0 0.0
    %4504 = vmatprep.subr.mxu0 0.0
    %4505 = vmatpush1.msra.mxu0 0.0
    %4506 = vmatprep.subr.mxu0 0.0
    %4507 = vmatpush1.msra.mxu0 0.0
    %4508 = vmatprep.subr.mxu0 0.0
    %4509 = vmatpush1.msra.mxu0 0.0
    %4510 = vmatprep.subr.mxu0 0.0
    %4511 = vmatpush1.msra.mxu0 0.0
    %4512 = vmatprep.subr.mxu0 0.0
    %4513 = vmatpush1.msra.mxu0 0.0
    %4514 = vmatprep.subr.mxu0 0.0
    %4515 = vmatpush1.msra.mxu0 0.0
    %4516 = vmatprep.subr.mxu0 0.0
    %4517 = vmatpush1.msra.mxu0 0.0
    %4518 = vmatprep.subr.mxu0 0.0
    %4519 = vmatpush1.msra.mxu0 0.0
    %4520 = vmatprep.subr.mxu0 0.0
    %4521 = vmatpush1.msra.mxu0 0.0
    %4522 = vmatprep.subr.mxu0 0.0
    %4523 = vmatpush1.msra.mxu0 0.0
    %4524 = vmatprep.subr.mxu0 0.0
    %4525 = vmatpush1.msra.mxu0 0.0
    %4526 = vmatprep.subr.mxu0 0.0
    %4527 = vmatpush1.msra.mxu0 0.0
    %4528 = vmatprep.subr.mxu0 0.0
    %4529 = vmatpush1.msra.mxu0 0.0
    %4530 = vmatprep.subr.mxu0 0.0
    %4531 = vmatpush1.msra.mxu0 0.0
    %4532 = vmatprep.subr.mxu0 0.0
    %4533 = vmatpush1.msra.mxu0 0.0
    %4534 = vmatprep.mubr.f32.mxu0 0.0
    %4535 = vmatmul.mubr.f32.gmra.mrb[0].mxu0 %v4326
    %v4536 = vpop.f32.mrb[0].mxu0
    %v4537 = vadd.f32 0.0, %v4536
    %v4538 = vpop.f32.mrb[0].mxu0
    %v4539 = vadd.f32 0.0, %v4538
    %4540 = vdwg.mxu0
    %4541 = vmatprep.subr.mxu0 %v4284
    %4542 = vmatpush1.msra.mxu0 %v4283
    %4543 = vmatprep.subr.mxu0 %v4292
    %4544 = vmatpush1.msra.mxu0 %v4291
    %4545 = vmatprep.subr.mxu0 %v4300
    %4546 = vmatpush1.msra.mxu0 %v4299
    %4547 = vmatprep.subr.mxu0 %v4308
    %4548 = vmatpush1.msra.mxu0 %v4307
    %4549 = vmatprep.subr.mxu0 %v4316
    %4550 = vmatpush1.msra.mxu0 %v4315
    %4551 = vmatprep.subr.mxu0 %v4324
    %4552 = vmatpush1.msra.mxu0 %v4323
    %4553 = vmatprep.subr.mxu0 0.0
    %4554 = vmatpush1.msra.mxu0 0.0
    %4555 = vmatprep.subr.mxu0 0.0
    %4556 = vmatpush1.msra.mxu0 0.0
    %4557 = vmatprep.subr.mxu0 0.0
    %4558 = vmatpush1.msra.mxu0 0.0
    %4559 = vmatprep.subr.mxu0 0.0
    %4560 = vmatpush1.msra.mxu0 0.0
    %4561 = vmatprep.subr.mxu0 0.0
    %4562 = vmatpush1.msra.mxu0 0.0
    %4563 = vmatprep.subr.mxu0 0.0
    %4564 = vmatpush1.msra.mxu0 0.0
    %4565 = vmatprep.subr.mxu0 0.0
    %4566 = vmatpush1.msra.mxu0 0.0
    %4567 = vmatprep.subr.mxu0 0.0
    %4568 = vmatpush1.msra.mxu0 0.0
    %4569 = vmatprep.subr.mxu0 0.0
    %4570 = vmatpush1.msra.mxu0 0.0
    %4571 = vmatprep.subr.mxu0 0.0
    %4572 = vmatpush1.msra.mxu0 0.0
    %4573 = vmatprep.subr.mxu0 0.0
    %4574 = vmatpush1.msra.mxu0 0.0
    %4575 = vmatprep.subr.mxu0 0.0
    %4576 = vmatpush1.msra.mxu0 0.0
    %4577 = vmatprep.subr.mxu0 0.0
    %4578 = vmatpush1.msra.mxu0 0.0
    %4579 = vmatprep.subr.mxu0 0.0
    %4580 = vmatpush1.msra.mxu0 0.0
    %4581 = vmatprep.subr.mxu0 0.0
    %4582 = vmatpush1.msra.mxu0 0.0
    %4583 = vmatprep.subr.mxu0 0.0
    %4584 = vmatpush1.msra.mxu0 0.0
    %4585 = vmatprep.subr.mxu0 0.0
    %4586 = vmatpush1.msra.mxu0 0.0
    %4587 = vmatprep.subr.mxu0 0.0
    %4588 = vmatpush1.msra.mxu0 0.0
    %4589 = vmatprep.subr.mxu0 0.0
    %4590 = vmatpush1.msra.mxu0 0.0
    %4591 = vmatprep.subr.mxu0 0.0
    %4592 = vmatpush1.msra.mxu0 0.0
    %4593 = vmatprep.subr.mxu0 0.0
    %4594 = vmatpush1.msra.mxu0 0.0
    %4595 = vmatprep.subr.mxu0 0.0
    %4596 = vmatpush1.msra.mxu0 0.0
    %4597 = vmatprep.subr.mxu0 0.0
    %4598 = vmatpush1.msra.mxu0 0.0
    %4599 = vmatprep.subr.mxu0 0.0
    %4600 = vmatpush1.msra.mxu0 0.0
    %4601 = vmatprep.subr.mxu0 0.0
    %4602 = vmatpush1.msra.mxu0 0.0
    %4603 = vmatprep.subr.mxu0 0.0
    %4604 = vmatpush1.msra.mxu0 0.0
    %4605 = vmatprep.mubr.f32.mxu0 0.0
    %4606 = vmatmul.mubr.f32.gmra.mrb[0].mxu0 %v4326
    %v4607 = vpop.f32.mrb[0].mxu0
    %v4608 = vadd.f32 0.0, %v4607
    %v4609 = vpop.f32.mrb[0].mxu0
    %v4610 = vadd.f32 0.0, %v4609
    %4611 = vdwg.mxu0
    %v4612 = vld [vmem:[#allocation7] sm:$0xff]
    %v4613 = vld [vmem:[#allocation7 + $0x8] sm:$0xff]
    %v4614 = vld [vmem:[#allocation7 + $0x10] sm:$0xff]
    %v4615 = vld [vmem:[#allocation7 + $0x18] sm:$0xff]
    %v4616 = vld [vmem:[#allocation7 + $0x20] sm:$0xff]
    %v4617 = vld [vmem:[#allocation7 + $0x28] sm:$0xff]
    %v4618 = vld [vmem:[#allocation7 + $0x30] sm:$0xff]
    %v4619 = vld [vmem:[#allocation7 + $0x38] sm:$0xff]
    %v4620 = vld [vmem:[#allocation7 + $0x40] sm:$0xff]
    %v4621 = vld [vmem:[#allocation7 + $0x48] sm:$0xff]
    %v4622 = vld [vmem:[#allocation7 + $0x50] sm:$0xff]
    %v4623 = vld [vmem:[#allocation7 + $0x58] sm:$0xff]
    %v4624 = vld [vmem:[#allocation7 + $0x60] sm:$0xff]
    %v4625 = vld [vmem:[#allocation7 + $0x68] sm:$0xff]
    %v4626 = vld [vmem:[#allocation7 + $0x70] sm:$0xff]
    %v4627 = vld [vmem:[#allocation7 + $0x78] sm:$0xff]
    %v4628 = vld [vmem:[#allocation7 + $0x80] sm:$0xff]
    %v4629 = vld [vmem:[#allocation7 + $0x88] sm:$0xff]
    %v4630 = vld [vmem:[#allocation7 + $0x90] sm:$0xff]
    %v4631 = vld [vmem:[#allocation7 + $0x98] sm:$0xff]
    %v4632 = vld [vmem:[#allocation7 + $0xa0] sm:$0xff]
    %v4633 = vld [vmem:[#allocation7 + $0xa8] sm:$0xff]
    %v4634 = vld [vmem:[#allocation7 + $0xb0] sm:$0xff]
    %v4635 = vld [vmem:[#allocation7 + $0xb8] sm:$0xff]
    %v4637 = vsel %vm640, %v4275, 0
    %4639 = vmatprep.subr.mxu0 %v4613
    %4640 = vmatpush1.msra.mxu0 %v4612
    %4641 = vmatprep.subr.mxu0 %v4617
    %4642 = vmatpush1.msra.mxu0 %v4616
    %4643 = vmatprep.subr.mxu0 %v4621
    %4644 = vmatpush1.msra.mxu0 %v4620
    %4645 = vmatprep.subr.mxu0 %v4625
    %4646 = vmatpush1.msra.mxu0 %v4624
    %4647 = vmatprep.subr.mxu0 %v4629
    %4648 = vmatpush1.msra.mxu0 %v4628
    %4649 = vmatprep.subr.mxu0 %v4633
    %4650 = vmatpush1.msra.mxu0 %v4632
    %4651 = vmatprep.subr.mxu0 0.0
    %4652 = vmatpush1.msra.mxu0 0.0
    %4653 = vmatprep.subr.mxu0 0.0
    %4654 = vmatpush1.msra.mxu0 0.0
    %4655 = vmatprep.subr.mxu0 0.0
    %4656 = vmatpush1.msra.mxu0 0.0
    %4657 = vmatprep.subr.mxu0 0.0
    %4658 = vmatpush1.msra.mxu0 0.0
    %4659 = vmatprep.subr.mxu0 0.0
    %4660 = vmatpush1.msra.mxu0 0.0
    %4661 = vmatprep.subr.mxu0 0.0
    %4662 = vmatpush1.msra.mxu0 0.0
    %4663 = vmatprep.subr.mxu0 0.0
    %4664 = vmatpush1.msra.mxu0 0.0
    %4665 = vmatprep.subr.mxu0 0.0
    %4666 = vmatpush1.msra.mxu0 0.0
    %4667 = vmatprep.subr.mxu0 0.0
    %4668 = vmatpush1.msra.mxu0 0.0
    %4669 = vmatprep.subr.mxu0 0.0
    %4670 = vmatpush1.msra.mxu0 0.0
    %4671 = vmatprep.subr.mxu0 0.0
    %4672 = vmatpush1.msra.mxu0 0.0
    %4673 = vmatprep.subr.mxu0 0.0
    %4674 = vmatpush1.msra.mxu0 0.0
    %4675 = vmatprep.subr.mxu0 0.0
    %4676 = vmatpush1.msra.mxu0 0.0
    %4677 = vmatprep.subr.mxu0 0.0
    %4678 = vmatpush1.msra.mxu0 0.0
    %4679 = vmatprep.subr.mxu0 0.0
    %4680 = vmatpush1.msra.mxu0 0.0
    %4681 = vmatprep.subr.mxu0 0.0
    %4682 = vmatpush1.msra.mxu0 0.0
    %4683 = vmatprep.subr.mxu0 0.0
    %4684 = vmatpush1.msra.mxu0 0.0
    %4685 = vmatprep.subr.mxu0 0.0
    %4686 = vmatpush1.msra.mxu0 0.0
    %4687 = vmatprep.subr.mxu0 0.0
    %4688 = vmatpush1.msra.mxu0 0.0
    %4689 = vmatprep.subr.mxu0 0.0
    %4690 = vmatpush1.msra.mxu0 0.0
    %4691 = vmatprep.subr.mxu0 0.0
    %4692 = vmatpush1.msra.mxu0 0.0
    %4693 = vmatprep.subr.mxu0 0.0
    %4694 = vmatpush1.msra.mxu0 0.0
    %4695 = vmatprep.subr.mxu0 0.0
    %4696 = vmatpush1.msra.mxu0 0.0
    %4697 = vmatprep.subr.mxu0 0.0
    %4698 = vmatpush1.msra.mxu0 0.0
    %4699 = vmatprep.subr.mxu0 0.0
    %4700 = vmatpush1.msra.mxu0 0.0
    %4701 = vmatprep.subr.mxu0 0.0
    %4702 = vmatpush1.msra.mxu0 0.0
    %4703 = vmatprep.mubr.f32.mxu0 0.0
    %4704 = vmatmul.mubr.f32.gmra.mrb[0].mxu0 %v4637
    %v4705 = vpop.f32.mrb[0].mxu0
    %v4706 = vadd.f32 0.0, %v4705
    %v4707 = vpop.f32.mrb[0].mxu0
    %v4708 = vadd.f32 0.0, %v4707
    %4709 = vdwg.mxu0
    %4710 = vmatprep.subr.mxu0 %v4615
    %4711 = vmatpush1.msra.mxu0 %v4614
    %4712 = vmatprep.subr.mxu0 %v4619
    %4713 = vmatpush1.msra.mxu0 %v4618
    %4714 = vmatprep.subr.mxu0 %v4623
    %4715 = vmatpush1.msra.mxu0 %v4622
    %4716 = vmatprep.subr.mxu0 %v4627
    %4717 = vmatpush1.msra.mxu0 %v4626
    %4718 = vmatprep.subr.mxu0 %v4631
    %4719 = vmatpush1.msra.mxu0 %v4630
    %4720 = vmatprep.subr.mxu0 %v4635
    %4721 = vmatpush1.msra.mxu0 %v4634
    %4722 = vmatprep.subr.mxu0 0.0
    %4723 = vmatpush1.msra.mxu0 0.0
    %4724 = vmatprep.subr.mxu0 0.0
    %4725 = vmatpush1.msra.mxu0 0.0
    %4726 = vmatprep.subr.mxu0 0.0
    %4727 = vmatpush1.msra.mxu0 0.0
    %4728 = vmatprep.subr.mxu0 0.0
    %4729 = vmatpush1.msra.mxu0 0.0
    %4730 = vmatprep.subr.mxu0 0.0
    %4731 = vmatpush1.msra.mxu0 0.0
    %4732 = vmatprep.subr.mxu0 0.0
    %4733 = vmatpush1.msra.mxu0 0.0
    %4734 = vmatprep.subr.mxu0 0.0
    %4735 = vmatpush1.msra.mxu0 0.0
    %4736 = vmatprep.subr.mxu0 0.0
    %4737 = vmatpush1.msra.mxu0 0.0
    %4738 = vmatprep.subr.mxu0 0.0
    %4739 = vmatpush1.msra.mxu0 0.0
    %4740 = vmatprep.subr.mxu0 0.0
    %4741 = vmatpush1.msra.mxu0 0.0
    %4742 = vmatprep.subr.mxu0 0.0
    %4743 = vmatpush1.msra.mxu0 0.0
    %4744 = vmatprep.subr.mxu0 0.0
    %4745 = vmatpush1.msra.mxu0 0.0
    %4746 = vmatprep.subr.mxu0 0.0
    %4747 = vmatpush1.msra.mxu0 0.0
    %4748 = vmatprep.subr.mxu0 0.0
    %4749 = vmatpush1.msra.mxu0 0.0
    %4750 = vmatprep.subr.mxu0 0.0
    %4751 = vmatpush1.msra.mxu0 0.0
    %4752 = vmatprep.subr.mxu0 0.0
    %4753 = vmatpush1.msra.mxu0 0.0
    %4754 = vmatprep.subr.mxu0 0.0
    %4755 = vmatpush1.msra.mxu0 0.0
    %4756 = vmatprep.subr.mxu0 0.0
    %4757 = vmatpush1.msra.mxu0 0.0
    %4758 = vmatprep.subr.mxu0 0.0
    %4759 = vmatpush1.msra.mxu0 0.0
    %4760 = vmatprep.subr.mxu0 0.0
    %4761 = vmatpush1.msra.mxu0 0.0
    %4762 = vmatprep.subr.mxu0 0.0
    %4763 = vmatpush1.msra.mxu0 0.0
    %4764 = vmatprep.subr.mxu0 0.0
    %4765 = vmatpush1.msra.mxu0 0.0
    %4766 = vmatprep.subr.mxu0 0.0
    %4767 = vmatpush1.msra.mxu0 0.0
    %4768 = vmatprep.subr.mxu0 0.0
    %4769 = vmatpush1.msra.mxu0 0.0
    %4770 = vmatprep.subr.mxu0 0.0
    %4771 = vmatpush1.msra.mxu0 0.0
    %4772 = vmatprep.subr.mxu0 0.0
    %4773 = vmatpush1.msra.mxu0 0.0
    %4774 = vmatprep.mubr.f32.mxu0 0.0
    %4775 = vmatmul.mubr.f32.gmra.mrb[0].mxu0 %v4637
    %v4776 = vpop.f32.mrb[0].mxu0
    %v4777 = vadd.f32 0.0, %v4776
    %v4778 = vpop.f32.mrb[0].mxu0
    %v4779 = vadd.f32 0.0, %v4778
    %4780 = vdwg.mxu0
    %v4781 = vld [vmem:[#allocation2 + $0x100] sm:$0xff]
    %v4782 = vld [vmem:[#allocation2 + $0x108] sm:$0xff]
    %v4783 = vld [vmem:[#allocation2 + $0x110] sm:$0xff]
    %v4784 = vld [vmem:[#allocation2 + $0x118] sm:$0xff]
    %v4785 = vadd.f32 %v4781, %v4395
    %v4786 = vadd.f32 %v4782, %v4397
    %v4787 = vadd.f32 %v4783, %v4466
    %v4788 = vadd.f32 %v4784, %v4468
    %v4789 = vtanh.pop %v4785
    %v4790 = vtanh.pop %v4786
    %v4791 = vtanh.pop %v4787
    %v4792 = vtanh.pop %v4788
    %v4793 = vmul.f32 %v4789, 0.5
    %v4794 = vadd.f32 %v4793, 0.5
    %v4795 = vmul.f32 %v4790, 0.5
    %v4796 = vadd.f32 %v4795, 0.5
    %v4797 = vmul.f32 %v4792, 0.5
    %v4798 = vadd.f32 %v4797, 0.5
    %v4799 = vmul.f32 %v4796, %v4250
    %v4800 = vmul.f32 %v4794, %v4791
    %v4801 = vadd.f32 %v4799, %v4800
    %v4802 = vtanh.pop %v4801
    %v4803 = vmul.f32 %v4798, %v4802
    %v4804 = vadd.f32 %v4537, %v556
    %v4805 = vadd.f32 %v4539, %v560
    %v4806 = vadd.f32 %v4608, %v564
    %v4807 = vadd.f32 %v4610, %v568
    %v4808 = vadd.f32 %v4804, %v4706
    %v4809 = vadd.f32 %v4805, %v4708
    %v4810 = vadd.f32 %v4806, %v4777
    %v4811 = vadd.f32 %v4807, %v4779
    %v4812 = vtanh.pop %v4808
    %v4813 = vtanh.pop %v4809
    %v4814 = vtanh.pop %v4810
    %v4815 = vtanh.pop %v4811
    %v4816 = vmul.f32 %v4812, 0.5
    %v4817 = vadd.f32 %v4816, 0.5
    %v4818 = vmul.f32 %v4813, 0.5
    %v4819 = vadd.f32 %v4818, 0.5
    %v4820 = vmul.f32 %v4815, 0.5
    %v4821 = vadd.f32 %v4820, 0.5
    %v4822 = vmul.f32 %v4819, %v4273
    %v4823 = vmul.f32 %v4817, %v4814
    %v4824 = vadd.f32 %v4822, %v4823
    %v4825 = vtanh.pop %v4824
    %v4826 = vmul.f32 %v4821, %v4825
    %4827 = vst.msk [vmem:[#allocation3 + $0x38] sm:$0xff] %vm640, %v4826
    %v4828 = vld [vmem:[#allocation4] sm:$0xff]
    %v4829 = vld [vmem:[#allocation4 + $0x8] sm:$0xff]
    %v4830 = vld [vmem:[#allocation4 + $0x10] sm:$0xff]
    %v4831 = vld [vmem:[#allocation4 + $0x18] sm:$0xff]
    %v4832 = vld [vmem:[#allocation4 + $0x20] sm:$0xff]
    %v4833 = vld [vmem:[#allocation4 + $0x28] sm:$0xff]
    %v4834 = vld [vmem:[#allocation4 + $0x30] sm:$0xff]
    %v4835 = vld [vmem:[#allocation4 + $0x38] sm:$0xff]
    %v4836 = vld [vmem:[#allocation4 + $0x40] sm:$0xff]
    %v4837 = vld [vmem:[#allocation4 + $0x48] sm:$0xff]
    %v4838 = vld [vmem:[#allocation4 + $0x50] sm:$0xff]
    %v4839 = vld [vmem:[#allocation4 + $0x58] sm:$0xff]
    %v4840 = vld [vmem:[#allocation4 + $0x60] sm:$0xff]
    %v4841 = vld [vmem:[#allocation4 + $0x68] sm:$0xff]
    %v4842 = vld [vmem:[#allocation4 + $0x70] sm:$0xff]
    %v4843 = vld [vmem:[#allocation4 + $0x78] sm:$0xff]
    %v4844 = vld [vmem:[#allocation4 + $0x80] sm:$0xff]
    %v4845 = vld [vmem:[#allocation4 + $0x88] sm:$0xff]
    %v4846 = vld [vmem:[#allocation4 + $0x90] sm:$0xff]
    %v4847 = vld [vmem:[#allocation4 + $0x98] sm:$0xff]
    %v4848 = vld [vmem:[#allocation4 + $0xa0] sm:$0xff]
    %v4849 = vld [vmem:[#allocation4 + $0xa8] sm:$0xff]
    %v4850 = vld [vmem:[#allocation4 + $0xb0] sm:$0xff]
    %v4851 = vld [vmem:[#allocation4 + $0xb8] sm:$0xff]
    %v4852 = vld [vmem:[#allocation4 + $0xc0] sm:$0xff]
    %v4853 = vld [vmem:[#allocation4 + $0xc8] sm:$0xff]
    %v4854 = vld [vmem:[#allocation4 + $0xd0] sm:$0xff]
    %v4855 = vld [vmem:[#allocation4 + $0xd8] sm:$0xff]
    %v4856 = vld [vmem:[#allocation4 + $0xe0] sm:$0xff]
    %v4857 = vld [vmem:[#allocation4 + $0xe8] sm:$0xff]
    %v4858 = vld [vmem:[#allocation4 + $0xf0] sm:$0xff]
    %v4859 = vld [vmem:[#allocation4 + $0xf8] sm:$0xff]
    %v4860 = vld [vmem:[#allocation4 + $0x100] sm:$0xff]
    %v4861 = vld [vmem:[#allocation4 + $0x108] sm:$0xff]
    %v4862 = vld [vmem:[#allocation4 + $0x110] sm:$0xff]
    %v4863 = vld [vmem:[#allocation4 + $0x118] sm:$0xff]
    %v4864 = vld [vmem:[#allocation4 + $0x120] sm:$0xff]
    %v4865 = vld [vmem:[#allocation4 + $0x128] sm:$0xff]
    %v4866 = vld [vmem:[#allocation4 + $0x130] sm:$0xff]
    %v4867 = vld [vmem:[#allocation4 + $0x138] sm:$0xff]
    %v4868 = vld [vmem:[#allocation4 + $0x140] sm:$0xff]
    %v4869 = vld [vmem:[#allocation4 + $0x148] sm:$0xff]
    %v4870 = vld [vmem:[#allocation4 + $0x150] sm:$0xff]
    %v4871 = vld [vmem:[#allocation4 + $0x158] sm:$0xff]
    %v4872 = vld [vmem:[#allocation4 + $0x160] sm:$0xff]
    %v4873 = vld [vmem:[#allocation4 + $0x168] sm:$0xff]
    %v4874 = vld [vmem:[#allocation4 + $0x170] sm:$0xff]
    %v4875 = vld [vmem:[#allocation4 + $0x178] sm:$0xff]
    %v4877 = vsel %vm640, %v4803, 0
    %4879 = vmatprep.subr.mxu0 %v4829
    %4880 = vmatpush1.msra.mxu0 %v4828
    %4881 = vmatprep.subr.mxu0 %v4837
    %4882 = vmatpush1.msra.mxu0 %v4836
    %4883 = vmatprep.subr.mxu0 %v4845
    %4884 = vmatpush1.msra.mxu0 %v4844
    %4885 = vmatprep.subr.mxu0 %v4853
    %4886 = vmatpush1.msra.mxu0 %v4852
    %4887 = vmatprep.subr.mxu0 %v4861
    %4888 = vmatpush1.msra.mxu0 %v4860
    %4889 = vmatprep.subr.mxu0 %v4869
    %4890 = vmatpush1.msra.mxu0 %v4868
    %4891 = vmatprep.subr.mxu0 0.0
    %4892 = vmatpush1.msra.mxu0 0.0
    %4893 = vmatprep.subr.mxu0 0.0
    %4894 = vmatpush1.msra.mxu0 0.0
    %4895 = vmatprep.subr.mxu0 0.0
    %4896 = vmatpush1.msra.mxu0 0.0
    %4897 = vmatprep.subr.mxu0 0.0
    %4898 = vmatpush1.msra.mxu0 0.0
    %4899 = vmatprep.subr.mxu0 0.0
    %4900 = vmatpush1.msra.mxu0 0.0
    %4901 = vmatprep.subr.mxu0 0.0
    %4902 = vmatpush1.msra.mxu0 0.0
    %4903 = vmatprep.subr.mxu0 0.0
    %4904 = vmatpush1.msra.mxu0 0.0
    %4905 = vmatprep.subr.mxu0 0.0
    %4906 = vmatpush1.msra.mxu0 0.0
    %4907 = vmatprep.subr.mxu0 0.0
    %4908 = vmatpush1.msra.mxu0 0.0
    %4909 = vmatprep.subr.mxu0 0.0
    %4910 = vmatpush1.msra.mxu0 0.0
    %4911 = vmatprep.subr.mxu0 0.0
    %4912 = vmatpush1.msra.mxu0 0.0
    %4913 = vmatprep.subr.mxu0 0.0
    %4914 = vmatpush1.msra.mxu0 0.0
    %4915 = vmatprep.subr.mxu0 0.0
    %4916 = vmatpush1.msra.mxu0 0.0
    %4917 = vmatprep.subr.mxu0 0.0
    %4918 = vmatpush1.msra.mxu0 0.0
    %4919 = vmatprep.subr.mxu0 0.0
    %4920 = vmatpush1.msra.mxu0 0.0
    %4921 = vmatprep.subr.mxu0 0.0
    %4922 = vmatpush1.msra.mxu0 0.0
    %4923 = vmatprep.subr.mxu0 0.0
    %4924 = vmatpush1.msra.mxu0 0.0
    %4925 = vmatprep.subr.mxu0 0.0
    %4926 = vmatpush1.msra.mxu0 0.0
    %4927 = vmatprep.subr.mxu0 0.0
    %4928 = vmatpush1.msra.mxu0 0.0
    %4929 = vmatprep.subr.mxu0 0.0
    %4930 = vmatpush1.msra.mxu0 0.0
    %4931 = vmatprep.subr.mxu0 0.0
    %4932 = vmatpush1.msra.mxu0 0.0
    %4933 = vmatprep.subr.mxu0 0.0
    %4934 = vmatpush1.msra.mxu0 0.0
    %4935 = vmatprep.subr.mxu0 0.0
    %4936 = vmatpush1.msra.mxu0 0.0
    %4937 = vmatprep.subr.mxu0 0.0
    %4938 = vmatpush1.msra.mxu0 0.0
    %4939 = vmatprep.subr.mxu0 0.0
    %4940 = vmatpush1.msra.mxu0 0.0
    %4941 = vmatprep.subr.mxu0 0.0
    %4942 = vmatpush1.msra.mxu0 0.0
    %4943 = vmatprep.mubr.f32.mxu0 0.0
    %4944 = vmatmul.mubr.f32.gmra.mrb[0].mxu0 %v4877
    %v4945 = vpop.f32.mrb[0].mxu0
    %v4946 = vadd.f32 0.0, %v4945
    %v4947 = vpop.f32.mrb[0].mxu0
    %v4948 = vadd.f32 0.0, %v4947
    %4949 = vdwg.mxu0
    %4950 = vmatprep.subr.mxu0 %v4831
    %4951 = vmatpush1.msra.mxu0 %v4830
    %4952 = vmatprep.subr.mxu0 %v4839
    %4953 = vmatpush1.msra.mxu0 %v4838
    %4954 = vmatprep.subr.mxu0 %v4847
    %4955 = vmatpush1.msra.mxu0 %v4846
    %4956 = vmatprep.subr.mxu0 %v4855
    %4957 = vmatpush1.msra.mxu0 %v4854
    %4958 = vmatprep.subr.mxu0 %v4863
    %4959 = vmatpush1.msra.mxu0 %v4862
    %4960 = vmatprep.subr.mxu0 %v4871
    %4961 = vmatpush1.msra.mxu0 %v4870
    %4962 = vmatprep.subr.mxu0 0.0
    %4963 = vmatpush1.msra.mxu0 0.0
    %4964 = vmatprep.subr.mxu0 0.0
    %4965 = vmatpush1.msra.mxu0 0.0
    %4966 = vmatprep.subr.mxu0 0.0
    %4967 = vmatpush1.msra.mxu0 0.0
    %4968 = vmatprep.subr.mxu0 0.0
    %4969 = vmatpush1.msra.mxu0 0.0
    %4970 = vmatprep.subr.mxu0 0.0
    %4971 = vmatpush1.msra.mxu0 0.0
    %4972 = vmatprep.subr.mxu0 0.0
    %4973 = vmatpush1.msra.mxu0 0.0
    %4974 = vmatprep.subr.mxu0 0.0
    %4975 = vmatpush1.msra.mxu0 0.0
    %4976 = vmatprep.subr.mxu0 0.0
    %4977 = vmatpush1.msra.mxu0 0.0
    %4978 = vmatprep.subr.mxu0 0.0
    %4979 = vmatpush1.msra.mxu0 0.0
    %4980 = vmatprep.subr.mxu0 0.0
    %4981 = vmatpush1.msra.mxu0 0.0
    %4982 = vmatprep.subr.mxu0 0.0
    %4983 = vmatpush1.msra.mxu0 0.0
    %4984 = vmatprep.subr.mxu0 0.0
    %4985 = vmatpush1.msra.mxu0 0.0
    %4986 = vmatprep.subr.mxu0 0.0
    %4987 = vmatpush1.msra.mxu0 0.0
    %4988 = vmatprep.subr.mxu0 0.0
    %4989 = vmatpush1.msra.mxu0 0.0
    %4990 = vmatprep.subr.mxu0 0.0
    %4991 = vmatpush1.msra.mxu0 0.0
    %4992 = vmatprep.subr.mxu0 0.0
    %4993 = vmatpush1.msra.mxu0 0.0
    %4994 = vmatprep.subr.mxu0 0.0
    %4995 = vmatpush1.msra.mxu0 0.0
    %4996 = vmatprep.subr.mxu0 0.0
    %4997 = vmatpush1.msra.mxu0 0.0
    %4998 = vmatprep.subr.mxu0 0.0
    %4999 = vmatpush1.msra.mxu0 0.0
    %5000 = vmatprep.subr.mxu0 0.0
    %5001 = vmatpush1.msra.mxu0 0.0
    %5002 = vmatprep.subr.mxu0 0.0
    %5003 = vmatpush1.msra.mxu0 0.0
    %5004 = vmatprep.subr.mxu0 0.0
    %5005 = vmatpush1.msra.mxu0 0.0
    %5006 = vmatprep.subr.mxu0 0.0
    %5007 = vmatpush1.msra.mxu0 0.0
    %5008 = vmatprep.subr.mxu0 0.0
    %5009 = vmatpush1.msra.mxu0 0.0
    %5010 = vmatprep.subr.mxu0 0.0
    %5011 = vmatpush1.msra.mxu0 0.0
    %5012 = vmatprep.subr.mxu0 0.0
    %5013 = vmatpush1.msra.mxu0 0.0
    %5014 = vmatprep.mubr.f32.mxu0 0.0
    %5015 = vmatmul.mubr.f32.gmra.mrb[0].mxu0 %v4877
    %v5016 = vpop.f32.mrb[0].mxu0
    %v5017 = vadd.f32 0.0, %v5016
    %v5018 = vpop.f32.mrb[0].mxu0
    %v5019 = vadd.f32 0.0, %v5018
    %5020 = vdwg.mxu0
    %5021 = vmatprep.subr.mxu0 %v4833
    %5022 = vmatpush1.msra.mxu0 %v4832
    %5023 = vmatprep.subr.mxu0 %v4841
    %5024 = vmatpush1.msra.mxu0 %v4840
    %5025 = vmatprep.subr.mxu0 %v4849
    %5026 = vmatpush1.msra.mxu0 %v4848
    %5027 = vmatprep.subr.mxu0 %v4857
    %5028 = vmatpush1.msra.mxu0 %v4856
    %5029 = vmatprep.subr.mxu0 %v4865
    %5030 = vmatpush1.msra.mxu0 %v4864
    %5031 = vmatprep.subr.mxu0 %v4873
    %5032 = vmatpush1.msra.mxu0 %v4872
    %5033 = vmatprep.subr.mxu0 0.0
    %5034 = vmatpush1.msra.mxu0 0.0
    %5035 = vmatprep.subr.mxu0 0.0
    %5036 = vmatpush1.msra.mxu0 0.0
    %5037 = vmatprep.subr.mxu0 0.0
    %5038 = vmatpush1.msra.mxu0 0.0
    %5039 = vmatprep.subr.mxu0 0.0
    %5040 = vmatpush1.msra.mxu0 0.0
    %5041 = vmatprep.subr.mxu0 0.0
    %5042 = vmatpush1.msra.mxu0 0.0
    %5043 = vmatprep.subr.mxu0 0.0
    %5044 = vmatpush1.msra.mxu0 0.0
    %5045 = vmatprep.subr.mxu0 0.0
    %5046 = vmatpush1.msra.mxu0 0.0
    %5047 = vmatprep.subr.mxu0 0.0
    %5048 = vmatpush1.msra.mxu0 0.0
    %5049 = vmatprep.subr.mxu0 0.0
    %5050 = vmatpush1.msra.mxu0 0.0
    %5051 = vmatprep.subr.mxu0 0.0
    %5052 = vmatpush1.msra.mxu0 0.0
    %5053 = vmatprep.subr.mxu0 0.0
    %5054 = vmatpush1.msra.mxu0 0.0
    %5055 = vmatprep.subr.mxu0 0.0
    %5056 = vmatpush1.msra.mxu0 0.0
    %5057 = vmatprep.subr.mxu0 0.0
    %5058 = vmatpush1.msra.mxu0 0.0
    %5059 = vmatprep.subr.mxu0 0.0
    %5060 = vmatpush1.msra.mxu0 0.0
    %5061 = vmatprep.subr.mxu0 0.0
    %5062 = vmatpush1.msra.mxu0 0.0
    %5063 = vmatprep.subr.mxu0 0.0
    %5064 = vmatpush1.msra.mxu0 0.0
    %5065 = vmatprep.subr.mxu0 0.0
    %5066 = vmatpush1.msra.mxu0 0.0
    %5067 = vmatprep.subr.mxu0 0.0
    %5068 = vmatpush1.msra.mxu0 0.0
    %5069 = vmatprep.subr.mxu0 0.0
    %5070 = vmatpush1.msra.mxu0 0.0
    %5071 = vmatprep.subr.mxu0 0.0
    %5072 = vmatpush1.msra.mxu0 0.0
    %5073 = vmatprep.subr.mxu0 0.0
    %5074 = vmatpush1.msra.mxu0 0.0
    %5075 = vmatprep.subr.mxu0 0.0
    %5076 = vmatpush1.msra.mxu0 0.0
    %5077 = vmatprep.subr.mxu0 0.0
    %5078 = vmatpush1.msra.mxu0 0.0
    %5079 = vmatprep.subr.mxu0 0.0
    %5080 = vmatpush1.msra.mxu0 0.0
    %5081 = vmatprep.subr.mxu0 0.0
    %5082 = vmatpush1.msra.mxu0 0.0
    %5083 = vmatprep.subr.mxu0 0.0
    %5084 = vmatpush1.msra.mxu0 0.0
    %5085 = vmatprep.mubr.f32.mxu0 0.0
    %5086 = vmatmul.mubr.f32.gmra.mrb[0].mxu0 %v4877
    %v5087 = vpop.f32.mrb[0].mxu0
    %v5088 = vadd.f32 0.0, %v5087
    %v5089 = vpop.f32.mrb[0].mxu0
    %v5090 = vadd.f32 0.0, %v5089
    %5091 = vdwg.mxu0
    %5092 = vmatprep.subr.mxu0 %v4835
    %5093 = vmatpush1.msra.mxu0 %v4834
    %5094 = vmatprep.subr.mxu0 %v4843
    %5095 = vmatpush1.msra.mxu0 %v4842
    %5096 = vmatprep.subr.mxu0 %v4851
    %5097 = vmatpush1.msra.mxu0 %v4850
    %5098 = vmatprep.subr.mxu0 %v4859
    %5099 = vmatpush1.msra.mxu0 %v4858
    %5100 = vmatprep.subr.mxu0 %v4867
    %5101 = vmatpush1.msra.mxu0 %v4866
    %5102 = vmatprep.subr.mxu0 %v4875
    %5103 = vmatpush1.msra.mxu0 %v4874
    %5104 = vmatprep.subr.mxu0 0.0
    %5105 = vmatpush1.msra.mxu0 0.0
    %5106 = vmatprep.subr.mxu0 0.0
    %5107 = vmatpush1.msra.mxu0 0.0
    %5108 = vmatprep.subr.mxu0 0.0
    %5109 = vmatpush1.msra.mxu0 0.0
    %5110 = vmatprep.subr.mxu0 0.0
    %5111 = vmatpush1.msra.mxu0 0.0
    %5112 = vmatprep.subr.mxu0 0.0
    %5113 = vmatpush1.msra.mxu0 0.0
    %5114 = vmatprep.subr.mxu0 0.0
    %5115 = vmatpush1.msra.mxu0 0.0
    %5116 = vmatprep.subr.mxu0 0.0
    %5117 = vmatpush1.msra.mxu0 0.0
    %5118 = vmatprep.subr.mxu0 0.0
    %5119 = vmatpush1.msra.mxu0 0.0
    %5120 = vmatprep.subr.mxu0 0.0
    %5121 = vmatpush1.msra.mxu0 0.0
    %5122 = vmatprep.subr.mxu0 0.0
    %5123 = vmatpush1.msra.mxu0 0.0
    %5124 = vmatprep.subr.mxu0 0.0
    %5125 = vmatpush1.msra.mxu0 0.0
    %5126 = vmatprep.subr.mxu0 0.0
    %5127 = vmatpush1.msra.mxu0 0.0
    %5128 = vmatprep.subr.mxu0 0.0
    %5129 = vmatpush1.msra.mxu0 0.0
    %5130 = vmatprep.subr.mxu0 0.0
    %5131 = vmatpush1.msra.mxu0 0.0
    %5132 = vmatprep.subr.mxu0 0.0
    %5133 = vmatpush1.msra.mxu0 0.0
    %5134 = vmatprep.subr.mxu0 0.0
    %5135 = vmatpush1.msra.mxu0 0.0
    %5136 = vmatprep.subr.mxu0 0.0
    %5137 = vmatpush1.msra.mxu0 0.0
    %5138 = vmatprep.subr.mxu0 0.0
    %5139 = vmatpush1.msra.mxu0 0.0
    %5140 = vmatprep.subr.mxu0 0.0
    %5141 = vmatpush1.msra.mxu0 0.0
    %5142 = vmatprep.subr.mxu0 0.0
    %5143 = vmatpush1.msra.mxu0 0.0
    %5144 = vmatprep.subr.mxu0 0.0
    %5145 = vmatpush1.msra.mxu0 0.0
    %5146 = vmatprep.subr.mxu0 0.0
    %5147 = vmatpush1.msra.mxu0 0.0
    %5148 = vmatprep.subr.mxu0 0.0
    %5149 = vmatpush1.msra.mxu0 0.0
    %5150 = vmatprep.subr.mxu0 0.0
    %5151 = vmatpush1.msra.mxu0 0.0
    %5152 = vmatprep.subr.mxu0 0.0
    %5153 = vmatpush1.msra.mxu0 0.0
    %5154 = vmatprep.subr.mxu0 0.0
    %5155 = vmatpush1.msra.mxu0 0.0
    %5156 = vmatprep.mubr.f32.mxu0 0.0
    %5157 = vmatmul.mubr.f32.gmra.mrb[0].mxu0 %v4877
    %v5158 = vpop.f32.mrb[0].mxu0
    %v5159 = vadd.f32 0.0, %v5158
    %v5160 = vpop.f32.mrb[0].mxu0
    %v5161 = vadd.f32 0.0, %v5160
    %5162 = vdwg.mxu0
    %v5163 = vld [vmem:[#allocation7] sm:$0xff]
    %v5164 = vld [vmem:[#allocation7 + $0x8] sm:$0xff]
    %v5165 = vld [vmem:[#allocation7 + $0x10] sm:$0xff]
    %v5166 = vld [vmem:[#allocation7 + $0x18] sm:$0xff]
    %v5167 = vld [vmem:[#allocation7 + $0x20] sm:$0xff]
    %v5168 = vld [vmem:[#allocation7 + $0x28] sm:$0xff]
    %v5169 = vld [vmem:[#allocation7 + $0x30] sm:$0xff]
    %v5170 = vld [vmem:[#allocation7 + $0x38] sm:$0xff]
    %v5171 = vld [vmem:[#allocation7 + $0x40] sm:$0xff]
    %v5172 = vld [vmem:[#allocation7 + $0x48] sm:$0xff]
    %v5173 = vld [vmem:[#allocation7 + $0x50] sm:$0xff]
    %v5174 = vld [vmem:[#allocation7 + $0x58] sm:$0xff]
    %v5175 = vld [vmem:[#allocation7 + $0x60] sm:$0xff]
    %v5176 = vld [vmem:[#allocation7 + $0x68] sm:$0xff]
    %v5177 = vld [vmem:[#allocation7 + $0x70] sm:$0xff]
    %v5178 = vld [vmem:[#allocation7 + $0x78] sm:$0xff]
    %v5179 = vld [vmem:[#allocation7 + $0x80] sm:$0xff]
    %v5180 = vld [vmem:[#allocation7 + $0x88] sm:$0xff]
    %v5181 = vld [vmem:[#allocation7 + $0x90] sm:$0xff]
    %v5182 = vld [vmem:[#allocation7 + $0x98] sm:$0xff]
    %v5183 = vld [vmem:[#allocation7 + $0xa0] sm:$0xff]
    %v5184 = vld [vmem:[#allocation7 + $0xa8] sm:$0xff]
    %v5185 = vld [vmem:[#allocation7 + $0xb0] sm:$0xff]
    %v5186 = vld [vmem:[#allocation7 + $0xb8] sm:$0xff]
    %v5188 = vsel %vm640, %v4826, 0
    %5190 = vmatprep.subr.mxu0 %v5164
    %5191 = vmatpush1.msra.mxu0 %v5163
    %5192 = vmatprep.subr.mxu0 %v5168
    %5193 = vmatpush1.msra.mxu0 %v5167
    %5194 = vmatprep.subr.mxu0 %v5172
    %5195 = vmatpush1.msra.mxu0 %v5171
    %5196 = vmatprep.subr.mxu0 %v5176
    %5197 = vmatpush1.msra.mxu0 %v5175
    %5198 = vmatprep.subr.mxu0 %v5180
    %5199 = vmatpush1.msra.mxu0 %v5179
    %5200 = vmatprep.subr.mxu0 %v5184
    %5201 = vmatpush1.msra.mxu0 %v5183
    %5202 = vmatprep.subr.mxu0 0.0
    %5203 = vmatpush1.msra.mxu0 0.0
    %5204 = vmatprep.subr.mxu0 0.0
    %5205 = vmatpush1.msra.mxu0 0.0
    %5206 = vmatprep.subr.mxu0 0.0
    %5207 = vmatpush1.msra.mxu0 0.0
    %5208 = vmatprep.subr.mxu0 0.0
    %5209 = vmatpush1.msra.mxu0 0.0
    %5210 = vmatprep.subr.mxu0 0.0
    %5211 = vmatpush1.msra.mxu0 0.0
    %5212 = vmatprep.subr.mxu0 0.0
    %5213 = vmatpush1.msra.mxu0 0.0
    %5214 = vmatprep.subr.mxu0 0.0
    %5215 = vmatpush1.msra.mxu0 0.0
    %5216 = vmatprep.subr.mxu0 0.0
    %5217 = vmatpush1.msra.mxu0 0.0
    %5218 = vmatprep.subr.mxu0 0.0
    %5219 = vmatpush1.msra.mxu0 0.0
    %5220 = vmatprep.subr.mxu0 0.0
    %5221 = vmatpush1.msra.mxu0 0.0
    %5222 = vmatprep.subr.mxu0 0.0
    %5223 = vmatpush1.msra.mxu0 0.0
    %5224 = vmatprep.subr.mxu0 0.0
    %5225 = vmatpush1.msra.mxu0 0.0
    %5226 = vmatprep.subr.mxu0 0.0
    %5227 = vmatpush1.msra.mxu0 0.0
    %5228 = vmatprep.subr.mxu0 0.0
    %5229 = vmatpush1.msra.mxu0 0.0
    %5230 = vmatprep.subr.mxu0 0.0
    %5231 = vmatpush1.msra.mxu0 0.0
    %5232 = vmatprep.subr.mxu0 0.0
    %5233 = vmatpush1.msra.mxu0 0.0
    %5234 = vmatprep.subr.mxu0 0.0
    %5235 = vmatpush1.msra.mxu0 0.0
    %5236 = vmatprep.subr.mxu0 0.0
    %5237 = vmatpush1.msra.mxu0 0.0
    %5238 = vmatprep.subr.mxu0 0.0
    %5239 = vmatpush1.msra.mxu0 0.0
    %5240 = vmatprep.subr.mxu0 0.0
    %5241 = vmatpush1.msra.mxu0 0.0
    %5242 = vmatprep.subr.mxu0 0.0
    %5243 = vmatpush1.msra.mxu0 0.0
    %5244 = vmatprep.subr.mxu0 0.0
    %5245 = vmatpush1.msra.mxu0 0.0
    %5246 = vmatprep.subr.mxu0 0.0
    %5247 = vmatpush1.msra.mxu0 0.0
    %5248 = vmatprep.subr.mxu0 0.0
    %5249 = vmatpush1.msra.mxu0 0.0
    %5250 = vmatprep.subr.mxu0 0.0
    %5251 = vmatpush1.msra.mxu0 0.0
    %5252 = vmatprep.subr.mxu0 0.0
    %5253 = vmatpush1.msra.mxu0 0.0
    %5254 = vmatprep.mubr.f32.mxu0 0.0
    %5255 = vmatmul.mubr.f32.gmra.mrb[0].mxu0 %v5188
    %v5256 = vpop.f32.mrb[0].mxu0
    %v5257 = vadd.f32 0.0, %v5256
    %v5258 = vpop.f32.mrb[0].mxu0
    %v5259 = vadd.f32 0.0, %v5258
    %5260 = vdwg.mxu0
    %5261 = vmatprep.subr.mxu0 %v5166
    %5262 = vmatpush1.msra.mxu0 %v5165
    %5263 = vmatprep.subr.mxu0 %v5170
    %5264 = vmatpush1.msra.mxu0 %v5169
    %5265 = vmatprep.subr.mxu0 %v5174
    %5266 = vmatpush1.msra.mxu0 %v5173
    %5267 = vmatprep.subr.mxu0 %v5178
    %5268 = vmatpush1.msra.mxu0 %v5177
    %5269 = vmatprep.subr.mxu0 %v5182
    %5270 = vmatpush1.msra.mxu0 %v5181
    %5271 = vmatprep.subr.mxu0 %v5186
    %5272 = vmatpush1.msra.mxu0 %v5185
    %5273 = vmatprep.subr.mxu0 0.0
    %5274 = vmatpush1.msra.mxu0 0.0
    %5275 = vmatprep.subr.mxu0 0.0
    %5276 = vmatpush1.msra.mxu0 0.0
    %5277 = vmatprep.subr.mxu0 0.0
    %5278 = vmatpush1.msra.mxu0 0.0
    %5279 = vmatprep.subr.mxu0 0.0
    %5280 = vmatpush1.msra.mxu0 0.0
    %5281 = vmatprep.subr.mxu0 0.0
    %5282 = vmatpush1.msra.mxu0 0.0
    %5283 = vmatprep.subr.mxu0 0.0
    %5284 = vmatpush1.msra.mxu0 0.0
    %5285 = vmatprep.subr.mxu0 0.0
    %5286 = vmatpush1.msra.mxu0 0.0
    %5287 = vmatprep.subr.mxu0 0.0
    %5288 = vmatpush1.msra.mxu0 0.0
    %5289 = vmatprep.subr.mxu0 0.0
    %5290 = vmatpush1.msra.mxu0 0.0
    %5291 = vmatprep.subr.mxu0 0.0
    %5292 = vmatpush1.msra.mxu0 0.0
    %5293 = vmatprep.subr.mxu0 0.0
    %5294 = vmatpush1.msra.mxu0 0.0
    %5295 = vmatprep.subr.mxu0 0.0
    %5296 = vmatpush1.msra.mxu0 0.0
    %5297 = vmatprep.subr.mxu0 0.0
    %5298 = vmatpush1.msra.mxu0 0.0
    %5299 = vmatprep.subr.mxu0 0.0
    %5300 = vmatpush1.msra.mxu0 0.0
    %5301 = vmatprep.subr.mxu0 0.0
    %5302 = vmatpush1.msra.mxu0 0.0
    %5303 = vmatprep.subr.mxu0 0.0
    %5304 = vmatpush1.msra.mxu0 0.0
    %5305 = vmatprep.subr.mxu0 0.0
    %5306 = vmatpush1.msra.mxu0 0.0
    %5307 = vmatprep.subr.mxu0 0.0
    %5308 = vmatpush1.msra.mxu0 0.0
    %5309 = vmatprep.subr.mxu0 0.0
    %5310 = vmatpush1.msra.mxu0 0.0
    %5311 = vmatprep.subr.mxu0 0.0
    %5312 = vmatpush1.msra.mxu0 0.0
    %5313 = vmatprep.subr.mxu0 0.0
    %5314 = vmatpush1.msra.mxu0 0.0
    %5315 = vmatprep.subr.mxu0 0.0
    %5316 = vmatpush1.msra.mxu0 0.0
    %5317 = vmatprep.subr.mxu0 0.0
    %5318 = vmatpush1.msra.mxu0 0.0
    %5319 = vmatprep.subr.mxu0 0.0
    %5320 = vmatpush1.msra.mxu0 0.0
    %5321 = vmatprep.subr.mxu0 0.0
    %5322 = vmatpush1.msra.mxu0 0.0
    %5323 = vmatprep.subr.mxu0 0.0
    %5324 = vmatpush1.msra.mxu0 0.0
    %5325 = vmatprep.mubr.f32.mxu0 0.0
    %5326 = vmatmul.mubr.f32.gmra.mrb[0].mxu0 %v5188
    %v5327 = vpop.f32.mrb[0].mxu0
    %v5328 = vadd.f32 0.0, %v5327
    %v5329 = vpop.f32.mrb[0].mxu0
    %v5330 = vadd.f32 0.0, %v5329
    %5331 = vdwg.mxu0
    %v5332 = vld [vmem:[#allocation2 + $0x120] sm:$0xff]
    %v5333 = vld [vmem:[#allocation2 + $0x128] sm:$0xff]
    %v5334 = vld [vmem:[#allocation2 + $0x130] sm:$0xff]
    %v5335 = vld [vmem:[#allocation2 + $0x138] sm:$0xff]
    %v5336 = vadd.f32 %v5332, %v4946
    %v5337 = vadd.f32 %v5333, %v4948
    %v5338 = vadd.f32 %v5334, %v5017
    %v5339 = vadd.f32 %v5335, %v5019
    %v5340 = vtanh.pop %v5336
    %v5341 = vtanh.pop %v5337
    %v5342 = vtanh.pop %v5338
    %v5343 = vtanh.pop %v5339
    %v5344 = vmul.f32 %v5340, 0.5
    %v5345 = vadd.f32 %v5344, 0.5
    %v5346 = vmul.f32 %v5341, 0.5
    %v5347 = vadd.f32 %v5346, 0.5
    %v5348 = vmul.f32 %v5343, 0.5
    %v5349 = vadd.f32 %v5348, 0.5
    %v5350 = vmul.f32 %v5347, %v4801
    %v5351 = vmul.f32 %v5345, %v5342
    %v5352 = vadd.f32 %v5350, %v5351
    %v5353 = vtanh.pop %v5352
    %v5354 = vmul.f32 %v5349, %v5353
    %v5355 = vadd.f32 %v5088, %v556
    %v5356 = vadd.f32 %v5090, %v560
    %v5357 = vadd.f32 %v5159, %v564
    %v5358 = vadd.f32 %v5161, %v568
    %v5359 = vadd.f32 %v5355, %v5257
    %v5360 = vadd.f32 %v5356, %v5259
    %v5361 = vadd.f32 %v5357, %v5328
    %v5362 = vadd.f32 %v5358, %v5330
    %v5363 = vtanh.pop %v5359
    %v5364 = vtanh.pop %v5360
    %v5365 = vtanh.pop %v5361
    %v5366 = vtanh.pop %v5362
    %v5367 = vmul.f32 %v5363, 0.5
    %v5368 = vadd.f32 %v5367, 0.5
    %v5369 = vmul.f32 %v5364, 0.5
    %v5370 = vadd.f32 %v5369, 0.5
    %v5371 = vmul.f32 %v5366, 0.5
    %v5372 = vadd.f32 %v5371, 0.5
    %v5373 = vmul.f32 %v5370, %v4824
    %v5374 = vmul.f32 %v5368, %v5365
    %v5375 = vadd.f32 %v5373, %v5374
    %v5376 = vtanh.pop %v5375
    %v5377 = vmul.f32 %v5372, %v5376
    %5378 = vst.msk [vmem:[#allocation3 + $0x40] sm:$0xff] %vm640, %v5377
    %v5379 = vld [vmem:[#allocation4] sm:$0xff]
    %v5380 = vld [vmem:[#allocation4 + $0x8] sm:$0xff]
    %v5381 = vld [vmem:[#allocation4 + $0x10] sm:$0xff]
    %v5382 = vld [vmem:[#allocation4 + $0x18] sm:$0xff]
    %v5383 = vld [vmem:[#allocation4 + $0x20] sm:$0xff]
    %v5384 = vld [vmem:[#allocation4 + $0x28] sm:$0xff]
    %v5385 = vld [vmem:[#allocation4 + $0x30] sm:$0xff]
    %v5386 = vld [vmem:[#allocation4 + $0x38] sm:$0xff]
    %v5387 = vld [vmem:[#allocation4 + $0x40] sm:$0xff]
    %v5388 = vld [vmem:[#allocation4 + $0x48] sm:$0xff]
    %v5389 = vld [vmem:[#allocation4 + $0x50] sm:$0xff]
    %v5390 = vld [vmem:[#allocation4 + $0x58] sm:$0xff]
    %v5391 = vld [vmem:[#allocation4 + $0x60] sm:$0xff]
    %v5392 = vld [vmem:[#allocation4 + $0x68] sm:$0xff]
    %v5393 = vld [vmem:[#allocation4 + $0x70] sm:$0xff]
    %v5394 = vld [vmem:[#allocation4 + $0x78] sm:$0xff]
    %v5395 = vld [vmem:[#allocation4 + $0x80] sm:$0xff]
    %v5396 = vld [vmem:[#allocation4 + $0x88] sm:$0xff]
    %v5397 = vld [vmem:[#allocation4 + $0x90] sm:$0xff]
    %v5398 = vld [vmem:[#allocation4 + $0x98] sm:$0xff]
    %v5399 = vld [vmem:[#allocation4 + $0xa0] sm:$0xff]
    %v5400 = vld [vmem:[#allocation4 + $0xa8] sm:$0xff]
    %v5401 = vld [vmem:[#allocation4 + $0xb0] sm:$0xff]
    %v5402 = vld [vmem:[#allocation4 + $0xb8] sm:$0xff]
    %v5403 = vld [vmem:[#allocation4 + $0xc0] sm:$0xff]
    %v5404 = vld [vmem:[#allocation4 + $0xc8] sm:$0xff]
    %v5405 = vld [vmem:[#allocation4 + $0xd0] sm:$0xff]
    %v5406 = vld [vmem:[#allocation4 + $0xd8] sm:$0xff]
    %v5407 = vld [vmem:[#allocation4 + $0xe0] sm:$0xff]
    %v5408 = vld [vmem:[#allocation4 + $0xe8] sm:$0xff]
    %v5409 = vld [vmem:[#allocation4 + $0xf0] sm:$0xff]
    %v5410 = vld [vmem:[#allocation4 + $0xf8] sm:$0xff]
    %v5411 = vld [vmem:[#allocation4 + $0x100] sm:$0xff]
    %v5412 = vld [vmem:[#allocation4 + $0x108] sm:$0xff]
    %v5413 = vld [vmem:[#allocation4 + $0x110] sm:$0xff]
    %v5414 = vld [vmem:[#allocation4 + $0x118] sm:$0xff]
    %v5415 = vld [vmem:[#allocation4 + $0x120] sm:$0xff]
    %v5416 = vld [vmem:[#allocation4 + $0x128] sm:$0xff]
    %v5417 = vld [vmem:[#allocation4 + $0x130] sm:$0xff]
    %v5418 = vld [vmem:[#allocation4 + $0x138] sm:$0xff]
    %v5419 = vld [vmem:[#allocation4 + $0x140] sm:$0xff]
    %v5420 = vld [vmem:[#allocation4 + $0x148] sm:$0xff]
    %v5421 = vld [vmem:[#allocation4 + $0x150] sm:$0xff]
    %v5422 = vld [vmem:[#allocation4 + $0x158] sm:$0xff]
    %v5423 = vld [vmem:[#allocation4 + $0x160] sm:$0xff]
    %v5424 = vld [vmem:[#allocation4 + $0x168] sm:$0xff]
    %v5425 = vld [vmem:[#allocation4 + $0x170] sm:$0xff]
    %v5426 = vld [vmem:[#allocation4 + $0x178] sm:$0xff]
    %v5428 = vsel %vm640, %v5354, 0
    %5430 = vmatprep.subr.mxu0 %v5380
    %5431 = vmatpush1.msra.mxu0 %v5379
    %5432 = vmatprep.subr.mxu0 %v5388
    %5433 = vmatpush1.msra.mxu0 %v5387
    %5434 = vmatprep.subr.mxu0 %v5396
    %5435 = vmatpush1.msra.mxu0 %v5395
    %5436 = vmatprep.subr.mxu0 %v5404
    %5437 = vmatpush1.msra.mxu0 %v5403
    %5438 = vmatprep.subr.mxu0 %v5412
    %5439 = vmatpush1.msra.mxu0 %v5411
    %5440 = vmatprep.subr.mxu0 %v5420
    %5441 = vmatpush1.msra.mxu0 %v5419
    %5442 = vmatprep.subr.mxu0 0.0
    %5443 = vmatpush1.msra.mxu0 0.0
    %5444 = vmatprep.subr.mxu0 0.0
    %5445 = vmatpush1.msra.mxu0 0.0
    %5446 = vmatprep.subr.mxu0 0.0
    %5447 = vmatpush1.msra.mxu0 0.0
    %5448 = vmatprep.subr.mxu0 0.0
    %5449 = vmatpush1.msra.mxu0 0.0
    %5450 = vmatprep.subr.mxu0 0.0
    %5451 = vmatpush1.msra.mxu0 0.0
    %5452 = vmatprep.subr.mxu0 0.0
    %5453 = vmatpush1.msra.mxu0 0.0
    %5454 = vmatprep.subr.mxu0 0.0
    %5455 = vmatpush1.msra.mxu0 0.0
    %5456 = vmatprep.subr.mxu0 0.0
    %5457 = vmatpush1.msra.mxu0 0.0
    %5458 = vmatprep.subr.mxu0 0.0
    %5459 = vmatpush1.msra.mxu0 0.0
    %5460 = vmatprep.subr.mxu0 0.0
    %5461 = vmatpush1.msra.mxu0 0.0
    %5462 = vmatprep.subr.mxu0 0.0
    %5463 = vmatpush1.msra.mxu0 0.0
    %5464 = vmatprep.subr.mxu0 0.0
    %5465 = vmatpush1.msra.mxu0 0.0
    %5466 = vmatprep.subr.mxu0 0.0
    %5467 = vmatpush1.msra.mxu0 0.0
    %5468 = vmatprep.subr.mxu0 0.0
    %5469 = vmatpush1.msra.mxu0 0.0
    %5470 = vmatprep.subr.mxu0 0.0
    %5471 = vmatpush1.msra.mxu0 0.0
    %5472 = vmatprep.subr.mxu0 0.0
    %5473 = vmatpush1.msra.mxu0 0.0
    %5474 = vmatprep.subr.mxu0 0.0
    %5475 = vmatpush1.msra.mxu0 0.0
    %5476 = vmatprep.subr.mxu0 0.0
    %5477 = vmatpush1.msra.mxu0 0.0
    %5478 = vmatprep.subr.mxu0 0.0
    %5479 = vmatpush1.msra.mxu0 0.0
    %5480 = vmatprep.subr.mxu0 0.0
    %5481 = vmatpush1.msra.mxu0 0.0
    %5482 = vmatprep.subr.mxu0 0.0
    %5483 = vmatpush1.msra.mxu0 0.0
    %5484 = vmatprep.subr.mxu0 0.0
    %5485 = vmatpush1.msra.mxu0 0.0
    %5486 = vmatprep.subr.mxu0 0.0
    %5487 = vmatpush1.msra.mxu0 0.0
    %5488 = vmatprep.subr.mxu0 0.0
    %5489 = vmatpush1.msra.mxu0 0.0
    %5490 = vmatprep.subr.mxu0 0.0
    %5491 = vmatpush1.msra.mxu0 0.0
    %5492 = vmatprep.subr.mxu0 0.0
    %5493 = vmatpush1.msra.mxu0 0.0
    %5494 = vmatprep.mubr.f32.mxu0 0.0
    %5495 = vmatmul.mubr.f32.gmra.mrb[0].mxu0 %v5428
    %v5496 = vpop.f32.mrb[0].mxu0
    %v5497 = vadd.f32 0.0, %v5496
    %v5498 = vpop.f32.mrb[0].mxu0
    %v5499 = vadd.f32 0.0, %v5498
    %5500 = vdwg.mxu0
    %5501 = vmatprep.subr.mxu0 %v5382
    %5502 = vmatpush1.msra.mxu0 %v5381
    %5503 = vmatprep.subr.mxu0 %v5390
    %5504 = vmatpush1.msra.mxu0 %v5389
    %5505 = vmatprep.subr.mxu0 %v5398
    %5506 = vmatpush1.msra.mxu0 %v5397
    %5507 = vmatprep.subr.mxu0 %v5406
    %5508 = vmatpush1.msra.mxu0 %v5405
    %5509 = vmatprep.subr.mxu0 %v5414
    %5510 = vmatpush1.msra.mxu0 %v5413
    %5511 = vmatprep.subr.mxu0 %v5422
    %5512 = vmatpush1.msra.mxu0 %v5421
    %5513 = vmatprep.subr.mxu0 0.0
    %5514 = vmatpush1.msra.mxu0 0.0
    %5515 = vmatprep.subr.mxu0 0.0
    %5516 = vmatpush1.msra.mxu0 0.0
    %5517 = vmatprep.subr.mxu0 0.0
    %5518 = vmatpush1.msra.mxu0 0.0
    %5519 = vmatprep.subr.mxu0 0.0
    %5520 = vmatpush1.msra.mxu0 0.0
    %5521 = vmatprep.subr.mxu0 0.0
    %5522 = vmatpush1.msra.mxu0 0.0
    %5523 = vmatprep.subr.mxu0 0.0
    %5524 = vmatpush1.msra.mxu0 0.0
    %5525 = vmatprep.subr.mxu0 0.0
    %5526 = vmatpush1.msra.mxu0 0.0
    %5527 = vmatprep.subr.mxu0 0.0
    %5528 = vmatpush1.msra.mxu0 0.0
    %5529 = vmatprep.subr.mxu0 0.0
    %5530 = vmatpush1.msra.mxu0 0.0
    %5531 = vmatprep.subr.mxu0 0.0
    %5532 = vmatpush1.msra.mxu0 0.0
    %5533 = vmatprep.subr.mxu0 0.0
    %5534 = vmatpush1.msra.mxu0 0.0
    %5535 = vmatprep.subr.mxu0 0.0
    %5536 = vmatpush1.msra.mxu0 0.0
    %5537 = vmatprep.subr.mxu0 0.0
    %5538 = vmatpush1.msra.mxu0 0.0
    %5539 = vmatprep.subr.mxu0 0.0
    %5540 = vmatpush1.msra.mxu0 0.0
    %5541 = vmatprep.subr.mxu0 0.0
    %5542 = vmatpush1.msra.mxu0 0.0
    %5543 = vmatprep.subr.mxu0 0.0
    %5544 = vmatpush1.msra.mxu0 0.0
    %5545 = vmatprep.subr.mxu0 0.0
    %5546 = vmatpush1.msra.mxu0 0.0
    %5547 = vmatprep.subr.mxu0 0.0
    %5548 = vmatpush1.msra.mxu0 0.0
    %5549 = vmatprep.subr.mxu0 0.0
    %5550 = vmatpush1.msra.mxu0 0.0
    %5551 = vmatprep.subr.mxu0 0.0
    %5552 = vmatpush1.msra.mxu0 0.0
    %5553 = vmatprep.subr.mxu0 0.0
    %5554 = vmatpush1.msra.mxu0 0.0
    %5555 = vmatprep.subr.mxu0 0.0
    %5556 = vmatpush1.msra.mxu0 0.0
    %5557 = vmatprep.subr.mxu0 0.0
    %5558 = vmatpush1.msra.mxu0 0.0
    %5559 = vmatprep.subr.mxu0 0.0
    %5560 = vmatpush1.msra.mxu0 0.0
    %5561 = vmatprep.subr.mxu0 0.0
    %5562 = vmatpush1.msra.mxu0 0.0
    %5563 = vmatprep.subr.mxu0 0.0
    %5564 = vmatpush1.msra.mxu0 0.0
    %5565 = vmatprep.mubr.f32.mxu0 0.0
    %5566 = vmatmul.mubr.f32.gmra.mrb[0].mxu0 %v5428
    %v5567 = vpop.f32.mrb[0].mxu0
    %v5568 = vadd.f32 0.0, %v5567
    %v5569 = vpop.f32.mrb[0].mxu0
    %v5570 = vadd.f32 0.0, %v5569
    %5571 = vdwg.mxu0
    %5572 = vmatprep.subr.mxu0 %v5384
    %5573 = vmatpush1.msra.mxu0 %v5383
    %5574 = vmatprep.subr.mxu0 %v5392
    %5575 = vmatpush1.msra.mxu0 %v5391
    %5576 = vmatprep.subr.mxu0 %v5400
    %5577 = vmatpush1.msra.mxu0 %v5399
    %5578 = vmatprep.subr.mxu0 %v5408
    %5579 = vmatpush1.msra.mxu0 %v5407
    %5580 = vmatprep.subr.mxu0 %v5416
    %5581 = vmatpush1.msra.mxu0 %v5415
    %5582 = vmatprep.subr.mxu0 %v5424
    %5583 = vmatpush1.msra.mxu0 %v5423
    %5584 = vmatprep.subr.mxu0 0.0
    %5585 = vmatpush1.msra.mxu0 0.0
    %5586 = vmatprep.subr.mxu0 0.0
    %5587 = vmatpush1.msra.mxu0 0.0
    %5588 = vmatprep.subr.mxu0 0.0
    %5589 = vmatpush1.msra.mxu0 0.0
    %5590 = vmatprep.subr.mxu0 0.0
    %5591 = vmatpush1.msra.mxu0 0.0
    %5592 = vmatprep.subr.mxu0 0.0
    %5593 = vmatpush1.msra.mxu0 0.0
    %5594 = vmatprep.subr.mxu0 0.0
    %5595 = vmatpush1.msra.mxu0 0.0
    %5596 = vmatprep.subr.mxu0 0.0
    %5597 = vmatpush1.msra.mxu0 0.0
    %5598 = vmatprep.subr.mxu0 0.0
    %5599 = vmatpush1.msra.mxu0 0.0
    %5600 = vmatprep.subr.mxu0 0.0
    %5601 = vmatpush1.msra.mxu0 0.0
    %5602 = vmatprep.subr.mxu0 0.0
    %5603 = vmatpush1.msra.mxu0 0.0
    %5604 = vmatprep.subr.mxu0 0.0
    %5605 = vmatpush1.msra.mxu0 0.0
    %5606 = vmatprep.subr.mxu0 0.0
    %5607 = vmatpush1.msra.mxu0 0.0
    %5608 = vmatprep.subr.mxu0 0.0
    %5609 = vmatpush1.msra.mxu0 0.0
    %5610 = vmatprep.subr.mxu0 0.0
    %5611 = vmatpush1.msra.mxu0 0.0
    %5612 = vmatprep.subr.mxu0 0.0
    %5613 = vmatpush1.msra.mxu0 0.0
    %5614 = vmatprep.subr.mxu0 0.0
    %5615 = vmatpush1.msra.mxu0 0.0
    %5616 = vmatprep.subr.mxu0 0.0
    %5617 = vmatpush1.msra.mxu0 0.0
    %5618 = vmatprep.subr.mxu0 0.0
    %5619 = vmatpush1.msra.mxu0 0.0
    %5620 = vmatprep.subr.mxu0 0.0
    %5621 = vmatpush1.msra.mxu0 0.0
    %5622 = vmatprep.subr.mxu0 0.0
    %5623 = vmatpush1.msra.mxu0 0.0
    %5624 = vmatprep.subr.mxu0 0.0
    %5625 = vmatpush1.msra.mxu0 0.0
    %5626 = vmatprep.subr.mxu0 0.0
    %5627 = vmatpush1.msra.mxu0 0.0
    %5628 = vmatprep.subr.mxu0 0.0
    %5629 = vmatpush1.msra.mxu0 0.0
    %5630 = vmatprep.subr.mxu0 0.0
    %5631 = vmatpush1.msra.mxu0 0.0
    %5632 = vmatprep.subr.mxu0 0.0
    %5633 = vmatpush1.msra.mxu0 0.0
    %5634 = vmatprep.subr.mxu0 0.0
    %5635 = vmatpush1.msra.mxu0 0.0
    %5636 = vmatprep.mubr.f32.mxu0 0.0
    %5637 = vmatmul.mubr.f32.gmra.mrb[0].mxu0 %v5428
    %v5638 = vpop.f32.mrb[0].mxu0
    %v5639 = vadd.f32 0.0, %v5638
    %v5640 = vpop.f32.mrb[0].mxu0
    %v5641 = vadd.f32 0.0, %v5640
    %5642 = vdwg.mxu0
    %5643 = vmatprep.subr.mxu0 %v5386
    %5644 = vmatpush1.msra.mxu0 %v5385
    %5645 = vmatprep.subr.mxu0 %v5394
    %5646 = vmatpush1.msra.mxu0 %v5393
    %5647 = vmatprep.subr.mxu0 %v5402
    %5648 = vmatpush1.msra.mxu0 %v5401
    %5649 = vmatprep.subr.mxu0 %v5410
    %5650 = vmatpush1.msra.mxu0 %v5409
    %5651 = vmatprep.subr.mxu0 %v5418
    %5652 = vmatpush1.msra.mxu0 %v5417
    %5653 = vmatprep.subr.mxu0 %v5426
    %5654 = vmatpush1.msra.mxu0 %v5425
    %5655 = vmatprep.subr.mxu0 0.0
    %5656 = vmatpush1.msra.mxu0 0.0
    %5657 = vmatprep.subr.mxu0 0.0
    %5658 = vmatpush1.msra.mxu0 0.0
    %5659 = vmatprep.subr.mxu0 0.0
    %5660 = vmatpush1.msra.mxu0 0.0
    %5661 = vmatprep.subr.mxu0 0.0
    %5662 = vmatpush1.msra.mxu0 0.0
    %5663 = vmatprep.subr.mxu0 0.0
    %5664 = vmatpush1.msra.mxu0 0.0
    %5665 = vmatprep.subr.mxu0 0.0
    %5666 = vmatpush1.msra.mxu0 0.0
    %5667 = vmatprep.subr.mxu0 0.0
    %5668 = vmatpush1.msra.mxu0 0.0
    %5669 = vmatprep.subr.mxu0 0.0
    %5670 = vmatpush1.msra.mxu0 0.0
    %5671 = vmatprep.subr.mxu0 0.0
    %5672 = vmatpush1.msra.mxu0 0.0
    %5673 = vmatprep.subr.mxu0 0.0
    %5674 = vmatpush1.msra.mxu0 0.0
    %5675 = vmatprep.subr.mxu0 0.0
    %5676 = vmatpush1.msra.mxu0 0.0
    %5677 = vmatprep.subr.mxu0 0.0
    %5678 = vmatpush1.msra.mxu0 0.0
    %5679 = vmatprep.subr.mxu0 0.0
    %5680 = vmatpush1.msra.mxu0 0.0
    %5681 = vmatprep.subr.mxu0 0.0
    %5682 = vmatpush1.msra.mxu0 0.0
    %5683 = vmatprep.subr.mxu0 0.0
    %5684 = vmatpush1.msra.mxu0 0.0
    %5685 = vmatprep.subr.mxu0 0.0
    %5686 = vmatpush1.msra.mxu0 0.0
    %5687 = vmatprep.subr.mxu0 0.0
    %5688 = vmatpush1.msra.mxu0 0.0
    %5689 = vmatprep.subr.mxu0 0.0
    %5690 = vmatpush1.msra.mxu0 0.0
    %5691 = vmatprep.subr.mxu0 0.0
    %5692 = vmatpush1.msra.mxu0 0.0
    %5693 = vmatprep.subr.mxu0 0.0
    %5694 = vmatpush1.msra.mxu0 0.0
    %5695 = vmatprep.subr.mxu0 0.0
    %5696 = vmatpush1.msra.mxu0 0.0
    %5697 = vmatprep.subr.mxu0 0.0
    %5698 = vmatpush1.msra.mxu0 0.0
    %5699 = vmatprep.subr.mxu0 0.0
    %5700 = vmatpush1.msra.mxu0 0.0
    %5701 = vmatprep.subr.mxu0 0.0
    %5702 = vmatpush1.msra.mxu0 0.0
    %5703 = vmatprep.subr.mxu0 0.0
    %5704 = vmatpush1.msra.mxu0 0.0
    %5705 = vmatprep.subr.mxu0 0.0
    %5706 = vmatpush1.msra.mxu0 0.0
    %5707 = vmatprep.mubr.f32.mxu0 0.0
    %5708 = vmatmul.mubr.f32.gmra.mrb[0].mxu0 %v5428
    %v5709 = vpop.f32.mrb[0].mxu0
    %v5710 = vadd.f32 0.0, %v5709
    %v5711 = vpop.f32.mrb[0].mxu0
    %v5712 = vadd.f32 0.0, %v5711
    %5713 = vdwg.mxu0
    %v5714 = vld [vmem:[#allocation7] sm:$0xff]
    %v5715 = vld [vmem:[#allocation7 + $0x8] sm:$0xff]
    %v5716 = vld [vmem:[#allocation7 + $0x10] sm:$0xff]
    %v5717 = vld [vmem:[#allocation7 + $0x18] sm:$0xff]
    %v5718 = vld [vmem:[#allocation7 + $0x20] sm:$0xff]
    %v5719 = vld [vmem:[#allocation7 + $0x28] sm:$0xff]
    %v5720 = vld [vmem:[#allocation7 + $0x30] sm:$0xff]
    %v5721 = vld [vmem:[#allocation7 + $0x38] sm:$0xff]
    %v5722 = vld [vmem:[#allocation7 + $0x40] sm:$0xff]
    %v5723 = vld [vmem:[#allocation7 + $0x48] sm:$0xff]
    %v5724 = vld [vmem:[#allocation7 + $0x50] sm:$0xff]
    %v5725 = vld [vmem:[#allocation7 + $0x58] sm:$0xff]
    %v5726 = vld [vmem:[#allocation7 + $0x60] sm:$0xff]
    %v5727 = vld [vmem:[#allocation7 + $0x68] sm:$0xff]
    %v5728 = vld [vmem:[#allocation7 + $0x70] sm:$0xff]
    %v5729 = vld [vmem:[#allocation7 + $0x78] sm:$0xff]
    %v5730 = vld [vmem:[#allocation7 + $0x80] sm:$0xff]
    %v5731 = vld [vmem:[#allocation7 + $0x88] sm:$0xff]
    %v5732 = vld [vmem:[#allocation7 + $0x90] sm:$0xff]
    %v5733 = vld [vmem:[#allocation7 + $0x98] sm:$0xff]
    %v5734 = vld [vmem:[#allocation7 + $0xa0] sm:$0xff]
    %v5735 = vld [vmem:[#allocation7 + $0xa8] sm:$0xff]
    %v5736 = vld [vmem:[#allocation7 + $0xb0] sm:$0xff]
    %v5737 = vld [vmem:[#allocation7 + $0xb8] sm:$0xff]
    %v5739 = vsel %vm640, %v5377, 0
    %5741 = vmatprep.subr.mxu0 %v5715
    %5742 = vmatpush1.msra.mxu0 %v5714
    %5743 = vmatprep.subr.mxu0 %v5719
    %5744 = vmatpush1.msra.mxu0 %v5718
    %5745 = vmatprep.subr.mxu0 %v5723
    %5746 = vmatpush1.msra.mxu0 %v5722
    %5747 = vmatprep.subr.mxu0 %v5727
    %5748 = vmatpush1.msra.mxu0 %v5726
    %5749 = vmatprep.subr.mxu0 %v5731
    %5750 = vmatpush1.msra.mxu0 %v5730
    %5751 = vmatprep.subr.mxu0 %v5735
    %5752 = vmatpush1.msra.mxu0 %v5734
    %5753 = vmatprep.subr.mxu0 0.0
    %5754 = vmatpush1.msra.mxu0 0.0
    %5755 = vmatprep.subr.mxu0 0.0
    %5756 = vmatpush1.msra.mxu0 0.0
    %5757 = vmatprep.subr.mxu0 0.0
    %5758 = vmatpush1.msra.mxu0 0.0
    %5759 = vmatprep.subr.mxu0 0.0
    %5760 = vmatpush1.msra.mxu0 0.0
    %5761 = vmatprep.subr.mxu0 0.0
    %5762 = vmatpush1.msra.mxu0 0.0
    %5763 = vmatprep.subr.mxu0 0.0
    %5764 = vmatpush1.msra.mxu0 0.0
    %5765 = vmatprep.subr.mxu0 0.0
    %5766 = vmatpush1.msra.mxu0 0.0
    %5767 = vmatprep.subr.mxu0 0.0
    %5768 = vmatpush1.msra.mxu0 0.0
    %5769 = vmatprep.subr.mxu0 0.0
    %5770 = vmatpush1.msra.mxu0 0.0
    %5771 = vmatprep.subr.mxu0 0.0
    %5772 = vmatpush1.msra.mxu0 0.0
    %5773 = vmatprep.subr.mxu0 0.0
    %5774 = vmatpush1.msra.mxu0 0.0
    %5775 = vmatprep.subr.mxu0 0.0
    %5776 = vmatpush1.msra.mxu0 0.0
    %5777 = vmatprep.subr.mxu0 0.0
    %5778 = vmatpush1.msra.mxu0 0.0
    %5779 = vmatprep.subr.mxu0 0.0
    %5780 = vmatpush1.msra.mxu0 0.0
    %5781 = vmatprep.subr.mxu0 0.0
    %5782 = vmatpush1.msra.mxu0 0.0
    %5783 = vmatprep.subr.mxu0 0.0
    %5784 = vmatpush1.msra.mxu0 0.0
    %5785 = vmatprep.subr.mxu0 0.0
    %5786 = vmatpush1.msra.mxu0 0.0
    %5787 = vmatprep.subr.mxu0 0.0
    %5788 = vmatpush1.msra.mxu0 0.0
    %5789 = vmatprep.subr.mxu0 0.0
    %5790 = vmatpush1.msra.mxu0 0.0
    %5791 = vmatprep.subr.mxu0 0.0
    %5792 = vmatpush1.msra.mxu0 0.0
    %5793 = vmatprep.subr.mxu0 0.0
    %5794 = vmatpush1.msra.mxu0 0.0
    %5795 = vmatprep.subr.mxu0 0.0
    %5796 = vmatpush1.msra.mxu0 0.0
    %5797 = vmatprep.subr.mxu0 0.0
    %5798 = vmatpush1.msra.mxu0 0.0
    %5799 = vmatprep.subr.mxu0 0.0
    %5800 = vmatpush1.msra.mxu0 0.0
    %5801 = vmatprep.subr.mxu0 0.0
    %5802 = vmatpush1.msra.mxu0 0.0
    %5803 = vmatprep.subr.mxu0 0.0
    %5804 = vmatpush1.msra.mxu0 0.0
    %5805 = vmatprep.mubr.f32.mxu0 0.0
    %5806 = vmatmul.mubr.f32.gmra.mrb[0].mxu0 %v5739
    %v5807 = vpop.f32.mrb[0].mxu0
    %v5808 = vadd.f32 0.0, %v5807
    %v5809 = vpop.f32.mrb[0].mxu0
    %v5810 = vadd.f32 0.0, %v5809
    %5811 = vdwg.mxu0
    %5812 = vmatprep.subr.mxu0 %v5717
    %5813 = vmatpush1.msra.mxu0 %v5716
    %5814 = vmatprep.subr.mxu0 %v5721
    %5815 = vmatpush1.msra.mxu0 %v5720
    %5816 = vmatprep.subr.mxu0 %v5725
    %5817 = vmatpush1.msra.mxu0 %v5724
    %5818 = vmatprep.subr.mxu0 %v5729
    %5819 = vmatpush1.msra.mxu0 %v5728
    %5820 = vmatprep.subr.mxu0 %v5733
    %5821 = vmatpush1.msra.mxu0 %v5732
    %5822 = vmatprep.subr.mxu0 %v5737
    %5823 = vmatpush1.msra.mxu0 %v5736
    %5824 = vmatprep.subr.mxu0 0.0
    %5825 = vmatpush1.msra.mxu0 0.0
    %5826 = vmatprep.subr.mxu0 0.0
    %5827 = vmatpush1.msra.mxu0 0.0
    %5828 = vmatprep.subr.mxu0 0.0
    %5829 = vmatpush1.msra.mxu0 0.0
    %5830 = vmatprep.subr.mxu0 0.0
    %5831 = vmatpush1.msra.mxu0 0.0
    %5832 = vmatprep.subr.mxu0 0.0
    %5833 = vmatpush1.msra.mxu0 0.0
    %5834 = vmatprep.subr.mxu0 0.0
    %5835 = vmatpush1.msra.mxu0 0.0
    %5836 = vmatprep.subr.mxu0 0.0
    %5837 = vmatpush1.msra.mxu0 0.0
    %5838 = vmatprep.subr.mxu0 0.0
    %5839 = vmatpush1.msra.mxu0 0.0
    %5840 = vmatprep.subr.mxu0 0.0
    %5841 = vmatpush1.msra.mxu0 0.0
    %5842 = vmatprep.subr.mxu0 0.0
    %5843 = vmatpush1.msra.mxu0 0.0
    %5844 = vmatprep.subr.mxu0 0.0
    %5845 = vmatpush1.msra.mxu0 0.0
    %5846 = vmatprep.subr.mxu0 0.0
    %5847 = vmatpush1.msra.mxu0 0.0
    %5848 = vmatprep.subr.mxu0 0.0
    %5849 = vmatpush1.msra.mxu0 0.0
    %5850 = vmatprep.subr.mxu0 0.0
    %5851 = vmatpush1.msra.mxu0 0.0
    %5852 = vmatprep.subr.mxu0 0.0
    %5853 = vmatpush1.msra.mxu0 0.0
    %5854 = vmatprep.subr.mxu0 0.0
    %5855 = vmatpush1.msra.mxu0 0.0
    %5856 = vmatprep.subr.mxu0 0.0
    %5857 = vmatpush1.msra.mxu0 0.0
    %5858 = vmatprep.subr.mxu0 0.0
    %5859 = vmatpush1.msra.mxu0 0.0
    %5860 = vmatprep.subr.mxu0 0.0
    %5861 = vmatpush1.msra.mxu0 0.0
    %5862 = vmatprep.subr.mxu0 0.0
    %5863 = vmatpush1.msra.mxu0 0.0
    %5864 = vmatprep.subr.mxu0 0.0
    %5865 = vmatpush1.msra.mxu0 0.0
    %5866 = vmatprep.subr.mxu0 0.0
    %5867 = vmatpush1.msra.mxu0 0.0
    %5868 = vmatprep.subr.mxu0 0.0
    %5869 = vmatpush1.msra.mxu0 0.0
    %5870 = vmatprep.subr.mxu0 0.0
    %5871 = vmatpush1.msra.mxu0 0.0
    %5872 = vmatprep.subr.mxu0 0.0
    %5873 = vmatpush1.msra.mxu0 0.0
    %5874 = vmatprep.subr.mxu0 0.0
    %5875 = vmatpush1.msra.mxu0 0.0
    %5876 = vmatprep.mubr.f32.mxu0 0.0
    %5877 = vmatmul.mubr.f32.gmra.mrb[0].mxu0 %v5739
    %v5878 = vpop.f32.mrb[0].mxu0
    %v5879 = vadd.f32 0.0, %v5878
    %v5880 = vpop.f32.mrb[0].mxu0
    %v5881 = vadd.f32 0.0, %v5880
    %5882 = vdwg.mxu0
    %v5883 = vld [vmem:[#allocation2 + $0x140] sm:$0xff]
    %v5884 = vld [vmem:[#allocation2 + $0x148] sm:$0xff]
    %v5885 = vld [vmem:[#allocation2 + $0x150] sm:$0xff]
    %v5886 = vld [vmem:[#allocation2 + $0x158] sm:$0xff]
    %v5887 = vadd.f32 %v5883, %v5497
    %v5888 = vadd.f32 %v5884, %v5499
    %v5889 = vadd.f32 %v5885, %v5568
    %v5890 = vadd.f32 %v5886, %v5570
    %v5891 = vtanh.pop %v5887
    %v5892 = vtanh.pop %v5888
    %v5893 = vtanh.pop %v5889
    %v5894 = vtanh.pop %v5890
    %v5895 = vmul.f32 %v5891, 0.5
    %v5896 = vadd.f32 %v5895, 0.5
    %v5897 = vmul.f32 %v5892, 0.5
    %v5898 = vadd.f32 %v5897, 0.5
    %v5899 = vmul.f32 %v5894, 0.5
    %v5900 = vadd.f32 %v5899, 0.5
    %v5901 = vmul.f32 %v5898, %v5352
    %v5902 = vmul.f32 %v5896, %v5893
    %v5903 = vadd.f32 %v5901, %v5902
    %v5904 = vtanh.pop %v5903
    %v5905 = vmul.f32 %v5900, %v5904
    %v5906 = vadd.f32 %v5639, %v556
    %v5907 = vadd.f32 %v5641, %v560
    %v5908 = vadd.f32 %v5710, %v564
    %v5909 = vadd.f32 %v5712, %v568
    %v5910 = vadd.f32 %v5906, %v5808
    %v5911 = vadd.f32 %v5907, %v5810
    %v5912 = vadd.f32 %v5908, %v5879
    %v5913 = vadd.f32 %v5909, %v5881
    %v5914 = vtanh.pop %v5910
    %v5915 = vtanh.pop %v5911
    %v5916 = vtanh.pop %v5912
    %v5917 = vtanh.pop %v5913
    %v5918 = vmul.f32 %v5914, 0.5
    %v5919 = vadd.f32 %v5918, 0.5
    %v5920 = vmul.f32 %v5915, 0.5
    %v5921 = vadd.f32 %v5920, 0.5
    %v5922 = vmul.f32 %v5917, 0.5
    %v5923 = vadd.f32 %v5922, 0.5
    %v5924 = vmul.f32 %v5921, %v5375
    %v5925 = vmul.f32 %v5919, %v5916
    %v5926 = vadd.f32 %v5924, %v5925
    %v5927 = vtanh.pop %v5926
    %v5928 = vmul.f32 %v5923, %v5927
    %5929 = vst.msk [vmem:[#allocation3 + $0x48] sm:$0xff] %vm640, %v5928
    %v5930 = vld [vmem:[#allocation4] sm:$0xff]
    %v5931 = vld [vmem:[#allocation4 + $0x8] sm:$0xff]
    %v5932 = vld [vmem:[#allocation4 + $0x10] sm:$0xff]
    %v5933 = vld [vmem:[#allocation4 + $0x18] sm:$0xff]
    %v5934 = vld [vmem:[#allocation4 + $0x20] sm:$0xff]
    %v5935 = vld [vmem:[#allocation4 + $0x28] sm:$0xff]
    %v5936 = vld [vmem:[#allocation4 + $0x30] sm:$0xff]
    %v5937 = vld [vmem:[#allocation4 + $0x38] sm:$0xff]
    %v5938 = vld [vmem:[#allocation4 + $0x40] sm:$0xff]
    %v5939 = vld [vmem:[#allocation4 + $0x48] sm:$0xff]
    %v5940 = vld [vmem:[#allocation4 + $0x50] sm:$0xff]
    %v5941 = vld [vmem:[#allocation4 + $0x58] sm:$0xff]
    %v5942 = vld [vmem:[#allocation4 + $0x60] sm:$0xff]
    %v5943 = vld [vmem:[#allocation4 + $0x68] sm:$0xff]
    %v5944 = vld [vmem:[#allocation4 + $0x70] sm:$0xff]
    %v5945 = vld [vmem:[#allocation4 + $0x78] sm:$0xff]
    %v5946 = vld [vmem:[#allocation4 + $0x80] sm:$0xff]
    %v5947 = vld [vmem:[#allocation4 + $0x88] sm:$0xff]
    %v5948 = vld [vmem:[#allocation4 + $0x90] sm:$0xff]
    %v5949 = vld [vmem:[#allocation4 + $0x98] sm:$0xff]
    %v5950 = vld [vmem:[#allocation4 + $0xa0] sm:$0xff]
    %v5951 = vld [vmem:[#allocation4 + $0xa8] sm:$0xff]
    %v5952 = vld [vmem:[#allocation4 + $0xb0] sm:$0xff]
    %v5953 = vld [vmem:[#allocation4 + $0xb8] sm:$0xff]
    %v5954 = vld [vmem:[#allocation4 + $0xc0] sm:$0xff]
    %v5955 = vld [vmem:[#allocation4 + $0xc8] sm:$0xff]
    %v5956 = vld [vmem:[#allocation4 + $0xd0] sm:$0xff]
    %v5957 = vld [vmem:[#allocation4 + $0xd8] sm:$0xff]
    %v5958 = vld [vmem:[#allocation4 + $0xe0] sm:$0xff]
    %v5959 = vld [vmem:[#allocation4 + $0xe8] sm:$0xff]
    %v5960 = vld [vmem:[#allocation4 + $0xf0] sm:$0xff]
    %v5961 = vld [vmem:[#allocation4 + $0xf8] sm:$0xff]
    %v5962 = vld [vmem:[#allocation4 + $0x100] sm:$0xff]
    %v5963 = vld [vmem:[#allocation4 + $0x108] sm:$0xff]
    %v5964 = vld [vmem:[#allocation4 + $0x110] sm:$0xff]
    %v5965 = vld [vmem:[#allocation4 + $0x118] sm:$0xff]
    %v5966 = vld [vmem:[#allocation4 + $0x120] sm:$0xff]
    %v5967 = vld [vmem:[#allocation4 + $0x128] sm:$0xff]
    %v5968 = vld [vmem:[#allocation4 + $0x130] sm:$0xff]
    %v5969 = vld [vmem:[#allocation4 + $0x138] sm:$0xff]
    %v5970 = vld [vmem:[#allocation4 + $0x140] sm:$0xff]
    %v5971 = vld [vmem:[#allocation4 + $0x148] sm:$0xff]
    %v5972 = vld [vmem:[#allocation4 + $0x150] sm:$0xff]
    %v5973 = vld [vmem:[#allocation4 + $0x158] sm:$0xff]
    %v5974 = vld [vmem:[#allocation4 + $0x160] sm:$0xff]
    %v5975 = vld [vmem:[#allocation4 + $0x168] sm:$0xff]
    %v5976 = vld [vmem:[#allocation4 + $0x170] sm:$0xff]
    %v5977 = vld [vmem:[#allocation4 + $0x178] sm:$0xff]
    %v5979 = vsel %vm640, %v5905, 0
    %5981 = vmatprep.subr.mxu0 %v5931
    %5982 = vmatpush1.msra.mxu0 %v5930
    %5983 = vmatprep.subr.mxu0 %v5939
    %5984 = vmatpush1.msra.mxu0 %v5938
    %5985 = vmatprep.subr.mxu0 %v5947
    %5986 = vmatpush1.msra.mxu0 %v5946
    %5987 = vmatprep.subr.mxu0 %v5955
    %5988 = vmatpush1.msra.mxu0 %v5954
    %5989 = vmatprep.subr.mxu0 %v5963
    %5990 = vmatpush1.msra.mxu0 %v5962
    %5991 = vmatprep.subr.mxu0 %v5971
    %5992 = vmatpush1.msra.mxu0 %v5970
    %5993 = vmatprep.subr.mxu0 0.0
    %5994 = vmatpush1.msra.mxu0 0.0
    %5995 = vmatprep.subr.mxu0 0.0
    %5996 = vmatpush1.msra.mxu0 0.0
    %5997 = vmatprep.subr.mxu0 0.0
    %5998 = vmatpush1.msra.mxu0 0.0
    %5999 = vmatprep.subr.mxu0 0.0
    %6000 = vmatpush1.msra.mxu0 0.0
    %6001 = vmatprep.subr.mxu0 0.0
    %6002 = vmatpush1.msra.mxu0 0.0
    %6003 = vmatprep.subr.mxu0 0.0
    %6004 = vmatpush1.msra.mxu0 0.0
    %6005 = vmatprep.subr.mxu0 0.0
    %6006 = vmatpush1.msra.mxu0 0.0
    %6007 = vmatprep.subr.mxu0 0.0
    %6008 = vmatpush1.msra.mxu0 0.0
    %6009 = vmatprep.subr.mxu0 0.0
    %6010 = vmatpush1.msra.mxu0 0.0
    %6011 = vmatprep.subr.mxu0 0.0
    %6012 = vmatpush1.msra.mxu0 0.0
    %6013 = vmatprep.subr.mxu0 0.0
    %6014 = vmatpush1.msra.mxu0 0.0
    %6015 = vmatprep.subr.mxu0 0.0
    %6016 = vmatpush1.msra.mxu0 0.0
    %6017 = vmatprep.subr.mxu0 0.0
    %6018 = vmatpush1.msra.mxu0 0.0
    %6019 = vmatprep.subr.mxu0 0.0
    %6020 = vmatpush1.msra.mxu0 0.0
    %6021 = vmatprep.subr.mxu0 0.0
    %6022 = vmatpush1.msra.mxu0 0.0
    %6023 = vmatprep.subr.mxu0 0.0
    %6024 = vmatpush1.msra.mxu0 0.0
    %6025 = vmatprep.subr.mxu0 0.0
    %6026 = vmatpush1.msra.mxu0 0.0
    %6027 = vmatprep.subr.mxu0 0.0
    %6028 = vmatpush1.msra.mxu0 0.0
    %6029 = vmatprep.subr.mxu0 0.0
    %6030 = vmatpush1.msra.mxu0 0.0
    %6031 = vmatprep.subr.mxu0 0.0
    %6032 = vmatpush1.msra.mxu0 0.0
    %6033 = vmatprep.subr.mxu0 0.0
    %6034 = vmatpush1.msra.mxu0 0.0
    %6035 = vmatprep.subr.mxu0 0.0
    %6036 = vmatpush1.msra.mxu0 0.0
    %6037 = vmatprep.subr.mxu0 0.0
    %6038 = vmatpush1.msra.mxu0 0.0
    %6039 = vmatprep.subr.mxu0 0.0
    %6040 = vmatpush1.msra.mxu0 0.0
    %6041 = vmatprep.subr.mxu0 0.0
    %6042 = vmatpush1.msra.mxu0 0.0
    %6043 = vmatprep.subr.mxu0 0.0
    %6044 = vmatpush1.msra.mxu0 0.0
    %6045 = vmatprep.mubr.f32.mxu0 0.0
    %6046 = vmatmul.mubr.f32.gmra.mrb[0].mxu0 %v5979
    %v6047 = vpop.f32.mrb[0].mxu0
    %v6048 = vadd.f32 0.0, %v6047
    %v6049 = vpop.f32.mrb[0].mxu0
    %v6050 = vadd.f32 0.0, %v6049
    %6051 = vdwg.mxu0
    %6052 = vmatprep.subr.mxu0 %v5933
    %6053 = vmatpush1.msra.mxu0 %v5932
    %6054 = vmatprep.subr.mxu0 %v5941
    %6055 = vmatpush1.msra.mxu0 %v5940
    %6056 = vmatprep.subr.mxu0 %v5949
    %6057 = vmatpush1.msra.mxu0 %v5948
    %6058 = vmatprep.subr.mxu0 %v5957
    %6059 = vmatpush1.msra.mxu0 %v5956
    %6060 = vmatprep.subr.mxu0 %v5965
    %6061 = vmatpush1.msra.mxu0 %v5964
    %6062 = vmatprep.subr.mxu0 %v5973
    %6063 = vmatpush1.msra.mxu0 %v5972
    %6064 = vmatprep.subr.mxu0 0.0
    %6065 = vmatpush1.msra.mxu0 0.0
    %6066 = vmatprep.subr.mxu0 0.0
    %6067 = vmatpush1.msra.mxu0 0.0
    %6068 = vmatprep.subr.mxu0 0.0
    %6069 = vmatpush1.msra.mxu0 0.0
    %6070 = vmatprep.subr.mxu0 0.0
    %6071 = vmatpush1.msra.mxu0 0.0
    %6072 = vmatprep.subr.mxu0 0.0
    %6073 = vmatpush1.msra.mxu0 0.0
    %6074 = vmatprep.subr.mxu0 0.0
    %6075 = vmatpush1.msra.mxu0 0.0
    %6076 = vmatprep.subr.mxu0 0.0
    %6077 = vmatpush1.msra.mxu0 0.0
    %6078 = vmatprep.subr.mxu0 0.0
    %6079 = vmatpush1.msra.mxu0 0.0
    %6080 = vmatprep.subr.mxu0 0.0
    %6081 = vmatpush1.msra.mxu0 0.0
    %6082 = vmatprep.subr.mxu0 0.0
    %6083 = vmatpush1.msra.mxu0 0.0
    %6084 = vmatprep.subr.mxu0 0.0
    %6085 = vmatpush1.msra.mxu0 0.0
    %6086 = vmatprep.subr.mxu0 0.0
    %6087 = vmatpush1.msra.mxu0 0.0
    %6088 = vmatprep.subr.mxu0 0.0
    %6089 = vmatpush1.msra.mxu0 0.0
    %6090 = vmatprep.subr.mxu0 0.0
    %6091 = vmatpush1.msra.mxu0 0.0
    %6092 = vmatprep.subr.mxu0 0.0
    %6093 = vmatpush1.msra.mxu0 0.0
    %6094 = vmatprep.subr.mxu0 0.0
    %6095 = vmatpush1.msra.mxu0 0.0
    %6096 = vmatprep.subr.mxu0 0.0
    %6097 = vmatpush1.msra.mxu0 0.0
    %6098 = vmatprep.subr.mxu0 0.0
    %6099 = vmatpush1.msra.mxu0 0.0
    %6100 = vmatprep.subr.mxu0 0.0
    %6101 = vmatpush1.msra.mxu0 0.0
    %6102 = vmatprep.subr.mxu0 0.0
    %6103 = vmatpush1.msra.mxu0 0.0
    %6104 = vmatprep.subr.mxu0 0.0
    %6105 = vmatpush1.msra.mxu0 0.0
    %6106 = vmatprep.subr.mxu0 0.0
    %6107 = vmatpush1.msra.mxu0 0.0
    %6108 = vmatprep.subr.mxu0 0.0
    %6109 = vmatpush1.msra.mxu0 0.0
    %6110 = vmatprep.subr.mxu0 0.0
    %6111 = vmatpush1.msra.mxu0 0.0
    %6112 = vmatprep.subr.mxu0 0.0
    %6113 = vmatpush1.msra.mxu0 0.0
    %6114 = vmatprep.subr.mxu0 0.0
    %6115 = vmatpush1.msra.mxu0 0.0
    %6116 = vmatprep.mubr.f32.mxu0 0.0
    %6117 = vmatmul.mubr.f32.gmra.mrb[0].mxu0 %v5979
    %v6118 = vpop.f32.mrb[0].mxu0
    %v6119 = vadd.f32 0.0, %v6118
    %v6120 = vpop.f32.mrb[0].mxu0
    %v6121 = vadd.f32 0.0, %v6120
    %6122 = vdwg.mxu0
    %6123 = vmatprep.subr.mxu0 %v5935
    %6124 = vmatpush1.msra.mxu0 %v5934
    %6125 = vmatprep.subr.mxu0 %v5943
    %6126 = vmatpush1.msra.mxu0 %v5942
    %6127 = vmatprep.subr.mxu0 %v5951
    %6128 = vmatpush1.msra.mxu0 %v5950
    %6129 = vmatprep.subr.mxu0 %v5959
    %6130 = vmatpush1.msra.mxu0 %v5958
    %6131 = vmatprep.subr.mxu0 %v5967
    %6132 = vmatpush1.msra.mxu0 %v5966
    %6133 = vmatprep.subr.mxu0 %v5975
    %6134 = vmatpush1.msra.mxu0 %v5974
    %6135 = vmatprep.subr.mxu0 0.0
    %6136 = vmatpush1.msra.mxu0 0.0
    %6137 = vmatprep.subr.mxu0 0.0
    %6138 = vmatpush1.msra.mxu0 0.0
    %6139 = vmatprep.subr.mxu0 0.0
    %6140 = vmatpush1.msra.mxu0 0.0
    %6141 = vmatprep.subr.mxu0 0.0
    %6142 = vmatpush1.msra.mxu0 0.0
    %6143 = vmatprep.subr.mxu0 0.0
    %6144 = vmatpush1.msra.mxu0 0.0
    %6145 = vmatprep.subr.mxu0 0.0
    %6146 = vmatpush1.msra.mxu0 0.0
    %6147 = vmatprep.subr.mxu0 0.0
    %6148 = vmatpush1.msra.mxu0 0.0
    %6149 = vmatprep.subr.mxu0 0.0
    %6150 = vmatpush1.msra.mxu0 0.0
    %6151 = vmatprep.subr.mxu0 0.0
    %6152 = vmatpush1.msra.mxu0 0.0
    %6153 = vmatprep.subr.mxu0 0.0
    %6154 = vmatpush1.msra.mxu0 0.0
    %6155 = vmatprep.subr.mxu0 0.0
    %6156 = vmatpush1.msra.mxu0 0.0
    %6157 = vmatprep.subr.mxu0 0.0
    %6158 = vmatpush1.msra.mxu0 0.0
    %6159 = vmatprep.subr.mxu0 0.0
    %6160 = vmatpush1.msra.mxu0 0.0
    %6161 = vmatprep.subr.mxu0 0.0
    %6162 = vmatpush1.msra.mxu0 0.0
    %6163 = vmatprep.subr.mxu0 0.0
    %6164 = vmatpush1.msra.mxu0 0.0
    %6165 = vmatprep.subr.mxu0 0.0
    %6166 = vmatpush1.msra.mxu0 0.0
    %6167 = vmatprep.subr.mxu0 0.0
    %6168 = vmatpush1.msra.mxu0 0.0
    %6169 = vmatprep.subr.mxu0 0.0
    %6170 = vmatpush1.msra.mxu0 0.0
    %6171 = vmatprep.subr.mxu0 0.0
    %6172 = vmatpush1.msra.mxu0 0.0
    %6173 = vmatprep.subr.mxu0 0.0
    %6174 = vmatpush1.msra.mxu0 0.0
    %6175 = vmatprep.subr.mxu0 0.0
    %6176 = vmatpush1.msra.mxu0 0.0
    %6177 = vmatprep.subr.mxu0 0.0
    %6178 = vmatpush1.msra.mxu0 0.0
    %6179 = vmatprep.subr.mxu0 0.0
    %6180 = vmatpush1.msra.mxu0 0.0
    %6181 = vmatprep.subr.mxu0 0.0
    %6182 = vmatpush1.msra.mxu0 0.0
    %6183 = vmatprep.subr.mxu0 0.0
    %6184 = vmatpush1.msra.mxu0 0.0
    %6185 = vmatprep.subr.mxu0 0.0
    %6186 = vmatpush1.msra.mxu0 0.0
    %6187 = vmatprep.mubr.f32.mxu0 0.0
    %6188 = vmatmul.mubr.f32.gmra.mrb[0].mxu0 %v5979
    %v6189 = vpop.f32.mrb[0].mxu0
    %v6190 = vadd.f32 0.0, %v6189
    %v6191 = vpop.f32.mrb[0].mxu0
    %v6192 = vadd.f32 0.0, %v6191
    %6193 = vdwg.mxu0
    %6194 = vmatprep.subr.mxu0 %v5937
    %6195 = vmatpush1.msra.mxu0 %v5936
    %6196 = vmatprep.subr.mxu0 %v5945
    %6197 = vmatpush1.msra.mxu0 %v5944
    %6198 = vmatprep.subr.mxu0 %v5953
    %6199 = vmatpush1.msra.mxu0 %v5952
    %6200 = vmatprep.subr.mxu0 %v5961
    %6201 = vmatpush1.msra.mxu0 %v5960
    %6202 = vmatprep.subr.mxu0 %v5969
    %6203 = vmatpush1.msra.mxu0 %v5968
    %6204 = vmatprep.subr.mxu0 %v5977
    %6205 = vmatpush1.msra.mxu0 %v5976
    %6206 = vmatprep.subr.mxu0 0.0
    %6207 = vmatpush1.msra.mxu0 0.0
    %6208 = vmatprep.subr.mxu0 0.0
    %6209 = vmatpush1.msra.mxu0 0.0
    %6210 = vmatprep.subr.mxu0 0.0
    %6211 = vmatpush1.msra.mxu0 0.0
    %6212 = vmatprep.subr.mxu0 0.0
    %6213 = vmatpush1.msra.mxu0 0.0
    %6214 = vmatprep.subr.mxu0 0.0
    %6215 = vmatpush1.msra.mxu0 0.0
    %6216 = vmatprep.subr.mxu0 0.0
    %6217 = vmatpush1.msra.mxu0 0.0
    %6218 = vmatprep.subr.mxu0 0.0
    %6219 = vmatpush1.msra.mxu0 0.0
    %6220 = vmatprep.subr.mxu0 0.0
    %6221 = vmatpush1.msra.mxu0 0.0
    %6222 = vmatprep.subr.mxu0 0.0
    %6223 = vmatpush1.msra.mxu0 0.0
    %6224 = vmatprep.subr.mxu0 0.0
    %6225 = vmatpush1.msra.mxu0 0.0
    %6226 = vmatprep.subr.mxu0 0.0
    %6227 = vmatpush1.msra.mxu0 0.0
    %6228 = vmatprep.subr.mxu0 0.0
    %6229 = vmatpush1.msra.mxu0 0.0
    %6230 = vmatprep.subr.mxu0 0.0
    %6231 = vmatpush1.msra.mxu0 0.0
    %6232 = vmatprep.subr.mxu0 0.0
    %6233 = vmatpush1.msra.mxu0 0.0
    %6234 = vmatprep.subr.mxu0 0.0
    %6235 = vmatpush1.msra.mxu0 0.0
    %6236 = vmatprep.subr.mxu0 0.0
    %6237 = vmatpush1.msra.mxu0 0.0
    %6238 = vmatprep.subr.mxu0 0.0
    %6239 = vmatpush1.msra.mxu0 0.0
    %6240 = vmatprep.subr.mxu0 0.0
    %6241 = vmatpush1.msra.mxu0 0.0
    %6242 = vmatprep.subr.mxu0 0.0
    %6243 = vmatpush1.msra.mxu0 0.0
    %6244 = vmatprep.subr.mxu0 0.0
    %6245 = vmatpush1.msra.mxu0 0.0
    %6246 = vmatprep.subr.mxu0 0.0
    %6247 = vmatpush1.msra.mxu0 0.0
    %6248 = vmatprep.subr.mxu0 0.0
    %6249 = vmatpush1.msra.mxu0 0.0
    %6250 = vmatprep.subr.mxu0 0.0
    %6251 = vmatpush1.msra.mxu0 0.0
    %6252 = vmatprep.subr.mxu0 0.0
    %6253 = vmatpush1.msra.mxu0 0.0
    %6254 = vmatprep.subr.mxu0 0.0
    %6255 = vmatpush1.msra.mxu0 0.0
    %6256 = vmatprep.subr.mxu0 0.0
    %6257 = vmatpush1.msra.mxu0 0.0
    %6258 = vmatprep.mubr.f32.mxu0 0.0
    %6259 = vmatmul.mubr.f32.gmra.mrb[0].mxu0 %v5979
    %v6260 = vpop.f32.mrb[0].mxu0
    %v6261 = vadd.f32 0.0, %v6260
    %v6262 = vpop.f32.mrb[0].mxu0
    %v6263 = vadd.f32 0.0, %v6262
    %6264 = vdwg.mxu0
    %v6265 = vld [vmem:[#allocation7] sm:$0xff]
    %v6266 = vld [vmem:[#allocation7 + $0x8] sm:$0xff]
    %v6267 = vld [vmem:[#allocation7 + $0x10] sm:$0xff]
    %v6268 = vld [vmem:[#allocation7 + $0x18] sm:$0xff]
    %v6269 = vld [vmem:[#allocation7 + $0x20] sm:$0xff]
    %v6270 = vld [vmem:[#allocation7 + $0x28] sm:$0xff]
    %v6271 = vld [vmem:[#allocation7 + $0x30] sm:$0xff]
    %v6272 = vld [vmem:[#allocation7 + $0x38] sm:$0xff]
    %v6273 = vld [vmem:[#allocation7 + $0x40] sm:$0xff]
    %v6274 = vld [vmem:[#allocation7 + $0x48] sm:$0xff]
    %v6275 = vld [vmem:[#allocation7 + $0x50] sm:$0xff]
    %v6276 = vld [vmem:[#allocation7 + $0x58] sm:$0xff]
    %v6277 = vld [vmem:[#allocation7 + $0x60] sm:$0xff]
    %v6278 = vld [vmem:[#allocation7 + $0x68] sm:$0xff]
    %v6279 = vld [vmem:[#allocation7 + $0x70] sm:$0xff]
    %v6280 = vld [vmem:[#allocation7 + $0x78] sm:$0xff]
    %v6281 = vld [vmem:[#allocation7 + $0x80] sm:$0xff]
    %v6282 = vld [vmem:[#allocation7 + $0x88] sm:$0xff]
    %v6283 = vld [vmem:[#allocation7 + $0x90] sm:$0xff]
    %v6284 = vld [vmem:[#allocation7 + $0x98] sm:$0xff]
    %v6285 = vld [vmem:[#allocation7 + $0xa0] sm:$0xff]
    %v6286 = vld [vmem:[#allocation7 + $0xa8] sm:$0xff]
    %v6287 = vld [vmem:[#allocation7 + $0xb0] sm:$0xff]
    %v6288 = vld [vmem:[#allocation7 + $0xb8] sm:$0xff]
    %v6290 = vsel %vm640, %v5928, 0
    %6292 = vmatprep.subr.mxu0 %v6266
    %6293 = vmatpush1.msra.mxu0 %v6265
    %6294 = vmatprep.subr.mxu0 %v6270
    %6295 = vmatpush1.msra.mxu0 %v6269
    %6296 = vmatprep.subr.mxu0 %v6274
    %6297 = vmatpush1.msra.mxu0 %v6273
    %6298 = vmatprep.subr.mxu0 %v6278
    %6299 = vmatpush1.msra.mxu0 %v6277
    %6300 = vmatprep.subr.mxu0 %v6282
    %6301 = vmatpush1.msra.mxu0 %v6281
    %6302 = vmatprep.subr.mxu0 %v6286
    %6303 = vmatpush1.msra.mxu0 %v6285
    %6304 = vmatprep.subr.mxu0 0.0
    %6305 = vmatpush1.msra.mxu0 0.0
    %6306 = vmatprep.subr.mxu0 0.0
    %6307 = vmatpush1.msra.mxu0 0.0
    %6308 = vmatprep.subr.mxu0 0.0
    %6309 = vmatpush1.msra.mxu0 0.0
    %6310 = vmatprep.subr.mxu0 0.0
    %6311 = vmatpush1.msra.mxu0 0.0
    %6312 = vmatprep.subr.mxu0 0.0
    %6313 = vmatpush1.msra.mxu0 0.0
    %6314 = vmatprep.subr.mxu0 0.0
    %6315 = vmatpush1.msra.mxu0 0.0
    %6316 = vmatprep.subr.mxu0 0.0
    %6317 = vmatpush1.msra.mxu0 0.0
    %6318 = vmatprep.subr.mxu0 0.0
    %6319 = vmatpush1.msra.mxu0 0.0
    %6320 = vmatprep.subr.mxu0 0.0
    %6321 = vmatpush1.msra.mxu0 0.0
    %6322 = vmatprep.subr.mxu0 0.0
    %6323 = vmatpush1.msra.mxu0 0.0
    %6324 = vmatprep.subr.mxu0 0.0
    %6325 = vmatpush1.msra.mxu0 0.0
    %6326 = vmatprep.subr.mxu0 0.0
    %6327 = vmatpush1.msra.mxu0 0.0
    %6328 = vmatprep.subr.mxu0 0.0
    %6329 = vmatpush1.msra.mxu0 0.0
    %6330 = vmatprep.subr.mxu0 0.0
    %6331 = vmatpush1.msra.mxu0 0.0
    %6332 = vmatprep.subr.mxu0 0.0
    %6333 = vmatpush1.msra.mxu0 0.0
    %6334 = vmatprep.subr.mxu0 0.0
    %6335 = vmatpush1.msra.mxu0 0.0
    %6336 = vmatprep.subr.mxu0 0.0
    %6337 = vmatpush1.msra.mxu0 0.0
    %6338 = vmatprep.subr.mxu0 0.0
    %6339 = vmatpush1.msra.mxu0 0.0
    %6340 = vmatprep.subr.mxu0 0.0
    %6341 = vmatpush1.msra.mxu0 0.0
    %6342 = vmatprep.subr.mxu0 0.0
    %6343 = vmatpush1.msra.mxu0 0.0
    %6344 = vmatprep.subr.mxu0 0.0
    %6345 = vmatpush1.msra.mxu0 0.0
    %6346 = vmatprep.subr.mxu0 0.0
    %6347 = vmatpush1.msra.mxu0 0.0
    %6348 = vmatprep.subr.mxu0 0.0
    %6349 = vmatpush1.msra.mxu0 0.0
    %6350 = vmatprep.subr.mxu0 0.0
    %6351 = vmatpush1.msra.mxu0 0.0
    %6352 = vmatprep.subr.mxu0 0.0
    %6353 = vmatpush1.msra.mxu0 0.0
    %6354 = vmatprep.subr.mxu0 0.0
    %6355 = vmatpush1.msra.mxu0 0.0
    %6356 = vmatprep.mubr.f32.mxu0 0.0
    %6357 = vmatmul.mubr.f32.gmra.mrb[0].mxu0 %v6290
    %v6358 = vpop.f32.mrb[0].mxu0
    %v6359 = vadd.f32 0.0, %v6358
    %v6360 = vpop.f32.mrb[0].mxu0
    %v6361 = vadd.f32 0.0, %v6360
    %6362 = vdwg.mxu0
    %6363 = vmatprep.subr.mxu0 %v6268
    %6364 = vmatpush1.msra.mxu0 %v6267
    %6365 = vmatprep.subr.mxu0 %v6272
    %6366 = vmatpush1.msra.mxu0 %v6271
    %6367 = vmatprep.subr.mxu0 %v6276
    %6368 = vmatpush1.msra.mxu0 %v6275
    %6369 = vmatprep.subr.mxu0 %v6280
    %6370 = vmatpush1.msra.mxu0 %v6279
    %6371 = vmatprep.subr.mxu0 %v6284
    %6372 = vmatpush1.msra.mxu0 %v6283
    %6373 = vmatprep.subr.mxu0 %v6288
    %6374 = vmatpush1.msra.mxu0 %v6287
    %6375 = vmatprep.subr.mxu0 0.0
    %6376 = vmatpush1.msra.mxu0 0.0
    %6377 = vmatprep.subr.mxu0 0.0
    %6378 = vmatpush1.msra.mxu0 0.0
    %6379 = vmatprep.subr.mxu0 0.0
    %6380 = vmatpush1.msra.mxu0 0.0
    %6381 = vmatprep.subr.mxu0 0.0
    %6382 = vmatpush1.msra.mxu0 0.0
    %6383 = vmatprep.subr.mxu0 0.0
    %6384 = vmatpush1.msra.mxu0 0.0
    %6385 = vmatprep.subr.mxu0 0.0
    %6386 = vmatpush1.msra.mxu0 0.0
    %6387 = vmatprep.subr.mxu0 0.0
    %6388 = vmatpush1.msra.mxu0 0.0
    %6389 = vmatprep.subr.mxu0 0.0
    %6390 = vmatpush1.msra.mxu0 0.0
    %6391 = vmatprep.subr.mxu0 0.0
    %6392 = vmatpush1.msra.mxu0 0.0
    %6393 = vmatprep.subr.mxu0 0.0
    %6394 = vmatpush1.msra.mxu0 0.0
    %6395 = vmatprep.subr.mxu0 0.0
    %6396 = vmatpush1.msra.mxu0 0.0
    %6397 = vmatprep.subr.mxu0 0.0
    %6398 = vmatpush1.msra.mxu0 0.0
    %6399 = vmatprep.subr.mxu0 0.0
    %6400 = vmatpush1.msra.mxu0 0.0
    %6401 = vmatprep.subr.mxu0 0.0
    %6402 = vmatpush1.msra.mxu0 0.0
    %6403 = vmatprep.subr.mxu0 0.0
    %6404 = vmatpush1.msra.mxu0 0.0
    %6405 = vmatprep.subr.mxu0 0.0
    %6406 = vmatpush1.msra.mxu0 0.0
    %6407 = vmatprep.subr.mxu0 0.0
    %6408 = vmatpush1.msra.mxu0 0.0
    %6409 = vmatprep.subr.mxu0 0.0
    %6410 = vmatpush1.msra.mxu0 0.0
    %6411 = vmatprep.subr.mxu0 0.0
    %6412 = vmatpush1.msra.mxu0 0.0
    %6413 = vmatprep.subr.mxu0 0.0
    %6414 = vmatpush1.msra.mxu0 0.0
    %6415 = vmatprep.subr.mxu0 0.0
    %6416 = vmatpush1.msra.mxu0 0.0
    %6417 = vmatprep.subr.mxu0 0.0
    %6418 = vmatpush1.msra.mxu0 0.0
    %6419 = vmatprep.subr.mxu0 0.0
    %6420 = vmatpush1.msra.mxu0 0.0
    %6421 = vmatprep.subr.mxu0 0.0
    %6422 = vmatpush1.msra.mxu0 0.0
    %6423 = vmatprep.subr.mxu0 0.0
    %6424 = vmatpush1.msra.mxu0 0.0
    %6425 = vmatprep.subr.mxu0 0.0
    %6426 = vmatpush1.msra.mxu0 0.0
    %6427 = vmatprep.mubr.f32.mxu0 0.0
    %6428 = vmatmul.mubr.f32.gmra.mrb[0].mxu0 %v6290
    %v6429 = vpop.f32.mrb[0].mxu0
    %v6430 = vadd.f32 0.0, %v6429
    %v6431 = vpop.f32.mrb[0].mxu0
    %v6432 = vadd.f32 0.0, %v6431
    %6433 = vdwg.mxu0
    %v6434 = vld [vmem:[#allocation2 + $0x160] sm:$0xff]
    %v6435 = vld [vmem:[#allocation2 + $0x168] sm:$0xff]
    %v6436 = vld [vmem:[#allocation2 + $0x170] sm:$0xff]
    %v6437 = vld [vmem:[#allocation2 + $0x178] sm:$0xff]
    %v6438 = vadd.f32 %v6434, %v6048
    %v6439 = vadd.f32 %v6435, %v6050
    %v6440 = vadd.f32 %v6436, %v6119
    %v6441 = vadd.f32 %v6437, %v6121
    %v6442 = vtanh.pop %v6438
    %v6443 = vtanh.pop %v6439
    %v6444 = vtanh.pop %v6440
    %v6445 = vtanh.pop %v6441
    %v6446 = vmul.f32 %v6442, 0.5
    %v6447 = vadd.f32 %v6446, 0.5
    %v6448 = vmul.f32 %v6443, 0.5
    %v6449 = vadd.f32 %v6448, 0.5
    %v6450 = vmul.f32 %v6445, 0.5
    %v6451 = vadd.f32 %v6450, 0.5
    %v6452 = vmul.f32 %v6449, %v5903
    %v6453 = vmul.f32 %v6447, %v6444
    %v6454 = vadd.f32 %v6452, %v6453
    %v6455 = vtanh.pop %v6454
    %v6456 = vmul.f32 %v6451, %v6455
    %v6457 = vadd.f32 %v6190, %v556
    %v6458 = vadd.f32 %v6192, %v560
    %v6459 = vadd.f32 %v6261, %v564
    %v6460 = vadd.f32 %v6263, %v568
    %v6461 = vadd.f32 %v6457, %v6359
    %v6462 = vadd.f32 %v6458, %v6361
    %v6463 = vadd.f32 %v6459, %v6430
    %v6464 = vadd.f32 %v6460, %v6432
    %v6465 = vtanh.pop %v6461
    %v6466 = vtanh.pop %v6462
    %v6467 = vtanh.pop %v6463
    %v6468 = vtanh.pop %v6464
    %v6469 = vmul.f32 %v6465, 0.5
    %v6470 = vadd.f32 %v6469, 0.5
    %v6471 = vmul.f32 %v6466, 0.5
    %v6472 = vadd.f32 %v6471, 0.5
    %v6473 = vmul.f32 %v6468, 0.5
    %v6474 = vadd.f32 %v6473, 0.5
    %v6475 = vmul.f32 %v6472, %v5926
    %v6476 = vmul.f32 %v6470, %v6467
    %v6477 = vadd.f32 %v6475, %v6476
    %v6478 = vtanh.pop %v6477
    %v6479 = vmul.f32 %v6474, %v6478
    %6480 = vst.msk [vmem:[#allocation3 + $0x50] sm:$0xff] %vm640, %v6479
    %v6481 = vld [vmem:[#allocation4] sm:$0xff]
    %v6482 = vld [vmem:[#allocation4 + $0x8] sm:$0xff]
    %v6483 = vld [vmem:[#allocation4 + $0x10] sm:$0xff]
    %v6484 = vld [vmem:[#allocation4 + $0x18] sm:$0xff]
    %v6485 = vld [vmem:[#allocation4 + $0x20] sm:$0xff]
    %v6486 = vld [vmem:[#allocation4 + $0x28] sm:$0xff]
    %v6487 = vld [vmem:[#allocation4 + $0x30] sm:$0xff]
    %v6488 = vld [vmem:[#allocation4 + $0x38] sm:$0xff]
    %v6489 = vld [vmem:[#allocation4 + $0x40] sm:$0xff]
    %v6490 = vld [vmem:[#allocation4 + $0x48] sm:$0xff]
    %v6491 = vld [vmem:[#allocation4 + $0x50] sm:$0xff]
    %v6492 = vld [vmem:[#allocation4 + $0x58] sm:$0xff]
    %v6493 = vld [vmem:[#allocation4 + $0x60] sm:$0xff]
    %v6494 = vld [vmem:[#allocation4 + $0x68] sm:$0xff]
    %v6495 = vld [vmem:[#allocation4 + $0x70] sm:$0xff]
    %v6496 = vld [vmem:[#allocation4 + $0x78] sm:$0xff]
    %v6497 = vld [vmem:[#allocation4 + $0x80] sm:$0xff]
    %v6498 = vld [vmem:[#allocation4 + $0x88] sm:$0xff]
    %v6499 = vld [vmem:[#allocation4 + $0x90] sm:$0xff]
    %v6500 = vld [vmem:[#allocation4 + $0x98] sm:$0xff]
    %v6501 = vld [vmem:[#allocation4 + $0xa0] sm:$0xff]
    %v6502 = vld [vmem:[#allocation4 + $0xa8] sm:$0xff]
    %v6503 = vld [vmem:[#allocation4 + $0xb0] sm:$0xff]
    %v6504 = vld [vmem:[#allocation4 + $0xb8] sm:$0xff]
    %v6505 = vld [vmem:[#allocation4 + $0xc0] sm:$0xff]
    %v6506 = vld [vmem:[#allocation4 + $0xc8] sm:$0xff]
    %v6507 = vld [vmem:[#allocation4 + $0xd0] sm:$0xff]
    %v6508 = vld [vmem:[#allocation4 + $0xd8] sm:$0xff]
    %v6509 = vld [vmem:[#allocation4 + $0xe0] sm:$0xff]
    %v6510 = vld [vmem:[#allocation4 + $0xe8] sm:$0xff]
    %v6511 = vld [vmem:[#allocation4 + $0xf0] sm:$0xff]
    %v6512 = vld [vmem:[#allocation4 + $0xf8] sm:$0xff]
    %v6513 = vld [vmem:[#allocation4 + $0x100] sm:$0xff]
    %v6514 = vld [vmem:[#allocation4 + $0x108] sm:$0xff]
    %v6515 = vld [vmem:[#allocation4 + $0x110] sm:$0xff]
    %v6516 = vld [vmem:[#allocation4 + $0x118] sm:$0xff]
    %v6517 = vld [vmem:[#allocation4 + $0x120] sm:$0xff]
    %v6518 = vld [vmem:[#allocation4 + $0x128] sm:$0xff]
    %v6519 = vld [vmem:[#allocation4 + $0x130] sm:$0xff]
    %v6520 = vld [vmem:[#allocation4 + $0x138] sm:$0xff]
    %v6521 = vld [vmem:[#allocation4 + $0x140] sm:$0xff]
    %v6522 = vld [vmem:[#allocation4 + $0x148] sm:$0xff]
    %v6523 = vld [vmem:[#allocation4 + $0x150] sm:$0xff]
    %v6524 = vld [vmem:[#allocation4 + $0x158] sm:$0xff]
    %v6525 = vld [vmem:[#allocation4 + $0x160] sm:$0xff]
    %v6526 = vld [vmem:[#allocation4 + $0x168] sm:$0xff]
    %v6527 = vld [vmem:[#allocation4 + $0x170] sm:$0xff]
    %v6528 = vld [vmem:[#allocation4 + $0x178] sm:$0xff]
    %v6530 = vsel %vm640, %v6456, 0
    %6532 = vmatprep.subr.mxu0 %v6482
    %6533 = vmatpush1.msra.mxu0 %v6481
    %6534 = vmatprep.subr.mxu0 %v6490
    %6535 = vmatpush1.msra.mxu0 %v6489
    %6536 = vmatprep.subr.mxu0 %v6498
    %6537 = vmatpush1.msra.mxu0 %v6497
    %6538 = vmatprep.subr.mxu0 %v6506
    %6539 = vmatpush1.msra.mxu0 %v6505
    %6540 = vmatprep.subr.mxu0 %v6514
    %6541 = vmatpush1.msra.mxu0 %v6513
    %6542 = vmatprep.subr.mxu0 %v6522
    %6543 = vmatpush1.msra.mxu0 %v6521
    %6544 = vmatprep.subr.mxu0 0.0
    %6545 = vmatpush1.msra.mxu0 0.0
    %6546 = vmatprep.subr.mxu0 0.0
    %6547 = vmatpush1.msra.mxu0 0.0
    %6548 = vmatprep.subr.mxu0 0.0
    %6549 = vmatpush1.msra.mxu0 0.0
    %6550 = vmatprep.subr.mxu0 0.0
    %6551 = vmatpush1.msra.mxu0 0.0
    %6552 = vmatprep.subr.mxu0 0.0
    %6553 = vmatpush1.msra.mxu0 0.0
    %6554 = vmatprep.subr.mxu0 0.0
    %6555 = vmatpush1.msra.mxu0 0.0
    %6556 = vmatprep.subr.mxu0 0.0
    %6557 = vmatpush1.msra.mxu0 0.0
    %6558 = vmatprep.subr.mxu0 0.0
    %6559 = vmatpush1.msra.mxu0 0.0
    %6560 = vmatprep.subr.mxu0 0.0
    %6561 = vmatpush1.msra.mxu0 0.0
    %6562 = vmatprep.subr.mxu0 0.0
    %6563 = vmatpush1.msra.mxu0 0.0
    %6564 = vmatprep.subr.mxu0 0.0
    %6565 = vmatpush1.msra.mxu0 0.0
    %6566 = vmatprep.subr.mxu0 0.0
    %6567 = vmatpush1.msra.mxu0 0.0
    %6568 = vmatprep.subr.mxu0 0.0
    %6569 = vmatpush1.msra.mxu0 0.0
    %6570 = vmatprep.subr.mxu0 0.0
    %6571 = vmatpush1.msra.mxu0 0.0
    %6572 = vmatprep.subr.mxu0 0.0
    %6573 = vmatpush1.msra.mxu0 0.0
    %6574 = vmatprep.subr.mxu0 0.0
    %6575 = vmatpush1.msra.mxu0 0.0
    %6576 = vmatprep.subr.mxu0 0.0
    %6577 = vmatpush1.msra.mxu0 0.0
    %6578 = vmatprep.subr.mxu0 0.0
    %6579 = vmatpush1.msra.mxu0 0.0
    %6580 = vmatprep.subr.mxu0 0.0
    %6581 = vmatpush1.msra.mxu0 0.0
    %6582 = vmatprep.subr.mxu0 0.0
    %6583 = vmatpush1.msra.mxu0 0.0
    %6584 = vmatprep.subr.mxu0 0.0
    %6585 = vmatpush1.msra.mxu0 0.0
    %6586 = vmatprep.subr.mxu0 0.0
    %6587 = vmatpush1.msra.mxu0 0.0
    %6588 = vmatprep.subr.mxu0 0.0
    %6589 = vmatpush1.msra.mxu0 0.0
    %6590 = vmatprep.subr.mxu0 0.0
    %6591 = vmatpush1.msra.mxu0 0.0
    %6592 = vmatprep.subr.mxu0 0.0
    %6593 = vmatpush1.msra.mxu0 0.0
    %6594 = vmatprep.subr.mxu0 0.0
    %6595 = vmatpush1.msra.mxu0 0.0
    %6596 = vmatprep.mubr.f32.mxu0 0.0
    %6597 = vmatmul.mubr.f32.gmra.mrb[0].mxu0 %v6530
    %v6598 = vpop.f32.mrb[0].mxu0
    %v6599 = vadd.f32 0.0, %v6598
    %v6600 = vpop.f32.mrb[0].mxu0
    %v6601 = vadd.f32 0.0, %v6600
    %6602 = vdwg.mxu0
    %6603 = vmatprep.subr.mxu0 %v6484
    %6604 = vmatpush1.msra.mxu0 %v6483
    %6605 = vmatprep.subr.mxu0 %v6492
    %6606 = vmatpush1.msra.mxu0 %v6491
    %6607 = vmatprep.subr.mxu0 %v6500
    %6608 = vmatpush1.msra.mxu0 %v6499
    %6609 = vmatprep.subr.mxu0 %v6508
    %6610 = vmatpush1.msra.mxu0 %v6507
    %6611 = vmatprep.subr.mxu0 %v6516
    %6612 = vmatpush1.msra.mxu0 %v6515
    %6613 = vmatprep.subr.mxu0 %v6524
    %6614 = vmatpush1.msra.mxu0 %v6523
    %6615 = vmatprep.subr.mxu0 0.0
    %6616 = vmatpush1.msra.mxu0 0.0
    %6617 = vmatprep.subr.mxu0 0.0
    %6618 = vmatpush1.msra.mxu0 0.0
    %6619 = vmatprep.subr.mxu0 0.0
    %6620 = vmatpush1.msra.mxu0 0.0
    %6621 = vmatprep.subr.mxu0 0.0
    %6622 = vmatpush1.msra.mxu0 0.0
    %6623 = vmatprep.subr.mxu0 0.0
    %6624 = vmatpush1.msra.mxu0 0.0
    %6625 = vmatprep.subr.mxu0 0.0
    %6626 = vmatpush1.msra.mxu0 0.0
    %6627 = vmatprep.subr.mxu0 0.0
    %6628 = vmatpush1.msra.mxu0 0.0
    %6629 = vmatprep.subr.mxu0 0.0
    %6630 = vmatpush1.msra.mxu0 0.0
    %6631 = vmatprep.subr.mxu0 0.0
    %6632 = vmatpush1.msra.mxu0 0.0
    %6633 = vmatprep.subr.mxu0 0.0
    %6634 = vmatpush1.msra.mxu0 0.0
    %6635 = vmatprep.subr.mxu0 0.0
    %6636 = vmatpush1.msra.mxu0 0.0
    %6637 = vmatprep.subr.mxu0 0.0
    %6638 = vmatpush1.msra.mxu0 0.0
    %6639 = vmatprep.subr.mxu0 0.0
    %6640 = vmatpush1.msra.mxu0 0.0
    %6641 = vmatprep.subr.mxu0 0.0
    %6642 = vmatpush1.msra.mxu0 0.0
    %6643 = vmatprep.subr.mxu0 0.0
    %6644 = vmatpush1.msra.mxu0 0.0
    %6645 = vmatprep.subr.mxu0 0.0
    %6646 = vmatpush1.msra.mxu0 0.0
    %6647 = vmatprep.subr.mxu0 0.0
    %6648 = vmatpush1.msra.mxu0 0.0
    %6649 = vmatprep.subr.mxu0 0.0
    %6650 = vmatpush1.msra.mxu0 0.0
    %6651 = vmatprep.subr.mxu0 0.0
    %6652 = vmatpush1.msra.mxu0 0.0
    %6653 = vmatprep.subr.mxu0 0.0
    %6654 = vmatpush1.msra.mxu0 0.0
    %6655 = vmatprep.subr.mxu0 0.0
    %6656 = vmatpush1.msra.mxu0 0.0
    %6657 = vmatprep.subr.mxu0 0.0
    %6658 = vmatpush1.msra.mxu0 0.0
    %6659 = vmatprep.subr.mxu0 0.0
    %6660 = vmatpush1.msra.mxu0 0.0
    %6661 = vmatprep.subr.mxu0 0.0
    %6662 = vmatpush1.msra.mxu0 0.0
    %6663 = vmatprep.subr.mxu0 0.0
    %6664 = vmatpush1.msra.mxu0 0.0
    %6665 = vmatprep.subr.mxu0 0.0
    %6666 = vmatpush1.msra.mxu0 0.0
    %6667 = vmatprep.mubr.f32.mxu0 0.0
    %6668 = vmatmul.mubr.f32.gmra.mrb[0].mxu0 %v6530
    %v6669 = vpop.f32.mrb[0].mxu0
    %v6670 = vadd.f32 0.0, %v6669
    %v6671 = vpop.f32.mrb[0].mxu0
    %v6672 = vadd.f32 0.0, %v6671
    %6673 = vdwg.mxu0
    %6674 = vmatprep.subr.mxu0 %v6486
    %6675 = vmatpush1.msra.mxu0 %v6485
    %6676 = vmatprep.subr.mxu0 %v6494
    %6677 = vmatpush1.msra.mxu0 %v6493
    %6678 = vmatprep.subr.mxu0 %v6502
    %6679 = vmatpush1.msra.mxu0 %v6501
    %6680 = vmatprep.subr.mxu0 %v6510
    %6681 = vmatpush1.msra.mxu0 %v6509
    %6682 = vmatprep.subr.mxu0 %v6518
    %6683 = vmatpush1.msra.mxu0 %v6517
    %6684 = vmatprep.subr.mxu0 %v6526
    %6685 = vmatpush1.msra.mxu0 %v6525
    %6686 = vmatprep.subr.mxu0 0.0
    %6687 = vmatpush1.msra.mxu0 0.0
    %6688 = vmatprep.subr.mxu0 0.0
    %6689 = vmatpush1.msra.mxu0 0.0
    %6690 = vmatprep.subr.mxu0 0.0
    %6691 = vmatpush1.msra.mxu0 0.0
    %6692 = vmatprep.subr.mxu0 0.0
    %6693 = vmatpush1.msra.mxu0 0.0
    %6694 = vmatprep.subr.mxu0 0.0
    %6695 = vmatpush1.msra.mxu0 0.0
    %6696 = vmatprep.subr.mxu0 0.0
    %6697 = vmatpush1.msra.mxu0 0.0
    %6698 = vmatprep.subr.mxu0 0.0
    %6699 = vmatpush1.msra.mxu0 0.0
    %6700 = vmatprep.subr.mxu0 0.0
    %6701 = vmatpush1.msra.mxu0 0.0
    %6702 = vmatprep.subr.mxu0 0.0
    %6703 = vmatpush1.msra.mxu0 0.0
    %6704 = vmatprep.subr.mxu0 0.0
    %6705 = vmatpush1.msra.mxu0 0.0
    %6706 = vmatprep.subr.mxu0 0.0
    %6707 = vmatpush1.msra.mxu0 0.0
    %6708 = vmatprep.subr.mxu0 0.0
    %6709 = vmatpush1.msra.mxu0 0.0
    %6710 = vmatprep.subr.mxu0 0.0
    %6711 = vmatpush1.msra.mxu0 0.0
    %6712 = vmatprep.subr.mxu0 0.0
    %6713 = vmatpush1.msra.mxu0 0.0
    %6714 = vmatprep.subr.mxu0 0.0
    %6715 = vmatpush1.msra.mxu0 0.0
    %6716 = vmatprep.subr.mxu0 0.0
    %6717 = vmatpush1.msra.mxu0 0.0
    %6718 = vmatprep.subr.mxu0 0.0
    %6719 = vmatpush1.msra.mxu0 0.0
    %6720 = vmatprep.subr.mxu0 0.0
    %6721 = vmatpush1.msra.mxu0 0.0
    %6722 = vmatprep.subr.mxu0 0.0
    %6723 = vmatpush1.msra.mxu0 0.0
    %6724 = vmatprep.subr.mxu0 0.0
    %6725 = vmatpush1.msra.mxu0 0.0
    %6726 = vmatprep.subr.mxu0 0.0
    %6727 = vmatpush1.msra.mxu0 0.0
    %6728 = vmatprep.subr.mxu0 0.0
    %6729 = vmatpush1.msra.mxu0 0.0
    %6730 = vmatprep.subr.mxu0 0.0
    %6731 = vmatpush1.msra.mxu0 0.0
    %6732 = vmatprep.subr.mxu0 0.0
    %6733 = vmatpush1.msra.mxu0 0.0
    %6734 = vmatprep.subr.mxu0 0.0
    %6735 = vmatpush1.msra.mxu0 0.0
    %6736 = vmatprep.subr.mxu0 0.0
    %6737 = vmatpush1.msra.mxu0 0.0
    %6738 = vmatprep.mubr.f32.mxu0 0.0
    %6739 = vmatmul.mubr.f32.gmra.mrb[0].mxu0 %v6530
    %v6740 = vpop.f32.mrb[0].mxu0
    %v6741 = vadd.f32 0.0, %v6740
    %v6742 = vpop.f32.mrb[0].mxu0
    %v6743 = vadd.f32 0.0, %v6742
    %6744 = vdwg.mxu0
    %6745 = vmatprep.subr.mxu0 %v6488
    %6746 = vmatpush1.msra.mxu0 %v6487
    %6747 = vmatprep.subr.mxu0 %v6496
    %6748 = vmatpush1.msra.mxu0 %v6495
    %6749 = vmatprep.subr.mxu0 %v6504
    %6750 = vmatpush1.msra.mxu0 %v6503
    %6751 = vmatprep.subr.mxu0 %v6512
    %6752 = vmatpush1.msra.mxu0 %v6511
    %6753 = vmatprep.subr.mxu0 %v6520
    %6754 = vmatpush1.msra.mxu0 %v6519
    %6755 = vmatprep.subr.mxu0 %v6528
    %6756 = vmatpush1.msra.mxu0 %v6527
    %6757 = vmatprep.subr.mxu0 0.0
    %6758 = vmatpush1.msra.mxu0 0.0
    %6759 = vmatprep.subr.mxu0 0.0
    %6760 = vmatpush1.msra.mxu0 0.0
    %6761 = vmatprep.subr.mxu0 0.0
    %6762 = vmatpush1.msra.mxu0 0.0
    %6763 = vmatprep.subr.mxu0 0.0
    %6764 = vmatpush1.msra.mxu0 0.0
    %6765 = vmatprep.subr.mxu0 0.0
    %6766 = vmatpush1.msra.mxu0 0.0
    %6767 = vmatprep.subr.mxu0 0.0
    %6768 = vmatpush1.msra.mxu0 0.0
    %6769 = vmatprep.subr.mxu0 0.0
    %6770 = vmatpush1.msra.mxu0 0.0
    %6771 = vmatprep.subr.mxu0 0.0
    %6772 = vmatpush1.msra.mxu0 0.0
    %6773 = vmatprep.subr.mxu0 0.0
    %6774 = vmatpush1.msra.mxu0 0.0
    %6775 = vmatprep.subr.mxu0 0.0
    %6776 = vmatpush1.msra.mxu0 0.0
    %6777 = vmatprep.subr.mxu0 0.0
    %6778 = vmatpush1.msra.mxu0 0.0
    %6779 = vmatprep.subr.mxu0 0.0
    %6780 = vmatpush1.msra.mxu0 0.0
    %6781 = vmatprep.subr.mxu0 0.0
    %6782 = vmatpush1.msra.mxu0 0.0
    %6783 = vmatprep.subr.mxu0 0.0
    %6784 = vmatpush1.msra.mxu0 0.0
    %6785 = vmatprep.subr.mxu0 0.0
    %6786 = vmatpush1.msra.mxu0 0.0
    %6787 = vmatprep.subr.mxu0 0.0
    %6788 = vmatpush1.msra.mxu0 0.0
    %6789 = vmatprep.subr.mxu0 0.0
    %6790 = vmatpush1.msra.mxu0 0.0
    %6791 = vmatprep.subr.mxu0 0.0
    %6792 = vmatpush1.msra.mxu0 0.0
    %6793 = vmatprep.subr.mxu0 0.0
    %6794 = vmatpush1.msra.mxu0 0.0
    %6795 = vmatprep.subr.mxu0 0.0
    %6796 = vmatpush1.msra.mxu0 0.0
    %6797 = vmatprep.subr.mxu0 0.0
    %6798 = vmatpush1.msra.mxu0 0.0
    %6799 = vmatprep.subr.mxu0 0.0
    %6800 = vmatpush1.msra.mxu0 0.0
    %6801 = vmatprep.subr.mxu0 0.0
    %6802 = vmatpush1.msra.mxu0 0.0
    %6803 = vmatprep.subr.mxu0 0.0
    %6804 = vmatpush1.msra.mxu0 0.0
    %6805 = vmatprep.subr.mxu0 0.0
    %6806 = vmatpush1.msra.mxu0 0.0
    %6807 = vmatprep.subr.mxu0 0.0
    %6808 = vmatpush1.msra.mxu0 0.0
    %6809 = vmatprep.mubr.f32.mxu0 0.0
    %6810 = vmatmul.mubr.f32.gmra.mrb[0].mxu0 %v6530
    %v6811 = vpop.f32.mrb[0].mxu0
    %v6812 = vadd.f32 0.0, %v6811
    %v6813 = vpop.f32.mrb[0].mxu0
    %v6814 = vadd.f32 0.0, %v6813
    %6815 = vdwg.mxu0
    %v6816 = vld [vmem:[#allocation7] sm:$0xff]
    %v6817 = vld [vmem:[#allocation7 + $0x8] sm:$0xff]
    %v6818 = vld [vmem:[#allocation7 + $0x10] sm:$0xff]
    %v6819 = vld [vmem:[#allocation7 + $0x18] sm:$0xff]
    %v6820 = vld [vmem:[#allocation7 + $0x20] sm:$0xff]
    %v6821 = vld [vmem:[#allocation7 + $0x28] sm:$0xff]
    %v6822 = vld [vmem:[#allocation7 + $0x30] sm:$0xff]
    %v6823 = vld [vmem:[#allocation7 + $0x38] sm:$0xff]
    %v6824 = vld [vmem:[#allocation7 + $0x40] sm:$0xff]
    %v6825 = vld [vmem:[#allocation7 + $0x48] sm:$0xff]
    %v6826 = vld [vmem:[#allocation7 + $0x50] sm:$0xff]
    %v6827 = vld [vmem:[#allocation7 + $0x58] sm:$0xff]
    %v6828 = vld [vmem:[#allocation7 + $0x60] sm:$0xff]
    %v6829 = vld [vmem:[#allocation7 + $0x68] sm:$0xff]
    %v6830 = vld [vmem:[#allocation7 + $0x70] sm:$0xff]
    %v6831 = vld [vmem:[#allocation7 + $0x78] sm:$0xff]
    %v6832 = vld [vmem:[#allocation7 + $0x80] sm:$0xff]
    %v6833 = vld [vmem:[#allocation7 + $0x88] sm:$0xff]
    %v6834 = vld [vmem:[#allocation7 + $0x90] sm:$0xff]
    %v6835 = vld [vmem:[#allocation7 + $0x98] sm:$0xff]
    %v6836 = vld [vmem:[#allocation7 + $0xa0] sm:$0xff]
    %v6837 = vld [vmem:[#allocation7 + $0xa8] sm:$0xff]
    %v6838 = vld [vmem:[#allocation7 + $0xb0] sm:$0xff]
    %v6839 = vld [vmem:[#allocation7 + $0xb8] sm:$0xff]
    %v6841 = vsel %vm640, %v6479, 0
    %6843 = vmatprep.subr.mxu0 %v6817
    %6844 = vmatpush1.msra.mxu0 %v6816
    %6845 = vmatprep.subr.mxu0 %v6821
    %6846 = vmatpush1.msra.mxu0 %v6820
    %6847 = vmatprep.subr.mxu0 %v6825
    %6848 = vmatpush1.msra.mxu0 %v6824
    %6849 = vmatprep.subr.mxu0 %v6829
    %6850 = vmatpush1.msra.mxu0 %v6828
    %6851 = vmatprep.subr.mxu0 %v6833
    %6852 = vmatpush1.msra.mxu0 %v6832
    %6853 = vmatprep.subr.mxu0 %v6837
    %6854 = vmatpush1.msra.mxu0 %v6836
    %6855 = vmatprep.subr.mxu0 0.0
    %6856 = vmatpush1.msra.mxu0 0.0
    %6857 = vmatprep.subr.mxu0 0.0
    %6858 = vmatpush1.msra.mxu0 0.0
    %6859 = vmatprep.subr.mxu0 0.0
    %6860 = vmatpush1.msra.mxu0 0.0
    %6861 = vmatprep.subr.mxu0 0.0
    %6862 = vmatpush1.msra.mxu0 0.0
    %6863 = vmatprep.subr.mxu0 0.0
    %6864 = vmatpush1.msra.mxu0 0.0
    %6865 = vmatprep.subr.mxu0 0.0
    %6866 = vmatpush1.msra.mxu0 0.0
    %6867 = vmatprep.subr.mxu0 0.0
    %6868 = vmatpush1.msra.mxu0 0.0
    %6869 = vmatprep.subr.mxu0 0.0
    %6870 = vmatpush1.msra.mxu0 0.0
    %6871 = vmatprep.subr.mxu0 0.0
    %6872 = vmatpush1.msra.mxu0 0.0
    %6873 = vmatprep.subr.mxu0 0.0
    %6874 = vmatpush1.msra.mxu0 0.0
    %6875 = vmatprep.subr.mxu0 0.0
    %6876 = vmatpush1.msra.mxu0 0.0
    %6877 = vmatprep.subr.mxu0 0.0
    %6878 = vmatpush1.msra.mxu0 0.0
    %6879 = vmatprep.subr.mxu0 0.0
    %6880 = vmatpush1.msra.mxu0 0.0
    %6881 = vmatprep.subr.mxu0 0.0
    %6882 = vmatpush1.msra.mxu0 0.0
    %6883 = vmatprep.subr.mxu0 0.0
    %6884 = vmatpush1.msra.mxu0 0.0
    %6885 = vmatprep.subr.mxu0 0.0
    %6886 = vmatpush1.msra.mxu0 0.0
    %6887 = vmatprep.subr.mxu0 0.0
    %6888 = vmatpush1.msra.mxu0 0.0
    %6889 = vmatprep.subr.mxu0 0.0
    %6890 = vmatpush1.msra.mxu0 0.0
    %6891 = vmatprep.subr.mxu0 0.0
    %6892 = vmatpush1.msra.mxu0 0.0
    %6893 = vmatprep.subr.mxu0 0.0
    %6894 = vmatpush1.msra.mxu0 0.0
    %6895 = vmatprep.subr.mxu0 0.0
    %6896 = vmatpush1.msra.mxu0 0.0
    %6897 = vmatprep.subr.mxu0 0.0
    %6898 = vmatpush1.msra.mxu0 0.0
    %6899 = vmatprep.subr.mxu0 0.0
    %6900 = vmatpush1.msra.mxu0 0.0
    %6901 = vmatprep.subr.mxu0 0.0
    %6902 = vmatpush1.msra.mxu0 0.0
    %6903 = vmatprep.subr.mxu0 0.0
    %6904 = vmatpush1.msra.mxu0 0.0
    %6905 = vmatprep.subr.mxu0 0.0
    %6906 = vmatpush1.msra.mxu0 0.0
    %6907 = vmatprep.mubr.f32.mxu0 0.0
    %6908 = vmatmul.mubr.f32.gmra.mrb[0].mxu0 %v6841
    %v6909 = vpop.f32.mrb[0].mxu0
    %v6910 = vadd.f32 0.0, %v6909
    %v6911 = vpop.f32.mrb[0].mxu0
    %v6912 = vadd.f32 0.0, %v6911
    %6913 = vdwg.mxu0
    %6914 = vmatprep.subr.mxu0 %v6819
    %6915 = vmatpush1.msra.mxu0 %v6818
    %6916 = vmatprep.subr.mxu0 %v6823
    %6917 = vmatpush1.msra.mxu0 %v6822
    %6918 = vmatprep.subr.mxu0 %v6827
    %6919 = vmatpush1.msra.mxu0 %v6826
    %6920 = vmatprep.subr.mxu0 %v6831
    %6921 = vmatpush1.msra.mxu0 %v6830
    %6922 = vmatprep.subr.mxu0 %v6835
    %6923 = vmatpush1.msra.mxu0 %v6834
    %6924 = vmatprep.subr.mxu0 %v6839
    %6925 = vmatpush1.msra.mxu0 %v6838
    %6926 = vmatprep.subr.mxu0 0.0
    %6927 = vmatpush1.msra.mxu0 0.0
    %6928 = vmatprep.subr.mxu0 0.0
    %6929 = vmatpush1.msra.mxu0 0.0
    %6930 = vmatprep.subr.mxu0 0.0
    %6931 = vmatpush1.msra.mxu0 0.0
    %6932 = vmatprep.subr.mxu0 0.0
    %6933 = vmatpush1.msra.mxu0 0.0
    %6934 = vmatprep.subr.mxu0 0.0
    %6935 = vmatpush1.msra.mxu0 0.0
    %6936 = vmatprep.subr.mxu0 0.0
    %6937 = vmatpush1.msra.mxu0 0.0
    %6938 = vmatprep.subr.mxu0 0.0
    %6939 = vmatpush1.msra.mxu0 0.0
    %6940 = vmatprep.subr.mxu0 0.0
    %6941 = vmatpush1.msra.mxu0 0.0
    %6942 = vmatprep.subr.mxu0 0.0
    %6943 = vmatpush1.msra.mxu0 0.0
    %6944 = vmatprep.subr.mxu0 0.0
    %6945 = vmatpush1.msra.mxu0 0.0
    %6946 = vmatprep.subr.mxu0 0.0
    %6947 = vmatpush1.msra.mxu0 0.0
    %6948 = vmatprep.subr.mxu0 0.0
    %6949 = vmatpush1.msra.mxu0 0.0
    %6950 = vmatprep.subr.mxu0 0.0
    %6951 = vmatpush1.msra.mxu0 0.0
    %6952 = vmatprep.subr.mxu0 0.0
    %6953 = vmatpush1.msra.mxu0 0.0
    %6954 = vmatprep.subr.mxu0 0.0
    %6955 = vmatpush1.msra.mxu0 0.0
    %6956 = vmatprep.subr.mxu0 0.0
    %6957 = vmatpush1.msra.mxu0 0.0
    %6958 = vmatprep.subr.mxu0 0.0
    %6959 = vmatpush1.msra.mxu0 0.0
    %6960 = vmatprep.subr.mxu0 0.0
    %6961 = vmatpush1.msra.mxu0 0.0
    %6962 = vmatprep.subr.mxu0 0.0
    %6963 = vmatpush1.msra.mxu0 0.0
    %6964 = vmatprep.subr.mxu0 0.0
    %6965 = vmatpush1.msra.mxu0 0.0
    %6966 = vmatprep.subr.mxu0 0.0
    %6967 = vmatpush1.msra.mxu0 0.0
    %6968 = vmatprep.subr.mxu0 0.0
    %6969 = vmatpush1.msra.mxu0 0.0
    %6970 = vmatprep.subr.mxu0 0.0
    %6971 = vmatpush1.msra.mxu0 0.0
    %6972 = vmatprep.subr.mxu0 0.0
    %6973 = vmatpush1.msra.mxu0 0.0
    %6974 = vmatprep.subr.mxu0 0.0
    %6975 = vmatpush1.msra.mxu0 0.0
    %6976 = vmatprep.subr.mxu0 0.0
    %6977 = vmatpush1.msra.mxu0 0.0
    %6978 = vmatprep.mubr.f32.mxu0 0.0
    %6979 = vmatmul.mubr.f32.gmra.mrb[0].mxu0 %v6841
    %v6980 = vpop.f32.mrb[0].mxu0
    %v6981 = vadd.f32 0.0, %v6980
    %v6982 = vpop.f32.mrb[0].mxu0
    %v6983 = vadd.f32 0.0, %v6982
    %6984 = vdwg.mxu0
    %v6985 = vld [vmem:[#allocation2 + $0x180] sm:$0xff]
    %v6986 = vld [vmem:[#allocation2 + $0x188] sm:$0xff]
    %v6987 = vld [vmem:[#allocation2 + $0x190] sm:$0xff]
    %v6988 = vld [vmem:[#allocation2 + $0x198] sm:$0xff]
    %v6989 = vadd.f32 %v6985, %v6599
    %v6990 = vadd.f32 %v6986, %v6601
    %v6991 = vadd.f32 %v6987, %v6670
    %v6992 = vadd.f32 %v6988, %v6672
    %v6993 = vtanh.pop %v6989
    %v6994 = vtanh.pop %v6990
    %v6995 = vtanh.pop %v6991
    %v6996 = vtanh.pop %v6992
    %v6997 = vmul.f32 %v6993, 0.5
    %v6998 = vadd.f32 %v6997, 0.5
    %v6999 = vmul.f32 %v6994, 0.5
    %v7000 = vadd.f32 %v6999, 0.5
    %v7001 = vmul.f32 %v6996, 0.5
    %v7002 = vadd.f32 %v7001, 0.5
    %v7003 = vmul.f32 %v7000, %v6454
    %v7004 = vmul.f32 %v6998, %v6995
    %v7005 = vadd.f32 %v7003, %v7004
    %v7006 = vtanh.pop %v7005
    %v7007 = vmul.f32 %v7002, %v7006
    %v7008 = vadd.f32 %v6741, %v556
    %v7009 = vadd.f32 %v6743, %v560
    %v7010 = vadd.f32 %v6812, %v564
    %v7011 = vadd.f32 %v6814, %v568
    %v7012 = vadd.f32 %v7008, %v6910
    %v7013 = vadd.f32 %v7009, %v6912
    %v7014 = vadd.f32 %v7010, %v6981
    %v7015 = vadd.f32 %v7011, %v6983
    %v7016 = vtanh.pop %v7012
    %v7017 = vtanh.pop %v7013
    %v7018 = vtanh.pop %v7014
    %v7019 = vtanh.pop %v7015
    %v7020 = vmul.f32 %v7016, 0.5
    %v7021 = vadd.f32 %v7020, 0.5
    %v7022 = vmul.f32 %v7017, 0.5
    %v7023 = vadd.f32 %v7022, 0.5
    %v7024 = vmul.f32 %v7019, 0.5
    %v7025 = vadd.f32 %v7024, 0.5
    %v7026 = vmul.f32 %v7023, %v6477
    %v7027 = vmul.f32 %v7021, %v7018
    %v7028 = vadd.f32 %v7026, %v7027
    %v7029 = vtanh.pop %v7028
    %v7030 = vmul.f32 %v7025, %v7029
    %7031 = vst.msk [vmem:[#allocation3 + $0x58] sm:$0xff] %vm640, %v7030
    %v7032 = vld [vmem:[#allocation4] sm:$0xff]
    %v7033 = vld [vmem:[#allocation4 + $0x8] sm:$0xff]
    %v7034 = vld [vmem:[#allocation4 + $0x10] sm:$0xff]
    %v7035 = vld [vmem:[#allocation4 + $0x18] sm:$0xff]
    %v7036 = vld [vmem:[#allocation4 + $0x20] sm:$0xff]
    %v7037 = vld [vmem:[#allocation4 + $0x28] sm:$0xff]
    %v7038 = vld [vmem:[#allocation4 + $0x30] sm:$0xff]
    %v7039 = vld [vmem:[#allocation4 + $0x38] sm:$0xff]
    %v7040 = vld [vmem:[#allocation4 + $0x40] sm:$0xff]
    %v7041 = vld [vmem:[#allocation4 + $0x48] sm:$0xff]
    %v7042 = vld [vmem:[#allocation4 + $0x50] sm:$0xff]
    %v7043 = vld [vmem:[#allocation4 + $0x58] sm:$0xff]
    %v7044 = vld [vmem:[#allocation4 + $0x60] sm:$0xff]
    %v7045 = vld [vmem:[#allocation4 + $0x68] sm:$0xff]
    %v7046 = vld [vmem:[#allocation4 + $0x70] sm:$0xff]
    %v7047 = vld [vmem:[#allocation4 + $0x78] sm:$0xff]
    %v7048 = vld [vmem:[#allocation4 + $0x80] sm:$0xff]
    %v7049 = vld [vmem:[#allocation4 + $0x88] sm:$0xff]
    %v7050 = vld [vmem:[#allocation4 + $0x90] sm:$0xff]
    %v7051 = vld [vmem:[#allocation4 + $0x98] sm:$0xff]
    %v7052 = vld [vmem:[#allocation4 + $0xa0] sm:$0xff]
    %v7053 = vld [vmem:[#allocation4 + $0xa8] sm:$0xff]
    %v7054 = vld [vmem:[#allocation4 + $0xb0] sm:$0xff]
    %v7055 = vld [vmem:[#allocation4 + $0xb8] sm:$0xff]
    %v7056 = vld [vmem:[#allocation4 + $0xc0] sm:$0xff]
    %v7057 = vld [vmem:[#allocation4 + $0xc8] sm:$0xff]
    %v7058 = vld [vmem:[#allocation4 + $0xd0] sm:$0xff]
    %v7059 = vld [vmem:[#allocation4 + $0xd8] sm:$0xff]
    %v7060 = vld [vmem:[#allocation4 + $0xe0] sm:$0xff]
    %v7061 = vld [vmem:[#allocation4 + $0xe8] sm:$0xff]
    %v7062 = vld [vmem:[#allocation4 + $0xf0] sm:$0xff]
    %v7063 = vld [vmem:[#allocation4 + $0xf8] sm:$0xff]
    %v7064 = vld [vmem:[#allocation4 + $0x100] sm:$0xff]
    %v7065 = vld [vmem:[#allocation4 + $0x108] sm:$0xff]
    %v7066 = vld [vmem:[#allocation4 + $0x110] sm:$0xff]
    %v7067 = vld [vmem:[#allocation4 + $0x118] sm:$0xff]
    %v7068 = vld [vmem:[#allocation4 + $0x120] sm:$0xff]
    %v7069 = vld [vmem:[#allocation4 + $0x128] sm:$0xff]
    %v7070 = vld [vmem:[#allocation4 + $0x130] sm:$0xff]
    %v7071 = vld [vmem:[#allocation4 + $0x138] sm:$0xff]
    %v7072 = vld [vmem:[#allocation4 + $0x140] sm:$0xff]
    %v7073 = vld [vmem:[#allocation4 + $0x148] sm:$0xff]
    %v7074 = vld [vmem:[#allocation4 + $0x150] sm:$0xff]
    %v7075 = vld [vmem:[#allocation4 + $0x158] sm:$0xff]
    %v7076 = vld [vmem:[#allocation4 + $0x160] sm:$0xff]
    %v7077 = vld [vmem:[#allocation4 + $0x168] sm:$0xff]
    %v7078 = vld [vmem:[#allocation4 + $0x170] sm:$0xff]
    %v7079 = vld [vmem:[#allocation4 + $0x178] sm:$0xff]
    %v7081 = vsel %vm640, %v7007, 0
    %7083 = vmatprep.subr.mxu0 %v7033
    %7084 = vmatpush1.msra.mxu0 %v7032
    %7085 = vmatprep.subr.mxu0 %v7041
    %7086 = vmatpush1.msra.mxu0 %v7040
    %7087 = vmatprep.subr.mxu0 %v7049
    %7088 = vmatpush1.msra.mxu0 %v7048
    %7089 = vmatprep.subr.mxu0 %v7057
    %7090 = vmatpush1.msra.mxu0 %v7056
    %7091 = vmatprep.subr.mxu0 %v7065
    %7092 = vmatpush1.msra.mxu0 %v7064
    %7093 = vmatprep.subr.mxu0 %v7073
    %7094 = vmatpush1.msra.mxu0 %v7072
    %7095 = vmatprep.subr.mxu0 0.0
    %7096 = vmatpush1.msra.mxu0 0.0
    %7097 = vmatprep.subr.mxu0 0.0
    %7098 = vmatpush1.msra.mxu0 0.0
    %7099 = vmatprep.subr.mxu0 0.0
    %7100 = vmatpush1.msra.mxu0 0.0
    %7101 = vmatprep.subr.mxu0 0.0
    %7102 = vmatpush1.msra.mxu0 0.0
    %7103 = vmatprep.subr.mxu0 0.0
    %7104 = vmatpush1.msra.mxu0 0.0
    %7105 = vmatprep.subr.mxu0 0.0
    %7106 = vmatpush1.msra.mxu0 0.0
    %7107 = vmatprep.subr.mxu0 0.0
    %7108 = vmatpush1.msra.mxu0 0.0
    %7109 = vmatprep.subr.mxu0 0.0
    %7110 = vmatpush1.msra.mxu0 0.0
    %7111 = vmatprep.subr.mxu0 0.0
    %7112 = vmatpush1.msra.mxu0 0.0
    %7113 = vmatprep.subr.mxu0 0.0
    %7114 = vmatpush1.msra.mxu0 0.0
    %7115 = vmatprep.subr.mxu0 0.0
    %7116 = vmatpush1.msra.mxu0 0.0
    %7117 = vmatprep.subr.mxu0 0.0
    %7118 = vmatpush1.msra.mxu0 0.0
    %7119 = vmatprep.subr.mxu0 0.0
    %7120 = vmatpush1.msra.mxu0 0.0
    %7121 = vmatprep.subr.mxu0 0.0
    %7122 = vmatpush1.msra.mxu0 0.0
    %7123 = vmatprep.subr.mxu0 0.0
    %7124 = vmatpush1.msra.mxu0 0.0
    %7125 = vmatprep.subr.mxu0 0.0
    %7126 = vmatpush1.msra.mxu0 0.0
    %7127 = vmatprep.subr.mxu0 0.0
    %7128 = vmatpush1.msra.mxu0 0.0
    %7129 = vmatprep.subr.mxu0 0.0
    %7130 = vmatpush1.msra.mxu0 0.0
    %7131 = vmatprep.subr.mxu0 0.0
    %7132 = vmatpush1.msra.mxu0 0.0
    %7133 = vmatprep.subr.mxu0 0.0
    %7134 = vmatpush1.msra.mxu0 0.0
    %7135 = vmatprep.subr.mxu0 0.0
    %7136 = vmatpush1.msra.mxu0 0.0
    %7137 = vmatprep.subr.mxu0 0.0
    %7138 = vmatpush1.msra.mxu0 0.0
    %7139 = vmatprep.subr.mxu0 0.0
    %7140 = vmatpush1.msra.mxu0 0.0
    %7141 = vmatprep.subr.mxu0 0.0
    %7142 = vmatpush1.msra.mxu0 0.0
    %7143 = vmatprep.subr.mxu0 0.0
    %7144 = vmatpush1.msra.mxu0 0.0
    %7145 = vmatprep.subr.mxu0 0.0
    %7146 = vmatpush1.msra.mxu0 0.0
    %7147 = vmatprep.mubr.f32.mxu0 0.0
    %7148 = vmatmul.mubr.f32.gmra.mrb[0].mxu0 %v7081
    %v7149 = vpop.f32.mrb[0].mxu0
    %v7150 = vadd.f32 0.0, %v7149
    %v7151 = vpop.f32.mrb[0].mxu0
    %v7152 = vadd.f32 0.0, %v7151
    %7153 = vdwg.mxu0
    %7154 = vmatprep.subr.mxu0 %v7035
    %7155 = vmatpush1.msra.mxu0 %v7034
    %7156 = vmatprep.subr.mxu0 %v7043
    %7157 = vmatpush1.msra.mxu0 %v7042
    %7158 = vmatprep.subr.mxu0 %v7051
    %7159 = vmatpush1.msra.mxu0 %v7050
    %7160 = vmatprep.subr.mxu0 %v7059
    %7161 = vmatpush1.msra.mxu0 %v7058
    %7162 = vmatprep.subr.mxu0 %v7067
    %7163 = vmatpush1.msra.mxu0 %v7066
    %7164 = vmatprep.subr.mxu0 %v7075
    %7165 = vmatpush1.msra.mxu0 %v7074
    %7166 = vmatprep.subr.mxu0 0.0
    %7167 = vmatpush1.msra.mxu0 0.0
    %7168 = vmatprep.subr.mxu0 0.0
    %7169 = vmatpush1.msra.mxu0 0.0
    %7170 = vmatprep.subr.mxu0 0.0
    %7171 = vmatpush1.msra.mxu0 0.0
    %7172 = vmatprep.subr.mxu0 0.0
    %7173 = vmatpush1.msra.mxu0 0.0
    %7174 = vmatprep.subr.mxu0 0.0
    %7175 = vmatpush1.msra.mxu0 0.0
    %7176 = vmatprep.subr.mxu0 0.0
    %7177 = vmatpush1.msra.mxu0 0.0
    %7178 = vmatprep.subr.mxu0 0.0
    %7179 = vmatpush1.msra.mxu0 0.0
    %7180 = vmatprep.subr.mxu0 0.0
    %7181 = vmatpush1.msra.mxu0 0.0
    %7182 = vmatprep.subr.mxu0 0.0
    %7183 = vmatpush1.msra.mxu0 0.0
    %7184 = vmatprep.subr.mxu0 0.0
    %7185 = vmatpush1.msra.mxu0 0.0
    %7186 = vmatprep.subr.mxu0 0.0
    %7187 = vmatpush1.msra.mxu0 0.0
    %7188 = vmatprep.subr.mxu0 0.0
    %7189 = vmatpush1.msra.mxu0 0.0
    %7190 = vmatprep.subr.mxu0 0.0
    %7191 = vmatpush1.msra.mxu0 0.0
    %7192 = vmatprep.subr.mxu0 0.0
    %7193 = vmatpush1.msra.mxu0 0.0
    %7194 = vmatprep.subr.mxu0 0.0
    %7195 = vmatpush1.msra.mxu0 0.0
    %7196 = vmatprep.subr.mxu0 0.0
    %7197 = vmatpush1.msra.mxu0 0.0
    %7198 = vmatprep.subr.mxu0 0.0
    %7199 = vmatpush1.msra.mxu0 0.0
    %7200 = vmatprep.subr.mxu0 0.0
    %7201 = vmatpush1.msra.mxu0 0.0
    %7202 = vmatprep.subr.mxu0 0.0
    %7203 = vmatpush1.msra.mxu0 0.0
    %7204 = vmatprep.subr.mxu0 0.0
    %7205 = vmatpush1.msra.mxu0 0.0
    %7206 = vmatprep.subr.mxu0 0.0
    %7207 = vmatpush1.msra.mxu0 0.0
    %7208 = vmatprep.subr.mxu0 0.0
    %7209 = vmatpush1.msra.mxu0 0.0
    %7210 = vmatprep.subr.mxu0 0.0
    %7211 = vmatpush1.msra.mxu0 0.0
    %7212 = vmatprep.subr.mxu0 0.0
    %7213 = vmatpush1.msra.mxu0 0.0
    %7214 = vmatprep.subr.mxu0 0.0
    %7215 = vmatpush1.msra.mxu0 0.0
    %7216 = vmatprep.subr.mxu0 0.0
    %7217 = vmatpush1.msra.mxu0 0.0
    %7218 = vmatprep.mubr.f32.mxu0 0.0
    %7219 = vmatmul.mubr.f32.gmra.mrb[0].mxu0 %v7081
    %v7220 = vpop.f32.mrb[0].mxu0
    %v7221 = vadd.f32 0.0, %v7220
    %v7222 = vpop.f32.mrb[0].mxu0
    %v7223 = vadd.f32 0.0, %v7222
    %7224 = vdwg.mxu0
    %7225 = vmatprep.subr.mxu0 %v7037
    %7226 = vmatpush1.msra.mxu0 %v7036
    %7227 = vmatprep.subr.mxu0 %v7045
    %7228 = vmatpush1.msra.mxu0 %v7044
    %7229 = vmatprep.subr.mxu0 %v7053
    %7230 = vmatpush1.msra.mxu0 %v7052
    %7231 = vmatprep.subr.mxu0 %v7061
    %7232 = vmatpush1.msra.mxu0 %v7060
    %7233 = vmatprep.subr.mxu0 %v7069
    %7234 = vmatpush1.msra.mxu0 %v7068
    %7235 = vmatprep.subr.mxu0 %v7077
    %7236 = vmatpush1.msra.mxu0 %v7076
    %7237 = vmatprep.subr.mxu0 0.0
    %7238 = vmatpush1.msra.mxu0 0.0
    %7239 = vmatprep.subr.mxu0 0.0
    %7240 = vmatpush1.msra.mxu0 0.0
    %7241 = vmatprep.subr.mxu0 0.0
    %7242 = vmatpush1.msra.mxu0 0.0
    %7243 = vmatprep.subr.mxu0 0.0
    %7244 = vmatpush1.msra.mxu0 0.0
    %7245 = vmatprep.subr.mxu0 0.0
    %7246 = vmatpush1.msra.mxu0 0.0
    %7247 = vmatprep.subr.mxu0 0.0
    %7248 = vmatpush1.msra.mxu0 0.0
    %7249 = vmatprep.subr.mxu0 0.0
    %7250 = vmatpush1.msra.mxu0 0.0
    %7251 = vmatprep.subr.mxu0 0.0
    %7252 = vmatpush1.msra.mxu0 0.0
    %7253 = vmatprep.subr.mxu0 0.0
    %7254 = vmatpush1.msra.mxu0 0.0
    %7255 = vmatprep.subr.mxu0 0.0
    %7256 = vmatpush1.msra.mxu0 0.0
    %7257 = vmatprep.subr.mxu0 0.0
    %7258 = vmatpush1.msra.mxu0 0.0
    %7259 = vmatprep.subr.mxu0 0.0
    %7260 = vmatpush1.msra.mxu0 0.0
    %7261 = vmatprep.subr.mxu0 0.0
    %7262 = vmatpush1.msra.mxu0 0.0
    %7263 = vmatprep.subr.mxu0 0.0
    %7264 = vmatpush1.msra.mxu0 0.0
    %7265 = vmatprep.subr.mxu0 0.0
    %7266 = vmatpush1.msra.mxu0 0.0
    %7267 = vmatprep.subr.mxu0 0.0
    %7268 = vmatpush1.msra.mxu0 0.0
    %7269 = vmatprep.subr.mxu0 0.0
    %7270 = vmatpush1.msra.mxu0 0.0
    %7271 = vmatprep.subr.mxu0 0.0
    %7272 = vmatpush1.msra.mxu0 0.0
    %7273 = vmatprep.subr.mxu0 0.0
    %7274 = vmatpush1.msra.mxu0 0.0
    %7275 = vmatprep.subr.mxu0 0.0
    %7276 = vmatpush1.msra.mxu0 0.0
    %7277 = vmatprep.subr.mxu0 0.0
    %7278 = vmatpush1.msra.mxu0 0.0
    %7279 = vmatprep.subr.mxu0 0.0
    %7280 = vmatpush1.msra.mxu0 0.0
    %7281 = vmatprep.subr.mxu0 0.0
    %7282 = vmatpush1.msra.mxu0 0.0
    %7283 = vmatprep.subr.mxu0 0.0
    %7284 = vmatpush1.msra.mxu0 0.0
    %7285 = vmatprep.subr.mxu0 0.0
    %7286 = vmatpush1.msra.mxu0 0.0
    %7287 = vmatprep.subr.mxu0 0.0
    %7288 = vmatpush1.msra.mxu0 0.0
    %7289 = vmatprep.mubr.f32.mxu0 0.0
    %7290 = vmatmul.mubr.f32.gmra.mrb[0].mxu0 %v7081
    %v7291 = vpop.f32.mrb[0].mxu0
    %v7292 = vadd.f32 0.0, %v7291
    %v7293 = vpop.f32.mrb[0].mxu0
    %v7294 = vadd.f32 0.0, %v7293
    %7295 = vdwg.mxu0
    %7296 = vmatprep.subr.mxu0 %v7039
    %7297 = vmatpush1.msra.mxu0 %v7038
    %7298 = vmatprep.subr.mxu0 %v7047
    %7299 = vmatpush1.msra.mxu0 %v7046
    %7300 = vmatprep.subr.mxu0 %v7055
    %7301 = vmatpush1.msra.mxu0 %v7054
    %7302 = vmatprep.subr.mxu0 %v7063
    %7303 = vmatpush1.msra.mxu0 %v7062
    %7304 = vmatprep.subr.mxu0 %v7071
    %7305 = vmatpush1.msra.mxu0 %v7070
    %7306 = vmatprep.subr.mxu0 %v7079
    %7307 = vmatpush1.msra.mxu0 %v7078
    %7308 = vmatprep.subr.mxu0 0.0
    %7309 = vmatpush1.msra.mxu0 0.0
    %7310 = vmatprep.subr.mxu0 0.0
    %7311 = vmatpush1.msra.mxu0 0.0
    %7312 = vmatprep.subr.mxu0 0.0
    %7313 = vmatpush1.msra.mxu0 0.0
    %7314 = vmatprep.subr.mxu0 0.0
    %7315 = vmatpush1.msra.mxu0 0.0
    %7316 = vmatprep.subr.mxu0 0.0
    %7317 = vmatpush1.msra.mxu0 0.0
    %7318 = vmatprep.subr.mxu0 0.0
    %7319 = vmatpush1.msra.mxu0 0.0
    %7320 = vmatprep.subr.mxu0 0.0
    %7321 = vmatpush1.msra.mxu0 0.0
    %7322 = vmatprep.subr.mxu0 0.0
    %7323 = vmatpush1.msra.mxu0 0.0
    %7324 = vmatprep.subr.mxu0 0.0
    %7325 = vmatpush1.msra.mxu0 0.0
    %7326 = vmatprep.subr.mxu0 0.0
    %7327 = vmatpush1.msra.mxu0 0.0
    %7328 = vmatprep.subr.mxu0 0.0
    %7329 = vmatpush1.msra.mxu0 0.0
    %7330 = vmatprep.subr.mxu0 0.0
    %7331 = vmatpush1.msra.mxu0 0.0
    %7332 = vmatprep.subr.mxu0 0.0
    %7333 = vmatpush1.msra.mxu0 0.0
    %7334 = vmatprep.subr.mxu0 0.0
    %7335 = vmatpush1.msra.mxu0 0.0
    %7336 = vmatprep.subr.mxu0 0.0
    %7337 = vmatpush1.msra.mxu0 0.0
    %7338 = vmatprep.subr.mxu0 0.0
    %7339 = vmatpush1.msra.mxu0 0.0
    %7340 = vmatprep.subr.mxu0 0.0
    %7341 = vmatpush1.msra.mxu0 0.0
    %7342 = vmatprep.subr.mxu0 0.0
    %7343 = vmatpush1.msra.mxu0 0.0
    %7344 = vmatprep.subr.mxu0 0.0
    %7345 = vmatpush1.msra.mxu0 0.0
    %7346 = vmatprep.subr.mxu0 0.0
    %7347 = vmatpush1.msra.mxu0 0.0
    %7348 = vmatprep.subr.mxu0 0.0
    %7349 = vmatpush1.msra.mxu0 0.0
    %7350 = vmatprep.subr.mxu0 0.0
    %7351 = vmatpush1.msra.mxu0 0.0
    %7352 = vmatprep.subr.mxu0 0.0
    %7353 = vmatpush1.msra.mxu0 0.0
    %7354 = vmatprep.subr.mxu0 0.0
    %7355 = vmatpush1.msra.mxu0 0.0
    %7356 = vmatprep.subr.mxu0 0.0
    %7357 = vmatpush1.msra.mxu0 0.0
    %7358 = vmatprep.subr.mxu0 0.0
    %7359 = vmatpush1.msra.mxu0 0.0
    %7360 = vmatprep.mubr.f32.mxu0 0.0
    %7361 = vmatmul.mubr.f32.gmra.mrb[0].mxu0 %v7081
    %v7362 = vpop.f32.mrb[0].mxu0
    %v7363 = vadd.f32 0.0, %v7362
    %v7364 = vpop.f32.mrb[0].mxu0
    %v7365 = vadd.f32 0.0, %v7364
    %7366 = vdwg.mxu0
    %v7367 = vld [vmem:[#allocation7] sm:$0xff]
    %v7368 = vld [vmem:[#allocation7 + $0x8] sm:$0xff]
    %v7369 = vld [vmem:[#allocation7 + $0x10] sm:$0xff]
    %v7370 = vld [vmem:[#allocation7 + $0x18] sm:$0xff]
    %v7371 = vld [vmem:[#allocation7 + $0x20] sm:$0xff]
    %v7372 = vld [vmem:[#allocation7 + $0x28] sm:$0xff]
    %v7373 = vld [vmem:[#allocation7 + $0x30] sm:$0xff]
    %v7374 = vld [vmem:[#allocation7 + $0x38] sm:$0xff]
    %v7375 = vld [vmem:[#allocation7 + $0x40] sm:$0xff]
    %v7376 = vld [vmem:[#allocation7 + $0x48] sm:$0xff]
    %v7377 = vld [vmem:[#allocation7 + $0x50] sm:$0xff]
    %v7378 = vld [vmem:[#allocation7 + $0x58] sm:$0xff]
    %v7379 = vld [vmem:[#allocation7 + $0x60] sm:$0xff]
    %v7380 = vld [vmem:[#allocation7 + $0x68] sm:$0xff]
    %v7381 = vld [vmem:[#allocation7 + $0x70] sm:$0xff]
    %v7382 = vld [vmem:[#allocation7 + $0x78] sm:$0xff]
    %v7383 = vld [vmem:[#allocation7 + $0x80] sm:$0xff]
    %v7384 = vld [vmem:[#allocation7 + $0x88] sm:$0xff]
    %v7385 = vld [vmem:[#allocation7 + $0x90] sm:$0xff]
    %v7386 = vld [vmem:[#allocation7 + $0x98] sm:$0xff]
    %v7387 = vld [vmem:[#allocation7 + $0xa0] sm:$0xff]
    %v7388 = vld [vmem:[#allocation7 + $0xa8] sm:$0xff]
    %v7389 = vld [vmem:[#allocation7 + $0xb0] sm:$0xff]
    %v7390 = vld [vmem:[#allocation7 + $0xb8] sm:$0xff]
    %v7392 = vsel %vm640, %v7030, 0
    %7394 = vmatprep.subr.mxu0 %v7368
    %7395 = vmatpush1.msra.mxu0 %v7367
    %7396 = vmatprep.subr.mxu0 %v7372
    %7397 = vmatpush1.msra.mxu0 %v7371
    %7398 = vmatprep.subr.mxu0 %v7376
    %7399 = vmatpush1.msra.mxu0 %v7375
    %7400 = vmatprep.subr.mxu0 %v7380
    %7401 = vmatpush1.msra.mxu0 %v7379
    %7402 = vmatprep.subr.mxu0 %v7384
    %7403 = vmatpush1.msra.mxu0 %v7383
    %7404 = vmatprep.subr.mxu0 %v7388
    %7405 = vmatpush1.msra.mxu0 %v7387
    %7406 = vmatprep.subr.mxu0 0.0
    %7407 = vmatpush1.msra.mxu0 0.0
    %7408 = vmatprep.subr.mxu0 0.0
    %7409 = vmatpush1.msra.mxu0 0.0
    %7410 = vmatprep.subr.mxu0 0.0
    %7411 = vmatpush1.msra.mxu0 0.0
    %7412 = vmatprep.subr.mxu0 0.0
    %7413 = vmatpush1.msra.mxu0 0.0
    %7414 = vmatprep.subr.mxu0 0.0
    %7415 = vmatpush1.msra.mxu0 0.0
    %7416 = vmatprep.subr.mxu0 0.0
    %7417 = vmatpush1.msra.mxu0 0.0
    %7418 = vmatprep.subr.mxu0 0.0
    %7419 = vmatpush1.msra.mxu0 0.0
    %7420 = vmatprep.subr.mxu0 0.0
    %7421 = vmatpush1.msra.mxu0 0.0
    %7422 = vmatprep.subr.mxu0 0.0
    %7423 = vmatpush1.msra.mxu0 0.0
    %7424 = vmatprep.subr.mxu0 0.0
    %7425 = vmatpush1.msra.mxu0 0.0
    %7426 = vmatprep.subr.mxu0 0.0
    %7427 = vmatpush1.msra.mxu0 0.0
    %7428 = vmatprep.subr.mxu0 0.0
    %7429 = vmatpush1.msra.mxu0 0.0
    %7430 = vmatprep.subr.mxu0 0.0
    %7431 = vmatpush1.msra.mxu0 0.0
    %7432 = vmatprep.subr.mxu0 0.0
    %7433 = vmatpush1.msra.mxu0 0.0
    %7434 = vmatprep.subr.mxu0 0.0
    %7435 = vmatpush1.msra.mxu0 0.0
    %7436 = vmatprep.subr.mxu0 0.0
    %7437 = vmatpush1.msra.mxu0 0.0
    %7438 = vmatprep.subr.mxu0 0.0
    %7439 = vmatpush1.msra.mxu0 0.0
    %7440 = vmatprep.subr.mxu0 0.0
    %7441 = vmatpush1.msra.mxu0 0.0
    %7442 = vmatprep.subr.mxu0 0.0
    %7443 = vmatpush1.msra.mxu0 0.0
    %7444 = vmatprep.subr.mxu0 0.0
    %7445 = vmatpush1.msra.mxu0 0.0
    %7446 = vmatprep.subr.mxu0 0.0
    %7447 = vmatpush1.msra.mxu0 0.0
    %7448 = vmatprep.subr.mxu0 0.0
    %7449 = vmatpush1.msra.mxu0 0.0
    %7450 = vmatprep.subr.mxu0 0.0
    %7451 = vmatpush1.msra.mxu0 0.0
    %7452 = vmatprep.subr.mxu0 0.0
    %7453 = vmatpush1.msra.mxu0 0.0
    %7454 = vmatprep.subr.mxu0 0.0
    %7455 = vmatpush1.msra.mxu0 0.0
    %7456 = vmatprep.subr.mxu0 0.0
    %7457 = vmatpush1.msra.mxu0 0.0
    %7458 = vmatprep.mubr.f32.mxu0 0.0
    %7459 = vmatmul.mubr.f32.gmra.mrb[0].mxu0 %v7392
    %v7460 = vpop.f32.mrb[0].mxu0
    %v7461 = vadd.f32 0.0, %v7460
    %v7462 = vpop.f32.mrb[0].mxu0
    %v7463 = vadd.f32 0.0, %v7462
    %7464 = vdwg.mxu0
    %7465 = vmatprep.subr.mxu0 %v7370
    %7466 = vmatpush1.msra.mxu0 %v7369
    %7467 = vmatprep.subr.mxu0 %v7374
    %7468 = vmatpush1.msra.mxu0 %v7373
    %7469 = vmatprep.subr.mxu0 %v7378
    %7470 = vmatpush1.msra.mxu0 %v7377
    %7471 = vmatprep.subr.mxu0 %v7382
    %7472 = vmatpush1.msra.mxu0 %v7381
    %7473 = vmatprep.subr.mxu0 %v7386
    %7474 = vmatpush1.msra.mxu0 %v7385
    %7475 = vmatprep.subr.mxu0 %v7390
    %7476 = vmatpush1.msra.mxu0 %v7389
    %7477 = vmatprep.subr.mxu0 0.0
    %7478 = vmatpush1.msra.mxu0 0.0
    %7479 = vmatprep.subr.mxu0 0.0
    %7480 = vmatpush1.msra.mxu0 0.0
    %7481 = vmatprep.subr.mxu0 0.0
    %7482 = vmatpush1.msra.mxu0 0.0
    %7483 = vmatprep.subr.mxu0 0.0
    %7484 = vmatpush1.msra.mxu0 0.0
    %7485 = vmatprep.subr.mxu0 0.0
    %7486 = vmatpush1.msra.mxu0 0.0
    %7487 = vmatprep.subr.mxu0 0.0
    %7488 = vmatpush1.msra.mxu0 0.0
    %7489 = vmatprep.subr.mxu0 0.0
    %7490 = vmatpush1.msra.mxu0 0.0
    %7491 = vmatprep.subr.mxu0 0.0
    %7492 = vmatpush1.msra.mxu0 0.0
    %7493 = vmatprep.subr.mxu0 0.0
    %7494 = vmatpush1.msra.mxu0 0.0
    %7495 = vmatprep.subr.mxu0 0.0
    %7496 = vmatpush1.msra.mxu0 0.0
    %7497 = vmatprep.subr.mxu0 0.0
    %7498 = vmatpush1.msra.mxu0 0.0
    %7499 = vmatprep.subr.mxu0 0.0
    %7500 = vmatpush1.msra.mxu0 0.0
    %7501 = vmatprep.subr.mxu0 0.0
    %7502 = vmatpush1.msra.mxu0 0.0
    %7503 = vmatprep.subr.mxu0 0.0
    %7504 = vmatpush1.msra.mxu0 0.0
    %7505 = vmatprep.subr.mxu0 0.0
    %7506 = vmatpush1.msra.mxu0 0.0
    %7507 = vmatprep.subr.mxu0 0.0
    %7508 = vmatpush1.msra.mxu0 0.0
    %7509 = vmatprep.subr.mxu0 0.0
    %7510 = vmatpush1.msra.mxu0 0.0
    %7511 = vmatprep.subr.mxu0 0.0
    %7512 = vmatpush1.msra.mxu0 0.0
    %7513 = vmatprep.subr.mxu0 0.0
    %7514 = vmatpush1.msra.mxu0 0.0
    %7515 = vmatprep.subr.mxu0 0.0
    %7516 = vmatpush1.msra.mxu0 0.0
    %7517 = vmatprep.subr.mxu0 0.0
    %7518 = vmatpush1.msra.mxu0 0.0
    %7519 = vmatprep.subr.mxu0 0.0
    %7520 = vmatpush1.msra.mxu0 0.0
    %7521 = vmatprep.subr.mxu0 0.0
    %7522 = vmatpush1.msra.mxu0 0.0
    %7523 = vmatprep.subr.mxu0 0.0
    %7524 = vmatpush1.msra.mxu0 0.0
    %7525 = vmatprep.subr.mxu0 0.0
    %7526 = vmatpush1.msra.mxu0 0.0
    %7527 = vmatprep.subr.mxu0 0.0
    %7528 = vmatpush1.msra.mxu0 0.0
    %7529 = vmatprep.mubr.f32.mxu0 0.0
    %7530 = vmatmul.mubr.f32.gmra.mrb[0].mxu0 %v7392
    %v7531 = vpop.f32.mrb[0].mxu0
    %v7532 = vadd.f32 0.0, %v7531
    %v7533 = vpop.f32.mrb[0].mxu0
    %v7534 = vadd.f32 0.0, %v7533
    %7535 = vdwg.mxu0
    %v7536 = vld [vmem:[#allocation2 + $0x1a0] sm:$0xff]
    %v7537 = vld [vmem:[#allocation2 + $0x1a8] sm:$0xff]
    %v7538 = vld [vmem:[#allocation2 + $0x1b0] sm:$0xff]
    %v7539 = vld [vmem:[#allocation2 + $0x1b8] sm:$0xff]
    %v7540 = vadd.f32 %v7536, %v7150
    %v7541 = vadd.f32 %v7537, %v7152
    %v7542 = vadd.f32 %v7538, %v7221
    %v7543 = vadd.f32 %v7539, %v7223
    %v7544 = vtanh.pop %v7540
    %v7545 = vtanh.pop %v7541
    %v7546 = vtanh.pop %v7542
    %v7547 = vtanh.pop %v7543
    %v7548 = vmul.f32 %v7544, 0.5
    %v7549 = vadd.f32 %v7548, 0.5
    %v7550 = vmul.f32 %v7545, 0.5
    %v7551 = vadd.f32 %v7550, 0.5
    %v7552 = vmul.f32 %v7547, 0.5
    %v7553 = vadd.f32 %v7552, 0.5
    %v7554 = vmul.f32 %v7551, %v7005
    %v7555 = vmul.f32 %v7549, %v7546
    %v7556 = vadd.f32 %v7554, %v7555
    %v7557 = vtanh.pop %v7556
    %v7558 = vmul.f32 %v7553, %v7557
    %v7559 = vadd.f32 %v7292, %v556
    %v7560 = vadd.f32 %v7294, %v560
    %v7561 = vadd.f32 %v7363, %v564
    %v7562 = vadd.f32 %v7365, %v568
    %v7563 = vadd.f32 %v7559, %v7461
    %v7564 = vadd.f32 %v7560, %v7463
    %v7565 = vadd.f32 %v7561, %v7532
    %v7566 = vadd.f32 %v7562, %v7534
    %v7567 = vtanh.pop %v7563
    %v7568 = vtanh.pop %v7564
    %v7569 = vtanh.pop %v7565
    %v7570 = vtanh.pop %v7566
    %v7571 = vmul.f32 %v7567, 0.5
    %v7572 = vadd.f32 %v7571, 0.5
    %v7573 = vmul.f32 %v7568, 0.5
    %v7574 = vadd.f32 %v7573, 0.5
    %v7575 = vmul.f32 %v7570, 0.5
    %v7576 = vadd.f32 %v7575, 0.5
    %v7577 = vmul.f32 %v7574, %v7028
    %v7578 = vmul.f32 %v7572, %v7569
    %v7579 = vadd.f32 %v7577, %v7578
    %v7580 = vtanh.pop %v7579
    %v7581 = vmul.f32 %v7576, %v7580
    %7582 = vst.msk [vmem:[#allocation3 + $0x60] sm:$0xff] %vm640, %v7581
    %v7583 = vld [vmem:[#allocation4] sm:$0xff]
    %v7584 = vld [vmem:[#allocation4 + $0x8] sm:$0xff]
    %v7585 = vld [vmem:[#allocation4 + $0x10] sm:$0xff]
    %v7586 = vld [vmem:[#allocation4 + $0x18] sm:$0xff]
    %v7587 = vld [vmem:[#allocation4 + $0x20] sm:$0xff]
    %v7588 = vld [vmem:[#allocation4 + $0x28] sm:$0xff]
    %v7589 = vld [vmem:[#allocation4 + $0x30] sm:$0xff]
    %v7590 = vld [vmem:[#allocation4 + $0x38] sm:$0xff]
    %v7591 = vld [vmem:[#allocation4 + $0x40] sm:$0xff]
    %v7592 = vld [vmem:[#allocation4 + $0x48] sm:$0xff]
    %v7593 = vld [vmem:[#allocation4 + $0x50] sm:$0xff]
    %v7594 = vld [vmem:[#allocation4 + $0x58] sm:$0xff]
    %v7595 = vld [vmem:[#allocation4 + $0x60] sm:$0xff]
    %v7596 = vld [vmem:[#allocation4 + $0x68] sm:$0xff]
    %v7597 = vld [vmem:[#allocation4 + $0x70] sm:$0xff]
    %v7598 = vld [vmem:[#allocation4 + $0x78] sm:$0xff]
    %v7599 = vld [vmem:[#allocation4 + $0x80] sm:$0xff]
    %v7600 = vld [vmem:[#allocation4 + $0x88] sm:$0xff]
    %v7601 = vld [vmem:[#allocation4 + $0x90] sm:$0xff]
    %v7602 = vld [vmem:[#allocation4 + $0x98] sm:$0xff]
    %v7603 = vld [vmem:[#allocation4 + $0xa0] sm:$0xff]
    %v7604 = vld [vmem:[#allocation4 + $0xa8] sm:$0xff]
    %v7605 = vld [vmem:[#allocation4 + $0xb0] sm:$0xff]
    %v7606 = vld [vmem:[#allocation4 + $0xb8] sm:$0xff]
    %v7607 = vld [vmem:[#allocation4 + $0xc0] sm:$0xff]
    %v7608 = vld [vmem:[#allocation4 + $0xc8] sm:$0xff]
    %v7609 = vld [vmem:[#allocation4 + $0xd0] sm:$0xff]
    %v7610 = vld [vmem:[#allocation4 + $0xd8] sm:$0xff]
    %v7611 = vld [vmem:[#allocation4 + $0xe0] sm:$0xff]
    %v7612 = vld [vmem:[#allocation4 + $0xe8] sm:$0xff]
    %v7613 = vld [vmem:[#allocation4 + $0xf0] sm:$0xff]
    %v7614 = vld [vmem:[#allocation4 + $0xf8] sm:$0xff]
    %v7615 = vld [vmem:[#allocation4 + $0x100] sm:$0xff]
    %v7616 = vld [vmem:[#allocation4 + $0x108] sm:$0xff]
    %v7617 = vld [vmem:[#allocation4 + $0x110] sm:$0xff]
    %v7618 = vld [vmem:[#allocation4 + $0x118] sm:$0xff]
    %v7619 = vld [vmem:[#allocation4 + $0x120] sm:$0xff]
    %v7620 = vld [vmem:[#allocation4 + $0x128] sm:$0xff]
    %v7621 = vld [vmem:[#allocation4 + $0x130] sm:$0xff]
    %v7622 = vld [vmem:[#allocation4 + $0x138] sm:$0xff]
    %v7623 = vld [vmem:[#allocation4 + $0x140] sm:$0xff]
    %v7624 = vld [vmem:[#allocation4 + $0x148] sm:$0xff]
    %v7625 = vld [vmem:[#allocation4 + $0x150] sm:$0xff]
    %v7626 = vld [vmem:[#allocation4 + $0x158] sm:$0xff]
    %v7627 = vld [vmem:[#allocation4 + $0x160] sm:$0xff]
    %v7628 = vld [vmem:[#allocation4 + $0x168] sm:$0xff]
    %v7629 = vld [vmem:[#allocation4 + $0x170] sm:$0xff]
    %v7630 = vld [vmem:[#allocation4 + $0x178] sm:$0xff]
    %v7632 = vsel %vm640, %v7558, 0
    %7634 = vmatprep.subr.mxu0 %v7584
    %7635 = vmatpush1.msra.mxu0 %v7583
    %7636 = vmatprep.subr.mxu0 %v7592
    %7637 = vmatpush1.msra.mxu0 %v7591
    %7638 = vmatprep.subr.mxu0 %v7600
    %7639 = vmatpush1.msra.mxu0 %v7599
    %7640 = vmatprep.subr.mxu0 %v7608
    %7641 = vmatpush1.msra.mxu0 %v7607
    %7642 = vmatprep.subr.mxu0 %v7616
    %7643 = vmatpush1.msra.mxu0 %v7615
    %7644 = vmatprep.subr.mxu0 %v7624
    %7645 = vmatpush1.msra.mxu0 %v7623
    %7646 = vmatprep.subr.mxu0 0.0
    %7647 = vmatpush1.msra.mxu0 0.0
    %7648 = vmatprep.subr.mxu0 0.0
    %7649 = vmatpush1.msra.mxu0 0.0
    %7650 = vmatprep.subr.mxu0 0.0
    %7651 = vmatpush1.msra.mxu0 0.0
    %7652 = vmatprep.subr.mxu0 0.0
    %7653 = vmatpush1.msra.mxu0 0.0
    %7654 = vmatprep.subr.mxu0 0.0
    %7655 = vmatpush1.msra.mxu0 0.0
    %7656 = vmatprep.subr.mxu0 0.0
    %7657 = vmatpush1.msra.mxu0 0.0
    %7658 = vmatprep.subr.mxu0 0.0
    %7659 = vmatpush1.msra.mxu0 0.0
    %7660 = vmatprep.subr.mxu0 0.0
    %7661 = vmatpush1.msra.mxu0 0.0
    %7662 = vmatprep.subr.mxu0 0.0
    %7663 = vmatpush1.msra.mxu0 0.0
    %7664 = vmatprep.subr.mxu0 0.0
    %7665 = vmatpush1.msra.mxu0 0.0
    %7666 = vmatprep.subr.mxu0 0.0
    %7667 = vmatpush1.msra.mxu0 0.0
    %7668 = vmatprep.subr.mxu0 0.0
    %7669 = vmatpush1.msra.mxu0 0.0
    %7670 = vmatprep.subr.mxu0 0.0
    %7671 = vmatpush1.msra.mxu0 0.0
    %7672 = vmatprep.subr.mxu0 0.0
    %7673 = vmatpush1.msra.mxu0 0.0
    %7674 = vmatprep.subr.mxu0 0.0
    %7675 = vmatpush1.msra.mxu0 0.0
    %7676 = vmatprep.subr.mxu0 0.0
    %7677 = vmatpush1.msra.mxu0 0.0
    %7678 = vmatprep.subr.mxu0 0.0
    %7679 = vmatpush1.msra.mxu0 0.0
    %7680 = vmatprep.subr.mxu0 0.0
    %7681 = vmatpush1.msra.mxu0 0.0
    %7682 = vmatprep.subr.mxu0 0.0
    %7683 = vmatpush1.msra.mxu0 0.0
    %7684 = vmatprep.subr.mxu0 0.0
    %7685 = vmatpush1.msra.mxu0 0.0
    %7686 = vmatprep.subr.mxu0 0.0
    %7687 = vmatpush1.msra.mxu0 0.0
    %7688 = vmatprep.subr.mxu0 0.0
    %7689 = vmatpush1.msra.mxu0 0.0
    %7690 = vmatprep.subr.mxu0 0.0
    %7691 = vmatpush1.msra.mxu0 0.0
    %7692 = vmatprep.subr.mxu0 0.0
    %7693 = vmatpush1.msra.mxu0 0.0
    %7694 = vmatprep.subr.mxu0 0.0
    %7695 = vmatpush1.msra.mxu0 0.0
    %7696 = vmatprep.subr.mxu0 0.0
    %7697 = vmatpush1.msra.mxu0 0.0
    %7698 = vmatprep.mubr.f32.mxu0 0.0
    %7699 = vmatmul.mubr.f32.gmra.mrb[0].mxu0 %v7632
    %v7700 = vpop.f32.mrb[0].mxu0
    %v7701 = vadd.f32 0.0, %v7700
    %v7702 = vpop.f32.mrb[0].mxu0
    %v7703 = vadd.f32 0.0, %v7702
    %7704 = vdwg.mxu0
    %7705 = vmatprep.subr.mxu0 %v7586
    %7706 = vmatpush1.msra.mxu0 %v7585
    %7707 = vmatprep.subr.mxu0 %v7594
    %7708 = vmatpush1.msra.mxu0 %v7593
    %7709 = vmatprep.subr.mxu0 %v7602
    %7710 = vmatpush1.msra.mxu0 %v7601
    %7711 = vmatprep.subr.mxu0 %v7610
    %7712 = vmatpush1.msra.mxu0 %v7609
    %7713 = vmatprep.subr.mxu0 %v7618
    %7714 = vmatpush1.msra.mxu0 %v7617
    %7715 = vmatprep.subr.mxu0 %v7626
    %7716 = vmatpush1.msra.mxu0 %v7625
    %7717 = vmatprep.subr.mxu0 0.0
    %7718 = vmatpush1.msra.mxu0 0.0
    %7719 = vmatprep.subr.mxu0 0.0
    %7720 = vmatpush1.msra.mxu0 0.0
    %7721 = vmatprep.subr.mxu0 0.0
    %7722 = vmatpush1.msra.mxu0 0.0
    %7723 = vmatprep.subr.mxu0 0.0
    %7724 = vmatpush1.msra.mxu0 0.0
    %7725 = vmatprep.subr.mxu0 0.0
    %7726 = vmatpush1.msra.mxu0 0.0
    %7727 = vmatprep.subr.mxu0 0.0
    %7728 = vmatpush1.msra.mxu0 0.0
    %7729 = vmatprep.subr.mxu0 0.0
    %7730 = vmatpush1.msra.mxu0 0.0
    %7731 = vmatprep.subr.mxu0 0.0
    %7732 = vmatpush1.msra.mxu0 0.0
    %7733 = vmatprep.subr.mxu0 0.0
    %7734 = vmatpush1.msra.mxu0 0.0
    %7735 = vmatprep.subr.mxu0 0.0
    %7736 = vmatpush1.msra.mxu0 0.0
    %7737 = vmatprep.subr.mxu0 0.0
    %7738 = vmatpush1.msra.mxu0 0.0
    %7739 = vmatprep.subr.mxu0 0.0
    %7740 = vmatpush1.msra.mxu0 0.0
    %7741 = vmatprep.subr.mxu0 0.0
    %7742 = vmatpush1.msra.mxu0 0.0
    %7743 = vmatprep.subr.mxu0 0.0
    %7744 = vmatpush1.msra.mxu0 0.0
    %7745 = vmatprep.subr.mxu0 0.0
    %7746 = vmatpush1.msra.mxu0 0.0
    %7747 = vmatprep.subr.mxu0 0.0
    %7748 = vmatpush1.msra.mxu0 0.0
    %7749 = vmatprep.subr.mxu0 0.0
    %7750 = vmatpush1.msra.mxu0 0.0
    %7751 = vmatprep.subr.mxu0 0.0
    %7752 = vmatpush1.msra.mxu0 0.0
    %7753 = vmatprep.subr.mxu0 0.0
    %7754 = vmatpush1.msra.mxu0 0.0
    %7755 = vmatprep.subr.mxu0 0.0
    %7756 = vmatpush1.msra.mxu0 0.0
    %7757 = vmatprep.subr.mxu0 0.0
    %7758 = vmatpush1.msra.mxu0 0.0
    %7759 = vmatprep.subr.mxu0 0.0
    %7760 = vmatpush1.msra.mxu0 0.0
    %7761 = vmatprep.subr.mxu0 0.0
    %7762 = vmatpush1.msra.mxu0 0.0
    %7763 = vmatprep.subr.mxu0 0.0
    %7764 = vmatpush1.msra.mxu0 0.0
    %7765 = vmatprep.subr.mxu0 0.0
    %7766 = vmatpush1.msra.mxu0 0.0
    %7767 = vmatprep.subr.mxu0 0.0
    %7768 = vmatpush1.msra.mxu0 0.0
    %7769 = vmatprep.mubr.f32.mxu0 0.0
    %7770 = vmatmul.mubr.f32.gmra.mrb[0].mxu0 %v7632
    %v7771 = vpop.f32.mrb[0].mxu0
    %v7772 = vadd.f32 0.0, %v7771
    %v7773 = vpop.f32.mrb[0].mxu0
    %v7774 = vadd.f32 0.0, %v7773
    %7775 = vdwg.mxu0
    %7776 = vmatprep.subr.mxu0 %v7588
    %7777 = vmatpush1.msra.mxu0 %v7587
    %7778 = vmatprep.subr.mxu0 %v7596
    %7779 = vmatpush1.msra.mxu0 %v7595
    %7780 = vmatprep.subr.mxu0 %v7604
    %7781 = vmatpush1.msra.mxu0 %v7603
    %7782 = vmatprep.subr.mxu0 %v7612
    %7783 = vmatpush1.msra.mxu0 %v7611
    %7784 = vmatprep.subr.mxu0 %v7620
    %7785 = vmatpush1.msra.mxu0 %v7619
    %7786 = vmatprep.subr.mxu0 %v7628
    %7787 = vmatpush1.msra.mxu0 %v7627
    %7788 = vmatprep.subr.mxu0 0.0
    %7789 = vmatpush1.msra.mxu0 0.0
    %7790 = vmatprep.subr.mxu0 0.0
    %7791 = vmatpush1.msra.mxu0 0.0
    %7792 = vmatprep.subr.mxu0 0.0
    %7793 = vmatpush1.msra.mxu0 0.0
    %7794 = vmatprep.subr.mxu0 0.0
    %7795 = vmatpush1.msra.mxu0 0.0
    %7796 = vmatprep.subr.mxu0 0.0
    %7797 = vmatpush1.msra.mxu0 0.0
    %7798 = vmatprep.subr.mxu0 0.0
    %7799 = vmatpush1.msra.mxu0 0.0
    %7800 = vmatprep.subr.mxu0 0.0
    %7801 = vmatpush1.msra.mxu0 0.0
    %7802 = vmatprep.subr.mxu0 0.0
    %7803 = vmatpush1.msra.mxu0 0.0
    %7804 = vmatprep.subr.mxu0 0.0
    %7805 = vmatpush1.msra.mxu0 0.0
    %7806 = vmatprep.subr.mxu0 0.0
    %7807 = vmatpush1.msra.mxu0 0.0
    %7808 = vmatprep.subr.mxu0 0.0
    %7809 = vmatpush1.msra.mxu0 0.0
    %7810 = vmatprep.subr.mxu0 0.0
    %7811 = vmatpush1.msra.mxu0 0.0
    %7812 = vmatprep.subr.mxu0 0.0
    %7813 = vmatpush1.msra.mxu0 0.0
    %7814 = vmatprep.subr.mxu0 0.0
    %7815 = vmatpush1.msra.mxu0 0.0
    %7816 = vmatprep.subr.mxu0 0.0
    %7817 = vmatpush1.msra.mxu0 0.0
    %7818 = vmatprep.subr.mxu0 0.0
    %7819 = vmatpush1.msra.mxu0 0.0
    %7820 = vmatprep.subr.mxu0 0.0
    %7821 = vmatpush1.msra.mxu0 0.0
    %7822 = vmatprep.subr.mxu0 0.0
    %7823 = vmatpush1.msra.mxu0 0.0
    %7824 = vmatprep.subr.mxu0 0.0
    %7825 = vmatpush1.msra.mxu0 0.0
    %7826 = vmatprep.subr.mxu0 0.0
    %7827 = vmatpush1.msra.mxu0 0.0
    %7828 = vmatprep.subr.mxu0 0.0
    %7829 = vmatpush1.msra.mxu0 0.0
    %7830 = vmatprep.subr.mxu0 0.0
    %7831 = vmatpush1.msra.mxu0 0.0
    %7832 = vmatprep.subr.mxu0 0.0
    %7833 = vmatpush1.msra.mxu0 0.0
    %7834 = vmatprep.subr.mxu0 0.0
    %7835 = vmatpush1.msra.mxu0 0.0
    %7836 = vmatprep.subr.mxu0 0.0
    %7837 = vmatpush1.msra.mxu0 0.0
    %7838 = vmatprep.subr.mxu0 0.0
    %7839 = vmatpush1.msra.mxu0 0.0
    %7840 = vmatprep.mubr.f32.mxu0 0.0
    %7841 = vmatmul.mubr.f32.gmra.mrb[0].mxu0 %v7632
    %v7842 = vpop.f32.mrb[0].mxu0
    %v7843 = vadd.f32 0.0, %v7842
    %v7844 = vpop.f32.mrb[0].mxu0
    %v7845 = vadd.f32 0.0, %v7844
    %7846 = vdwg.mxu0
    %7847 = vmatprep.subr.mxu0 %v7590
    %7848 = vmatpush1.msra.mxu0 %v7589
    %7849 = vmatprep.subr.mxu0 %v7598
    %7850 = vmatpush1.msra.mxu0 %v7597
    %7851 = vmatprep.subr.mxu0 %v7606
    %7852 = vmatpush1.msra.mxu0 %v7605
    %7853 = vmatprep.subr.mxu0 %v7614
    %7854 = vmatpush1.msra.mxu0 %v7613
    %7855 = vmatprep.subr.mxu0 %v7622
    %7856 = vmatpush1.msra.mxu0 %v7621
    %7857 = vmatprep.subr.mxu0 %v7630
    %7858 = vmatpush1.msra.mxu0 %v7629
    %7859 = vmatprep.subr.mxu0 0.0
    %7860 = vmatpush1.msra.mxu0 0.0
    %7861 = vmatprep.subr.mxu0 0.0
    %7862 = vmatpush1.msra.mxu0 0.0
    %7863 = vmatprep.subr.mxu0 0.0
    %7864 = vmatpush1.msra.mxu0 0.0
    %7865 = vmatprep.subr.mxu0 0.0
    %7866 = vmatpush1.msra.mxu0 0.0
    %7867 = vmatprep.subr.mxu0 0.0
    %7868 = vmatpush1.msra.mxu0 0.0
    %7869 = vmatprep.subr.mxu0 0.0
    %7870 = vmatpush1.msra.mxu0 0.0
    %7871 = vmatprep.subr.mxu0 0.0
    %7872 = vmatpush1.msra.mxu0 0.0
    %7873 = vmatprep.subr.mxu0 0.0
    %7874 = vmatpush1.msra.mxu0 0.0
    %7875 = vmatprep.subr.mxu0 0.0
    %7876 = vmatpush1.msra.mxu0 0.0
    %7877 = vmatprep.subr.mxu0 0.0
    %7878 = vmatpush1.msra.mxu0 0.0
    %7879 = vmatprep.subr.mxu0 0.0
    %7880 = vmatpush1.msra.mxu0 0.0
    %7881 = vmatprep.subr.mxu0 0.0
    %7882 = vmatpush1.msra.mxu0 0.0
    %7883 = vmatprep.subr.mxu0 0.0
    %7884 = vmatpush1.msra.mxu0 0.0
    %7885 = vmatprep.subr.mxu0 0.0
    %7886 = vmatpush1.msra.mxu0 0.0
    %7887 = vmatprep.subr.mxu0 0.0
    %7888 = vmatpush1.msra.mxu0 0.0
    %7889 = vmatprep.subr.mxu0 0.0
    %7890 = vmatpush1.msra.mxu0 0.0
    %7891 = vmatprep.subr.mxu0 0.0
    %7892 = vmatpush1.msra.mxu0 0.0
    %7893 = vmatprep.subr.mxu0 0.0
    %7894 = vmatpush1.msra.mxu0 0.0
    %7895 = vmatprep.subr.mxu0 0.0
    %7896 = vmatpush1.msra.mxu0 0.0
    %7897 = vmatprep.subr.mxu0 0.0
    %7898 = vmatpush1.msra.mxu0 0.0
    %7899 = vmatprep.subr.mxu0 0.0
    %7900 = vmatpush1.msra.mxu0 0.0
    %7901 = vmatprep.subr.mxu0 0.0
    %7902 = vmatpush1.msra.mxu0 0.0
    %7903 = vmatprep.subr.mxu0 0.0
    %7904 = vmatpush1.msra.mxu0 0.0
    %7905 = vmatprep.subr.mxu0 0.0
    %7906 = vmatpush1.msra.mxu0 0.0
    %7907 = vmatprep.subr.mxu0 0.0
    %7908 = vmatpush1.msra.mxu0 0.0
    %7909 = vmatprep.subr.mxu0 0.0
    %7910 = vmatpush1.msra.mxu0 0.0
    %7911 = vmatprep.mubr.f32.mxu0 0.0
    %7912 = vmatmul.mubr.f32.gmra.mrb[0].mxu0 %v7632
    %v7913 = vpop.f32.mrb[0].mxu0
    %v7914 = vadd.f32 0.0, %v7913
    %v7915 = vpop.f32.mrb[0].mxu0
    %v7916 = vadd.f32 0.0, %v7915
    %7917 = vdwg.mxu0
    %v7918 = vld [vmem:[#allocation7] sm:$0xff]
    %v7919 = vld [vmem:[#allocation7 + $0x8] sm:$0xff]
    %v7920 = vld [vmem:[#allocation7 + $0x10] sm:$0xff]
    %v7921 = vld [vmem:[#allocation7 + $0x18] sm:$0xff]
    %v7922 = vld [vmem:[#allocation7 + $0x20] sm:$0xff]
    %v7923 = vld [vmem:[#allocation7 + $0x28] sm:$0xff]
    %v7924 = vld [vmem:[#allocation7 + $0x30] sm:$0xff]
    %v7925 = vld [vmem:[#allocation7 + $0x38] sm:$0xff]
    %v7926 = vld [vmem:[#allocation7 + $0x40] sm:$0xff]
    %v7927 = vld [vmem:[#allocation7 + $0x48] sm:$0xff]
    %v7928 = vld [vmem:[#allocation7 + $0x50] sm:$0xff]
    %v7929 = vld [vmem:[#allocation7 + $0x58] sm:$0xff]
    %v7930 = vld [vmem:[#allocation7 + $0x60] sm:$0xff]
    %v7931 = vld [vmem:[#allocation7 + $0x68] sm:$0xff]
    %v7932 = vld [vmem:[#allocation7 + $0x70] sm:$0xff]
    %v7933 = vld [vmem:[#allocation7 + $0x78] sm:$0xff]
    %v7934 = vld [vmem:[#allocation7 + $0x80] sm:$0xff]
    %v7935 = vld [vmem:[#allocation7 + $0x88] sm:$0xff]
    %v7936 = vld [vmem:[#allocation7 + $0x90] sm:$0xff]
    %v7937 = vld [vmem:[#allocation7 + $0x98] sm:$0xff]
    %v7938 = vld [vmem:[#allocation7 + $0xa0] sm:$0xff]
    %v7939 = vld [vmem:[#allocation7 + $0xa8] sm:$0xff]
    %v7940 = vld [vmem:[#allocation7 + $0xb0] sm:$0xff]
    %v7941 = vld [vmem:[#allocation7 + $0xb8] sm:$0xff]
    %v7943 = vsel %vm640, %v7581, 0
    %7945 = vmatprep.subr.mxu0 %v7919
    %7946 = vmatpush1.msra.mxu0 %v7918
    %7947 = vmatprep.subr.mxu0 %v7923
    %7948 = vmatpush1.msra.mxu0 %v7922
    %7949 = vmatprep.subr.mxu0 %v7927
    %7950 = vmatpush1.msra.mxu0 %v7926
    %7951 = vmatprep.subr.mxu0 %v7931
    %7952 = vmatpush1.msra.mxu0 %v7930
    %7953 = vmatprep.subr.mxu0 %v7935
    %7954 = vmatpush1.msra.mxu0 %v7934
    %7955 = vmatprep.subr.mxu0 %v7939
    %7956 = vmatpush1.msra.mxu0 %v7938
    %7957 = vmatprep.subr.mxu0 0.0
    %7958 = vmatpush1.msra.mxu0 0.0
    %7959 = vmatprep.subr.mxu0 0.0
    %7960 = vmatpush1.msra.mxu0 0.0
    %7961 = vmatprep.subr.mxu0 0.0
    %7962 = vmatpush1.msra.mxu0 0.0
    %7963 = vmatprep.subr.mxu0 0.0
    %7964 = vmatpush1.msra.mxu0 0.0
    %7965 = vmatprep.subr.mxu0 0.0
    %7966 = vmatpush1.msra.mxu0 0.0
    %7967 = vmatprep.subr.mxu0 0.0
    %7968 = vmatpush1.msra.mxu0 0.0
    %7969 = vmatprep.subr.mxu0 0.0
    %7970 = vmatpush1.msra.mxu0 0.0
    %7971 = vmatprep.subr.mxu0 0.0
    %7972 = vmatpush1.msra.mxu0 0.0
    %7973 = vmatprep.subr.mxu0 0.0
    %7974 = vmatpush1.msra.mxu0 0.0
    %7975 = vmatprep.subr.mxu0 0.0
    %7976 = vmatpush1.msra.mxu0 0.0
    %7977 = vmatprep.subr.mxu0 0.0
    %7978 = vmatpush1.msra.mxu0 0.0
    %7979 = vmatprep.subr.mxu0 0.0
    %7980 = vmatpush1.msra.mxu0 0.0
    %7981 = vmatprep.subr.mxu0 0.0
    %7982 = vmatpush1.msra.mxu0 0.0
    %7983 = vmatprep.subr.mxu0 0.0
    %7984 = vmatpush1.msra.mxu0 0.0
    %7985 = vmatprep.subr.mxu0 0.0
    %7986 = vmatpush1.msra.mxu0 0.0
    %7987 = vmatprep.subr.mxu0 0.0
    %7988 = vmatpush1.msra.mxu0 0.0
    %7989 = vmatprep.subr.mxu0 0.0
    %7990 = vmatpush1.msra.mxu0 0.0
    %7991 = vmatprep.subr.mxu0 0.0
    %7992 = vmatpush1.msra.mxu0 0.0
    %7993 = vmatprep.subr.mxu0 0.0
    %7994 = vmatpush1.msra.mxu0 0.0
    %7995 = vmatprep.subr.mxu0 0.0
    %7996 = vmatpush1.msra.mxu0 0.0
    %7997 = vmatprep.subr.mxu0 0.0
    %7998 = vmatpush1.msra.mxu0 0.0
    %7999 = vmatprep.subr.mxu0 0.0
    %8000 = vmatpush1.msra.mxu0 0.0
    %8001 = vmatprep.subr.mxu0 0.0
    %8002 = vmatpush1.msra.mxu0 0.0
    %8003 = vmatprep.subr.mxu0 0.0
    %8004 = vmatpush1.msra.mxu0 0.0
    %8005 = vmatprep.subr.mxu0 0.0
    %8006 = vmatpush1.msra.mxu0 0.0
    %8007 = vmatprep.subr.mxu0 0.0
    %8008 = vmatpush1.msra.mxu0 0.0
    %8009 = vmatprep.mubr.f32.mxu0 0.0
    %8010 = vmatmul.mubr.f32.gmra.mrb[0].mxu0 %v7943
    %v8011 = vpop.f32.mrb[0].mxu0
    %v8012 = vadd.f32 0.0, %v8011
    %v8013 = vpop.f32.mrb[0].mxu0
    %v8014 = vadd.f32 0.0, %v8013
    %8015 = vdwg.mxu0
    %8016 = vmatprep.subr.mxu0 %v7921
    %8017 = vmatpush1.msra.mxu0 %v7920
    %8018 = vmatprep.subr.mxu0 %v7925
    %8019 = vmatpush1.msra.mxu0 %v7924
    %8020 = vmatprep.subr.mxu0 %v7929
    %8021 = vmatpush1.msra.mxu0 %v7928
    %8022 = vmatprep.subr.mxu0 %v7933
    %8023 = vmatpush1.msra.mxu0 %v7932
    %8024 = vmatprep.subr.mxu0 %v7937
    %8025 = vmatpush1.msra.mxu0 %v7936
    %8026 = vmatprep.subr.mxu0 %v7941
    %8027 = vmatpush1.msra.mxu0 %v7940
    %8028 = vmatprep.subr.mxu0 0.0
    %8029 = vmatpush1.msra.mxu0 0.0
    %8030 = vmatprep.subr.mxu0 0.0
    %8031 = vmatpush1.msra.mxu0 0.0
    %8032 = vmatprep.subr.mxu0 0.0
    %8033 = vmatpush1.msra.mxu0 0.0
    %8034 = vmatprep.subr.mxu0 0.0
    %8035 = vmatpush1.msra.mxu0 0.0
    %8036 = vmatprep.subr.mxu0 0.0
    %8037 = vmatpush1.msra.mxu0 0.0
    %8038 = vmatprep.subr.mxu0 0.0
    %8039 = vmatpush1.msra.mxu0 0.0
    %8040 = vmatprep.subr.mxu0 0.0
    %8041 = vmatpush1.msra.mxu0 0.0
    %8042 = vmatprep.subr.mxu0 0.0
    %8043 = vmatpush1.msra.mxu0 0.0
    %8044 = vmatprep.subr.mxu0 0.0
    %8045 = vmatpush1.msra.mxu0 0.0
    %8046 = vmatprep.subr.mxu0 0.0
    %8047 = vmatpush1.msra.mxu0 0.0
    %8048 = vmatprep.subr.mxu0 0.0
    %8049 = vmatpush1.msra.mxu0 0.0
    %8050 = vmatprep.subr.mxu0 0.0
    %8051 = vmatpush1.msra.mxu0 0.0
    %8052 = vmatprep.subr.mxu0 0.0
    %8053 = vmatpush1.msra.mxu0 0.0
    %8054 = vmatprep.subr.mxu0 0.0
    %8055 = vmatpush1.msra.mxu0 0.0
    %8056 = vmatprep.subr.mxu0 0.0
    %8057 = vmatpush1.msra.mxu0 0.0
    %8058 = vmatprep.subr.mxu0 0.0
    %8059 = vmatpush1.msra.mxu0 0.0
    %8060 = vmatprep.subr.mxu0 0.0
    %8061 = vmatpush1.msra.mxu0 0.0
    %8062 = vmatprep.subr.mxu0 0.0
    %8063 = vmatpush1.msra.mxu0 0.0
    %8064 = vmatprep.subr.mxu0 0.0
    %8065 = vmatpush1.msra.mxu0 0.0
    %8066 = vmatprep.subr.mxu0 0.0
    %8067 = vmatpush1.msra.mxu0 0.0
    %8068 = vmatprep.subr.mxu0 0.0
    %8069 = vmatpush1.msra.mxu0 0.0
    %8070 = vmatprep.subr.mxu0 0.0
    %8071 = vmatpush1.msra.mxu0 0.0
    %8072 = vmatprep.subr.mxu0 0.0
    %8073 = vmatpush1.msra.mxu0 0.0
    %8074 = vmatprep.subr.mxu0 0.0
    %8075 = vmatpush1.msra.mxu0 0.0
    %8076 = vmatprep.subr.mxu0 0.0
    %8077 = vmatpush1.msra.mxu0 0.0
    %8078 = vmatprep.subr.mxu0 0.0
    %8079 = vmatpush1.msra.mxu0 0.0
    %8080 = vmatprep.mubr.f32.mxu0 0.0
    %8081 = vmatmul.mubr.f32.gmra.mrb[0].mxu0 %v7943
    %v8082 = vpop.f32.mrb[0].mxu0
    %v8083 = vadd.f32 0.0, %v8082
    %v8084 = vpop.f32.mrb[0].mxu0
    %v8085 = vadd.f32 0.0, %v8084
    %8086 = vdwg.mxu0
    %v8087 = vld [vmem:[#allocation2 + $0x1c0] sm:$0xff]
    %v8088 = vld [vmem:[#allocation2 + $0x1c8] sm:$0xff]
    %v8089 = vld [vmem:[#allocation2 + $0x1d0] sm:$0xff]
    %v8090 = vld [vmem:[#allocation2 + $0x1d8] sm:$0xff]
    %v8091 = vadd.f32 %v8087, %v7701
    %v8092 = vadd.f32 %v8088, %v7703
    %v8093 = vadd.f32 %v8089, %v7772
    %v8094 = vadd.f32 %v8090, %v7774
    %v8095 = vtanh.pop %v8091
    %v8096 = vtanh.pop %v8092
    %v8097 = vtanh.pop %v8093
    %v8098 = vtanh.pop %v8094
    %v8099 = vmul.f32 %v8095, 0.5
    %v8100 = vadd.f32 %v8099, 0.5
    %v8101 = vmul.f32 %v8096, 0.5
    %v8102 = vadd.f32 %v8101, 0.5
    %v8103 = vmul.f32 %v8098, 0.5
    %v8104 = vadd.f32 %v8103, 0.5
    %v8105 = vmul.f32 %v8102, %v7556
    %v8106 = vmul.f32 %v8100, %v8097
    %v8107 = vadd.f32 %v8105, %v8106
    %v8108 = vtanh.pop %v8107
    %v8109 = vmul.f32 %v8104, %v8108
    %v8110 = vadd.f32 %v7843, %v556
    %v8111 = vadd.f32 %v7845, %v560
    %v8112 = vadd.f32 %v7914, %v564
    %v8113 = vadd.f32 %v7916, %v568
    %v8114 = vadd.f32 %v8110, %v8012
    %v8115 = vadd.f32 %v8111, %v8014
    %v8116 = vadd.f32 %v8112, %v8083
    %v8117 = vadd.f32 %v8113, %v8085
    %v8118 = vtanh.pop %v8114
    %v8119 = vtanh.pop %v8115
    %v8120 = vtanh.pop %v8116
    %v8121 = vtanh.pop %v8117
    %v8122 = vmul.f32 %v8118, 0.5
    %v8123 = vadd.f32 %v8122, 0.5
    %v8124 = vmul.f32 %v8119, 0.5
    %v8125 = vadd.f32 %v8124, 0.5
    %v8126 = vmul.f32 %v8121, 0.5
    %v8127 = vadd.f32 %v8126, 0.5
    %v8128 = vmul.f32 %v8125, %v7579
    %v8129 = vmul.f32 %v8123, %v8120
    %v8130 = vadd.f32 %v8128, %v8129
    %v8131 = vtanh.pop %v8130
    %v8132 = vmul.f32 %v8127, %v8131
    %8133 = vst.msk [vmem:[#allocation3 + $0x68] sm:$0xff] %vm640, %v8132
    %v8134 = vld [vmem:[#allocation4] sm:$0xff]
    %v8135 = vld [vmem:[#allocation4 + $0x8] sm:$0xff]
    %v8136 = vld [vmem:[#allocation4 + $0x10] sm:$0xff]
    %v8137 = vld [vmem:[#allocation4 + $0x18] sm:$0xff]
    %v8138 = vld [vmem:[#allocation4 + $0x20] sm:$0xff]
    %v8139 = vld [vmem:[#allocation4 + $0x28] sm:$0xff]
    %v8140 = vld [vmem:[#allocation4 + $0x30] sm:$0xff]
    %v8141 = vld [vmem:[#allocation4 + $0x38] sm:$0xff]
    %v8142 = vld [vmem:[#allocation4 + $0x40] sm:$0xff]
    %v8143 = vld [vmem:[#allocation4 + $0x48] sm:$0xff]
    %v8144 = vld [vmem:[#allocation4 + $0x50] sm:$0xff]
    %v8145 = vld [vmem:[#allocation4 + $0x58] sm:$0xff]
    %v8146 = vld [vmem:[#allocation4 + $0x60] sm:$0xff]
    %v8147 = vld [vmem:[#allocation4 + $0x68] sm:$0xff]
    %v8148 = vld [vmem:[#allocation4 + $0x70] sm:$0xff]
    %v8149 = vld [vmem:[#allocation4 + $0x78] sm:$0xff]
    %v8150 = vld [vmem:[#allocation4 + $0x80] sm:$0xff]
    %v8151 = vld [vmem:[#allocation4 + $0x88] sm:$0xff]
    %v8152 = vld [vmem:[#allocation4 + $0x90] sm:$0xff]
    %v8153 = vld [vmem:[#allocation4 + $0x98] sm:$0xff]
    %v8154 = vld [vmem:[#allocation4 + $0xa0] sm:$0xff]
    %v8155 = vld [vmem:[#allocation4 + $0xa8] sm:$0xff]
    %v8156 = vld [vmem:[#allocation4 + $0xb0] sm:$0xff]
    %v8157 = vld [vmem:[#allocation4 + $0xb8] sm:$0xff]
    %v8158 = vld [vmem:[#allocation4 + $0xc0] sm:$0xff]
    %v8159 = vld [vmem:[#allocation4 + $0xc8] sm:$0xff]
    %v8160 = vld [vmem:[#allocation4 + $0xd0] sm:$0xff]
    %v8161 = vld [vmem:[#allocation4 + $0xd8] sm:$0xff]
    %v8162 = vld [vmem:[#allocation4 + $0xe0] sm:$0xff]
    %v8163 = vld [vmem:[#allocation4 + $0xe8] sm:$0xff]
    %v8164 = vld [vmem:[#allocation4 + $0xf0] sm:$0xff]
    %v8165 = vld [vmem:[#allocation4 + $0xf8] sm:$0xff]
    %v8166 = vld [vmem:[#allocation4 + $0x100] sm:$0xff]
    %v8167 = vld [vmem:[#allocation4 + $0x108] sm:$0xff]
    %v8168 = vld [vmem:[#allocation4 + $0x110] sm:$0xff]
    %v8169 = vld [vmem:[#allocation4 + $0x118] sm:$0xff]
    %v8170 = vld [vmem:[#allocation4 + $0x120] sm:$0xff]
    %v8171 = vld [vmem:[#allocation4 + $0x128] sm:$0xff]
    %v8172 = vld [vmem:[#allocation4 + $0x130] sm:$0xff]
    %v8173 = vld [vmem:[#allocation4 + $0x138] sm:$0xff]
    %v8174 = vld [vmem:[#allocation4 + $0x140] sm:$0xff]
    %v8175 = vld [vmem:[#allocation4 + $0x148] sm:$0xff]
    %v8176 = vld [vmem:[#allocation4 + $0x150] sm:$0xff]
    %v8177 = vld [vmem:[#allocation4 + $0x158] sm:$0xff]
    %v8178 = vld [vmem:[#allocation4 + $0x160] sm:$0xff]
    %v8179 = vld [vmem:[#allocation4 + $0x168] sm:$0xff]
    %v8180 = vld [vmem:[#allocation4 + $0x170] sm:$0xff]
    %v8181 = vld [vmem:[#allocation4 + $0x178] sm:$0xff]
    %v8183 = vsel %vm640, %v8109, 0
    %8185 = vmatprep.subr.mxu0 %v8135
    %8186 = vmatpush1.msra.mxu0 %v8134
    %8187 = vmatprep.subr.mxu0 %v8143
    %8188 = vmatpush1.msra.mxu0 %v8142
    %8189 = vmatprep.subr.mxu0 %v8151
    %8190 = vmatpush1.msra.mxu0 %v8150
    %8191 = vmatprep.subr.mxu0 %v8159
    %8192 = vmatpush1.msra.mxu0 %v8158
    %8193 = vmatprep.subr.mxu0 %v8167
    %8194 = vmatpush1.msra.mxu0 %v8166
    %8195 = vmatprep.subr.mxu0 %v8175
    %8196 = vmatpush1.msra.mxu0 %v8174
    %8197 = vmatprep.subr.mxu0 0.0
    %8198 = vmatpush1.msra.mxu0 0.0
    %8199 = vmatprep.subr.mxu0 0.0
    %8200 = vmatpush1.msra.mxu0 0.0
    %8201 = vmatprep.subr.mxu0 0.0
    %8202 = vmatpush1.msra.mxu0 0.0
    %8203 = vmatprep.subr.mxu0 0.0
    %8204 = vmatpush1.msra.mxu0 0.0
    %8205 = vmatprep.subr.mxu0 0.0
    %8206 = vmatpush1.msra.mxu0 0.0
    %8207 = vmatprep.subr.mxu0 0.0
    %8208 = vmatpush1.msra.mxu0 0.0
    %8209 = vmatprep.subr.mxu0 0.0
    %8210 = vmatpush1.msra.mxu0 0.0
    %8211 = vmatprep.subr.mxu0 0.0
    %8212 = vmatpush1.msra.mxu0 0.0
    %8213 = vmatprep.subr.mxu0 0.0
    %8214 = vmatpush1.msra.mxu0 0.0
    %8215 = vmatprep.subr.mxu0 0.0
    %8216 = vmatpush1.msra.mxu0 0.0
    %8217 = vmatprep.subr.mxu0 0.0
    %8218 = vmatpush1.msra.mxu0 0.0
    %8219 = vmatprep.subr.mxu0 0.0
    %8220 = vmatpush1.msra.mxu0 0.0
    %8221 = vmatprep.subr.mxu0 0.0
    %8222 = vmatpush1.msra.mxu0 0.0
    %8223 = vmatprep.subr.mxu0 0.0
    %8224 = vmatpush1.msra.mxu0 0.0
    %8225 = vmatprep.subr.mxu0 0.0
    %8226 = vmatpush1.msra.mxu0 0.0
    %8227 = vmatprep.subr.mxu0 0.0
    %8228 = vmatpush1.msra.mxu0 0.0
    %8229 = vmatprep.subr.mxu0 0.0
    %8230 = vmatpush1.msra.mxu0 0.0
    %8231 = vmatprep.subr.mxu0 0.0
    %8232 = vmatpush1.msra.mxu0 0.0
    %8233 = vmatprep.subr.mxu0 0.0
    %8234 = vmatpush1.msra.mxu0 0.0
    %8235 = vmatprep.subr.mxu0 0.0
    %8236 = vmatpush1.msra.mxu0 0.0
    %8237 = vmatprep.subr.mxu0 0.0
    %8238 = vmatpush1.msra.mxu0 0.0
    %8239 = vmatprep.subr.mxu0 0.0
    %8240 = vmatpush1.msra.mxu0 0.0
    %8241 = vmatprep.subr.mxu0 0.0
    %8242 = vmatpush1.msra.mxu0 0.0
    %8243 = vmatprep.subr.mxu0 0.0
    %8244 = vmatpush1.msra.mxu0 0.0
    %8245 = vmatprep.subr.mxu0 0.0
    %8246 = vmatpush1.msra.mxu0 0.0
    %8247 = vmatprep.subr.mxu0 0.0
    %8248 = vmatpush1.msra.mxu0 0.0
    %8249 = vmatprep.mubr.f32.mxu0 0.0
    %8250 = vmatmul.mubr.f32.gmra.mrb[0].mxu0 %v8183
    %v8251 = vpop.f32.mrb[0].mxu0
    %v8252 = vadd.f32 0.0, %v8251
    %v8253 = vpop.f32.mrb[0].mxu0
    %v8254 = vadd.f32 0.0, %v8253
    %8255 = vdwg.mxu0
    %8256 = vmatprep.subr.mxu0 %v8137
    %8257 = vmatpush1.msra.mxu0 %v8136
    %8258 = vmatprep.subr.mxu0 %v8145
    %8259 = vmatpush1.msra.mxu0 %v8144
    %8260 = vmatprep.subr.mxu0 %v8153
    %8261 = vmatpush1.msra.mxu0 %v8152
    %8262 = vmatprep.subr.mxu0 %v8161
    %8263 = vmatpush1.msra.mxu0 %v8160
    %8264 = vmatprep.subr.mxu0 %v8169
    %8265 = vmatpush1.msra.mxu0 %v8168
    %8266 = vmatprep.subr.mxu0 %v8177
    %8267 = vmatpush1.msra.mxu0 %v8176
    %8268 = vmatprep.subr.mxu0 0.0
    %8269 = vmatpush1.msra.mxu0 0.0
    %8270 = vmatprep.subr.mxu0 0.0
    %8271 = vmatpush1.msra.mxu0 0.0
    %8272 = vmatprep.subr.mxu0 0.0
    %8273 = vmatpush1.msra.mxu0 0.0
    %8274 = vmatprep.subr.mxu0 0.0
    %8275 = vmatpush1.msra.mxu0 0.0
    %8276 = vmatprep.subr.mxu0 0.0
    %8277 = vmatpush1.msra.mxu0 0.0
    %8278 = vmatprep.subr.mxu0 0.0
    %8279 = vmatpush1.msra.mxu0 0.0
    %8280 = vmatprep.subr.mxu0 0.0
    %8281 = vmatpush1.msra.mxu0 0.0
    %8282 = vmatprep.subr.mxu0 0.0
    %8283 = vmatpush1.msra.mxu0 0.0
    %8284 = vmatprep.subr.mxu0 0.0
    %8285 = vmatpush1.msra.mxu0 0.0
    %8286 = vmatprep.subr.mxu0 0.0
    %8287 = vmatpush1.msra.mxu0 0.0
    %8288 = vmatprep.subr.mxu0 0.0
    %8289 = vmatpush1.msra.mxu0 0.0
    %8290 = vmatprep.subr.mxu0 0.0
    %8291 = vmatpush1.msra.mxu0 0.0
    %8292 = vmatprep.subr.mxu0 0.0
    %8293 = vmatpush1.msra.mxu0 0.0
    %8294 = vmatprep.subr.mxu0 0.0
    %8295 = vmatpush1.msra.mxu0 0.0
    %8296 = vmatprep.subr.mxu0 0.0
    %8297 = vmatpush1.msra.mxu0 0.0
    %8298 = vmatprep.subr.mxu0 0.0
    %8299 = vmatpush1.msra.mxu0 0.0
    %8300 = vmatprep.subr.mxu0 0.0
    %8301 = vmatpush1.msra.mxu0 0.0
    %8302 = vmatprep.subr.mxu0 0.0
    %8303 = vmatpush1.msra.mxu0 0.0
    %8304 = vmatprep.subr.mxu0 0.0
    %8305 = vmatpush1.msra.mxu0 0.0
    %8306 = vmatprep.subr.mxu0 0.0
    %8307 = vmatpush1.msra.mxu0 0.0
    %8308 = vmatprep.subr.mxu0 0.0
    %8309 = vmatpush1.msra.mxu0 0.0
    %8310 = vmatprep.subr.mxu0 0.0
    %8311 = vmatpush1.msra.mxu0 0.0
    %8312 = vmatprep.subr.mxu0 0.0
    %8313 = vmatpush1.msra.mxu0 0.0
    %8314 = vmatprep.subr.mxu0 0.0
    %8315 = vmatpush1.msra.mxu0 0.0
    %8316 = vmatprep.subr.mxu0 0.0
    %8317 = vmatpush1.msra.mxu0 0.0
    %8318 = vmatprep.subr.mxu0 0.0
    %8319 = vmatpush1.msra.mxu0 0.0
    %8320 = vmatprep.mubr.f32.mxu0 0.0
    %8321 = vmatmul.mubr.f32.gmra.mrb[0].mxu0 %v8183
    %v8322 = vpop.f32.mrb[0].mxu0
    %v8323 = vadd.f32 0.0, %v8322
    %v8324 = vpop.f32.mrb[0].mxu0
    %v8325 = vadd.f32 0.0, %v8324
    %8326 = vdwg.mxu0
    %8327 = vmatprep.subr.mxu0 %v8139
    %8328 = vmatpush1.msra.mxu0 %v8138
    %8329 = vmatprep.subr.mxu0 %v8147
    %8330 = vmatpush1.msra.mxu0 %v8146
    %8331 = vmatprep.subr.mxu0 %v8155
    %8332 = vmatpush1.msra.mxu0 %v8154
    %8333 = vmatprep.subr.mxu0 %v8163
    %8334 = vmatpush1.msra.mxu0 %v8162
    %8335 = vmatprep.subr.mxu0 %v8171
    %8336 = vmatpush1.msra.mxu0 %v8170
    %8337 = vmatprep.subr.mxu0 %v8179
    %8338 = vmatpush1.msra.mxu0 %v8178
    %8339 = vmatprep.subr.mxu0 0.0
    %8340 = vmatpush1.msra.mxu0 0.0
    %8341 = vmatprep.subr.mxu0 0.0
    %8342 = vmatpush1.msra.mxu0 0.0
    %8343 = vmatprep.subr.mxu0 0.0
    %8344 = vmatpush1.msra.mxu0 0.0
    %8345 = vmatprep.subr.mxu0 0.0
    %8346 = vmatpush1.msra.mxu0 0.0
    %8347 = vmatprep.subr.mxu0 0.0
    %8348 = vmatpush1.msra.mxu0 0.0
    %8349 = vmatprep.subr.mxu0 0.0
    %8350 = vmatpush1.msra.mxu0 0.0
    %8351 = vmatprep.subr.mxu0 0.0
    %8352 = vmatpush1.msra.mxu0 0.0
    %8353 = vmatprep.subr.mxu0 0.0
    %8354 = vmatpush1.msra.mxu0 0.0
    %8355 = vmatprep.subr.mxu0 0.0
    %8356 = vmatpush1.msra.mxu0 0.0
    %8357 = vmatprep.subr.mxu0 0.0
    %8358 = vmatpush1.msra.mxu0 0.0
    %8359 = vmatprep.subr.mxu0 0.0
    %8360 = vmatpush1.msra.mxu0 0.0
    %8361 = vmatprep.subr.mxu0 0.0
    %8362 = vmatpush1.msra.mxu0 0.0
    %8363 = vmatprep.subr.mxu0 0.0
    %8364 = vmatpush1.msra.mxu0 0.0
    %8365 = vmatprep.subr.mxu0 0.0
    %8366 = vmatpush1.msra.mxu0 0.0
    %8367 = vmatprep.subr.mxu0 0.0
    %8368 = vmatpush1.msra.mxu0 0.0
    %8369 = vmatprep.subr.mxu0 0.0
    %8370 = vmatpush1.msra.mxu0 0.0
    %8371 = vmatprep.subr.mxu0 0.0
    %8372 = vmatpush1.msra.mxu0 0.0
    %8373 = vmatprep.subr.mxu0 0.0
    %8374 = vmatpush1.msra.mxu0 0.0
    %8375 = vmatprep.subr.mxu0 0.0
    %8376 = vmatpush1.msra.mxu0 0.0
    %8377 = vmatprep.subr.mxu0 0.0
    %8378 = vmatpush1.msra.mxu0 0.0
    %8379 = vmatprep.subr.mxu0 0.0
    %8380 = vmatpush1.msra.mxu0 0.0
    %8381 = vmatprep.subr.mxu0 0.0
    %8382 = vmatpush1.msra.mxu0 0.0
    %8383 = vmatprep.subr.mxu0 0.0
    %8384 = vmatpush1.msra.mxu0 0.0
    %8385 = vmatprep.subr.mxu0 0.0
    %8386 = vmatpush1.msra.mxu0 0.0
    %8387 = vmatprep.subr.mxu0 0.0
    %8388 = vmatpush1.msra.mxu0 0.0
    %8389 = vmatprep.subr.mxu0 0.0
    %8390 = vmatpush1.msra.mxu0 0.0
    %8391 = vmatprep.mubr.f32.mxu0 0.0
    %8392 = vmatmul.mubr.f32.gmra.mrb[0].mxu0 %v8183
    %v8393 = vpop.f32.mrb[0].mxu0
    %v8394 = vadd.f32 0.0, %v8393
    %v8395 = vpop.f32.mrb[0].mxu0
    %v8396 = vadd.f32 0.0, %v8395
    %8397 = vdwg.mxu0
    %8398 = vmatprep.subr.mxu0 %v8141
    %8399 = vmatpush1.msra.mxu0 %v8140
    %8400 = vmatprep.subr.mxu0 %v8149
    %8401 = vmatpush1.msra.mxu0 %v8148
    %8402 = vmatprep.subr.mxu0 %v8157
    %8403 = vmatpush1.msra.mxu0 %v8156
    %8404 = vmatprep.subr.mxu0 %v8165
    %8405 = vmatpush1.msra.mxu0 %v8164
    %8406 = vmatprep.subr.mxu0 %v8173
    %8407 = vmatpush1.msra.mxu0 %v8172
    %8408 = vmatprep.subr.mxu0 %v8181
    %8409 = vmatpush1.msra.mxu0 %v8180
    %8410 = vmatprep.subr.mxu0 0.0
    %8411 = vmatpush1.msra.mxu0 0.0
    %8412 = vmatprep.subr.mxu0 0.0
    %8413 = vmatpush1.msra.mxu0 0.0
    %8414 = vmatprep.subr.mxu0 0.0
    %8415 = vmatpush1.msra.mxu0 0.0
    %8416 = vmatprep.subr.mxu0 0.0
    %8417 = vmatpush1.msra.mxu0 0.0
    %8418 = vmatprep.subr.mxu0 0.0
    %8419 = vmatpush1.msra.mxu0 0.0
    %8420 = vmatprep.subr.mxu0 0.0
    %8421 = vmatpush1.msra.mxu0 0.0
    %8422 = vmatprep.subr.mxu0 0.0
    %8423 = vmatpush1.msra.mxu0 0.0
    %8424 = vmatprep.subr.mxu0 0.0
    %8425 = vmatpush1.msra.mxu0 0.0
    %8426 = vmatprep.subr.mxu0 0.0
    %8427 = vmatpush1.msra.mxu0 0.0
    %8428 = vmatprep.subr.mxu0 0.0
    %8429 = vmatpush1.msra.mxu0 0.0
    %8430 = vmatprep.subr.mxu0 0.0
    %8431 = vmatpush1.msra.mxu0 0.0
    %8432 = vmatprep.subr.mxu0 0.0
    %8433 = vmatpush1.msra.mxu0 0.0
    %8434 = vmatprep.subr.mxu0 0.0
    %8435 = vmatpush1.msra.mxu0 0.0
    %8436 = vmatprep.subr.mxu0 0.0
    %8437 = vmatpush1.msra.mxu0 0.0
    %8438 = vmatprep.subr.mxu0 0.0
    %8439 = vmatpush1.msra.mxu0 0.0
    %8440 = vmatprep.subr.mxu0 0.0
    %8441 = vmatpush1.msra.mxu0 0.0
    %8442 = vmatprep.subr.mxu0 0.0
    %8443 = vmatpush1.msra.mxu0 0.0
    %8444 = vmatprep.subr.mxu0 0.0
    %8445 = vmatpush1.msra.mxu0 0.0
    %8446 = vmatprep.subr.mxu0 0.0
    %8447 = vmatpush1.msra.mxu0 0.0
    %8448 = vmatprep.subr.mxu0 0.0
    %8449 = vmatpush1.msra.mxu0 0.0
    %8450 = vmatprep.subr.mxu0 0.0
    %8451 = vmatpush1.msra.mxu0 0.0
    %8452 = vmatprep.subr.mxu0 0.0
    %8453 = vmatpush1.msra.mxu0 0.0
    %8454 = vmatprep.subr.mxu0 0.0
    %8455 = vmatpush1.msra.mxu0 0.0
    %8456 = vmatprep.subr.mxu0 0.0
    %8457 = vmatpush1.msra.mxu0 0.0
    %8458 = vmatprep.subr.mxu0 0.0
    %8459 = vmatpush1.msra.mxu0 0.0
    %8460 = vmatprep.subr.mxu0 0.0
    %8461 = vmatpush1.msra.mxu0 0.0
    %8462 = vmatprep.mubr.f32.mxu0 0.0
    %8463 = vmatmul.mubr.f32.gmra.mrb[0].mxu0 %v8183
    %v8464 = vpop.f32.mrb[0].mxu0
    %v8465 = vadd.f32 0.0, %v8464
    %v8466 = vpop.f32.mrb[0].mxu0
    %v8467 = vadd.f32 0.0, %v8466
    %8468 = vdwg.mxu0
    %v8469 = vld [vmem:[#allocation7] sm:$0xff]
    %v8470 = vld [vmem:[#allocation7 + $0x8] sm:$0xff]
    %v8471 = vld [vmem:[#allocation7 + $0x10] sm:$0xff]
    %v8472 = vld [vmem:[#allocation7 + $0x18] sm:$0xff]
    %v8473 = vld [vmem:[#allocation7 + $0x20] sm:$0xff]
    %v8474 = vld [vmem:[#allocation7 + $0x28] sm:$0xff]
    %v8475 = vld [vmem:[#allocation7 + $0x30] sm:$0xff]
    %v8476 = vld [vmem:[#allocation7 + $0x38] sm:$0xff]
    %v8477 = vld [vmem:[#allocation7 + $0x40] sm:$0xff]
    %v8478 = vld [vmem:[#allocation7 + $0x48] sm:$0xff]
    %v8479 = vld [vmem:[#allocation7 + $0x50] sm:$0xff]
    %v8480 = vld [vmem:[#allocation7 + $0x58] sm:$0xff]
    %v8481 = vld [vmem:[#allocation7 + $0x60] sm:$0xff]
    %v8482 = vld [vmem:[#allocation7 + $0x68] sm:$0xff]
    %v8483 = vld [vmem:[#allocation7 + $0x70] sm:$0xff]
    %v8484 = vld [vmem:[#allocation7 + $0x78] sm:$0xff]
    %v8485 = vld [vmem:[#allocation7 + $0x80] sm:$0xff]
    %v8486 = vld [vmem:[#allocation7 + $0x88] sm:$0xff]
    %v8487 = vld [vmem:[#allocation7 + $0x90] sm:$0xff]
    %v8488 = vld [vmem:[#allocation7 + $0x98] sm:$0xff]
    %v8489 = vld [vmem:[#allocation7 + $0xa0] sm:$0xff]
    %v8490 = vld [vmem:[#allocation7 + $0xa8] sm:$0xff]
    %v8491 = vld [vmem:[#allocation7 + $0xb0] sm:$0xff]
    %v8492 = vld [vmem:[#allocation7 + $0xb8] sm:$0xff]
    %v8494 = vsel %vm640, %v8132, 0
    %8496 = vmatprep.subr.mxu0 %v8470
    %8497 = vmatpush1.msra.mxu0 %v8469
    %8498 = vmatprep.subr.mxu0 %v8474
    %8499 = vmatpush1.msra.mxu0 %v8473
    %8500 = vmatprep.subr.mxu0 %v8478
    %8501 = vmatpush1.msra.mxu0 %v8477
    %8502 = vmatprep.subr.mxu0 %v8482
    %8503 = vmatpush1.msra.mxu0 %v8481
    %8504 = vmatprep.subr.mxu0 %v8486
    %8505 = vmatpush1.msra.mxu0 %v8485
    %8506 = vmatprep.subr.mxu0 %v8490
    %8507 = vmatpush1.msra.mxu0 %v8489
    %8508 = vmatprep.subr.mxu0 0.0
    %8509 = vmatpush1.msra.mxu0 0.0
    %8510 = vmatprep.subr.mxu0 0.0
    %8511 = vmatpush1.msra.mxu0 0.0
    %8512 = vmatprep.subr.mxu0 0.0
    %8513 = vmatpush1.msra.mxu0 0.0
    %8514 = vmatprep.subr.mxu0 0.0
    %8515 = vmatpush1.msra.mxu0 0.0
    %8516 = vmatprep.subr.mxu0 0.0
    %8517 = vmatpush1.msra.mxu0 0.0
    %8518 = vmatprep.subr.mxu0 0.0
    %8519 = vmatpush1.msra.mxu0 0.0
    %8520 = vmatprep.subr.mxu0 0.0
    %8521 = vmatpush1.msra.mxu0 0.0
    %8522 = vmatprep.subr.mxu0 0.0
    %8523 = vmatpush1.msra.mxu0 0.0
    %8524 = vmatprep.subr.mxu0 0.0
    %8525 = vmatpush1.msra.mxu0 0.0
    %8526 = vmatprep.subr.mxu0 0.0
    %8527 = vmatpush1.msra.mxu0 0.0
    %8528 = vmatprep.subr.mxu0 0.0
    %8529 = vmatpush1.msra.mxu0 0.0
    %8530 = vmatprep.subr.mxu0 0.0
    %8531 = vmatpush1.msra.mxu0 0.0
    %8532 = vmatprep.subr.mxu0 0.0
    %8533 = vmatpush1.msra.mxu0 0.0
    %8534 = vmatprep.subr.mxu0 0.0
    %8535 = vmatpush1.msra.mxu0 0.0
    %8536 = vmatprep.subr.mxu0 0.0
    %8537 = vmatpush1.msra.mxu0 0.0
    %8538 = vmatprep.subr.mxu0 0.0
    %8539 = vmatpush1.msra.mxu0 0.0
    %8540 = vmatprep.subr.mxu0 0.0
    %8541 = vmatpush1.msra.mxu0 0.0
    %8542 = vmatprep.subr.mxu0 0.0
    %8543 = vmatpush1.msra.mxu0 0.0
    %8544 = vmatprep.subr.mxu0 0.0
    %8545 = vmatpush1.msra.mxu0 0.0
    %8546 = vmatprep.subr.mxu0 0.0
    %8547 = vmatpush1.msra.mxu0 0.0
    %8548 = vmatprep.subr.mxu0 0.0
    %8549 = vmatpush1.msra.mxu0 0.0
    %8550 = vmatprep.subr.mxu0 0.0
    %8551 = vmatpush1.msra.mxu0 0.0
    %8552 = vmatprep.subr.mxu0 0.0
    %8553 = vmatpush1.msra.mxu0 0.0
    %8554 = vmatprep.subr.mxu0 0.0
    %8555 = vmatpush1.msra.mxu0 0.0
    %8556 = vmatprep.subr.mxu0 0.0
    %8557 = vmatpush1.msra.mxu0 0.0
    %8558 = vmatprep.subr.mxu0 0.0
    %8559 = vmatpush1.msra.mxu0 0.0
    %8560 = vmatprep.mubr.f32.mxu0 0.0
    %8561 = vmatmul.mubr.f32.gmra.mrb[0].mxu0 %v8494
    %v8562 = vpop.f32.mrb[0].mxu0
    %v8563 = vadd.f32 0.0, %v8562
    %v8564 = vpop.f32.mrb[0].mxu0
    %v8565 = vadd.f32 0.0, %v8564
    %8566 = vdwg.mxu0
    %8567 = vmatprep.subr.mxu0 %v8472
    %8568 = vmatpush1.msra.mxu0 %v8471
    %8569 = vmatprep.subr.mxu0 %v8476
    %8570 = vmatpush1.msra.mxu0 %v8475
    %8571 = vmatprep.subr.mxu0 %v8480
    %8572 = vmatpush1.msra.mxu0 %v8479
    %8573 = vmatprep.subr.mxu0 %v8484
    %8574 = vmatpush1.msra.mxu0 %v8483
    %8575 = vmatprep.subr.mxu0 %v8488
    %8576 = vmatpush1.msra.mxu0 %v8487
    %8577 = vmatprep.subr.mxu0 %v8492
    %8578 = vmatpush1.msra.mxu0 %v8491
    %8579 = vmatprep.subr.mxu0 0.0
    %8580 = vmatpush1.msra.mxu0 0.0
    %8581 = vmatprep.subr.mxu0 0.0
    %8582 = vmatpush1.msra.mxu0 0.0
    %8583 = vmatprep.subr.mxu0 0.0
    %8584 = vmatpush1.msra.mxu0 0.0
    %8585 = vmatprep.subr.mxu0 0.0
    %8586 = vmatpush1.msra.mxu0 0.0
    %8587 = vmatprep.subr.mxu0 0.0
    %8588 = vmatpush1.msra.mxu0 0.0
    %8589 = vmatprep.subr.mxu0 0.0
    %8590 = vmatpush1.msra.mxu0 0.0
    %8591 = vmatprep.subr.mxu0 0.0
    %8592 = vmatpush1.msra.mxu0 0.0
    %8593 = vmatprep.subr.mxu0 0.0
    %8594 = vmatpush1.msra.mxu0 0.0
    %8595 = vmatprep.subr.mxu0 0.0
    %8596 = vmatpush1.msra.mxu0 0.0
    %8597 = vmatprep.subr.mxu0 0.0
    %8598 = vmatpush1.msra.mxu0 0.0
    %8599 = vmatprep.subr.mxu0 0.0
    %8600 = vmatpush1.msra.mxu0 0.0
    %8601 = vmatprep.subr.mxu0 0.0
    %8602 = vmatpush1.msra.mxu0 0.0
    %8603 = vmatprep.subr.mxu0 0.0
    %8604 = vmatpush1.msra.mxu0 0.0
    %8605 = vmatprep.subr.mxu0 0.0
    %8606 = vmatpush1.msra.mxu0 0.0
    %8607 = vmatprep.subr.mxu0 0.0
    %8608 = vmatpush1.msra.mxu0 0.0
    %8609 = vmatprep.subr.mxu0 0.0
    %8610 = vmatpush1.msra.mxu0 0.0
    %8611 = vmatprep.subr.mxu0 0.0
    %8612 = vmatpush1.msra.mxu0 0.0
    %8613 = vmatprep.subr.mxu0 0.0
    %8614 = vmatpush1.msra.mxu0 0.0
    %8615 = vmatprep.subr.mxu0 0.0
    %8616 = vmatpush1.msra.mxu0 0.0
    %8617 = vmatprep.subr.mxu0 0.0
    %8618 = vmatpush1.msra.mxu0 0.0
    %8619 = vmatprep.subr.mxu0 0.0
    %8620 = vmatpush1.msra.mxu0 0.0
    %8621 = vmatprep.subr.mxu0 0.0
    %8622 = vmatpush1.msra.mxu0 0.0
    %8623 = vmatprep.subr.mxu0 0.0
    %8624 = vmatpush1.msra.mxu0 0.0
    %8625 = vmatprep.subr.mxu0 0.0
    %8626 = vmatpush1.msra.mxu0 0.0
    %8627 = vmatprep.subr.mxu0 0.0
    %8628 = vmatpush1.msra.mxu0 0.0
    %8629 = vmatprep.subr.mxu0 0.0
    %8630 = vmatpush1.msra.mxu0 0.0
    %8631 = vmatprep.mubr.f32.mxu0 0.0
    %8632 = vmatmul.mubr.f32.gmra.mrb[0].mxu0 %v8494
    %v8633 = vpop.f32.mrb[0].mxu0
    %v8634 = vadd.f32 0.0, %v8633
    %v8635 = vpop.f32.mrb[0].mxu0
    %v8636 = vadd.f32 0.0, %v8635
    %8637 = vdwg.mxu0
    %v8638 = vld [vmem:[#allocation2 + $0x1e0] sm:$0xff]
    %v8639 = vld [vmem:[#allocation2 + $0x1e8] sm:$0xff]
    %v8640 = vld [vmem:[#allocation2 + $0x1f0] sm:$0xff]
    %v8641 = vld [vmem:[#allocation2 + $0x1f8] sm:$0xff]
    %v8642 = vadd.f32 %v8638, %v8252
    %v8643 = vadd.f32 %v8639, %v8254
    %v8644 = vadd.f32 %v8640, %v8323
    %v8645 = vadd.f32 %v8641, %v8325
    %v8646 = vtanh.pop %v8642
    %v8647 = vtanh.pop %v8643
    %v8648 = vtanh.pop %v8644
    %v8649 = vtanh.pop %v8645
    %v8650 = vmul.f32 %v8646, 0.5
    %v8651 = vadd.f32 %v8650, 0.5
    %v8652 = vmul.f32 %v8647, 0.5
    %v8653 = vadd.f32 %v8652, 0.5
    %v8654 = vmul.f32 %v8649, 0.5
    %v8655 = vadd.f32 %v8654, 0.5
    %v8656 = vmul.f32 %v8653, %v8107
    %v8657 = vmul.f32 %v8651, %v8648
    %v8658 = vadd.f32 %v8656, %v8657
    %v8659 = vtanh.pop %v8658
    %v8660 = vmul.f32 %v8655, %v8659
    %v8661 = vadd.f32 %v8394, %v556
    %v8662 = vadd.f32 %v8396, %v560
    %v8663 = vadd.f32 %v8465, %v564
    %v8664 = vadd.f32 %v8467, %v568
    %v8665 = vadd.f32 %v8661, %v8563
    %v8666 = vadd.f32 %v8662, %v8565
    %v8667 = vadd.f32 %v8663, %v8634
    %v8668 = vadd.f32 %v8664, %v8636
    %v8669 = vtanh.pop %v8665
    %v8670 = vtanh.pop %v8666
    %v8671 = vtanh.pop %v8667
    %v8672 = vtanh.pop %v8668
    %v8673 = vmul.f32 %v8669, 0.5
    %v8674 = vadd.f32 %v8673, 0.5
    %v8675 = vmul.f32 %v8670, 0.5
    %v8676 = vadd.f32 %v8675, 0.5
    %v8677 = vmul.f32 %v8672, 0.5
    %v8678 = vadd.f32 %v8677, 0.5
    %v8679 = vmul.f32 %v8676, %v8130
    %v8680 = vmul.f32 %v8674, %v8671
    %v8681 = vadd.f32 %v8679, %v8680
    %v8682 = vtanh.pop %v8681
    %v8683 = vmul.f32 %v8678, %v8682
    %8684 = vst.msk [vmem:[#allocation3 + $0x70] sm:$0xff] %vm640, %v8683
    %v8685 = vld [vmem:[#allocation4 + $0x20] sm:$0xff]
    %v8686 = vld [vmem:[#allocation4 + $0x28] sm:$0xff]
    %v8687 = vld [vmem:[#allocation4 + $0x30] sm:$0xff]
    %v8688 = vld [vmem:[#allocation4 + $0x38] sm:$0xff]
    %v8689 = vld [vmem:[#allocation4 + $0x60] sm:$0xff]
    %v8690 = vld [vmem:[#allocation4 + $0x68] sm:$0xff]
    %v8691 = vld [vmem:[#allocation4 + $0x70] sm:$0xff]
    %v8692 = vld [vmem:[#allocation4 + $0x78] sm:$0xff]
    %v8693 = vld [vmem:[#allocation4 + $0xa0] sm:$0xff]
    %v8694 = vld [vmem:[#allocation4 + $0xa8] sm:$0xff]
    %v8695 = vld [vmem:[#allocation4 + $0xb0] sm:$0xff]
    %v8696 = vld [vmem:[#allocation4 + $0xb8] sm:$0xff]
    %v8697 = vld [vmem:[#allocation4 + $0xe0] sm:$0xff]
    %v8698 = vld [vmem:[#allocation4 + $0xe8] sm:$0xff]
    %v8699 = vld [vmem:[#allocation4 + $0xf0] sm:$0xff]
    %v8700 = vld [vmem:[#allocation4 + $0xf8] sm:$0xff]
    %v8701 = vld [vmem:[#allocation4 + $0x120] sm:$0xff]
    %v8702 = vld [vmem:[#allocation4 + $0x128] sm:$0xff]
    %v8703 = vld [vmem:[#allocation4 + $0x130] sm:$0xff]
    %v8704 = vld [vmem:[#allocation4 + $0x138] sm:$0xff]
    %v8705 = vld [vmem:[#allocation4 + $0x160] sm:$0xff]
    %v8706 = vld [vmem:[#allocation4 + $0x168] sm:$0xff]
    %v8707 = vld [vmem:[#allocation4 + $0x170] sm:$0xff]
    %v8708 = vld [vmem:[#allocation4 + $0x178] sm:$0xff]
    %v8710 = vsel %vm640, %v8660, 0
    %8712 = vmatprep.subr.mxu0 %v8686
    %8713 = vmatpush1.msra.mxu0 %v8685
    %8714 = vmatprep.subr.mxu0 %v8690
    %8715 = vmatpush1.msra.mxu0 %v8689
    %8716 = vmatprep.subr.mxu0 %v8694
    %8717 = vmatpush1.msra.mxu0 %v8693
    %8718 = vmatprep.subr.mxu0 %v8698
    %8719 = vmatpush1.msra.mxu0 %v8697
    %8720 = vmatprep.subr.mxu0 %v8702
    %8721 = vmatpush1.msra.mxu0 %v8701
    %8722 = vmatprep.subr.mxu0 %v8706
    %8723 = vmatpush1.msra.mxu0 %v8705
    %8724 = vmatprep.subr.mxu0 0.0
    %8725 = vmatpush1.msra.mxu0 0.0
    %8726 = vmatprep.subr.mxu0 0.0
    %8727 = vmatpush1.msra.mxu0 0.0
    %8728 = vmatprep.subr.mxu0 0.0
    %8729 = vmatpush1.msra.mxu0 0.0
    %8730 = vmatprep.subr.mxu0 0.0
    %8731 = vmatpush1.msra.mxu0 0.0
    %8732 = vmatprep.subr.mxu0 0.0
    %8733 = vmatpush1.msra.mxu0 0.0
    %8734 = vmatprep.subr.mxu0 0.0
    %8735 = vmatpush1.msra.mxu0 0.0
    %8736 = vmatprep.subr.mxu0 0.0
    %8737 = vmatpush1.msra.mxu0 0.0
    %8738 = vmatprep.subr.mxu0 0.0
    %8739 = vmatpush1.msra.mxu0 0.0
    %8740 = vmatprep.subr.mxu0 0.0
    %8741 = vmatpush1.msra.mxu0 0.0
    %8742 = vmatprep.subr.mxu0 0.0
    %8743 = vmatpush1.msra.mxu0 0.0
    %8744 = vmatprep.subr.mxu0 0.0
    %8745 = vmatpush1.msra.mxu0 0.0
    %8746 = vmatprep.subr.mxu0 0.0
    %8747 = vmatpush1.msra.mxu0 0.0
    %8748 = vmatprep.subr.mxu0 0.0
    %8749 = vmatpush1.msra.mxu0 0.0
    %8750 = vmatprep.subr.mxu0 0.0
    %8751 = vmatpush1.msra.mxu0 0.0
    %8752 = vmatprep.subr.mxu0 0.0
    %8753 = vmatpush1.msra.mxu0 0.0
    %8754 = vmatprep.subr.mxu0 0.0
    %8755 = vmatpush1.msra.mxu0 0.0
    %8756 = vmatprep.subr.mxu0 0.0
    %8757 = vmatpush1.msra.mxu0 0.0
    %8758 = vmatprep.subr.mxu0 0.0
    %8759 = vmatpush1.msra.mxu0 0.0
    %8760 = vmatprep.subr.mxu0 0.0
    %8761 = vmatpush1.msra.mxu0 0.0
    %8762 = vmatprep.subr.mxu0 0.0
    %8763 = vmatpush1.msra.mxu0 0.0
    %8764 = vmatprep.subr.mxu0 0.0
    %8765 = vmatpush1.msra.mxu0 0.0
    %8766 = vmatprep.subr.mxu0 0.0
    %8767 = vmatpush1.msra.mxu0 0.0
    %8768 = vmatprep.subr.mxu0 0.0
    %8769 = vmatpush1.msra.mxu0 0.0
    %8770 = vmatprep.subr.mxu0 0.0
    %8771 = vmatpush1.msra.mxu0 0.0
    %8772 = vmatprep.subr.mxu0 0.0
    %8773 = vmatpush1.msra.mxu0 0.0
    %8774 = vmatprep.subr.mxu0 0.0
    %8775 = vmatpush1.msra.mxu0 0.0
    %8776 = vmatprep.mubr.f32.mxu0 0.0
    %8777 = vmatmul.mubr.f32.gmra.mrb[0].mxu0 %v8710
    %v8778 = vpop.f32.mrb[0].mxu0
    %v8779 = vadd.f32 0.0, %v8778
    %v8780 = vpop.f32.mrb[0].mxu0
    %v8781 = vadd.f32 0.0, %v8780
    %8782 = vdwg.mxu0
    %8783 = vmatprep.subr.mxu0 %v8688
    %8784 = vmatpush1.msra.mxu0 %v8687
    %8785 = vmatprep.subr.mxu0 %v8692
    %8786 = vmatpush1.msra.mxu0 %v8691
    %8787 = vmatprep.subr.mxu0 %v8696
    %8788 = vmatpush1.msra.mxu0 %v8695
    %8789 = vmatprep.subr.mxu0 %v8700
    %8790 = vmatpush1.msra.mxu0 %v8699
    %8791 = vmatprep.subr.mxu0 %v8704
    %8792 = vmatpush1.msra.mxu0 %v8703
    %8793 = vmatprep.subr.mxu0 %v8708
    %8794 = vmatpush1.msra.mxu0 %v8707
    %8795 = vmatprep.subr.mxu0 0.0
    %8796 = vmatpush1.msra.mxu0 0.0
    %8797 = vmatprep.subr.mxu0 0.0
    %8798 = vmatpush1.msra.mxu0 0.0
    %8799 = vmatprep.subr.mxu0 0.0
    %8800 = vmatpush1.msra.mxu0 0.0
    %8801 = vmatprep.subr.mxu0 0.0
    %8802 = vmatpush1.msra.mxu0 0.0
    %8803 = vmatprep.subr.mxu0 0.0
    %8804 = vmatpush1.msra.mxu0 0.0
    %8805 = vmatprep.subr.mxu0 0.0
    %8806 = vmatpush1.msra.mxu0 0.0
    %8807 = vmatprep.subr.mxu0 0.0
    %8808 = vmatpush1.msra.mxu0 0.0
    %8809 = vmatprep.subr.mxu0 0.0
    %8810 = vmatpush1.msra.mxu0 0.0
    %8811 = vmatprep.subr.mxu0 0.0
    %8812 = vmatpush1.msra.mxu0 0.0
    %8813 = vmatprep.subr.mxu0 0.0
    %8814 = vmatpush1.msra.mxu0 0.0
    %8815 = vmatprep.subr.mxu0 0.0
    %8816 = vmatpush1.msra.mxu0 0.0
    %8817 = vmatprep.subr.mxu0 0.0
    %8818 = vmatpush1.msra.mxu0 0.0
    %8819 = vmatprep.subr.mxu0 0.0
    %8820 = vmatpush1.msra.mxu0 0.0
    %8821 = vmatprep.subr.mxu0 0.0
    %8822 = vmatpush1.msra.mxu0 0.0
    %8823 = vmatprep.subr.mxu0 0.0
    %8824 = vmatpush1.msra.mxu0 0.0
    %8825 = vmatprep.subr.mxu0 0.0
    %8826 = vmatpush1.msra.mxu0 0.0
    %8827 = vmatprep.subr.mxu0 0.0
    %8828 = vmatpush1.msra.mxu0 0.0
    %8829 = vmatprep.subr.mxu0 0.0
    %8830 = vmatpush1.msra.mxu0 0.0
    %8831 = vmatprep.subr.mxu0 0.0
    %8832 = vmatpush1.msra.mxu0 0.0
    %8833 = vmatprep.subr.mxu0 0.0
    %8834 = vmatpush1.msra.mxu0 0.0
    %8835 = vmatprep.subr.mxu0 0.0
    %8836 = vmatpush1.msra.mxu0 0.0
    %8837 = vmatprep.subr.mxu0 0.0
    %8838 = vmatpush1.msra.mxu0 0.0
    %8839 = vmatprep.subr.mxu0 0.0
    %8840 = vmatpush1.msra.mxu0 0.0
    %8841 = vmatprep.subr.mxu0 0.0
    %8842 = vmatpush1.msra.mxu0 0.0
    %8843 = vmatprep.subr.mxu0 0.0
    %8844 = vmatpush1.msra.mxu0 0.0
    %8845 = vmatprep.subr.mxu0 0.0
    %8846 = vmatpush1.msra.mxu0 0.0
    %8847 = vmatprep.mubr.f32.mxu0 0.0
    %8848 = vmatmul.mubr.f32.gmra.mrb[0].mxu0 %v8710
    %v8849 = vpop.f32.mrb[0].mxu0
    %v8850 = vadd.f32 0.0, %v8849
    %v8851 = vpop.f32.mrb[0].mxu0
    %v8852 = vadd.f32 0.0, %v8851
    %8853 = vdwg.mxu0
    %v8854 = vld [vmem:[#allocation7] sm:$0xff]
    %v8855 = vld [vmem:[#allocation7 + $0x8] sm:$0xff]
    %v8856 = vld [vmem:[#allocation7 + $0x10] sm:$0xff]
    %v8857 = vld [vmem:[#allocation7 + $0x18] sm:$0xff]
    %v8858 = vld [vmem:[#allocation7 + $0x20] sm:$0xff]
    %v8859 = vld [vmem:[#allocation7 + $0x28] sm:$0xff]
    %v8860 = vld [vmem:[#allocation7 + $0x30] sm:$0xff]
    %v8861 = vld [vmem:[#allocation7 + $0x38] sm:$0xff]
    %v8862 = vld [vmem:[#allocation7 + $0x40] sm:$0xff]
    %v8863 = vld [vmem:[#allocation7 + $0x48] sm:$0xff]
    %v8864 = vld [vmem:[#allocation7 + $0x50] sm:$0xff]
    %v8865 = vld [vmem:[#allocation7 + $0x58] sm:$0xff]
    %v8866 = vld [vmem:[#allocation7 + $0x60] sm:$0xff]
    %v8867 = vld [vmem:[#allocation7 + $0x68] sm:$0xff]
    %v8868 = vld [vmem:[#allocation7 + $0x70] sm:$0xff]
    %v8869 = vld [vmem:[#allocation7 + $0x78] sm:$0xff]
    %v8870 = vld [vmem:[#allocation7 + $0x80] sm:$0xff]
    %v8871 = vld [vmem:[#allocation7 + $0x88] sm:$0xff]
    %v8872 = vld [vmem:[#allocation7 + $0x90] sm:$0xff]
    %v8873 = vld [vmem:[#allocation7 + $0x98] sm:$0xff]
    %v8874 = vld [vmem:[#allocation7 + $0xa0] sm:$0xff]
    %v8875 = vld [vmem:[#allocation7 + $0xa8] sm:$0xff]
    %v8876 = vld [vmem:[#allocation7 + $0xb0] sm:$0xff]
    %v8877 = vld [vmem:[#allocation7 + $0xb8] sm:$0xff]
    %v8879 = vsel %vm640, %v8683, 0
    %8881 = vmatprep.subr.mxu0 %v8855
    %8882 = vmatpush1.msra.mxu0 %v8854
    %8883 = vmatprep.subr.mxu0 %v8859
    %8884 = vmatpush1.msra.mxu0 %v8858
    %8885 = vmatprep.subr.mxu0 %v8863
    %8886 = vmatpush1.msra.mxu0 %v8862
    %8887 = vmatprep.subr.mxu0 %v8867
    %8888 = vmatpush1.msra.mxu0 %v8866
    %8889 = vmatprep.subr.mxu0 %v8871
    %8890 = vmatpush1.msra.mxu0 %v8870
    %8891 = vmatprep.subr.mxu0 %v8875
    %8892 = vmatpush1.msra.mxu0 %v8874
    %8893 = vmatprep.subr.mxu0 0.0
    %8894 = vmatpush1.msra.mxu0 0.0
    %8895 = vmatprep.subr.mxu0 0.0
    %8896 = vmatpush1.msra.mxu0 0.0
    %8897 = vmatprep.subr.mxu0 0.0
    %8898 = vmatpush1.msra.mxu0 0.0
    %8899 = vmatprep.subr.mxu0 0.0
    %8900 = vmatpush1.msra.mxu0 0.0
    %8901 = vmatprep.subr.mxu0 0.0
    %8902 = vmatpush1.msra.mxu0 0.0
    %8903 = vmatprep.subr.mxu0 0.0
    %8904 = vmatpush1.msra.mxu0 0.0
    %8905 = vmatprep.subr.mxu0 0.0
    %8906 = vmatpush1.msra.mxu0 0.0
    %8907 = vmatprep.subr.mxu0 0.0
    %8908 = vmatpush1.msra.mxu0 0.0
    %8909 = vmatprep.subr.mxu0 0.0
    %8910 = vmatpush1.msra.mxu0 0.0
    %8911 = vmatprep.subr.mxu0 0.0
    %8912 = vmatpush1.msra.mxu0 0.0
    %8913 = vmatprep.subr.mxu0 0.0
    %8914 = vmatpush1.msra.mxu0 0.0
    %8915 = vmatprep.subr.mxu0 0.0
    %8916 = vmatpush1.msra.mxu0 0.0
    %8917 = vmatprep.subr.mxu0 0.0
    %8918 = vmatpush1.msra.mxu0 0.0
    %8919 = vmatprep.subr.mxu0 0.0
    %8920 = vmatpush1.msra.mxu0 0.0
    %8921 = vmatprep.subr.mxu0 0.0
    %8922 = vmatpush1.msra.mxu0 0.0
    %8923 = vmatprep.subr.mxu0 0.0
    %8924 = vmatpush1.msra.mxu0 0.0
    %8925 = vmatprep.subr.mxu0 0.0
    %8926 = vmatpush1.msra.mxu0 0.0
    %8927 = vmatprep.subr.mxu0 0.0
    %8928 = vmatpush1.msra.mxu0 0.0
    %8929 = vmatprep.subr.mxu0 0.0
    %8930 = vmatpush1.msra.mxu0 0.0
    %8931 = vmatprep.subr.mxu0 0.0
    %8932 = vmatpush1.msra.mxu0 0.0
    %8933 = vmatprep.subr.mxu0 0.0
    %8934 = vmatpush1.msra.mxu0 0.0
    %8935 = vmatprep.subr.mxu0 0.0
    %8936 = vmatpush1.msra.mxu0 0.0
    %8937 = vmatprep.subr.mxu0 0.0
    %8938 = vmatpush1.msra.mxu0 0.0
    %8939 = vmatprep.subr.mxu0 0.0
    %8940 = vmatpush1.msra.mxu0 0.0
    %8941 = vmatprep.subr.mxu0 0.0
    %8942 = vmatpush1.msra.mxu0 0.0
    %8943 = vmatprep.subr.mxu0 0.0
    %8944 = vmatpush1.msra.mxu0 0.0
    %8945 = vmatprep.mubr.f32.mxu0 0.0
    %8946 = vmatmul.mubr.f32.gmra.mrb[0].mxu0 %v8879
    %v8947 = vpop.f32.mrb[0].mxu0
    %v8948 = vadd.f32 0.0, %v8947
    %v8949 = vpop.f32.mrb[0].mxu0
    %v8950 = vadd.f32 0.0, %v8949
    %8951 = vdwg.mxu0
    %8952 = vmatprep.subr.mxu0 %v8857
    %8953 = vmatpush1.msra.mxu0 %v8856
    %8954 = vmatprep.subr.mxu0 %v8861
    %8955 = vmatpush1.msra.mxu0 %v8860
    %8956 = vmatprep.subr.mxu0 %v8865
    %8957 = vmatpush1.msra.mxu0 %v8864
    %8958 = vmatprep.subr.mxu0 %v8869
    %8959 = vmatpush1.msra.mxu0 %v8868
    %8960 = vmatprep.subr.mxu0 %v8873
    %8961 = vmatpush1.msra.mxu0 %v8872
    %8962 = vmatprep.subr.mxu0 %v8877
    %8963 = vmatpush1.msra.mxu0 %v8876
    %8964 = vmatprep.subr.mxu0 0.0
    %8965 = vmatpush1.msra.mxu0 0.0
    %8966 = vmatprep.subr.mxu0 0.0
    %8967 = vmatpush1.msra.mxu0 0.0
    %8968 = vmatprep.subr.mxu0 0.0
    %8969 = vmatpush1.msra.mxu0 0.0
    %8970 = vmatprep.subr.mxu0 0.0
    %8971 = vmatpush1.msra.mxu0 0.0
    %8972 = vmatprep.subr.mxu0 0.0
    %8973 = vmatpush1.msra.mxu0 0.0
    %8974 = vmatprep.subr.mxu0 0.0
    %8975 = vmatpush1.msra.mxu0 0.0
    %8976 = vmatprep.subr.mxu0 0.0
    %8977 = vmatpush1.msra.mxu0 0.0
    %8978 = vmatprep.subr.mxu0 0.0
    %8979 = vmatpush1.msra.mxu0 0.0
    %8980 = vmatprep.subr.mxu0 0.0
    %8981 = vmatpush1.msra.mxu0 0.0
    %8982 = vmatprep.subr.mxu0 0.0
    %8983 = vmatpush1.msra.mxu0 0.0
    %8984 = vmatprep.subr.mxu0 0.0
    %8985 = vmatpush1.msra.mxu0 0.0
    %8986 = vmatprep.subr.mxu0 0.0
    %8987 = vmatpush1.msra.mxu0 0.0
    %8988 = vmatprep.subr.mxu0 0.0
    %8989 = vmatpush1.msra.mxu0 0.0
    %8990 = vmatprep.subr.mxu0 0.0
    %8991 = vmatpush1.msra.mxu0 0.0
    %8992 = vmatprep.subr.mxu0 0.0
    %8993 = vmatpush1.msra.mxu0 0.0
    %8994 = vmatprep.subr.mxu0 0.0
    %8995 = vmatpush1.msra.mxu0 0.0
    %8996 = vmatprep.subr.mxu0 0.0
    %8997 = vmatpush1.msra.mxu0 0.0
    %8998 = vmatprep.subr.mxu0 0.0
    %8999 = vmatpush1.msra.mxu0 0.0
    %9000 = vmatprep.subr.mxu0 0.0
    %9001 = vmatpush1.msra.mxu0 0.0
    %9002 = vmatprep.subr.mxu0 0.0
    %9003 = vmatpush1.msra.mxu0 0.0
    %9004 = vmatprep.subr.mxu0 0.0
    %9005 = vmatpush1.msra.mxu0 0.0
    %9006 = vmatprep.subr.mxu0 0.0
    %9007 = vmatpush1.msra.mxu0 0.0
    %9008 = vmatprep.subr.mxu0 0.0
    %9009 = vmatpush1.msra.mxu0 0.0
    %9010 = vmatprep.subr.mxu0 0.0
    %9011 = vmatpush1.msra.mxu0 0.0
    %9012 = vmatprep.subr.mxu0 0.0
    %9013 = vmatpush1.msra.mxu0 0.0
    %9014 = vmatprep.subr.mxu0 0.0
    %9015 = vmatpush1.msra.mxu0 0.0
    %9016 = vmatprep.mubr.f32.mxu0 0.0
    %9017 = vmatmul.mubr.f32.gmra.mrb[0].mxu0 %v8879
    %v9018 = vpop.f32.mrb[0].mxu0
    %v9019 = vadd.f32 0.0, %v9018
    %v9020 = vpop.f32.mrb[0].mxu0
    %v9021 = vadd.f32 0.0, %v9020
    %9022 = vdwg.mxu0
    %v9023 = vadd.f32 %v8779, %v556
    %v9024 = vadd.f32 %v8781, %v560
    %v9025 = vadd.f32 %v8850, %v564
    %v9026 = vadd.f32 %v8852, %v568
    %v9027 = vadd.f32 %v9023, %v8948
    %v9028 = vadd.f32 %v9024, %v8950
    %v9029 = vadd.f32 %v9025, %v9019
    %v9030 = vadd.f32 %v9026, %v9021
    %v9031 = vtanh.pop %v9027
    %v9032 = vtanh.pop %v9028
    %v9033 = vtanh.pop %v9029
    %v9034 = vtanh.pop %v9030
    %v9035 = vmul.f32 %v9031, 0.5
    %v9036 = vadd.f32 %v9035, 0.5
    %v9037 = vmul.f32 %v9032, 0.5
    %v9038 = vadd.f32 %v9037, 0.5
    %v9039 = vmul.f32 %v9034, 0.5
    %v9040 = vadd.f32 %v9039, 0.5
    %v9041 = vmul.f32 %v9038, %v8681
    %v9042 = vmul.f32 %v9036, %v9033
    %v9043 = vadd.f32 %v9041, %v9042
    %v9044 = vtanh.pop %v9043
    %v9045 = vmul.f32 %v9040, %v9044
    %9046 = vst.msk [vmem:[#allocation3 + $0x78] sm:$0xff] %vm640, %v9045
    %v9047 = vld [vmem:[%s1] sm:$0xff]
    %v9048 = vld [vmem:[%s1 + $0x8] sm:$0xff]
    %v9049 = vld [vmem:[%s7] sm:$0xff]
    %v9050 = vld [vmem:[%s7 + $0x8] sm:$0xff]
    %v9051 = vld [vmem:[%s7 + $0x10] sm:$0xff]
    %v9052 = vld [vmem:[%s7 + $0x18] sm:$0xff]
    %v9053 = vld [vmem:[%s7 + $0x20] sm:$0xff]
    %v9054 = vld [vmem:[%s7 + $0x28] sm:$0xff]
    %v9055 = vld [vmem:[%s8] sm:$0x1]
    %v9056 = vld [vmem:[#allocation3] ss:$8 sm:$0xf]
    %v9057 = vld [vmem:[#allocation3] ss:$8 sm:$0xf0]
    %v9058 = vor.u32 %v9056, %v9057
    %s9059 = scalar_lea.vmem [#allocation3], 64
    %v9060 = vld [vmem:[%s9059] ss:$8 sm:$0xf]
    %v9061 = vld [vmem:[%s9059] ss:$8 sm:$0xf0]
    %v9062 = vor.u32 %v9060, %v9061
    %vm9063 = vcmask 130048
    %v9065 = vsel %vm9063, %v9047, 0
    %v9068 = vsel %vm9063, %v9048, 0
    %9070 = vmatprep.subr.mxu0 0.0
    %9071 = vmatpush1.msra.mxu0 %v9058
    %9072 = vmatprep.subr.mxu0 0.0
    %9073 = vmatpush1.msra.mxu0 %v9062
    %9074 = vmatprep.subr.mxu0 0.0
    %9075 = vmatpush1.msra.mxu0 0.0
    %9076 = vmatprep.subr.mxu0 0.0
    %9077 = vmatpush1.msra.mxu0 0.0
    %9078 = vmatprep.subr.mxu0 0.0
    %9079 = vmatpush1.msra.mxu0 0.0
    %9080 = vmatprep.subr.mxu0 0.0
    %9081 = vmatpush1.msra.mxu0 0.0
    %9082 = vmatprep.subr.mxu0 0.0
    %9083 = vmatpush1.msra.mxu0 0.0
    %9084 = vmatprep.subr.mxu0 0.0
    %9085 = vmatpush1.msra.mxu0 0.0
    %9086 = vmatprep.subr.mxu0 0.0
    %9087 = vmatpush1.msra.mxu0 0.0
    %9088 = vmatprep.subr.mxu0 0.0
    %9089 = vmatpush1.msra.mxu0 0.0
    %9090 = vmatprep.subr.mxu0 0.0
    %9091 = vmatpush1.msra.mxu0 0.0
    %9092 = vmatprep.subr.mxu0 0.0
    %9093 = vmatpush1.msra.mxu0 0.0
    %9094 = vmatprep.subr.mxu0 0.0
    %9095 = vmatpush1.msra.mxu0 0.0
    %9096 = vmatprep.subr.mxu0 0.0
    %9097 = vmatpush1.msra.mxu0 0.0
    %9098 = vmatprep.subr.mxu0 0.0
    %9099 = vmatpush1.msra.mxu0 0.0
    %9100 = vmatprep.subr.mxu0 0.0
    %9101 = vmatpush1.msra.mxu0 0.0
    %9102 = vmatprep.subr.mxu0 0.0
    %9103 = vmatpush1.msra.mxu0 0.0
    %9104 = vmatprep.subr.mxu0 0.0
    %9105 = vmatpush1.msra.mxu0 0.0
    %9106 = vmatprep.subr.mxu0 0.0
    %9107 = vmatpush1.msra.mxu0 0.0
    %9108 = vmatprep.subr.mxu0 0.0
    %9109 = vmatpush1.msra.mxu0 0.0
    %9110 = vmatprep.subr.mxu0 0.0
    %9111 = vmatpush1.msra.mxu0 0.0
    %9112 = vmatprep.subr.mxu0 0.0
    %9113 = vmatpush1.msra.mxu0 0.0
    %9114 = vmatprep.subr.mxu0 0.0
    %9115 = vmatpush1.msra.mxu0 0.0
    %9116 = vmatprep.subr.mxu0 0.0
    %9117 = vmatpush1.msra.mxu0 0.0
    %9118 = vmatprep.subr.mxu0 0.0
    %9119 = vmatpush1.msra.mxu0 0.0
    %9120 = vmatprep.subr.mxu0 0.0
    %9121 = vmatpush1.msra.mxu0 0.0
    %9122 = vmatprep.subr.mxu0 0.0
    %9123 = vmatpush1.msra.mxu0 0.0
    %9124 = vmatprep.subr.mxu0 0.0
    %9125 = vmatpush1.msra.mxu0 0.0
    %9126 = vmatprep.subr.mxu0 0.0
    %9127 = vmatpush1.msra.mxu0 0.0
    %9128 = vmatprep.subr.mxu0 0.0
    %9129 = vmatpush1.msra.mxu0 0.0
    %9130 = vmatprep.subr.mxu0 0.0
    %9131 = vmatpush1.msra.mxu0 0.0
    %9132 = vmatprep.subr.mxu0 0.0
    %9133 = vmatpush1.msra.mxu0 0.0
    %9134 = vmatprep.mubr.f32.mxu0 0.0
    %9135 = vmatmul.mubr.f32.gmra.mrb[0].mxu0 %v9065
    %v9136 = vpop.f32.mrb[0].mxu0
    %v9137 = vadd.f32 0.0, %v9136
    %v9138 = vpop.f32.mrb[0].mxu0
    %9139 = vmatprep.mubr.f32.mxu0 0.0
    %9140 = vmatmul.mubr.f32.gmra.mrb[0].mxu0 %v9068
    %v9141 = vpop.f32.mrb[0].mxu0
    %v9142 = vadd.f32 0.0, %v9141
    %v9143 = vpop.f32.mrb[0].mxu0
    %9144 = vdwg.mxu0
    %v9145 = vmax.f32 %v9137, 0.0
    %v9146 = vmax.f32 %v9142, 0.0
    %v9148 = vlaneseq
    %v9149 = vshrl.u32 %v9148, 7
    %v9150 = vsub.s32 0, %v9149
    %v9151 = vrot.slane %v9055, %v9150
    %v9154 = vsel %vm640, %v9145, 0
    %v9157 = vsel %vm640, %v9146, 0
    %9159 = vmatprep.subr.mxu0 0.0
    %9160 = vmatpush1.msra.mxu0 %v9049
    %9161 = vmatprep.subr.mxu0 0.0
    %9162 = vmatpush1.msra.mxu0 %v9050
    %9163 = vmatprep.subr.mxu0 0.0
    %9164 = vmatpush1.msra.mxu0 %v9051
    %9165 = vmatprep.subr.mxu0 0.0
    %9166 = vmatpush1.msra.mxu0 %v9052
    %9167 = vmatprep.subr.mxu0 0.0
    %9168 = vmatpush1.msra.mxu0 %v9053
    %9169 = vmatprep.subr.mxu0 0.0
    %9170 = vmatpush1.msra.mxu0 %v9054
    %9171 = vmatprep.subr.mxu0 0.0
    %9172 = vmatpush1.msra.mxu0 0.0
    %9173 = vmatprep.subr.mxu0 0.0
    %9174 = vmatpush1.msra.mxu0 0.0
    %9175 = vmatprep.subr.mxu0 0.0
    %9176 = vmatpush1.msra.mxu0 0.0
    %9177 = vmatprep.subr.mxu0 0.0
    %9178 = vmatpush1.msra.mxu0 0.0
    %9179 = vmatprep.subr.mxu0 0.0
    %9180 = vmatpush1.msra.mxu0 0.0
    %9181 = vmatprep.subr.mxu0 0.0
    %9182 = vmatpush1.msra.mxu0 0.0
    %9183 = vmatprep.subr.mxu0 0.0
    %9184 = vmatpush1.msra.mxu0 0.0
    %9185 = vmatprep.subr.mxu0 0.0
    %9186 = vmatpush1.msra.mxu0 0.0
    %9187 = vmatprep.subr.mxu0 0.0
    %9188 = vmatpush1.msra.mxu0 0.0
    %9189 = vmatprep.subr.mxu0 0.0
    %9190 = vmatpush1.msra.mxu0 0.0
    %9191 = vmatprep.subr.mxu0 0.0
    %9192 = vmatpush1.msra.mxu0 0.0
    %9193 = vmatprep.subr.mxu0 0.0
    %9194 = vmatpush1.msra.mxu0 0.0
    %9195 = vmatprep.subr.mxu0 0.0
    %9196 = vmatpush1.msra.mxu0 0.0
    %9197 = vmatprep.subr.mxu0 0.0
    %9198 = vmatpush1.msra.mxu0 0.0
    %9199 = vmatprep.subr.mxu0 0.0
    %9200 = vmatpush1.msra.mxu0 0.0
    %9201 = vmatprep.subr.mxu0 0.0
    %9202 = vmatpush1.msra.mxu0 0.0
    %9203 = vmatprep.subr.mxu0 0.0
    %9204 = vmatpush1.msra.mxu0 0.0
    %9205 = vmatprep.subr.mxu0 0.0
    %9206 = vmatpush1.msra.mxu0 0.0
    %9207 = vmatprep.subr.mxu0 0.0
    %9208 = vmatpush1.msra.mxu0 0.0
    %9209 = vmatprep.subr.mxu0 0.0
    %9210 = vmatpush1.msra.mxu0 0.0
    %9211 = vmatprep.subr.mxu0 0.0
    %9212 = vmatpush1.msra.mxu0 0.0
    %9213 = vmatprep.subr.mxu0 0.0
    %9214 = vmatpush1.msra.mxu0 0.0
    %9215 = vmatprep.subr.mxu0 0.0
    %9216 = vmatpush1.msra.mxu0 0.0
    %9217 = vmatprep.subr.mxu0 0.0
    %9218 = vmatpush1.msra.mxu0 0.0
    %9219 = vmatprep.subr.mxu0 0.0
    %9220 = vmatpush1.msra.mxu0 0.0
    %9221 = vmatprep.subr.mxu0 0.0
    %9222 = vmatpush1.msra.mxu0 0.0
    %9223 = vmatprep.mubr.f32.mxu0 0.0
    %9224 = vmatmul.mubr.f32.gmra.mrb[0].mxu0 %v9154
    %v9225 = vpop.f32.mrb[0].mxu0
    %v9226 = vadd.f32 %v9151, %v9225
    %v9227 = vpop.f32.mrb[0].mxu0
    %9228 = vmatprep.mubr.f32.mxu0 0.0
    %9229 = vmatmul.mubr.f32.gmra.mrb[0].mxu0 %v9157
    %v9230 = vpop.f32.mrb[0].mxu0
    %v9231 = vadd.f32 %v9151, %v9230
    %v9232 = vpop.f32.mrb[0].mxu0
    %9233 = vdwg.mxu0
    %9234 = vmatprep.subr.mxu0 0.0
    %9235 = vmatpush1.msra.mxu0 %v9226
    %9236 = vmatprep.subr.mxu0 0.0
    %9237 = vmatpush1.msra.mxu0 %v9231
    %9238 = vmatprep.subr.mxu0 0.0
    %9239 = vmatpush1.msra.mxu0 0.0
    %9240 = vmatprep.subr.mxu0 0.0
    %9241 = vmatpush1.msra.mxu0 0.0
    %9242 = vmatprep.subr.mxu0 0.0
    %9243 = vmatpush1.msra.mxu0 0.0
    %9244 = vmatprep.subr.mxu0 0.0
    %9245 = vmatpush1.msra.mxu0 0.0
    %9246 = vmatprep.subr.mxu0 0.0
    %9247 = vmatpush1.msra.mxu0 0.0
    %9248 = vmatprep.subr.mxu0 0.0
    %9249 = vmatpush1.msra.mxu0 0.0
    %9250 = vmatprep.subr.mxu0 0.0
    %9251 = vmatpush1.msra.mxu0 0.0
    %9252 = vmatprep.subr.mxu0 0.0
    %9253 = vmatpush1.msra.mxu0 0.0
    %9254 = vmatprep.subr.mxu0 0.0
    %9255 = vmatpush1.msra.mxu0 0.0
    %9256 = vmatprep.subr.mxu0 0.0
    %9257 = vmatpush1.msra.mxu0 0.0
    %9258 = vmatprep.subr.mxu0 0.0
    %9259 = vmatpush1.msra.mxu0 0.0
    %9260 = vmatprep.subr.mxu0 0.0
    %9261 = vmatpush1.msra.mxu0 0.0
    %9262 = vmatprep.subr.mxu0 0.0
    %9263 = vmatpush1.msra.mxu0 0.0
    %9264 = vmatprep.subr.mxu0 0.0
    %9265 = vmatpush1.msra.mxu0 0.0
    %9266 = vmatprep.subr.mxu0 0.0
    %9267 = vmatpush1.msra.mxu0 0.0
    %9268 = vmatprep.subr.mxu0 0.0
    %9269 = vmatpush1.msra.mxu0 0.0
    %9270 = vmatprep.subr.mxu0 0.0
    %9271 = vmatpush1.msra.mxu0 0.0
    %9272 = vmatprep.subr.mxu0 0.0
    %9273 = vmatpush1.msra.mxu0 0.0
    %9274 = vmatprep.subr.mxu0 0.0
    %9275 = vmatpush1.msra.mxu0 0.0
    %9276 = vmatprep.subr.mxu0 0.0
    %9277 = vmatpush1.msra.mxu0 0.0
    %9278 = vmatprep.subr.mxu0 0.0
    %9279 = vmatpush1.msra.mxu0 0.0
    %9280 = vmatprep.subr.mxu0 0.0
    %9281 = vmatpush1.msra.mxu0 0.0
    %9282 = vmatprep.subr.mxu0 0.0
    %9283 = vmatpush1.msra.mxu0 0.0
    %9284 = vmatprep.subr.mxu0 0.0
    %9285 = vmatpush1.msra.mxu0 0.0
    %9286 = vmatprep.subr.mxu0 0.0
    %9287 = vmatpush1.msra.mxu0 0.0
    %9288 = vmatprep.subr.mxu0 0.0
    %9289 = vmatpush1.msra.mxu0 0.0
    %9290 = vmatprep.subr.mxu0 0.0
    %9291 = vmatpush1.msra.mxu0 0.0
    %9292 = vmatprep.subr.mxu0 0.0
    %9293 = vmatpush1.msra.mxu0 0.0
    %9294 = vmatprep.subr.mxu0 0.0
    %9295 = vmatpush1.msra.mxu0 0.0
    %9296 = vmatprep.subr.mxu0 0.0
    %9297 = vmatpush1.msra.mxu0 0.0
    %9298 = vmatprep.mubr.f32.mxu0 0.0
    %9299 = vmatmul.mubr.f32.gmra.mrb[0].mxu0 %v9065
    %v9300 = vpop.f32.mrb[0].mxu0
    %v9301 = vadd.f32 0.0, %v9300
    %v9302 = vpop.f32.mrb[0].mxu0
    %9303 = vmatprep.mubr.f32.mxu0 0.0
    %9304 = vmatmul.mubr.f32.gmra.mrb[0].mxu0 %v9068
    %v9305 = vpop.f32.mrb[0].mxu0
    %v9306 = vadd.f32 0.0, %v9305
    %v9307 = vpop.f32.mrb[0].mxu0
    %9308 = vdwg.mxu0
    %v9309 = vmax.f32 %v9301, 0.0
    %v9310 = vmax.f32 %v9306, 0.0
    %9311 = vst [vmem:[#allocation9] sm:$0xff] %v9309
    %9312 = vst [vmem:[#allocation9 + $0x8] sm:$0xff] %v9310
    %s9313 = scalar_lea.vmem [#allocation3], 1
    %v9314 = vld [vmem:[%s9313] ss:$8 sm:$0xf]
    %v9315 = vld [vmem:[%s9313] ss:$8 sm:$0xf0]
    %v9316 = vor.u32 %v9314, %v9315
    %s9317 = scalar_lea.vmem [#allocation3], 65
    %v9318 = vld [vmem:[%s9317] ss:$8 sm:$0xf]
    %v9319 = vld [vmem:[%s9317] ss:$8 sm:$0xf0]
    %v9320 = vor.u32 %v9318, %v9319
    %9321 = vmatprep.subr.mxu0 0.0
    %9322 = vmatpush1.msra.mxu0 %v9316
    %9323 = vmatprep.subr.mxu0 0.0
    %9324 = vmatpush1.msra.mxu0 %v9320
    %9325 = vmatprep.subr.mxu0 0.0
    %9326 = vmatpush1.msra.mxu0 0.0
    %9327 = vmatprep.subr.mxu0 0.0
    %9328 = vmatpush1.msra.mxu0 0.0
    %9329 = vmatprep.subr.mxu0 0.0
    %9330 = vmatpush1.msra.mxu0 0.0
    %9331 = vmatprep.subr.mxu0 0.0
    %9332 = vmatpush1.msra.mxu0 0.0
    %9333 = vmatprep.subr.mxu0 0.0
    %9334 = vmatpush1.msra.mxu0 0.0
    %9335 = vmatprep.subr.mxu0 0.0
    %9336 = vmatpush1.msra.mxu0 0.0
    %9337 = vmatprep.subr.mxu0 0.0
    %9338 = vmatpush1.msra.mxu0 0.0
    %9339 = vmatprep.subr.mxu0 0.0
    %9340 = vmatpush1.msra.mxu0 0.0
    %9341 = vmatprep.subr.mxu0 0.0
    %9342 = vmatpush1.msra.mxu0 0.0
    %9343 = vmatprep.subr.mxu0 0.0
    %9344 = vmatpush1.msra.mxu0 0.0
    %9345 = vmatprep.subr.mxu0 0.0
    %9346 = vmatpush1.msra.mxu0 0.0
    %9347 = vmatprep.subr.mxu0 0.0
    %9348 = vmatpush1.msra.mxu0 0.0
    %9349 = vmatprep.subr.mxu0 0.0
    %9350 = vmatpush1.msra.mxu0 0.0
    %9351 = vmatprep.subr.mxu0 0.0
    %9352 = vmatpush1.msra.mxu0 0.0
    %9353 = vmatprep.subr.mxu0 0.0
    %9354 = vmatpush1.msra.mxu0 0.0
    %9355 = vmatprep.subr.mxu0 0.0
    %9356 = vmatpush1.msra.mxu0 0.0
    %9357 = vmatprep.subr.mxu0 0.0
    %9358 = vmatpush1.msra.mxu0 0.0
    %9359 = vmatprep.subr.mxu0 0.0
    %9360 = vmatpush1.msra.mxu0 0.0
    %9361 = vmatprep.subr.mxu0 0.0
    %9362 = vmatpush1.msra.mxu0 0.0
    %9363 = vmatprep.subr.mxu0 0.0
    %9364 = vmatpush1.msra.mxu0 0.0
    %9365 = vmatprep.subr.mxu0 0.0
    %9366 = vmatpush1.msra.mxu0 0.0
    %9367 = vmatprep.subr.mxu0 0.0
    %9368 = vmatpush1.msra.mxu0 0.0
    %9369 = vmatprep.subr.mxu0 0.0
    %9370 = vmatpush1.msra.mxu0 0.0
    %9371 = vmatprep.subr.mxu0 0.0
    %9372 = vmatpush1.msra.mxu0 0.0
    %9373 = vmatprep.subr.mxu0 0.0
    %9374 = vmatpush1.msra.mxu0 0.0
    %9375 = vmatprep.subr.mxu0 0.0
    %9376 = vmatpush1.msra.mxu0 0.0
    %9377 = vmatprep.subr.mxu0 0.0
    %9378 = vmatpush1.msra.mxu0 0.0
    %9379 = vmatprep.subr.mxu0 0.0
    %9380 = vmatpush1.msra.mxu0 0.0
    %9381 = vmatprep.subr.mxu0 0.0
    %9382 = vmatpush1.msra.mxu0 0.0
    %9383 = vmatprep.subr.mxu0 0.0
    %9384 = vmatpush1.msra.mxu0 0.0
    %9385 = vmatprep.mubr.f32.mxu0 0.0
    %9386 = vmatmul.mubr.f32.gmra.mrb[0].mxu0 %v9065
    %v9387 = vpop.f32.mrb[0].mxu0
    %v9388 = vadd.f32 0.0, %v9387
    %v9389 = vpop.f32.mrb[0].mxu0
    %9390 = vmatprep.mubr.f32.mxu0 0.0
    %9391 = vmatmul.mubr.f32.gmra.mrb[0].mxu0 %v9068
    %v9392 = vpop.f32.mrb[0].mxu0
    %v9393 = vadd.f32 0.0, %v9392
    %v9394 = vpop.f32.mrb[0].mxu0
    %9395 = vdwg.mxu0
    %v9396 = vmax.f32 %v9388, 0.0
    %v9397 = vmax.f32 %v9393, 0.0
    %v9399 = vsel %vm640, %v9396, 0
    %v9402 = vsel %vm640, %v9397, 0
    %9404 = vmatprep.subr.mxu0 0.0
    %9405 = vmatpush1.msra.mxu0 %v9049
    %9406 = vmatprep.subr.mxu0 0.0
    %9407 = vmatpush1.msra.mxu0 %v9050
    %9408 = vmatprep.subr.mxu0 0.0
    %9409 = vmatpush1.msra.mxu0 %v9051
    %9410 = vmatprep.subr.mxu0 0.0
    %9411 = vmatpush1.msra.mxu0 %v9052
    %9412 = vmatprep.subr.mxu0 0.0
    %9413 = vmatpush1.msra.mxu0 %v9053
    %9414 = vmatprep.subr.mxu0 0.0
    %9415 = vmatpush1.msra.mxu0 %v9054
    %9416 = vmatprep.subr.mxu0 0.0
    %9417 = vmatpush1.msra.mxu0 0.0
    %9418 = vmatprep.subr.mxu0 0.0
    %9419 = vmatpush1.msra.mxu0 0.0
    %9420 = vmatprep.subr.mxu0 0.0
    %9421 = vmatpush1.msra.mxu0 0.0
    %9422 = vmatprep.subr.mxu0 0.0
    %9423 = vmatpush1.msra.mxu0 0.0
    %9424 = vmatprep.subr.mxu0 0.0
    %9425 = vmatpush1.msra.mxu0 0.0
    %9426 = vmatprep.subr.mxu0 0.0
    %9427 = vmatpush1.msra.mxu0 0.0
    %9428 = vmatprep.subr.mxu0 0.0
    %9429 = vmatpush1.msra.mxu0 0.0
    %9430 = vmatprep.subr.mxu0 0.0
    %9431 = vmatpush1.msra.mxu0 0.0
    %9432 = vmatprep.subr.mxu0 0.0
    %9433 = vmatpush1.msra.mxu0 0.0
    %9434 = vmatprep.subr.mxu0 0.0
    %9435 = vmatpush1.msra.mxu0 0.0
    %9436 = vmatprep.subr.mxu0 0.0
    %9437 = vmatpush1.msra.mxu0 0.0
    %9438 = vmatprep.subr.mxu0 0.0
    %9439 = vmatpush1.msra.mxu0 0.0
    %9440 = vmatprep.subr.mxu0 0.0
    %9441 = vmatpush1.msra.mxu0 0.0
    %9442 = vmatprep.subr.mxu0 0.0
    %9443 = vmatpush1.msra.mxu0 0.0
    %9444 = vmatprep.subr.mxu0 0.0
    %9445 = vmatpush1.msra.mxu0 0.0
    %9446 = vmatprep.subr.mxu0 0.0
    %9447 = vmatpush1.msra.mxu0 0.0
    %9448 = vmatprep.subr.mxu0 0.0
    %9449 = vmatpush1.msra.mxu0 0.0
    %9450 = vmatprep.subr.mxu0 0.0
    %9451 = vmatpush1.msra.mxu0 0.0
    %9452 = vmatprep.subr.mxu0 0.0
    %9453 = vmatpush1.msra.mxu0 0.0
    %9454 = vmatprep.subr.mxu0 0.0
    %9455 = vmatpush1.msra.mxu0 0.0
    %9456 = vmatprep.subr.mxu0 0.0
    %9457 = vmatpush1.msra.mxu0 0.0
    %9458 = vmatprep.subr.mxu0 0.0
    %9459 = vmatpush1.msra.mxu0 0.0
    %9460 = vmatprep.subr.mxu0 0.0
    %9461 = vmatpush1.msra.mxu0 0.0
    %9462 = vmatprep.subr.mxu0 0.0
    %9463 = vmatpush1.msra.mxu0 0.0
    %9464 = vmatprep.subr.mxu0 0.0
    %9465 = vmatpush1.msra.mxu0 0.0
    %9466 = vmatprep.subr.mxu0 0.0
    %9467 = vmatpush1.msra.mxu0 0.0
    %9468 = vmatprep.mubr.f32.mxu0 0.0
    %9469 = vmatmul.mubr.f32.gmra.mrb[0].mxu0 %v9399
    %v9470 = vpop.f32.mrb[0].mxu0
    %v9471 = vadd.f32 %v9151, %v9470
    %v9472 = vpop.f32.mrb[0].mxu0
    %9473 = vmatprep.mubr.f32.mxu0 0.0
    %9474 = vmatmul.mubr.f32.gmra.mrb[0].mxu0 %v9402
    %v9475 = vpop.f32.mrb[0].mxu0
    %v9476 = vadd.f32 %v9151, %v9475
    %v9477 = vpop.f32.mrb[0].mxu0
    %9478 = vdwg.mxu0
    %9479 = vmatprep.subr.mxu0 0.0
    %9480 = vmatpush1.msra.mxu0 %v9471
    %9481 = vmatprep.subr.mxu0 0.0
    %9482 = vmatpush1.msra.mxu0 %v9476
    %9483 = vmatprep.subr.mxu0 0.0
    %9484 = vmatpush1.msra.mxu0 0.0
    %9485 = vmatprep.subr.mxu0 0.0
    %9486 = vmatpush1.msra.mxu0 0.0
    %9487 = vmatprep.subr.mxu0 0.0
    %9488 = vmatpush1.msra.mxu0 0.0
    %9489 = vmatprep.subr.mxu0 0.0
    %9490 = vmatpush1.msra.mxu0 0.0
    %9491 = vmatprep.subr.mxu0 0.0
    %9492 = vmatpush1.msra.mxu0 0.0
    %9493 = vmatprep.subr.mxu0 0.0
    %9494 = vmatpush1.msra.mxu0 0.0
    %9495 = vmatprep.subr.mxu0 0.0
    %9496 = vmatpush1.msra.mxu0 0.0
    %9497 = vmatprep.subr.mxu0 0.0
    %9498 = vmatpush1.msra.mxu0 0.0
    %9499 = vmatprep.subr.mxu0 0.0
    %9500 = vmatpush1.msra.mxu0 0.0
    %9501 = vmatprep.subr.mxu0 0.0
    %9502 = vmatpush1.msra.mxu0 0.0
    %9503 = vmatprep.subr.mxu0 0.0
    %9504 = vmatpush1.msra.mxu0 0.0
    %9505 = vmatprep.subr.mxu0 0.0
    %9506 = vmatpush1.msra.mxu0 0.0
    %9507 = vmatprep.subr.mxu0 0.0
    %9508 = vmatpush1.msra.mxu0 0.0
    %9509 = vmatprep.subr.mxu0 0.0
    %9510 = vmatpush1.msra.mxu0 0.0
    %9511 = vmatprep.subr.mxu0 0.0
    %9512 = vmatpush1.msra.mxu0 0.0
    %9513 = vmatprep.subr.mxu0 0.0
    %9514 = vmatpush1.msra.mxu0 0.0
    %9515 = vmatprep.subr.mxu0 0.0
    %9516 = vmatpush1.msra.mxu0 0.0
    %9517 = vmatprep.subr.mxu0 0.0
    %9518 = vmatpush1.msra.mxu0 0.0
    %9519 = vmatprep.subr.mxu0 0.0
    %9520 = vmatpush1.msra.mxu0 0.0
    %9521 = vmatprep.subr.mxu0 0.0
    %9522 = vmatpush1.msra.mxu0 0.0
    %9523 = vmatprep.subr.mxu0 0.0
    %9524 = vmatpush1.msra.mxu0 0.0
    %9525 = vmatprep.subr.mxu0 0.0
    %9526 = vmatpush1.msra.mxu0 0.0
    %9527 = vmatprep.subr.mxu0 0.0
    %9528 = vmatpush1.msra.mxu0 0.0
    %9529 = vmatprep.subr.mxu0 0.0
    %9530 = vmatpush1.msra.mxu0 0.0
    %9531 = vmatprep.subr.mxu0 0.0
    %9532 = vmatpush1.msra.mxu0 0.0
    %9533 = vmatprep.subr.mxu0 0.0
    %9534 = vmatpush1.msra.mxu0 0.0
    %9535 = vmatprep.subr.mxu0 0.0
    %9536 = vmatpush1.msra.mxu0 0.0
    %9537 = vmatprep.subr.mxu0 0.0
    %9538 = vmatpush1.msra.mxu0 0.0
    %9539 = vmatprep.subr.mxu0 0.0
    %9540 = vmatpush1.msra.mxu0 0.0
    %9541 = vmatprep.subr.mxu0 0.0
    %9542 = vmatpush1.msra.mxu0 0.0
    %9543 = vmatprep.mubr.f32.mxu0 0.0
    %9544 = vmatmul.mubr.f32.gmra.mrb[0].mxu0 %v9065
    %v9545 = vpop.f32.mrb[0].mxu0
    %v9546 = vadd.f32 0.0, %v9545
    %v9547 = vpop.f32.mrb[0].mxu0
    %9548 = vmatprep.mubr.f32.mxu0 0.0
    %9549 = vmatmul.mubr.f32.gmra.mrb[0].mxu0 %v9068
    %v9550 = vpop.f32.mrb[0].mxu0
    %v9551 = vadd.f32 0.0, %v9550
    %v9552 = vpop.f32.mrb[0].mxu0
    %9553 = vdwg.mxu0
    %v9554 = vmax.f32 %v9546, 0.0
    %v9555 = vmax.f32 %v9551, 0.0
    %9556 = vst [vmem:[#allocation9 + $0x10] sm:$0xff] %v9554
    %9557 = vst [vmem:[#allocation9 + $0x18] sm:$0xff] %v9555
    // Predicated region
    $region46: #{tpu_custom_call.1} parent=1 // pred_check
      _
    $region47: #{tpu_custom_call.1} parent=1 // pred_check_branch
      %9559 = sbr.rel (0) target = $region49
    $region48: #{tpu_custom_call.1} parent=1 // pred_region
      %s9561 = ssub.s32 512, 512
      %9562 = vsyncadd [#allocation6], %s9561
      %s9563 = sshll.u32 [#allocation9], 4
      %s9564 = int_to_ptr.vmem [resolvable:$true] %s9563
      %9569 = dma.vmem_to_hbm [thread:$0]  %s9564, 512, %s9, [#allocation6], 128, 128, 8
    $region49: #{tpu_custom_call.1} parent=1 // pred_fallthru
      _
    // Predicated region
    $region50: #{tpu_custom_call.1} parent=1 // pred_check
      _
    $region51: #{tpu_custom_call.1} parent=1 // pred_check_branch
      %9571 = sbr.rel (0) target = $region53
    $region52: #{tpu_custom_call.1} parent=1 // pred_region
      %9572 = dma.done [#allocation6], 512
    $region53: #{tpu_custom_call.1} parent=1 // pred_fallthru
      _
    %9573 = vsyncpa [#allocation5], 1
    %9574 = vsyncpa [#allocation8], 1
    %9575 = vsyncpa [#allocation6], 1

</llo_original>
